<compile_context>
chip_gen: v7x
topology: tpu7x:2x2x1
jax: 0.10.0
libtpu: 0.0.40
codegen_flags: <defaults>
</compile_context>

<pallas_src>
import jax
import jax.numpy as jnp
from jax.experimental import pallas as pl
from jax.experimental.pallas import tpu as pltpu


AE_DIMS = (2048, 1024, 512, 256, 512, 1024, 2048)
# activation after each Linear (encoder: ReLU, ReLU, none; decoder: LeakyReLU(0.3) x2, Sigmoid)
AE_ACTS = ("relu", "relu", "none", "leaky_relu", "leaky_relu", "sigmoid")

WBUF_N = 1024                     # weight-slab lane width
WBUF_DEPTH = 3                    # triple-buffered weight DMA
CHUNK_BYTES = 2 * 1024 * 1024     # target bytes per weight DMA chunk

# One entry per streamed weight block: (layer, output-column offset, K, N).
# The last layer (1024 -> 2048) is split into two contiguous 1024-wide column halves
# so its HBM reads and VMEM writes are fully contiguous.
WEIGHT_BLOCKS = (
    (0, 0, 2048, 1024),
    (1, 0, 1024, 512),
    (2, 0, 512, 256),
    (3, 0, 256, 512),
    (4, 0, 512, 1024),
    (5, 0, 1024, 1024),
    (5, 1024, 1024, 1024),
)


def _apply_act(y, act):
    if act == "relu":
        return jnp.maximum(y, 0.0)
    if act == "leaky_relu":
        return jnp.where(y > 0.0, y, 0.3 * y)
    if act == "sigmoid":
        return jax.nn.sigmoid(y)
    if act == "none":
        return y
    raise ValueError(f"unknown activation {act}")


def _chunk_schedule(weight_dtype):
    """Static per-chunk schedule: constant-byte chunks of full weight rows."""
    itemsize = jnp.dtype(weight_dtype).itemsize
    max_rows = max(8, (CHUNK_BYTES // itemsize) // WBUF_N)   # 1024 bf16 / 512 f32
    sched = []  # (block_idx, k0, tk, is_first_chunk, is_last_chunk)
    for blk, (_, _, K, _) in enumerate(WEIGHT_BLOCKS):
        tk = min(K, max_rows)
        assert K % tk == 0, (K, tk)
        nsteps = K // tk
        for s in range(nsteps):
            sched.append((blk, s * tk, tk, s == 0, s == nsteps - 1))
    return sched, max_rows


def _ae_fused_kernel(x_ref,
                     w0, w1, w2, w3, w4, w5a, w5b,   # HBM weight refs (K, N)
                     b0, b1, b2, b3, b4, b5,          # VMEM bias refs (1, N_l)
                     o_ref,                            # VMEM output block (M, 2048)
                     wbuf,                             # VMEM weight slab (DEPTH, rows, 1024)
                     sem):                             # DMA semaphores (DEPTH,)
    w_refs = (w0, w1, w2, w3, w4, w5a, w5b)
    b_refs = (b0, b1, b2, b3, b4, b5)
    wdtype = wbuf.dtype
    sched, _ = _chunk_schedule(wdtype)
    n_layers = len(AE_ACTS)

    # One DMA descriptor per chunk; slots (and their semaphores) rotate over DEPTH bufs.
    copies = []
    for i, (blk, k0, tk, _, _) in enumerate(sched):
        _, _, _, n = WEIGHT_BLOCKS[blk]
        slot = i % WBUF_DEPTH
        copies.append(
            pltpu.make_async_copy(
                w_refs[blk].at[pl.ds(k0, tk), :],
                wbuf.at[slot, pl.ds(0, tk), pl.ds(0, n)],
                sem.at[slot],
            )
        )

    # Prime the pipeline with DEPTH-1 chunks in flight.
    for i in range(min(WBUF_DEPTH - 1, len(copies))):
        copies[i].start()

    # Activations + per-layer partial sums live entirely in vregs (M is tiny).
    acts = x_ref[...]          # (M, 2048) f32
    acc = None
    for i, (blk, k0, tk, first, last) in enumerate(sched):
        layer, col, _, n = WEIGHT_BLOCKS[blk]
        copies[i].wait()

        # Refill the slot freed in the previous iteration *before* this chunk's matmul,
        # so the DMA engine always has work queued during the compute/epilogue.
        nxt = i + WBUF_DEPTH - 1
        if nxt < len(copies):
            copies[nxt].start()

        slot = i % WBUF_DEPTH
        x_blk = acts[:, k0:k0 + tk]                    # (M, tk) f32, register-resident
        w_blk = wbuf[slot, :tk, :n]                    # (tk, n) in streaming dtype
        partial = jnp.dot(x_blk.astype(wdtype), w_blk,
                          preferred_element_type=jnp.float32)
        acc = partial if first else acc + partial

        if last:
            y = _apply_act(acc + b_refs[layer][:, col:col + n], AE_ACTS[layer])
            if layer == n_layers - 1:
                o_ref[:, col:col + n] = y.astype(o_ref.dtype)
            else:
                acts = y                               # becomes next layer's input
            acc = None


def prepare_params(params, weight_dtype=jnp.bfloat16):
    """One-time host/device prep: cast weights to the streaming dtype, split the final
    (1024, 2048) weight into two contiguous (1024, 1024) column halves, reshape biases.
    Do this once outside the per-call path so the jitted forward is only the kernel."""
    ws, bs = [], []
    for l, (w, b) in enumerate(params):
        w = w.astype(weight_dtype)
        if l == len(params) - 1:
            ws.append(w[:, :WBUF_N])
            ws.append(w[:, WBUF_N:])
        else:
            ws.append(w)
        bs.append(b.reshape(1, -1).astype(jnp.float32))
    return tuple(ws), tuple(bs)


def ae_forward(img, ws, bs):
    """Fused Pallas forward pass of the AE. img: (M, 2048) f32; (ws, bs) from prepare_params."""
    M_orig, D = img.shape
    assert D == AE_DIMS[0]
    assert len(ws) == len(WEIGHT_BLOCKS) and len(bs) == len(AE_ACTS)
    for w, (_, _, K, N) in zip(ws, WEIGHT_BLOCKS):
        assert w.shape == (K, N), (w.shape, K, N)

    # Pad the batch to the f32 sublane multiple (8) if needed.
    if M_orig % 8 != 0:
        img = jnp.pad(img, ((0, (-M_orig) % 8), (0, 0)))
    M = img.shape[0]

    wdtype = ws[0].dtype
    _, max_rows = _chunk_schedule(wdtype)

    weight_elems = sum(K * N for _, _, K, N in WEIGHT_BLOCKS)
    bias_elems = sum(AE_DIMS[1:])
    flops = 2 * M * weight_elems
    bytes_accessed = (weight_elems * jnp.dtype(wdtype).itemsize
                      + 4 * (bias_elems + M * (AE_DIMS[0] + AE_DIMS[-1])))

    grid_spec = pltpu.PrefetchScalarGridSpec(
        num_scalar_prefetch=0,
        grid=(1,),
        in_specs=(
            [pl.BlockSpec((M, AE_DIMS[0]), lambda i: (0, 0))]                # x -> VMEM
            + [pl.BlockSpec(memory_space=pl.ANY) for _ in WEIGHT_BLOCKS]     # weights stay in HBM
            + [pl.BlockSpec((1, n), lambda i: (0, 0)) for n in AE_DIMS[1:]]  # biases -> VMEM
        ),
        out_specs=pl.BlockSpec((M, AE_DIMS[-1]), lambda i: (0, 0)),
        scratch_shapes=[
            pltpu.VMEM((WBUF_DEPTH, max_rows, WBUF_N), wdtype),  # 3 x 2 MB weight slab
            pltpu.SemaphoreType.DMA((WBUF_DEPTH,)),
        ],
    )

    out = pl.pallas_call(
        _ae_fused_kernel,
        out_shape=jax.ShapeDtypeStruct((M, AE_DIMS[-1]), jnp.float32),
        grid_spec=grid_spec,
        compiler_params=pltpu.CompilerParams(
            dimension_semantics=("arbitrary",),
            vmem_limit_bytes=32 * 1024 * 1024,   # explicit headroom (safe on v5e/v6e/v7x)
        ),
        cost_estimate=pl.CostEstimate(
            flops=flops,
            transcendentals=M * AE_DIMS[-1],
            bytes_accessed=bytes_accessed,
        ),
    )(img, *ws, *bs)

    return out[:M_orig] if M_orig != M else out


# ----------------------------------------------------------------------------
# Parameters (deterministic, mirrors nn.Linear shapes; weight stored transposed).
# ----------------------------------------------------------------------------
def init_ae_params(key):
    params = []
    for fan_in, fan_out in zip(AE_DIMS[:-1], AE_DIMS[1:]):
        key, kw, kb = jax.random.split(key, 3)
        bound = 1.0 / jnp.sqrt(fan_in)  # PyTorch Linear default init range
        w = jax.random.uniform(kw, (fan_in, fan_out), jnp.float32, -bound, bound)
        b = jax.random.uniform(kb, (fan_out,), jnp.float32, -bound, bound)
        params.append((w, b))
    return params


def ae_forward_ref(img, params, compute_dtype=jnp.float32):
    """Plain-JAX reference; compute_dtype controls the matmul input dtype so the bf16
    streaming path can be checked against matched numerics (f32 accumulation in both)."""
    x = img
    for (w, b), act in zip(params, AE_ACTS):
        y = jnp.dot(x.astype(compute_dtype), w.astype(compute_dtype),
                    preferred_element_type=jnp.float32) + b
        x = _apply_act(y, act)
    return x


if __name__ == "__main__":
    key = jax.random.PRNGKey(0)
    key, kx, kp = jax.random.split(key, 3)

    batch = 8
    img = jax.random.normal(kx, (batch, AE_DIMS[0]), jnp.float32)
    params = init_ae_params(kp)

    fwd = jax.jit(ae_forward)

    # Default path: bf16 weight streaming (half the HBM bytes). Checked against a
    # reference using the same bf16 matmul inputs so the test isolates kernel machinery.
    ws16, bs16 = prepare_params(params, jnp.bfloat16)
    out16 = jax.block_until_ready(fwd(img, ws16, bs16))
    assert out16.shape == (batch, AE_DIMS[-1]) and out16.dtype == jnp.float32
    ref16 = jax.block_until_ready(ae_forward_ref(img, params, compute_dtype=jnp.bfloat16))
    assert jnp.allclose(out16, ref16, atol=2e-3, rtol=2e-3), "bf16 path mismatch vs reference"

    # f32 streaming path: bit-faithful semantics vs the PyTorch module, tight tolerance.
    ws32, bs32 = prepare_params(params, jnp.float32)
    out32 = jax.block_until_ready(fwd(img, ws32, bs32))
    ref32 = jax.block_until_ready(ae_forward_ref(img, params, compute_dtype=jnp.float32))
    assert jnp.allclose(out32, ref32, atol=2e-5, rtol=2e-5), "f32 path mismatch vs reference"

    print("KERNEL_OK")
</pallas_src>

<mosaic_0001>
module attributes {stable_mosaic.version = 11 : i64} {
  func.func @_ae_fused_kernel(%arg0: i32, %arg1: memref<8x2048xf32, #tpu.memory_space<vmem>>, %arg2: memref<2048x1024xbf16, #tpu.memory_space<any>>, %arg3: memref<1024x512xbf16, #tpu.memory_space<any>>, %arg4: memref<512x256xbf16, #tpu.memory_space<any>>, %arg5: memref<256x512xbf16, #tpu.memory_space<any>>, %arg6: memref<512x1024xbf16, #tpu.memory_space<any>>, %arg7: memref<1024x1024xbf16, #tpu.memory_space<any>>, %arg8: memref<1024x1024xbf16, #tpu.memory_space<any>>, %arg9: memref<1x1024xf32, #tpu.memory_space<vmem>>, %arg10: memref<1x512xf32, #tpu.memory_space<vmem>>, %arg11: memref<1x256xf32, #tpu.memory_space<vmem>>, %arg12: memref<1x512xf32, #tpu.memory_space<vmem>>, %arg13: memref<1x1024xf32, #tpu.memory_space<vmem>>, %arg14: memref<1x2048xf32, #tpu.memory_space<vmem>>, %arg15: memref<8x2048xf32, #tpu.memory_space<vmem>>, %arg16: memref<3x1024x1024xbf16, #tpu.memory_space<vmem>>, %arg17: memref<3x!tpu.dma_semaphore, #tpu.memory_space<semaphore_mem>>) attributes {dimension_semantics = [#tpu.dimension_semantics<arbitrary>], iteration_bounds = array<i64: 1>, scalar_prefetch = 0 : i64, scratch_operands = 2 : i64, tpu.core_type = #tpu.core_type<tc>, window_params = [{pipeline_mode = #tpu.pipeline_mode<synchronous>, transform_indices = @transform_0, window_bounds = array<i64: 8, 2048>}, {}, {}, {}, {}, {}, {}, {}, {pipeline_mode = #tpu.pipeline_mode<synchronous>, transform_indices = @transform_8, window_bounds = array<i64: 1, 1024>}, {pipeline_mode = #tpu.pipeline_mode<synchronous>, transform_indices = @transform_9, window_bounds = array<i64: 1, 512>}, {pipeline_mode = #tpu.pipeline_mode<synchronous>, transform_indices = @transform_10, window_bounds = array<i64: 1, 256>}, {pipeline_mode = #tpu.pipeline_mode<synchronous>, transform_indices = @transform_11, window_bounds = array<i64: 1, 512>}, {pipeline_mode = #tpu.pipeline_mode<synchronous>, transform_indices = @transform_12, window_bounds = array<i64: 1, 1024>}, {pipeline_mode = #tpu.pipeline_mode<synchronous>, transform_indices = @transform_13, window_bounds = array<i64: 1, 2048>}, {pipeline_mode = #tpu.pipeline_mode<synchronous>, transform_indices = @transform_14, window_bounds = array<i64: 8, 2048>}]} {
    %c0_i32 = arith.constant 0 : i32
    %c0_i32_0 = arith.constant 0 : i32
    %c0_i32_1 = arith.constant 0 : i32
    %c0_i32_2 = arith.constant 0 : i32
    %0 = tpu.memref_slice %arg2[%c0_i32_1, %c0_i32_2] : memref<2048x1024xbf16, #tpu.memory_space<any>> -> memref<1024x1024xbf16, #tpu.memory_space<any>>
    %c0_i32_3 = arith.constant 0 : i32
    %c0_i32_4 = arith.constant 0 : i32
    %1 = tpu.memref_slice %arg16[%c0_i32, %c0_i32_3, %c0_i32_4] : memref<3x1024x1024xbf16, #tpu.memory_space<vmem>> -> memref<1x1024x1024xbf16, #tpu.memory_space<vmem>>
    %2 = tpu.memref_squeeze %1 : memref<1x1024x1024xbf16, #tpu.memory_space<vmem>> -> memref<1024x1024xbf16, #tpu.memory_space<vmem>>
    %3 = tpu.memref_slice %arg17[%c0_i32_0] : memref<3x!tpu.dma_semaphore, #tpu.memory_space<semaphore_mem>> -> memref<1x!tpu.dma_semaphore, #tpu.memory_space<semaphore_mem>>
    %4 = tpu.memref_squeeze %3 : memref<1x!tpu.dma_semaphore, #tpu.memory_space<semaphore_mem>> -> memref<!tpu.dma_semaphore, #tpu.memory_space<semaphore_mem>>
    tpu.enqueue_dma source(%0 : memref<1024x1024xbf16, #tpu.memory_space<any>>) target(%2 : memref<1024x1024xbf16, #tpu.memory_space<vmem>>) target_semaphore(%4 : memref<!tpu.dma_semaphore, #tpu.memory_space<semaphore_mem>>)
    %c1_i32 = arith.constant 1 : i32
    %c1_i32_5 = arith.constant 1 : i32
    %c1024_i32 = arith.constant 1024 : i32
    %c0_i32_6 = arith.constant 0 : i32
    %5 = tpu.memref_slice %arg2[%c1024_i32, %c0_i32_6] : memref<2048x1024xbf16, #tpu.memory_space<any>> -> memref<1024x1024xbf16, #tpu.memory_space<any>>
    %c0_i32_7 = arith.constant 0 : i32
    %c0_i32_8 = arith.constant 0 : i32
    %6 = tpu.memref_slice %arg16[%c1_i32, %c0_i32_7, %c0_i32_8] : memref<3x1024x1024xbf16, #tpu.memory_space<vmem>> -> memref<1x1024x1024xbf16, #tpu.memory_space<vmem>>
    %7 = tpu.memref_squeeze %6 : memref<1x1024x1024xbf16, #tpu.memory_space<vmem>> -> memref<1024x1024xbf16, #tpu.memory_space<vmem>>
    %8 = tpu.memref_slice %arg17[%c1_i32_5] : memref<3x!tpu.dma_semaphore, #tpu.memory_space<semaphore_mem>> -> memref<1x!tpu.dma_semaphore, #tpu.memory_space<semaphore_mem>>
    %9 = tpu.memref_squeeze %8 : memref<1x!tpu.dma_semaphore, #tpu.memory_space<semaphore_mem>> -> memref<!tpu.dma_semaphore, #tpu.memory_space<semaphore_mem>>
    tpu.enqueue_dma source(%5 : memref<1024x1024xbf16, #tpu.memory_space<any>>) target(%7 : memref<1024x1024xbf16, #tpu.memory_space<vmem>>) target_semaphore(%9 : memref<!tpu.dma_semaphore, #tpu.memory_space<semaphore_mem>>)
    %c0 = arith.constant 0 : index
    %c0_9 = arith.constant 0 : index
    %10 = vector.load %arg1[%c0, %c0_9] : memref<8x2048xf32, #tpu.memory_space<vmem>>, vector<8x2048xf32>
    %c0_i32_10 = arith.constant 0 : i32
    %c0_i32_11 = arith.constant 0 : i32
    %c0_i32_12 = arith.constant 0 : i32
    %c0_i32_13 = arith.constant 0 : i32
    %11 = tpu.memref_slice %arg2[%c0_i32_12, %c0_i32_13] : memref<2048x1024xbf16, #tpu.memory_space<any>> -> memref<1024x1024xbf16, #tpu.memory_space<any>>
    %c0_i32_14 = arith.constant 0 : i32
    %c0_i32_15 = arith.constant 0 : i32
    %12 = tpu.memref_slice %arg16[%c0_i32_10, %c0_i32_14, %c0_i32_15] : memref<3x1024x1024xbf16, #tpu.memory_space<vmem>> -> memref<1x1024x1024xbf16, #tpu.memory_space<vmem>>
    %13 = tpu.memref_squeeze %12 : memref<1x1024x1024xbf16, #tpu.memory_space<vmem>> -> memref<1024x1024xbf16, #tpu.memory_space<vmem>>
    %14 = tpu.memref_slice %arg17[%c0_i32_11] : memref<3x!tpu.dma_semaphore, #tpu.memory_space<semaphore_mem>> -> memref<1x!tpu.dma_semaphore, #tpu.memory_space<semaphore_mem>>
    %15 = tpu.memref_squeeze %14 : memref<1x!tpu.dma_semaphore, #tpu.memory_space<semaphore_mem>> -> memref<!tpu.dma_semaphore, #tpu.memory_space<semaphore_mem>>
    tpu.wait_dma2 semaphore(%15 : memref<!tpu.dma_semaphore, #tpu.memory_space<semaphore_mem>>) src(%11 : memref<1024x1024xbf16, #tpu.memory_space<any>>) dst(%13 : memref<1024x1024xbf16, #tpu.memory_space<vmem>>)
    %c2_i32 = arith.constant 2 : i32
    %c2_i32_16 = arith.constant 2 : i32
    %c0_i32_17 = arith.constant 0 : i32
    %c0_i32_18 = arith.constant 0 : i32
    %16 = tpu.memref_slice %arg3[%c0_i32_17, %c0_i32_18] : memref<1024x512xbf16, #tpu.memory_space<any>> -> memref<1024x512xbf16, #tpu.memory_space<any>>
    %c0_i32_19 = arith.constant 0 : i32
    %c0_i32_20 = arith.constant 0 : i32
    %17 = tpu.memref_slice %arg16[%c2_i32, %c0_i32_19, %c0_i32_20] : memref<3x1024x1024xbf16, #tpu.memory_space<vmem>> -> memref<1x1024x512xbf16, #tpu.memory_space<vmem>>
    %18 = tpu.memref_squeeze %17 : memref<1x1024x512xbf16, #tpu.memory_space<vmem>> -> memref<1024x512xbf16, #tpu.memory_space<vmem>>
    %19 = tpu.memref_slice %arg17[%c2_i32_16] : memref<3x!tpu.dma_semaphore, #tpu.memory_space<semaphore_mem>> -> memref<1x!tpu.dma_semaphore, #tpu.memory_space<semaphore_mem>>
    %20 = tpu.memref_squeeze %19 : memref<1x!tpu.dma_semaphore, #tpu.memory_space<semaphore_mem>> -> memref<!tpu.dma_semaphore, #tpu.memory_space<semaphore_mem>>
    tpu.enqueue_dma source(%16 : memref<1024x512xbf16, #tpu.memory_space<any>>) target(%18 : memref<1024x512xbf16, #tpu.memory_space<vmem>>) target_semaphore(%20 : memref<!tpu.dma_semaphore, #tpu.memory_space<semaphore_mem>>)
    %21 = vector.extract_strided_slice %10 {offsets = [0, 0], sizes = [8, 1024], strides = [1, 1]} : vector<8x2048xf32> to vector<8x1024xf32>
    %c0_21 = arith.constant 0 : index
    %c0_22 = arith.constant 0 : index
    %c0_23 = arith.constant 0 : index
    %22 = vector.load %arg16[%c0_21, %c0_22, %c0_23] : memref<3x1024x1024xbf16, #tpu.memory_space<vmem>>, vector<1x1024x1024xbf16>
    %23 = vector.shape_cast %22 : vector<1x1024x1024xbf16> to vector<1024x1024xbf16>
    %24 = arith.truncf %21 : vector<8x1024xf32> to vector<8x1024xbf16>
    %cst = arith.constant dense<0.000000e+00> : vector<8x1024xf32>
    %25 = tpu.matmul %24, %23, %cst {dimension_numbers = #tpu.dot_dimension_numbers<[1], [0], [0], [1], [0, 0, 1, 1], [], []>} : vector<8x1024xbf16>, vector<1024x1024xbf16>, vector<8x1024xf32> -> vector<8x1024xf32>
    %c1_i32_24 = arith.constant 1 : i32
    %c1_i32_25 = arith.constant 1 : i32
    %c1024_i32_26 = arith.constant 1024 : i32
    %c0_i32_27 = arith.constant 0 : i32
    %26 = tpu.memref_slice %arg2[%c1024_i32_26, %c0_i32_27] : memref<2048x1024xbf16, #tpu.memory_space<any>> -> memref<1024x1024xbf16, #tpu.memory_space<any>>
    %c0_i32_28 = arith.constant 0 : i32
    %c0_i32_29 = arith.constant 0 : i32
    %27 = tpu.memref_slice %arg16[%c1_i32_24, %c0_i32_28, %c0_i32_29] : memref<3x1024x1024xbf16, #tpu.memory_space<vmem>> -> memref<1x1024x1024xbf16, #tpu.memory_space<vmem>>
    %28 = tpu.memref_squeeze %27 : memref<1x1024x1024xbf16, #tpu.memory_space<vmem>> -> memref<1024x1024xbf16, #tpu.memory_space<vmem>>
    %29 = tpu.memref_slice %arg17[%c1_i32_25] : memref<3x!tpu.dma_semaphore, #tpu.memory_space<semaphore_mem>> -> memref<1x!tpu.dma_semaphore, #tpu.memory_space<semaphore_mem>>
    %30 = tpu.memref_squeeze %29 : memref<1x!tpu.dma_semaphore, #tpu.memory_space<semaphore_mem>> -> memref<!tpu.dma_semaphore, #tpu.memory_space<semaphore_mem>>
    tpu.wait_dma2 semaphore(%30 : memref<!tpu.dma_semaphore, #tpu.memory_space<semaphore_mem>>) src(%26 : memref<1024x1024xbf16, #tpu.memory_space<any>>) dst(%28 : memref<1024x1024xbf16, #tpu.memory_space<vmem>>)
    %c0_i32_30 = arith.constant 0 : i32
    %c0_i32_31 = arith.constant 0 : i32
    %c0_i32_32 = arith.constant 0 : i32
    %c0_i32_33 = arith.constant 0 : i32
    %31 = tpu.memref_slice %arg4[%c0_i32_32, %c0_i32_33] : memref<512x256xbf16, #tpu.memory_space<any>> -> memref<512x256xbf16, #tpu.memory_space<any>>
    %c0_i32_34 = arith.constant 0 : i32
    %c0_i32_35 = arith.constant 0 : i32
    %32 = tpu.memref_slice %arg16[%c0_i32_30, %c0_i32_34, %c0_i32_35] : memref<3x1024x1024xbf16, #tpu.memory_space<vmem>> -> memref<1x512x256xbf16, #tpu.memory_space<vmem>>
    %33 = tpu.memref_squeeze %32 : memref<1x512x256xbf16, #tpu.memory_space<vmem>> -> memref<512x256xbf16, #tpu.memory_space<vmem>>
    %34 = tpu.memref_slice %arg17[%c0_i32_31] : memref<3x!tpu.dma_semaphore, #tpu.memory_space<semaphore_mem>> -> memref<1x!tpu.dma_semaphore, #tpu.memory_space<semaphore_mem>>
    %35 = tpu.memref_squeeze %34 : memref<1x!tpu.dma_semaphore, #tpu.memory_space<semaphore_mem>> -> memref<!tpu.dma_semaphore, #tpu.memory_space<semaphore_mem>>
    tpu.enqueue_dma source(%31 : memref<512x256xbf16, #tpu.memory_space<any>>) target(%33 : memref<512x256xbf16, #tpu.memory_space<vmem>>) target_semaphore(%35 : memref<!tpu.dma_semaphore, #tpu.memory_space<semaphore_mem>>)
    %36 = vector.extract_strided_slice %10 {offsets = [0, 1024], sizes = [8, 1024], strides = [1, 1]} : vector<8x2048xf32> to vector<8x1024xf32>
    %c1 = arith.constant 1 : index
    %c0_36 = arith.constant 0 : index
    %c0_37 = arith.constant 0 : index
    %37 = vector.load %arg16[%c1, %c0_36, %c0_37] : memref<3x1024x1024xbf16, #tpu.memory_space<vmem>>, vector<1x1024x1024xbf16>
    %38 = vector.shape_cast %37 : vector<1x1024x1024xbf16> to vector<1024x1024xbf16>
    %39 = arith.truncf %36 : vector<8x1024xf32> to vector<8x1024xbf16>
    %cst_38 = arith.constant dense<0.000000e+00> : vector<8x1024xf32>
    %40 = tpu.matmul %39, %38, %cst_38 {dimension_numbers = #tpu.dot_dimension_numbers<[1], [0], [0], [1], [0, 0, 1, 1], [], []>} : vector<8x1024xbf16>, vector<1024x1024xbf16>, vector<8x1024xf32> -> vector<8x1024xf32>
    %41 = arith.addf %25, %40 : vector<8x1024xf32>
    %c0_39 = arith.constant 0 : index
    %c0_40 = arith.constant 0 : index
    %42 = vector.load %arg9[%c0_39, %c0_40] : memref<1x1024xf32, #tpu.memory_space<vmem>>, vector<1x1024xf32>
    %43 = vector.broadcast %42 : vector<1x1024xf32> to vector<8x1024xf32>
    %44 = arith.addf %41, %43 : vector<8x1024xf32>
    %cst_41 = arith.constant 0.000000e+00 : f32
    %45 = vector.broadcast %cst_41 : f32 to vector<8x1024xf32>
    %46 = arith.maximumf %44, %45 : vector<8x1024xf32>
    %c2_i32_42 = arith.constant 2 : i32
    %c2_i32_43 = arith.constant 2 : i32
    %c0_i32_44 = arith.constant 0 : i32
    %c0_i32_45 = arith.constant 0 : i32
    %47 = tpu.memref_slice %arg3[%c0_i32_44, %c0_i32_45] : memref<1024x512xbf16, #tpu.memory_space<any>> -> memref<1024x512xbf16, #tpu.memory_space<any>>
    %c0_i32_46 = arith.constant 0 : i32
    %c0_i32_47 = arith.constant 0 : i32
    %48 = tpu.memref_slice %arg16[%c2_i32_42, %c0_i32_46, %c0_i32_47] : memref<3x1024x1024xbf16, #tpu.memory_space<vmem>> -> memref<1x1024x512xbf16, #tpu.memory_space<vmem>>
    %49 = tpu.memref_squeeze %48 : memref<1x1024x512xbf16, #tpu.memory_space<vmem>> -> memref<1024x512xbf16, #tpu.memory_space<vmem>>
    %50 = tpu.memref_slice %arg17[%c2_i32_43] : memref<3x!tpu.dma_semaphore, #tpu.memory_space<semaphore_mem>> -> memref<1x!tpu.dma_semaphore, #tpu.memory_space<semaphore_mem>>
    %51 = tpu.memref_squeeze %50 : memref<1x!tpu.dma_semaphore, #tpu.memory_space<semaphore_mem>> -> memref<!tpu.dma_semaphore, #tpu.memory_space<semaphore_mem>>
    tpu.wait_dma2 semaphore(%51 : memref<!tpu.dma_semaphore, #tpu.memory_space<semaphore_mem>>) src(%47 : memref<1024x512xbf16, #tpu.memory_space<any>>) dst(%49 : memref<1024x512xbf16, #tpu.memory_space<vmem>>)
    %c1_i32_48 = arith.constant 1 : i32
    %c1_i32_49 = arith.constant 1 : i32
    %c0_i32_50 = arith.constant 0 : i32
    %c0_i32_51 = arith.constant 0 : i32
    %52 = tpu.memref_slice %arg5[%c0_i32_50, %c0_i32_51] : memref<256x512xbf16, #tpu.memory_space<any>> -> memref<256x512xbf16, #tpu.memory_space<any>>
    %c0_i32_52 = arith.constant 0 : i32
    %c0_i32_53 = arith.constant 0 : i32
    %53 = tpu.memref_slice %arg16[%c1_i32_48, %c0_i32_52, %c0_i32_53] : memref<3x1024x1024xbf16, #tpu.memory_space<vmem>> -> memref<1x256x512xbf16, #tpu.memory_space<vmem>>
    %54 = tpu.memref_squeeze %53 : memref<1x256x512xbf16, #tpu.memory_space<vmem>> -> memref<256x512xbf16, #tpu.memory_space<vmem>>
    %55 = tpu.memref_slice %arg17[%c1_i32_49] : memref<3x!tpu.dma_semaphore, #tpu.memory_space<semaphore_mem>> -> memref<1x!tpu.dma_semaphore, #tpu.memory_space<semaphore_mem>>
    %56 = tpu.memref_squeeze %55 : memref<1x!tpu.dma_semaphore, #tpu.memory_space<semaphore_mem>> -> memref<!tpu.dma_semaphore, #tpu.memory_space<semaphore_mem>>
    tpu.enqueue_dma source(%52 : memref<256x512xbf16, #tpu.memory_space<any>>) target(%54 : memref<256x512xbf16, #tpu.memory_space<vmem>>) target_semaphore(%56 : memref<!tpu.dma_semaphore, #tpu.memory_space<semaphore_mem>>)
    %c2 = arith.constant 2 : index
    %c0_54 = arith.constant 0 : index
    %c0_55 = arith.constant 0 : index
    %57 = vector.load %arg16[%c2, %c0_54, %c0_55] : memref<3x1024x1024xbf16, #tpu.memory_space<vmem>>, vector<1x1024x512xbf16>
    %58 = vector.shape_cast %57 : vector<1x1024x512xbf16> to vector<1024x512xbf16>
    %59 = arith.truncf %46 : vector<8x1024xf32> to vector<8x1024xbf16>
    %cst_56 = arith.constant dense<0.000000e+00> : vector<8x512xf32>
    %60 = tpu.matmul %59, %58, %cst_56 {dimension_numbers = #tpu.dot_dimension_numbers<[1], [0], [0], [1], [0, 0, 1, 1], [], []>} : vector<8x1024xbf16>, vector<1024x512xbf16>, vector<8x512xf32> -> vector<8x512xf32>
    %c0_57 = arith.constant 0 : index
    %c0_58 = arith.constant 0 : index
    %61 = vector.load %arg10[%c0_57, %c0_58] : memref<1x512xf32, #tpu.memory_space<vmem>>, vector<1x512xf32>
    %62 = vector.broadcast %61 : vector<1x512xf32> to vector<8x512xf32>
    %63 = arith.addf %60, %62 : vector<8x512xf32>
    %cst_59 = arith.constant 0.000000e+00 : f32
    %64 = vector.broadcast %cst_59 : f32 to vector<8x512xf32>
    %65 = arith.maximumf %63, %64 : vector<8x512xf32>
    %c0_i32_60 = arith.constant 0 : i32
    %c0_i32_61 = arith.constant 0 : i32
    %c0_i32_62 = arith.constant 0 : i32
    %c0_i32_63 = arith.constant 0 : i32
    %66 = tpu.memref_slice %arg4[%c0_i32_62, %c0_i32_63] : memref<512x256xbf16, #tpu.memory_space<any>> -> memref<512x256xbf16, #tpu.memory_space<any>>
    %c0_i32_64 = arith.constant 0 : i32
    %c0_i32_65 = arith.constant 0 : i32
    %67 = tpu.memref_slice %arg16[%c0_i32_60, %c0_i32_64, %c0_i32_65] : memref<3x1024x1024xbf16, #tpu.memory_space<vmem>> -> memref<1x512x256xbf16, #tpu.memory_space<vmem>>
    %68 = tpu.memref_squeeze %67 : memref<1x512x256xbf16, #tpu.memory_space<vmem>> -> memref<512x256xbf16, #tpu.memory_space<vmem>>
    %69 = tpu.memref_slice %arg17[%c0_i32_61] : memref<3x!tpu.dma_semaphore, #tpu.memory_space<semaphore_mem>> -> memref<1x!tpu.dma_semaphore, #tpu.memory_space<semaphore_mem>>
    %70 = tpu.memref_squeeze %69 : memref<1x!tpu.dma_semaphore, #tpu.memory_space<semaphore_mem>> -> memref<!tpu.dma_semaphore, #tpu.memory_space<semaphore_mem>>
    tpu.wait_dma2 semaphore(%70 : memref<!tpu.dma_semaphore, #tpu.memory_space<semaphore_mem>>) src(%66 : memref<512x256xbf16, #tpu.memory_space<any>>) dst(%68 : memref<512x256xbf16, #tpu.memory_space<vmem>>)
    %c2_i32_66 = arith.constant 2 : i32
    %c2_i32_67 = arith.constant 2 : i32
    %c0_i32_68 = arith.constant 0 : i32
    %c0_i32_69 = arith.constant 0 : i32
    %71 = tpu.memref_slice %arg6[%c0_i32_68, %c0_i32_69] : memref<512x1024xbf16, #tpu.memory_space<any>> -> memref<512x1024xbf16, #tpu.memory_space<any>>
    %c0_i32_70 = arith.constant 0 : i32
    %c0_i32_71 = arith.constant 0 : i32
    %72 = tpu.memref_slice %arg16[%c2_i32_66, %c0_i32_70, %c0_i32_71] : memref<3x1024x1024xbf16, #tpu.memory_space<vmem>> -> memref<1x512x1024xbf16, #tpu.memory_space<vmem>>
    %73 = tpu.memref_squeeze %72 : memref<1x512x1024xbf16, #tpu.memory_space<vmem>> -> memref<512x1024xbf16, #tpu.memory_space<vmem>>
    %74 = tpu.memref_slice %arg17[%c2_i32_67] : memref<3x!tpu.dma_semaphore, #tpu.memory_space<semaphore_mem>> -> memref<1x!tpu.dma_semaphore, #tpu.memory_space<semaphore_mem>>
    %75 = tpu.memref_squeeze %74 : memref<1x!tpu.dma_semaphore, #tpu.memory_space<semaphore_mem>> -> memref<!tpu.dma_semaphore, #tpu.memory_space<semaphore_mem>>
    tpu.enqueue_dma source(%71 : memref<512x1024xbf16, #tpu.memory_space<any>>) target(%73 : memref<512x1024xbf16, #tpu.memory_space<vmem>>) target_semaphore(%75 : memref<!tpu.dma_semaphore, #tpu.memory_space<semaphore_mem>>)
    %c0_72 = arith.constant 0 : index
    %c0_73 = arith.constant 0 : index
    %c0_74 = arith.constant 0 : index
    %76 = vector.load %arg16[%c0_72, %c0_73, %c0_74] : memref<3x1024x1024xbf16, #tpu.memory_space<vmem>>, vector<1x512x256xbf16>
    %77 = vector.shape_cast %76 : vector<1x512x256xbf16> to vector<512x256xbf16>
    %78 = arith.truncf %65 : vector<8x512xf32> to vector<8x512xbf16>
    %cst_75 = arith.constant dense<0.000000e+00> : vector<8x256xf32>
    %79 = tpu.matmul %78, %77, %cst_75 {dimension_numbers = #tpu.dot_dimension_numbers<[1], [0], [0], [1], [0, 0, 1, 1], [], []>} : vector<8x512xbf16>, vector<512x256xbf16>, vector<8x256xf32> -> vector<8x256xf32>
    %c0_76 = arith.constant 0 : index
    %c0_77 = arith.constant 0 : index
    %80 = vector.load %arg11[%c0_76, %c0_77] : memref<1x256xf32, #tpu.memory_space<vmem>>, vector<1x256xf32>
    %81 = vector.broadcast %80 : vector<1x256xf32> to vector<8x256xf32>
    %82 = arith.addf %79, %81 : vector<8x256xf32>
    %c1_i32_78 = arith.constant 1 : i32
    %c1_i32_79 = arith.constant 1 : i32
    %c0_i32_80 = arith.constant 0 : i32
    %c0_i32_81 = arith.constant 0 : i32
    %83 = tpu.memref_slice %arg5[%c0_i32_80, %c0_i32_81] : memref<256x512xbf16, #tpu.memory_space<any>> -> memref<256x512xbf16, #tpu.memory_space<any>>
    %c0_i32_82 = arith.constant 0 : i32
    %c0_i32_83 = arith.constant 0 : i32
    %84 = tpu.memref_slice %arg16[%c1_i32_78, %c0_i32_82, %c0_i32_83] : memref<3x1024x1024xbf16, #tpu.memory_space<vmem>> -> memref<1x256x512xbf16, #tpu.memory_space<vmem>>
    %85 = tpu.memref_squeeze %84 : memref<1x256x512xbf16, #tpu.memory_space<vmem>> -> memref<256x512xbf16, #tpu.memory_space<vmem>>
    %86 = tpu.memref_slice %arg17[%c1_i32_79] : memref<3x!tpu.dma_semaphore, #tpu.memory_space<semaphore_mem>> -> memref<1x!tpu.dma_semaphore, #tpu.memory_space<semaphore_mem>>
    %87 = tpu.memref_squeeze %86 : memref<1x!tpu.dma_semaphore, #tpu.memory_space<semaphore_mem>> -> memref<!tpu.dma_semaphore, #tpu.memory_space<semaphore_mem>>
    tpu.wait_dma2 semaphore(%87 : memref<!tpu.dma_semaphore, #tpu.memory_space<semaphore_mem>>) src(%83 : memref<256x512xbf16, #tpu.memory_space<any>>) dst(%85 : memref<256x512xbf16, #tpu.memory_space<vmem>>)
    %c0_i32_84 = arith.constant 0 : i32
    %c0_i32_85 = arith.constant 0 : i32
    %c0_i32_86 = arith.constant 0 : i32
    %c0_i32_87 = arith.constant 0 : i32
    %88 = tpu.memref_slice %arg7[%c0_i32_86, %c0_i32_87] : memref<1024x1024xbf16, #tpu.memory_space<any>> -> memref<1024x1024xbf16, #tpu.memory_space<any>>
    %c0_i32_88 = arith.constant 0 : i32
    %c0_i32_89 = arith.constant 0 : i32
    %89 = tpu.memref_slice %arg16[%c0_i32_84, %c0_i32_88, %c0_i32_89] : memref<3x1024x1024xbf16, #tpu.memory_space<vmem>> -> memref<1x1024x1024xbf16, #tpu.memory_space<vmem>>
    %90 = tpu.memref_squeeze %89 : memref<1x1024x1024xbf16, #tpu.memory_space<vmem>> -> memref<1024x1024xbf16, #tpu.memory_space<vmem>>
    %91 = tpu.memref_slice %arg17[%c0_i32_85] : memref<3x!tpu.dma_semaphore, #tpu.memory_space<semaphore_mem>> -> memref<1x!tpu.dma_semaphore, #tpu.memory_space<semaphore_mem>>
    %92 = tpu.memref_squeeze %91 : memref<1x!tpu.dma_semaphore, #tpu.memory_space<semaphore_mem>> -> memref<!tpu.dma_semaphore, #tpu.memory_space<semaphore_mem>>
    tpu.enqueue_dma source(%88 : memref<1024x1024xbf16, #tpu.memory_space<any>>) target(%90 : memref<1024x1024xbf16, #tpu.memory_space<vmem>>) target_semaphore(%92 : memref<!tpu.dma_semaphore, #tpu.memory_space<semaphore_mem>>)
    %c1_90 = arith.constant 1 : index
    %c0_91 = arith.constant 0 : index
    %c0_92 = arith.constant 0 : index
    %93 = vector.load %arg16[%c1_90, %c0_91, %c0_92] : memref<3x1024x1024xbf16, #tpu.memory_space<vmem>>, vector<1x256x512xbf16>
    %94 = vector.shape_cast %93 : vector<1x256x512xbf16> to vector<256x512xbf16>
    %95 = arith.truncf %82 : vector<8x256xf32> to vector<8x256xbf16>
    %cst_93 = arith.constant dense<0.000000e+00> : vector<8x512xf32>
    %96 = tpu.matmul %95, %94, %cst_93 {dimension_numbers = #tpu.dot_dimension_numbers<[1], [0], [0], [1], [0, 0, 1, 1], [], []>} : vector<8x256xbf16>, vector<256x512xbf16>, vector<8x512xf32> -> vector<8x512xf32>
    %c0_94 = arith.constant 0 : index
    %c0_95 = arith.constant 0 : index
    %97 = vector.load %arg12[%c0_94, %c0_95] : memref<1x512xf32, #tpu.memory_space<vmem>>, vector<1x512xf32>
    %98 = vector.broadcast %97 : vector<1x512xf32> to vector<8x512xf32>
    %99 = arith.addf %96, %98 : vector<8x512xf32>
    %cst_96 = arith.constant 0.000000e+00 : f32
    %100 = vector.broadcast %cst_96 : f32 to vector<8x512xf32>
    %101 = arith.cmpf ogt, %99, %100 : vector<8x512xf32>
    %cst_97 = arith.constant 3.000000e-01 : f32
    %102 = vector.broadcast %cst_97 : f32 to vector<8x512xf32>
    %103 = arith.mulf %102, %99 : vector<8x512xf32>
    %104 = arith.select %101, %99, %103 : vector<8x512xi1>, vector<8x512xf32>
    %c2_i32_98 = arith.constant 2 : i32
    %c2_i32_99 = arith.constant 2 : i32
    %c0_i32_100 = arith.constant 0 : i32
    %c0_i32_101 = arith.constant 0 : i32
    %105 = tpu.memref_slice %arg6[%c0_i32_100, %c0_i32_101] : memref<512x1024xbf16, #tpu.memory_space<any>> -> memref<512x1024xbf16, #tpu.memory_space<any>>
    %c0_i32_102 = arith.constant 0 : i32
    %c0_i32_103 = arith.constant 0 : i32
    %106 = tpu.memref_slice %arg16[%c2_i32_98, %c0_i32_102, %c0_i32_103] : memref<3x1024x1024xbf16, #tpu.memory_space<vmem>> -> memref<1x512x1024xbf16, #tpu.memory_space<vmem>>
    %107 = tpu.memref_squeeze %106 : memref<1x512x1024xbf16, #tpu.memory_space<vmem>> -> memref<512x1024xbf16, #tpu.memory_space<vmem>>
    %108 = tpu.memref_slice %arg17[%c2_i32_99] : memref<3x!tpu.dma_semaphore, #tpu.memory_space<semaphore_mem>> -> memref<1x!tpu.dma_semaphore, #tpu.memory_space<semaphore_mem>>
    %109 = tpu.memref_squeeze %108 : memref<1x!tpu.dma_semaphore, #tpu.memory_space<semaphore_mem>> -> memref<!tpu.dma_semaphore, #tpu.memory_space<semaphore_mem>>
    tpu.wait_dma2 semaphore(%109 : memref<!tpu.dma_semaphore, #tpu.memory_space<semaphore_mem>>) src(%105 : memref<512x1024xbf16, #tpu.memory_space<any>>) dst(%107 : memref<512x1024xbf16, #tpu.memory_space<vmem>>)
    %c1_i32_104 = arith.constant 1 : i32
    %c1_i32_105 = arith.constant 1 : i32
    %c0_i32_106 = arith.constant 0 : i32
    %c0_i32_107 = arith.constant 0 : i32
    %110 = tpu.memref_slice %arg8[%c0_i32_106, %c0_i32_107] : memref<1024x1024xbf16, #tpu.memory_space<any>> -> memref<1024x1024xbf16, #tpu.memory_space<any>>
    %c0_i32_108 = arith.constant 0 : i32
    %c0_i32_109 = arith.constant 0 : i32
    %111 = tpu.memref_slice %arg16[%c1_i32_104, %c0_i32_108, %c0_i32_109] : memref<3x1024x1024xbf16, #tpu.memory_space<vmem>> -> memref<1x1024x1024xbf16, #tpu.memory_space<vmem>>
    %112 = tpu.memref_squeeze %111 : memref<1x1024x1024xbf16, #tpu.memory_space<vmem>> -> memref<1024x1024xbf16, #tpu.memory_space<vmem>>
    %113 = tpu.memref_slice %arg17[%c1_i32_105] : memref<3x!tpu.dma_semaphore, #tpu.memory_space<semaphore_mem>> -> memref<1x!tpu.dma_semaphore, #tpu.memory_space<semaphore_mem>>
    %114 = tpu.memref_squeeze %113 : memref<1x!tpu.dma_semaphore, #tpu.memory_space<semaphore_mem>> -> memref<!tpu.dma_semaphore, #tpu.memory_space<semaphore_mem>>
    tpu.enqueue_dma source(%110 : memref<1024x1024xbf16, #tpu.memory_space<any>>) target(%112 : memref<1024x1024xbf16, #tpu.memory_space<vmem>>) target_semaphore(%114 : memref<!tpu.dma_semaphore, #tpu.memory_space<semaphore_mem>>)
    %c2_110 = arith.constant 2 : index
    %c0_111 = arith.constant 0 : index
    %c0_112 = arith.constant 0 : index
    %115 = vector.load %arg16[%c2_110, %c0_111, %c0_112] : memref<3x1024x1024xbf16, #tpu.memory_space<vmem>>, vector<1x512x1024xbf16>
    %116 = vector.shape_cast %115 : vector<1x512x1024xbf16> to vector<512x1024xbf16>
    %117 = arith.truncf %104 : vector<8x512xf32> to vector<8x512xbf16>
    %cst_113 = arith.constant dense<0.000000e+00> : vector<8x1024xf32>
    %118 = tpu.matmul %117, %116, %cst_113 {dimension_numbers = #tpu.dot_dimension_numbers<[1], [0], [0], [1], [0, 0, 1, 1], [], []>} : vector<8x512xbf16>, vector<512x1024xbf16>, vector<8x1024xf32> -> vector<8x1024xf32>
    %c0_114 = arith.constant 0 : index
    %c0_115 = arith.constant 0 : index
    %119 = vector.load %arg13[%c0_114, %c0_115] : memref<1x1024xf32, #tpu.memory_space<vmem>>, vector<1x1024xf32>
    %120 = vector.broadcast %119 : vector<1x1024xf32> to vector<8x1024xf32>
    %121 = arith.addf %118, %120 : vector<8x1024xf32>
    %cst_116 = arith.constant 0.000000e+00 : f32
    %122 = vector.broadcast %cst_116 : f32 to vector<8x1024xf32>
    %123 = arith.cmpf ogt, %121, %122 : vector<8x1024xf32>
    %cst_117 = arith.constant 3.000000e-01 : f32
    %124 = vector.broadcast %cst_117 : f32 to vector<8x1024xf32>
    %125 = arith.mulf %124, %121 : vector<8x1024xf32>
    %126 = arith.select %123, %121, %125 : vector<8x1024xi1>, vector<8x1024xf32>
    %c0_i32_118 = arith.constant 0 : i32
    %c0_i32_119 = arith.constant 0 : i32
    %c0_i32_120 = arith.constant 0 : i32
    %c0_i32_121 = arith.constant 0 : i32
    %127 = tpu.memref_slice %arg7[%c0_i32_120, %c0_i32_121] : memref<1024x1024xbf16, #tpu.memory_space<any>> -> memref<1024x1024xbf16, #tpu.memory_space<any>>
    %c0_i32_122 = arith.constant 0 : i32
    %c0_i32_123 = arith.constant 0 : i32
    %128 = tpu.memref_slice %arg16[%c0_i32_118, %c0_i32_122, %c0_i32_123] : memref<3x1024x1024xbf16, #tpu.memory_space<vmem>> -> memref<1x1024x1024xbf16, #tpu.memory_space<vmem>>
    %129 = tpu.memref_squeeze %128 : memref<1x1024x1024xbf16, #tpu.memory_space<vmem>> -> memref<1024x1024xbf16, #tpu.memory_space<vmem>>
    %130 = tpu.memref_slice %arg17[%c0_i32_119] : memref<3x!tpu.dma_semaphore, #tpu.memory_space<semaphore_mem>> -> memref<1x!tpu.dma_semaphore, #tpu.memory_space<semaphore_mem>>
    %131 = tpu.memref_squeeze %130 : memref<1x!tpu.dma_semaphore, #tpu.memory_space<semaphore_mem>> -> memref<!tpu.dma_semaphore, #tpu.memory_space<semaphore_mem>>
    tpu.wait_dma2 semaphore(%131 : memref<!tpu.dma_semaphore, #tpu.memory_space<semaphore_mem>>) src(%127 : memref<1024x1024xbf16, #tpu.memory_space<any>>) dst(%129 : memref<1024x1024xbf16, #tpu.memory_space<vmem>>)
    %c0_124 = arith.constant 0 : index
    %c0_125 = arith.constant 0 : index
    %c0_126 = arith.constant 0 : index
    %132 = vector.load %arg16[%c0_124, %c0_125, %c0_126] : memref<3x1024x1024xbf16, #tpu.memory_space<vmem>>, vector<1x1024x1024xbf16>
    %133 = vector.shape_cast %132 : vector<1x1024x1024xbf16> to vector<1024x1024xbf16>
    %134 = arith.truncf %126 : vector<8x1024xf32> to vector<8x1024xbf16>
    %cst_127 = arith.constant dense<0.000000e+00> : vector<8x1024xf32>
    %135 = tpu.matmul %134, %133, %cst_127 {dimension_numbers = #tpu.dot_dimension_numbers<[1], [0], [0], [1], [0, 0, 1, 1], [], []>} : vector<8x1024xbf16>, vector<1024x1024xbf16>, vector<8x1024xf32> -> vector<8x1024xf32>
    %c0_128 = arith.constant 0 : index
    %c0_129 = arith.constant 0 : index
    %136 = vector.load %arg14[%c0_128, %c0_129] : memref<1x2048xf32, #tpu.memory_space<vmem>>, vector<1x1024xf32>
    %137 = vector.broadcast %136 : vector<1x1024xf32> to vector<8x1024xf32>
    %138 = arith.addf %135, %137 : vector<8x1024xf32>
    %139 = arith.negf %138 : vector<8x1024xf32>
    %140 = math.exp %139 : vector<8x1024xf32>
    %cst_130 = arith.constant 1.000000e+00 : f32
    %141 = vector.broadcast %cst_130 : f32 to vector<8x1024xf32>
    %142 = arith.addf %141, %140 : vector<8x1024xf32>
    %143 = arith.divf %141, %142 : vector<8x1024xf32>
    %c0_131 = arith.constant 0 : index
    %c0_132 = arith.constant 0 : index
    %144 = vector.load %arg15[%c0_131, %c0_132] : memref<8x2048xf32, #tpu.memory_space<vmem>>, vector<8x1024xf32>
    tpu.vector_store %arg15[%c0_131, %c0_132], %143 {strides = array<i32>} : memref<8x2048xf32, #tpu.memory_space<vmem>>, vector<8x1024xf32>,
    %c1_i32_133 = arith.constant 1 : i32
    %c1_i32_134 = arith.constant 1 : i32
    %c0_i32_135 = arith.constant 0 : i32
    %c0_i32_136 = arith.constant 0 : i32
    %145 = tpu.memref_slice %arg8[%c0_i32_135, %c0_i32_136] : memref<1024x1024xbf16, #tpu.memory_space<any>> -> memref<1024x1024xbf16, #tpu.memory_space<any>>
    %c0_i32_137 = arith.constant 0 : i32
    %c0_i32_138 = arith.constant 0 : i32
    %146 = tpu.memref_slice %arg16[%c1_i32_133, %c0_i32_137, %c0_i32_138] : memref<3x1024x1024xbf16, #tpu.memory_space<vmem>> -> memref<1x1024x1024xbf16, #tpu.memory_space<vmem>>
    %147 = tpu.memref_squeeze %146 : memref<1x1024x1024xbf16, #tpu.memory_space<vmem>> -> memref<1024x1024xbf16, #tpu.memory_space<vmem>>
    %148 = tpu.memref_slice %arg17[%c1_i32_134] : memref<3x!tpu.dma_semaphore, #tpu.memory_space<semaphore_mem>> -> memref<1x!tpu.dma_semaphore, #tpu.memory_space<semaphore_mem>>
    %149 = tpu.memref_squeeze %148 : memref<1x!tpu.dma_semaphore, #tpu.memory_space<semaphore_mem>> -> memref<!tpu.dma_semaphore, #tpu.memory_space<semaphore_mem>>
    tpu.wait_dma2 semaphore(%149 : memref<!tpu.dma_semaphore, #tpu.memory_space<semaphore_mem>>) src(%145 : memref<1024x1024xbf16, #tpu.memory_space<any>>) dst(%147 : memref<1024x1024xbf16, #tpu.memory_space<vmem>>)
    %c1_139 = arith.constant 1 : index
    %c0_140 = arith.constant 0 : index
    %c0_141 = arith.constant 0 : index
    %150 = vector.load %arg16[%c1_139, %c0_140, %c0_141] : memref<3x1024x1024xbf16, #tpu.memory_space<vmem>>, vector<1x1024x1024xbf16>
    %151 = vector.shape_cast %150 : vector<1x1024x1024xbf16> to vector<1024x1024xbf16>
    %152 = arith.truncf %126 : vector<8x1024xf32> to vector<8x1024xbf16>
    %cst_142 = arith.constant dense<0.000000e+00> : vector<8x1024xf32>
    %153 = tpu.matmul %152, %151, %cst_142 {dimension_numbers = #tpu.dot_dimension_numbers<[1], [0], [0], [1], [0, 0, 1, 1], [], []>} : vector<8x1024xbf16>, vector<1024x1024xbf16>, vector<8x1024xf32> -> vector<8x1024xf32>
    %c0_143 = arith.constant 0 : index
    %c1024 = arith.constant 1024 : index
    %154 = vector.load %arg14[%c0_143, %c1024] : memref<1x2048xf32, #tpu.memory_space<vmem>>, vector<1x1024xf32>
    %155 = vector.broadcast %154 : vector<1x1024xf32> to vector<8x1024xf32>
    %156 = arith.addf %153, %155 : vector<8x1024xf32>
    %157 = arith.negf %156 : vector<8x1024xf32>
    %158 = math.exp %157 : vector<8x1024xf32>
    %cst_144 = arith.constant 1.000000e+00 : f32
    %159 = vector.broadcast %cst_144 : f32 to vector<8x1024xf32>
    %160 = arith.addf %159, %158 : vector<8x1024xf32>
    %161 = arith.divf %159, %160 : vector<8x1024xf32>
    %c0_145 = arith.constant 0 : index
    %c1024_146 = arith.constant 1024 : index
    %162 = vector.load %arg15[%c0_145, %c1024_146] : memref<8x2048xf32, #tpu.memory_space<vmem>>, vector<8x1024xf32>
    tpu.vector_store %arg15[%c0_145, %c1024_146], %161 {strides = array<i32>} : memref<8x2048xf32, #tpu.memory_space<vmem>>, vector<8x1024xf32>,
    return
  }
  func.func @transform_0(%arg0: i32) -> (i32, i32) {
    %c0_i32 = arith.constant 0 : i32
    %c0_i32_0 = arith.constant 0 : i32
    %c0_i32_1 = arith.constant 0 : i32
    return %c0_i32, %c0_i32_0 : i32, i32
  }
  func.func @transform_8(%arg0: i32) -> (i32, i32) {
    %c0_i32 = arith.constant 0 : i32
    %c0_i32_0 = arith.constant 0 : i32
    %c0_i32_1 = arith.constant 0 : i32
    return %c0_i32, %c0_i32_0 : i32, i32
  }
  func.func @transform_9(%arg0: i32) -> (i32, i32) {
    %c0_i32 = arith.constant 0 : i32
    %c0_i32_0 = arith.constant 0 : i32
    %c0_i32_1 = arith.constant 0 : i32
    return %c0_i32, %c0_i32_0 : i32, i32
  }
  func.func @transform_10(%arg0: i32) -> (i32, i32) {
    %c0_i32 = arith.constant 0 : i32
    %c0_i32_0 = arith.constant 0 : i32
    %c0_i32_1 = arith.constant 0 : i32
    return %c0_i32, %c0_i32_0 : i32, i32
  }
  func.func @transform_11(%arg0: i32) -> (i32, i32) {
    %c0_i32 = arith.constant 0 : i32
    %c0_i32_0 = arith.constant 0 : i32
    %c0_i32_1 = arith.constant 0 : i32
    return %c0_i32, %c0_i32_0 : i32, i32
  }
  func.func @transform_12(%arg0: i32) -> (i32, i32) {
    %c0_i32 = arith.constant 0 : i32
    %c0_i32_0 = arith.constant 0 : i32
    %c0_i32_1 = arith.constant 0 : i32
    return %c0_i32, %c0_i32_0 : i32, i32
  }
  func.func @transform_13(%arg0: i32) -> (i32, i32) {
    %c0_i32 = arith.constant 0 : i32
    %c0_i32_0 = arith.constant 0 : i32
    %c0_i32_1 = arith.constant 0 : i32
    return %c0_i32, %c0_i32_0 : i32, i32
  }
  func.func @transform_14(%arg0: i32) -> (i32, i32) {
    %c0_i32 = arith.constant 0 : i32
    %c0_i32_0 = arith.constant 0 : i32
    %c0_i32_1 = arith.constant 0 : i32
    return %c0_i32, %c0_i32_0 : i32, i32
  }
}

</mosaic_0001>

<llo_original>
// kernel: ae_forward.1
$region0: #{ae_forward.1}
  #allocation0 [shape = 'u32[]', space=smem, size = 0x4, offset = 0x4, fixed_abs, tag = 'smem constant byte address 0x4 - core index']
  #allocation1 [shape = 'u32[144,128]{1,0:T(1,128)}', space=vmem, size = 0x12000, scoped, tag = 'internal scratch']
  #allocation2 [shape = 'bf16[3,1024,1024]{2,1,0:T(16,128)(2,1)}', space=vmem, size = 0x600000, scoped, tag = 'scratch operand']
  #allocation3 [shape = 's32[3]{0}', space=sflag, size = 0xc, scoped, tag = 'scratch operand']
  #allocation17 [shape = 's32[]', space=sflag, size = 0x4, offset = 0, fixed_abs, tag = 'sflag constant byte address 0x0 - dummy sync flag']
  #allocation19 [shape = 's32[]', space=sflag, size = 0x4, offset = 0, fixed_abs, tag = 'sflag constant byte address 0x0 - dummy sync flag']
  #allocation21 [shape = 's32[]', space=sflag, size = 0x4, offset = 0, fixed_abs, tag = 'sflag constant byte address 0x0 - dummy sync flag']
  #allocation23 [shape = 's32[]', space=sflag, size = 0x4, offset = 0, fixed_abs, tag = 'sflag constant byte address 0x0 - dummy sync flag']
  #allocation25 [shape = 's32[]', space=sflag, size = 0x4, offset = 0, fixed_abs, tag = 'sflag constant byte address 0x0 - dummy sync flag']
  #allocation27 [shape = 's32[]', space=sflag, size = 0x4, offset = 0, fixed_abs, tag = 'sflag constant byte address 0x0 - dummy sync flag']
  #allocation29 [shape = 's32[]', space=sflag, size = 0x4, offset = 0, fixed_abs, tag = 'sflag constant byte address 0x0 - dummy sync flag']
  #allocation31 [shape = 's32[]', space=sflag, size = 0x4, offset = 0, fixed_abs, tag = 'sflag constant byte address 0x0 - dummy sync flag']
  %s0 = inlined_call_operand.hbm [shape: f32[8,2048], index: 0, kind: input, shape index: {}]
  %s1 = inlined_call_operand.hbm [shape: bf16[2048,1024], index: 1, kind: input, shape index: {}]
  %s2 = inlined_call_operand.hbm [shape: bf16[1024,512], index: 2, kind: input, shape index: {}]
  %s3 = inlined_call_operand.hbm [shape: bf16[512,256], index: 3, kind: input, shape index: {}]
  %s4 = inlined_call_operand.hbm [shape: bf16[256,512], index: 4, kind: input, shape index: {}]
  %s5 = inlined_call_operand.hbm [shape: bf16[512,1024], index: 5, kind: input, shape index: {}]
  %s6 = inlined_call_operand.hbm [shape: bf16[1024,1024], index: 6, kind: input, shape index: {}]
  %s7 = inlined_call_operand.hbm [shape: bf16[1024,1024], index: 7, kind: input, shape index: {}]
  %s8 = inlined_call_operand.hbm [shape: f32[1,1024], index: 8, kind: input, shape index: {}]
  %s9 = inlined_call_operand.hbm [shape: f32[1,512], index: 9, kind: input, shape index: {}]
  %s10 = inlined_call_operand.hbm [shape: f32[1,256], index: 10, kind: input, shape index: {}]
  %s11 = inlined_call_operand.hbm [shape: f32[1,512], index: 11, kind: input, shape index: {}]
  %s12 = inlined_call_operand.hbm [shape: f32[1,1024], index: 12, kind: input, shape index: {}]
  %s13 = inlined_call_operand.hbm [shape: f32[1,2048], index: 13, kind: input, shape index: {}]
  %s14 = inlined_call_operand.hbm [shape: f32[8,2048], index: 14, kind: output, shape index: {}]
  %s15 = sld [smem:[#allocation0]]
  $region66: #{ae_forward.1} parent=0
    _
  %s17 = ssub.s32 1, %s15
  %s18 = scalar_select 0, %s17, %s15
  $region1: #{ae_forward.1} parent=0
    #allocation4 [shape = 'u8[65536]{0}', space=vmem, size = 0x10000, scoped, tag = 'input window, operand 0, single buffered']
    #allocation5 [shape = 's32[1]{0}', space=sflag, size = 0x4, scoped, tag = 'scoped memory for ae_forward.1']
    #allocation6 [shape = 's32[1]{0}', space=sflag, size = 0x4, scoped, tag = 'scoped memory for ae_forward.1']
    #allocation7 [shape = 'u8[4096]{0}', space=vmem, size = 0x1000, scoped, tag = 'input window, operand 8, single buffered']
    #allocation8 [shape = 's32[1]{0}', space=sflag, size = 0x4, scoped, tag = 'scoped memory for ae_forward.1']
    #allocation9 [shape = 'u8[2048]{0}', space=vmem, size = 0x800, scoped, tag = 'input window, operand 9, single buffered']
    #allocation10 [shape = 'u8[1024]{0}', space=vmem, size = 0x400, scoped, tag = 'input window, operand 10, single buffered']
    #allocation11 [shape = 's32[1]{0}', space=sflag, size = 0x4, scoped, tag = 'scoped memory for ae_forward.1']
    #allocation12 [shape = 'u8[2048]{0}', space=vmem, size = 0x800, scoped, tag = 'input window, operand 11, single buffered']
    #allocation13 [shape = 'u8[4096]{0}', space=vmem, size = 0x1000, scoped, tag = 'input window, operand 12, single buffered']
    #allocation14 [shape = 's32[1]{0}', space=sflag, size = 0x4, scoped, tag = 'scoped memory for ae_forward.1']
    #allocation15 [shape = 'u8[8192]{0}', space=vmem, size = 0x2000, scoped, tag = 'input window, operand 13, single buffered']
    #allocation16 [shape = 'u8[65536]{0}', space=vmem, size = 0x10000, scoped, tag = 'output window, operand 0, single buffered']
    #allocation18 [shape = 'u32[9]{0}', space=smem, size = 0x24, scoped, tag = 'DMA stride descriptor']
    #allocation20 [shape = 'u32[9]{0}', space=smem, size = 0x24, scoped, tag = 'DMA stride descriptor']
    #allocation22 [shape = 'u32[9]{0}', space=smem, size = 0x24, scoped, tag = 'DMA stride descriptor']
    #allocation24 [shape = 'u32[9]{0}', space=smem, size = 0x24, scoped, tag = 'DMA stride descriptor']
    #allocation26 [shape = 'u32[9]{0}', space=smem, size = 0x24, scoped, tag = 'DMA stride descriptor']
    #allocation28 [shape = 'u32[9]{0}', space=smem, size = 0x24, scoped, tag = 'DMA stride descriptor']
    #allocation30 [shape = 'u32[9]{0}', space=smem, size = 0x24, scoped, tag = 'DMA stride descriptor']
    #allocation32 [shape = 'u32[9]{0}', space=smem, size = 0x24, scoped, tag = 'DMA stride descriptor']
    %19 = vsyncpa [#allocation5], 0
    %20 = vsyncpa [#allocation8], 0
    %21 = vsyncpa [#allocation11], 0
    %22 = vsyncpa [#allocation14], 0
    %23 = vsyncpa [#allocation6], 0
    // Predicated region
    $region2: #{ae_forward.1} parent=1 // pred_check
      _
    $region3: #{ae_forward.1} parent=1 // pred_check_branch
      %25 = sbr.rel (0) target = $region5
    $region4: #{ae_forward.1} parent=1 // pred_region
      %s27 = ssub.s32 2048, 2048
      %28 = vsyncadd [#allocation5], %s27
      %s30 = sshll.u32 [#allocation4], 4
      %s31 = int_to_ptr.vmem [resolvable:$true] %s30
      %33 = dma.hbm_to_vmem [thread:$0]  %s0, 2048, %s31, [#allocation5]
    $region5: #{ae_forward.1} parent=1 // pred_fallthru
      _
    // Predicated region
    $region6: #{ae_forward.1} parent=1 // pred_check
      _
    $region7: #{ae_forward.1} parent=1 // pred_check_branch
      %35 = sbr.rel (0) target = $region9
    $region8: #{ae_forward.1} parent=1 // pred_region
      %s37 = ssub.s32 128, 128
      %38 = vsyncadd [#allocation8], %s37
      %s40 = sshll.u32 [#allocation7], 4
      %s41 = int_to_ptr.vmem [resolvable:$true] %s40
      %43 = dma.hbm_to_vmem [thread:$0]  %s8, 128, %s41, [#allocation8]
    $region9: #{ae_forward.1} parent=1 // pred_fallthru
      _
    // Predicated region
    $region10: #{ae_forward.1} parent=1 // pred_check
      _
    $region11: #{ae_forward.1} parent=1 // pred_check_branch
      %45 = sbr.rel (0) target = $region13
    $region12: #{ae_forward.1} parent=1 // pred_region
      %s47 = ssub.s32 64, 64
      %48 = vsyncadd [#allocation8], %s47
      %s50 = sshll.u32 [#allocation9], 4
      %s51 = int_to_ptr.vmem [resolvable:$true] %s50
      %53 = dma.hbm_to_vmem [thread:$0]  %s9, 64, %s51, [#allocation8]
    $region13: #{ae_forward.1} parent=1 // pred_fallthru
      _
    // Predicated region
    $region14: #{ae_forward.1} parent=1 // pred_check
      _
    $region15: #{ae_forward.1} parent=1 // pred_check_branch
      %55 = sbr.rel (0) target = $region17
    $region16: #{ae_forward.1} parent=1 // pred_region
      %s57 = ssub.s32 32, 32
      %58 = vsyncadd [#allocation11], %s57
      %s60 = sshll.u32 [#allocation10], 4
      %s61 = int_to_ptr.vmem [resolvable:$true] %s60
      %63 = dma.hbm_to_vmem [thread:$0]  %s10, 32, %s61, [#allocation11]
    $region17: #{ae_forward.1} parent=1 // pred_fallthru
      _
    // Predicated region
    $region18: #{ae_forward.1} parent=1 // pred_check
      _
    $region19: #{ae_forward.1} parent=1 // pred_check_branch
      %65 = sbr.rel (0) target = $region21
    $region20: #{ae_forward.1} parent=1 // pred_region
      %s67 = ssub.s32 64, 64
      %68 = vsyncadd [#allocation11], %s67
      %s70 = sshll.u32 [#allocation12], 4
      %s71 = int_to_ptr.vmem [resolvable:$true] %s70
      %73 = dma.hbm_to_vmem [thread:$0]  %s11, 64, %s71, [#allocation11]
    $region21: #{ae_forward.1} parent=1 // pred_fallthru
      _
    // Predicated region
    $region22: #{ae_forward.1} parent=1 // pred_check
      _
    $region23: #{ae_forward.1} parent=1 // pred_check_branch
      %75 = sbr.rel (0) target = $region25
    $region24: #{ae_forward.1} parent=1 // pred_region
      %s77 = ssub.s32 128, 128
      %78 = vsyncadd [#allocation14], %s77
      %s80 = sshll.u32 [#allocation13], 4
      %s81 = int_to_ptr.vmem [resolvable:$true] %s80
      %83 = dma.hbm_to_vmem [thread:$0]  %s12, 128, %s81, [#allocation14]
    $region25: #{ae_forward.1} parent=1 // pred_fallthru
      _
    // Predicated region
    $region26: #{ae_forward.1} parent=1 // pred_check
      _
    $region27: #{ae_forward.1} parent=1 // pred_check_branch
      %85 = sbr.rel (0) target = $region29
    $region28: #{ae_forward.1} parent=1 // pred_region
      %s87 = ssub.s32 256, 256
      %88 = vsyncadd [#allocation14], %s87
      %s90 = sshll.u32 [#allocation15], 4
      %s91 = int_to_ptr.vmem [resolvable:$true] %s90
      %93 = dma.hbm_to_vmem [thread:$0]  %s13, 256, %s91, [#allocation14]
    $region29: #{ae_forward.1} parent=1 // pred_fallthru
      _
    // Predicated region
    $region30: #{ae_forward.1} parent=1 // pred_check
      _
    $region31: #{ae_forward.1} parent=1 // pred_check_branch
      %95 = sbr.rel (0) target = $region33
    $region32: #{ae_forward.1} parent=1 // pred_region
      %96 = dma.done [#allocation5], 2048
    $region33: #{ae_forward.1} parent=1 // pred_fallthru
      _
    // Predicated region
    $region34: #{ae_forward.1} parent=1 // pred_check
      _
    $region35: #{ae_forward.1} parent=1 // pred_check_branch
      %98 = sbr.rel (0) target = $region37
    $region36: #{ae_forward.1} parent=1 // pred_region
      %99 = dma.done [#allocation8], 128
    $region37: #{ae_forward.1} parent=1 // pred_fallthru
      _
    // Predicated region
    $region38: #{ae_forward.1} parent=1 // pred_check
      _
    $region39: #{ae_forward.1} parent=1 // pred_check_branch
      %101 = sbr.rel (0) target = $region41
    $region40: #{ae_forward.1} parent=1 // pred_region
      %102 = dma.done [#allocation8], 64
    $region41: #{ae_forward.1} parent=1 // pred_fallthru
      _
    // Predicated region
    $region42: #{ae_forward.1} parent=1 // pred_check
      _
    $region43: #{ae_forward.1} parent=1 // pred_check_branch
      %104 = sbr.rel (0) target = $region45
    $region44: #{ae_forward.1} parent=1 // pred_region
      %105 = dma.done [#allocation11], 32
    $region45: #{ae_forward.1} parent=1 // pred_fallthru
      _
    // Predicated region
    $region46: #{ae_forward.1} parent=1 // pred_check
      _
    $region47: #{ae_forward.1} parent=1 // pred_check_branch
      %107 = sbr.rel (0) target = $region49
    $region48: #{ae_forward.1} parent=1 // pred_region
      %108 = dma.done [#allocation11], 64
    $region49: #{ae_forward.1} parent=1 // pred_fallthru
      _
    // Predicated region
    $region50: #{ae_forward.1} parent=1 // pred_check
      _
    $region51: #{ae_forward.1} parent=1 // pred_check_branch
      %110 = sbr.rel (0) target = $region53
    $region52: #{ae_forward.1} parent=1 // pred_region
      %111 = dma.done [#allocation14], 128
    $region53: #{ae_forward.1} parent=1 // pred_fallthru
      _
    // Predicated region
    $region54: #{ae_forward.1} parent=1 // pred_check
      _
    $region55: #{ae_forward.1} parent=1 // pred_check_branch
      %113 = sbr.rel (0) target = $region57
    $region56: #{ae_forward.1} parent=1 // pred_region
      %114 = dma.done [#allocation14], 256
    $region57: #{ae_forward.1} parent=1 // pred_fallthru
      _
    %s116 = sshll.u32 1, 14
    %s117 = sxor.u32 4294967295, %s116
    %s119 = sld [smem:[#allocation0]]
    %s120 = sadd.s32 2, %s119
    %s122 = sshll.u32 7, 26
    %s123 = sxor.u32 4294967295, %s122
    %s124 = sand.u32 0, %s123
    %s125 = sshll.u32 %s120, 26
    %s126 = sor.u32 %s124, %s125
    %s127 = sshll.u32 [#allocation2], 4
    %s128 = int_to_ptr.vmem [resolvable:$true] %s127
    %131 = sst [smem:[#allocation18]] 1024
    %s132 = scalar_lea.smem [#allocation18], 1
    %133 = sst [smem:[%s132]] 1024
    %s134 = scalar_lea.smem [#allocation18], 2
    %135 = sst [smem:[%s134]] 8
    %s136 = scalar_lea.smem [#allocation18], 3
    %137 = sst [smem:[%s136]] 64
    %s138 = scalar_lea.smem [#allocation18], 4
    %139 = sst [smem:[%s138]] 128
    %s140 = scalar_lea.smem [#allocation18], 5
    %141 = sst [smem:[%s140]] 2
    %s142 = scalar_lea.smem [#allocation18], 6
    %143 = sst [smem:[%s142]] 512
    %s144 = scalar_lea.smem [#allocation18], 7
    %145 = sst [smem:[%s144]] 64
    %s146 = scalar_lea.smem [#allocation18], 8
    %147 = sst [smem:[%s146]] 4
    %149 = dma.general %s1, 65536, %s128, [#allocation3], [#allocation17], [#allocation18], %s126, 0
    %s150 = scalar_lea.hbm %s1, 65536
    %s151 = scalar_lea.vmem [#allocation2], 4096
    %s152 = scalar_lea.sflag [#allocation3], 1
    %s154 = sshll.u32 1, 14
    %s155 = sxor.u32 4294967295, %s154
    %s157 = sadd.s32 2, %s119
    %s159 = sshll.u32 7, 26
    %s160 = sxor.u32 4294967295, %s159
    %s161 = sand.u32 0, %s160
    %s162 = sshll.u32 %s157, 26
    %s163 = sor.u32 %s161, %s162
    %s164 = sshll.u32 %s151, 4
    %s165 = int_to_ptr.vmem [resolvable:$true] %s164
    %168 = sst [smem:[#allocation20]] 1024
    %s169 = scalar_lea.smem [#allocation20], 1
    %170 = sst [smem:[%s169]] 1024
    %s171 = scalar_lea.smem [#allocation20], 2
    %172 = sst [smem:[%s171]] 8
    %s173 = scalar_lea.smem [#allocation20], 3
    %174 = sst [smem:[%s173]] 64
    %s175 = scalar_lea.smem [#allocation20], 4
    %176 = sst [smem:[%s175]] 128
    %s177 = scalar_lea.smem [#allocation20], 5
    %178 = sst [smem:[%s177]] 2
    %s179 = scalar_lea.smem [#allocation20], 6
    %180 = sst [smem:[%s179]] 512
    %s181 = scalar_lea.smem [#allocation20], 7
    %182 = sst [smem:[%s181]] 64
    %s183 = scalar_lea.smem [#allocation20], 8
    %184 = sst [smem:[%s183]] 4
    %186 = dma.general %s150, 65536, %s165, %s152, [#allocation19], [#allocation20], %s163, 0
    %v187 = vld [vmem:[#allocation4] sm:$0xff]
    %v188 = vld [vmem:[#allocation4 + $0x8] sm:$0xff]
    %v189 = vld [vmem:[#allocation4 + $0x10] sm:$0xff]
    %v190 = vld [vmem:[#allocation4 + $0x18] sm:$0xff]
    %v191 = vld [vmem:[#allocation4 + $0x20] sm:$0xff]
    %v192 = vld [vmem:[#allocation4 + $0x28] sm:$0xff]
    %v193 = vld [vmem:[#allocation4 + $0x30] sm:$0xff]
    %v194 = vld [vmem:[#allocation4 + $0x38] sm:$0xff]
    %v195 = vld [vmem:[#allocation4 + $0x40] sm:$0xff]
    %v196 = vld [vmem:[#allocation4 + $0x48] sm:$0xff]
    %v197 = vld [vmem:[#allocation4 + $0x50] sm:$0xff]
    %v198 = vld [vmem:[#allocation4 + $0x58] sm:$0xff]
    %v199 = vld [vmem:[#allocation4 + $0x60] sm:$0xff]
    %v200 = vld [vmem:[#allocation4 + $0x68] sm:$0xff]
    %v201 = vld [vmem:[#allocation4 + $0x70] sm:$0xff]
    %v202 = vld [vmem:[#allocation4 + $0x78] sm:$0xff]
    %s203 = smul.u32 4, 128
    %s204 = smul.u32 %s203, 8
    %s205 = sshll.u32 %s204, 4
    %206 = dma.done [#allocation3], %s205
    %s207 = scalar_lea.vmem [#allocation2], 8192
    %s208 = scalar_lea.sflag [#allocation3], 2
    %s210 = sshll.u32 1, 14
    %s211 = sxor.u32 4294967295, %s210
    %s213 = sadd.s32 2, %s119
    %s215 = sshll.u32 7, 26
    %s216 = sxor.u32 4294967295, %s215
    %s217 = sand.u32 0, %s216
    %s218 = sshll.u32 %s213, 26
    %s219 = sor.u32 %s217, %s218
    %s220 = sshll.u32 %s207, 4
    %s221 = int_to_ptr.vmem [resolvable:$true] %s220
    %224 = sst [smem:[#allocation22]] 512
    %s225 = scalar_lea.smem [#allocation22], 1
    %226 = sst [smem:[%s225]] 1024
    %s227 = scalar_lea.smem [#allocation22], 2
    %228 = sst [smem:[%s227]] 4
    %s229 = scalar_lea.smem [#allocation22], 3
    %230 = sst [smem:[%s229]] 64
    %s231 = scalar_lea.smem [#allocation22], 4
    %232 = sst [smem:[%s231]] 128
    %s233 = scalar_lea.smem [#allocation22], 5
    %234 = sst [smem:[%s233]] 2
    %s235 = scalar_lea.smem [#allocation22], 6
    %236 = sst [smem:[%s235]] 256
    %s237 = scalar_lea.smem [#allocation22], 7
    %238 = sst [smem:[%s237]] 64
    %s239 = scalar_lea.smem [#allocation22], 8
    %240 = sst [smem:[%s239]] 4
    %242 = dma.general %s2, 32768, %s221, %s208, [#allocation21], [#allocation22], %s219, 0
    %v243 = vld [vmem:[#allocation2] sm:$0xff]
    %v244 = vld [vmem:[#allocation2 + $0x8] sm:$0xff]
    %v245 = vld [vmem:[#allocation2 + $0x10] sm:$0xff]
    %v246 = vld [vmem:[#allocation2 + $0x18] sm:$0xff]
    %v247 = vld [vmem:[#allocation2 + $0x20] sm:$0xff]
    %v248 = vld [vmem:[#allocation2 + $0x28] sm:$0xff]
    %v249 = vld [vmem:[#allocation2 + $0x30] sm:$0xff]
    %v250 = vld [vmem:[#allocation2 + $0x38] sm:$0xff]
    %v251 = vld [vmem:[#allocation2 + $0x40] sm:$0xff]
    %v252 = vld [vmem:[#allocation2 + $0x48] sm:$0xff]
    %v253 = vld [vmem:[#allocation2 + $0x50] sm:$0xff]
    %v254 = vld [vmem:[#allocation2 + $0x58] sm:$0xff]
    %v255 = vld [vmem:[#allocation2 + $0x60] sm:$0xff]
    %v256 = vld [vmem:[#allocation2 + $0x68] sm:$0xff]
    %v257 = vld [vmem:[#allocation2 + $0x70] sm:$0xff]
    %v258 = vld [vmem:[#allocation2 + $0x78] sm:$0xff]
    %v259 = vld [vmem:[#allocation2 + $0x80] sm:$0xff]
    %v260 = vld [vmem:[#allocation2 + $0x88] sm:$0xff]
    %v261 = vld [vmem:[#allocation2 + $0x90] sm:$0xff]
    %v262 = vld [vmem:[#allocation2 + $0x98] sm:$0xff]
    %v263 = vld [vmem:[#allocation2 + $0xa0] sm:$0xff]
    %v264 = vld [vmem:[#allocation2 + $0xa8] sm:$0xff]
    %v265 = vld [vmem:[#allocation2 + $0xb0] sm:$0xff]
    %v266 = vld [vmem:[#allocation2 + $0xb8] sm:$0xff]
    %v267 = vld [vmem:[#allocation2 + $0xc0] sm:$0xff]
    %v268 = vld [vmem:[#allocation2 + $0xc8] sm:$0xff]
    %v269 = vld [vmem:[#allocation2 + $0xd0] sm:$0xff]
    %v270 = vld [vmem:[#allocation2 + $0xd8] sm:$0xff]
    %v271 = vld [vmem:[#allocation2 + $0xe0] sm:$0xff]
    %v272 = vld [vmem:[#allocation2 + $0xe8] sm:$0xff]
    %v273 = vld [vmem:[#allocation2 + $0xf0] sm:$0xff]
    %v274 = vld [vmem:[#allocation2 + $0xf8] sm:$0xff]
    %v275 = vld [vmem:[#allocation2 + $0x100] sm:$0xff]
    %v276 = vld [vmem:[#allocation2 + $0x108] sm:$0xff]
    %v277 = vld [vmem:[#allocation2 + $0x110] sm:$0xff]
    %v278 = vld [vmem:[#allocation2 + $0x118] sm:$0xff]
    %v279 = vld [vmem:[#allocation2 + $0x120] sm:$0xff]
    %v280 = vld [vmem:[#allocation2 + $0x128] sm:$0xff]
    %v281 = vld [vmem:[#allocation2 + $0x130] sm:$0xff]
    %v282 = vld [vmem:[#allocation2 + $0x138] sm:$0xff]
    %v283 = vld [vmem:[#allocation2 + $0x140] sm:$0xff]
    %v284 = vld [vmem:[#allocation2 + $0x148] sm:$0xff]
    %v285 = vld [vmem:[#allocation2 + $0x150] sm:$0xff]
    %v286 = vld [vmem:[#allocation2 + $0x158] sm:$0xff]
    %v287 = vld [vmem:[#allocation2 + $0x160] sm:$0xff]
    %v288 = vld [vmem:[#allocation2 + $0x168] sm:$0xff]
    %v289 = vld [vmem:[#allocation2 + $0x170] sm:$0xff]
    %v290 = vld [vmem:[#allocation2 + $0x178] sm:$0xff]
    %v291 = vld [vmem:[#allocation2 + $0x180] sm:$0xff]
    %v292 = vld [vmem:[#allocation2 + $0x188] sm:$0xff]
    %v293 = vld [vmem:[#allocation2 + $0x190] sm:$0xff]
    %v294 = vld [vmem:[#allocation2 + $0x198] sm:$0xff]
    %v295 = vld [vmem:[#allocation2 + $0x1a0] sm:$0xff]
    %v296 = vld [vmem:[#allocation2 + $0x1a8] sm:$0xff]
    %v297 = vld [vmem:[#allocation2 + $0x1b0] sm:$0xff]
    %v298 = vld [vmem:[#allocation2 + $0x1b8] sm:$0xff]
    %v299 = vld [vmem:[#allocation2 + $0x1c0] sm:$0xff]
    %v300 = vld [vmem:[#allocation2 + $0x1c8] sm:$0xff]
    %v301 = vld [vmem:[#allocation2 + $0x1d0] sm:$0xff]
    %v302 = vld [vmem:[#allocation2 + $0x1d8] sm:$0xff]
    %v303 = vld [vmem:[#allocation2 + $0x1e0] sm:$0xff]
    %v304 = vld [vmem:[#allocation2 + $0x1e8] sm:$0xff]
    %v305 = vld [vmem:[#allocation2 + $0x1f0] sm:$0xff]
    %v306 = vld [vmem:[#allocation2 + $0x1f8] sm:$0xff]
    %v307 = vld [vmem:[#allocation2 + $0x200] sm:$0xff]
    %v308 = vld [vmem:[#allocation2 + $0x208] sm:$0xff]
    %v309 = vld [vmem:[#allocation2 + $0x210] sm:$0xff]
    %v310 = vld [vmem:[#allocation2 + $0x218] sm:$0xff]
    %v311 = vld [vmem:[#allocation2 + $0x220] sm:$0xff]
    %v312 = vld [vmem:[#allocation2 + $0x228] sm:$0xff]
    %v313 = vld [vmem:[#allocation2 + $0x230] sm:$0xff]
    %v314 = vld [vmem:[#allocation2 + $0x238] sm:$0xff]
    %v315 = vld [vmem:[#allocation2 + $0x240] sm:$0xff]
    %v316 = vld [vmem:[#allocation2 + $0x248] sm:$0xff]
    %v317 = vld [vmem:[#allocation2 + $0x250] sm:$0xff]
    %v318 = vld [vmem:[#allocation2 + $0x258] sm:$0xff]
    %v319 = vld [vmem:[#allocation2 + $0x260] sm:$0xff]
    %v320 = vld [vmem:[#allocation2 + $0x268] sm:$0xff]
    %v321 = vld [vmem:[#allocation2 + $0x270] sm:$0xff]
    %v322 = vld [vmem:[#allocation2 + $0x278] sm:$0xff]
    %v323 = vld [vmem:[#allocation2 + $0x280] sm:$0xff]
    %v324 = vld [vmem:[#allocation2 + $0x288] sm:$0xff]
    %v325 = vld [vmem:[#allocation2 + $0x290] sm:$0xff]
    %v326 = vld [vmem:[#allocation2 + $0x298] sm:$0xff]
    %v327 = vld [vmem:[#allocation2 + $0x2a0] sm:$0xff]
    %v328 = vld [vmem:[#allocation2 + $0x2a8] sm:$0xff]
    %v329 = vld [vmem:[#allocation2 + $0x2b0] sm:$0xff]
    %v330 = vld [vmem:[#allocation2 + $0x2b8] sm:$0xff]
    %v331 = vld [vmem:[#allocation2 + $0x2c0] sm:$0xff]
    %v332 = vld [vmem:[#allocation2 + $0x2c8] sm:$0xff]
    %v333 = vld [vmem:[#allocation2 + $0x2d0] sm:$0xff]
    %v334 = vld [vmem:[#allocation2 + $0x2d8] sm:$0xff]
    %v335 = vld [vmem:[#allocation2 + $0x2e0] sm:$0xff]
    %v336 = vld [vmem:[#allocation2 + $0x2e8] sm:$0xff]
    %v337 = vld [vmem:[#allocation2 + $0x2f0] sm:$0xff]
    %v338 = vld [vmem:[#allocation2 + $0x2f8] sm:$0xff]
    %v339 = vld [vmem:[#allocation2 + $0x300] sm:$0xff]
    %v340 = vld [vmem:[#allocation2 + $0x308] sm:$0xff]
    %v341 = vld [vmem:[#allocation2 + $0x310] sm:$0xff]
    %v342 = vld [vmem:[#allocation2 + $0x318] sm:$0xff]
    %v343 = vld [vmem:[#allocation2 + $0x320] sm:$0xff]
    %v344 = vld [vmem:[#allocation2 + $0x328] sm:$0xff]
    %v345 = vld [vmem:[#allocation2 + $0x330] sm:$0xff]
    %v346 = vld [vmem:[#allocation2 + $0x338] sm:$0xff]
    %v347 = vld [vmem:[#allocation2 + $0x340] sm:$0xff]
    %v348 = vld [vmem:[#allocation2 + $0x348] sm:$0xff]
    %v349 = vld [vmem:[#allocation2 + $0x350] sm:$0xff]
    %v350 = vld [vmem:[#allocation2 + $0x358] sm:$0xff]
    %v351 = vld [vmem:[#allocation2 + $0x360] sm:$0xff]
    %v352 = vld [vmem:[#allocation2 + $0x368] sm:$0xff]
    %v353 = vld [vmem:[#allocation2 + $0x370] sm:$0xff]
    %v354 = vld [vmem:[#allocation2 + $0x378] sm:$0xff]
    %v355 = vld [vmem:[#allocation2 + $0x380] sm:$0xff]
    %v356 = vld [vmem:[#allocation2 + $0x388] sm:$0xff]
    %v357 = vld [vmem:[#allocation2 + $0x390] sm:$0xff]
    %v358 = vld [vmem:[#allocation2 + $0x398] sm:$0xff]
    %v359 = vld [vmem:[#allocation2 + $0x3a0] sm:$0xff]
    %v360 = vld [vmem:[#allocation2 + $0x3a8] sm:$0xff]
    %v361 = vld [vmem:[#allocation2 + $0x3b0] sm:$0xff]
    %v362 = vld [vmem:[#allocation2 + $0x3b8] sm:$0xff]
    %v363 = vld [vmem:[#allocation2 + $0x3c0] sm:$0xff]
    %v364 = vld [vmem:[#allocation2 + $0x3c8] sm:$0xff]
    %v365 = vld [vmem:[#allocation2 + $0x3d0] sm:$0xff]
    %v366 = vld [vmem:[#allocation2 + $0x3d8] sm:$0xff]
    %v367 = vld [vmem:[#allocation2 + $0x3e0] sm:$0xff]
    %v368 = vld [vmem:[#allocation2 + $0x3e8] sm:$0xff]
    %v369 = vld [vmem:[#allocation2 + $0x3f0] sm:$0xff]
    %v370 = vld [vmem:[#allocation2 + $0x3f8] sm:$0xff]
    %v371 = vld [vmem:[#allocation2 + $0x400] sm:$0xff]
    %v372 = vld [vmem:[#allocation2 + $0x408] sm:$0xff]
    %v373 = vld [vmem:[#allocation2 + $0x410] sm:$0xff]
    %v374 = vld [vmem:[#allocation2 + $0x418] sm:$0xff]
    %v375 = vld [vmem:[#allocation2 + $0x420] sm:$0xff]
    %v376 = vld [vmem:[#allocation2 + $0x428] sm:$0xff]
    %v377 = vld [vmem:[#allocation2 + $0x430] sm:$0xff]
    %v378 = vld [vmem:[#allocation2 + $0x438] sm:$0xff]
    %v379 = vld [vmem:[#allocation2 + $0x440] sm:$0xff]
    %v380 = vld [vmem:[#allocation2 + $0x448] sm:$0xff]
    %v381 = vld [vmem:[#allocation2 + $0x450] sm:$0xff]
    %v382 = vld [vmem:[#allocation2 + $0x458] sm:$0xff]
    %v383 = vld [vmem:[#allocation2 + $0x460] sm:$0xff]
    %v384 = vld [vmem:[#allocation2 + $0x468] sm:$0xff]
    %v385 = vld [vmem:[#allocation2 + $0x470] sm:$0xff]
    %v386 = vld [vmem:[#allocation2 + $0x478] sm:$0xff]
    %v387 = vld [vmem:[#allocation2 + $0x480] sm:$0xff]
    %v388 = vld [vmem:[#allocation2 + $0x488] sm:$0xff]
    %v389 = vld [vmem:[#allocation2 + $0x490] sm:$0xff]
    %v390 = vld [vmem:[#allocation2 + $0x498] sm:$0xff]
    %v391 = vld [vmem:[#allocation2 + $0x4a0] sm:$0xff]
    %v392 = vld [vmem:[#allocation2 + $0x4a8] sm:$0xff]
    %v393 = vld [vmem:[#allocation2 + $0x4b0] sm:$0xff]
    %v394 = vld [vmem:[#allocation2 + $0x4b8] sm:$0xff]
    %v395 = vld [vmem:[#allocation2 + $0x4c0] sm:$0xff]
    %v396 = vld [vmem:[#allocation2 + $0x4c8] sm:$0xff]
    %v397 = vld [vmem:[#allocation2 + $0x4d0] sm:$0xff]
    %v398 = vld [vmem:[#allocation2 + $0x4d8] sm:$0xff]
    %v399 = vld [vmem:[#allocation2 + $0x4e0] sm:$0xff]
    %v400 = vld [vmem:[#allocation2 + $0x4e8] sm:$0xff]
    %v401 = vld [vmem:[#allocation2 + $0x4f0] sm:$0xff]
    %v402 = vld [vmem:[#allocation2 + $0x4f8] sm:$0xff]
    %v403 = vld [vmem:[#allocation2 + $0x500] sm:$0xff]
    %v404 = vld [vmem:[#allocation2 + $0x508] sm:$0xff]
    %v405 = vld [vmem:[#allocation2 + $0x510] sm:$0xff]
    %v406 = vld [vmem:[#allocation2 + $0x518] sm:$0xff]
    %v407 = vld [vmem:[#allocation2 + $0x520] sm:$0xff]
    %v408 = vld [vmem:[#allocation2 + $0x528] sm:$0xff]
    %v409 = vld [vmem:[#allocation2 + $0x530] sm:$0xff]
    %v410 = vld [vmem:[#allocation2 + $0x538] sm:$0xff]
    %v411 = vld [vmem:[#allocation2 + $0x540] sm:$0xff]
    %v412 = vld [vmem:[#allocation2 + $0x548] sm:$0xff]
    %v413 = vld [vmem:[#allocation2 + $0x550] sm:$0xff]
    %v414 = vld [vmem:[#allocation2 + $0x558] sm:$0xff]
    %v415 = vld [vmem:[#allocation2 + $0x560] sm:$0xff]
    %v416 = vld [vmem:[#allocation2 + $0x568] sm:$0xff]
    %v417 = vld [vmem:[#allocation2 + $0x570] sm:$0xff]
    %v418 = vld [vmem:[#allocation2 + $0x578] sm:$0xff]
    %v419 = vld [vmem:[#allocation2 + $0x580] sm:$0xff]
    %v420 = vld [vmem:[#allocation2 + $0x588] sm:$0xff]
    %v421 = vld [vmem:[#allocation2 + $0x590] sm:$0xff]
    %v422 = vld [vmem:[#allocation2 + $0x598] sm:$0xff]
    %v423 = vld [vmem:[#allocation2 + $0x5a0] sm:$0xff]
    %v424 = vld [vmem:[#allocation2 + $0x5a8] sm:$0xff]
    %v425 = vld [vmem:[#allocation2 + $0x5b0] sm:$0xff]
    %v426 = vld [vmem:[#allocation2 + $0x5b8] sm:$0xff]
    %v427 = vld [vmem:[#allocation2 + $0x5c0] sm:$0xff]
    %v428 = vld [vmem:[#allocation2 + $0x5c8] sm:$0xff]
    %v429 = vld [vmem:[#allocation2 + $0x5d0] sm:$0xff]
    %v430 = vld [vmem:[#allocation2 + $0x5d8] sm:$0xff]
    %v431 = vld [vmem:[#allocation2 + $0x5e0] sm:$0xff]
    %v432 = vld [vmem:[#allocation2 + $0x5e8] sm:$0xff]
    %v433 = vld [vmem:[#allocation2 + $0x5f0] sm:$0xff]
    %v434 = vld [vmem:[#allocation2 + $0x5f8] sm:$0xff]
    %v435 = vld [vmem:[#allocation2 + $0x600] sm:$0xff]
    %v436 = vld [vmem:[#allocation2 + $0x608] sm:$0xff]
    %v437 = vld [vmem:[#allocation2 + $0x610] sm:$0xff]
    %v438 = vld [vmem:[#allocation2 + $0x618] sm:$0xff]
    %v439 = vld [vmem:[#allocation2 + $0x620] sm:$0xff]
    %v440 = vld [vmem:[#allocation2 + $0x628] sm:$0xff]
    %v441 = vld [vmem:[#allocation2 + $0x630] sm:$0xff]
    %v442 = vld [vmem:[#allocation2 + $0x638] sm:$0xff]
    %v443 = vld [vmem:[#allocation2 + $0x640] sm:$0xff]
    %v444 = vld [vmem:[#allocation2 + $0x648] sm:$0xff]
    %v445 = vld [vmem:[#allocation2 + $0x650] sm:$0xff]
    %v446 = vld [vmem:[#allocation2 + $0x658] sm:$0xff]
    %v447 = vld [vmem:[#allocation2 + $0x660] sm:$0xff]
    %v448 = vld [vmem:[#allocation2 + $0x668] sm:$0xff]
    %v449 = vld [vmem:[#allocation2 + $0x670] sm:$0xff]
    %v450 = vld [vmem:[#allocation2 + $0x678] sm:$0xff]
    %v451 = vld [vmem:[#allocation2 + $0x680] sm:$0xff]
    %v452 = vld [vmem:[#allocation2 + $0x688] sm:$0xff]
    %v453 = vld [vmem:[#allocation2 + $0x690] sm:$0xff]
    %v454 = vld [vmem:[#allocation2 + $0x698] sm:$0xff]
    %v455 = vld [vmem:[#allocation2 + $0x6a0] sm:$0xff]
    %v456 = vld [vmem:[#allocation2 + $0x6a8] sm:$0xff]
    %v457 = vld [vmem:[#allocation2 + $0x6b0] sm:$0xff]
    %v458 = vld [vmem:[#allocation2 + $0x6b8] sm:$0xff]
    %v459 = vld [vmem:[#allocation2 + $0x6c0] sm:$0xff]
    %v460 = vld [vmem:[#allocation2 + $0x6c8] sm:$0xff]
    %v461 = vld [vmem:[#allocation2 + $0x6d0] sm:$0xff]
    %v462 = vld [vmem:[#allocation2 + $0x6d8] sm:$0xff]
    %v463 = vld [vmem:[#allocation2 + $0x6e0] sm:$0xff]
    %v464 = vld [vmem:[#allocation2 + $0x6e8] sm:$0xff]
    %v465 = vld [vmem:[#allocation2 + $0x6f0] sm:$0xff]
    %v466 = vld [vmem:[#allocation2 + $0x6f8] sm:$0xff]
    %v467 = vld [vmem:[#allocation2 + $0x700] sm:$0xff]
    %v468 = vld [vmem:[#allocation2 + $0x708] sm:$0xff]
    %v469 = vld [vmem:[#allocation2 + $0x710] sm:$0xff]
    %v470 = vld [vmem:[#allocation2 + $0x718] sm:$0xff]
    %v471 = vld [vmem:[#allocation2 + $0x720] sm:$0xff]
    %v472 = vld [vmem:[#allocation2 + $0x728] sm:$0xff]
    %v473 = vld [vmem:[#allocation2 + $0x730] sm:$0xff]
    %v474 = vld [vmem:[#allocation2 + $0x738] sm:$0xff]
    %v475 = vld [vmem:[#allocation2 + $0x740] sm:$0xff]
    %v476 = vld [vmem:[#allocation2 + $0x748] sm:$0xff]
    %v477 = vld [vmem:[#allocation2 + $0x750] sm:$0xff]
    %v478 = vld [vmem:[#allocation2 + $0x758] sm:$0xff]
    %v479 = vld [vmem:[#allocation2 + $0x760] sm:$0xff]
    %v480 = vld [vmem:[#allocation2 + $0x768] sm:$0xff]
    %v481 = vld [vmem:[#allocation2 + $0x770] sm:$0xff]
    %v482 = vld [vmem:[#allocation2 + $0x778] sm:$0xff]
    %v483 = vld [vmem:[#allocation2 + $0x780] sm:$0xff]
    %v484 = vld [vmem:[#allocation2 + $0x788] sm:$0xff]
    %v485 = vld [vmem:[#allocation2 + $0x790] sm:$0xff]
    %v486 = vld [vmem:[#allocation2 + $0x798] sm:$0xff]
    %v487 = vld [vmem:[#allocation2 + $0x7a0] sm:$0xff]
    %v488 = vld [vmem:[#allocation2 + $0x7a8] sm:$0xff]
    %v489 = vld [vmem:[#allocation2 + $0x7b0] sm:$0xff]
    %v490 = vld [vmem:[#allocation2 + $0x7b8] sm:$0xff]
    %v491 = vld [vmem:[#allocation2 + $0x7c0] sm:$0xff]
    %v492 = vld [vmem:[#allocation2 + $0x7c8] sm:$0xff]
    %v493 = vld [vmem:[#allocation2 + $0x7d0] sm:$0xff]
    %v494 = vld [vmem:[#allocation2 + $0x7d8] sm:$0xff]
    %v495 = vld [vmem:[#allocation2 + $0x7e0] sm:$0xff]
    %v496 = vld [vmem:[#allocation2 + $0x7e8] sm:$0xff]
    %v497 = vld [vmem:[#allocation2 + $0x7f0] sm:$0xff]
    %v498 = vld [vmem:[#allocation2 + $0x7f8] sm:$0xff]
    %v499 = vld [vmem:[#allocation2 + $0x800] sm:$0xff]
    %v500 = vld [vmem:[#allocation2 + $0x808] sm:$0xff]
    %v501 = vld [vmem:[#allocation2 + $0x810] sm:$0xff]
    %v502 = vld [vmem:[#allocation2 + $0x818] sm:$0xff]
    %v503 = vld [vmem:[#allocation2 + $0x820] sm:$0xff]
    %v504 = vld [vmem:[#allocation2 + $0x828] sm:$0xff]
    %v505 = vld [vmem:[#allocation2 + $0x830] sm:$0xff]
    %v506 = vld [vmem:[#allocation2 + $0x838] sm:$0xff]
    %v507 = vld [vmem:[#allocation2 + $0x840] sm:$0xff]
    %v508 = vld [vmem:[#allocation2 + $0x848] sm:$0xff]
    %v509 = vld [vmem:[#allocation2 + $0x850] sm:$0xff]
    %v510 = vld [vmem:[#allocation2 + $0x858] sm:$0xff]
    %v511 = vld [vmem:[#allocation2 + $0x860] sm:$0xff]
    %v512 = vld [vmem:[#allocation2 + $0x868] sm:$0xff]
    %v513 = vld [vmem:[#allocation2 + $0x870] sm:$0xff]
    %v514 = vld [vmem:[#allocation2 + $0x878] sm:$0xff]
    %v515 = vld [vmem:[#allocation2 + $0x880] sm:$0xff]
    %v516 = vld [vmem:[#allocation2 + $0x888] sm:$0xff]
    %v517 = vld [vmem:[#allocation2 + $0x890] sm:$0xff]
    %v518 = vld [vmem:[#allocation2 + $0x898] sm:$0xff]
    %v519 = vld [vmem:[#allocation2 + $0x8a0] sm:$0xff]
    %v520 = vld [vmem:[#allocation2 + $0x8a8] sm:$0xff]
    %v521 = vld [vmem:[#allocation2 + $0x8b0] sm:$0xff]
    %v522 = vld [vmem:[#allocation2 + $0x8b8] sm:$0xff]
    %v523 = vld [vmem:[#allocation2 + $0x8c0] sm:$0xff]
    %v524 = vld [vmem:[#allocation2 + $0x8c8] sm:$0xff]
    %v525 = vld [vmem:[#allocation2 + $0x8d0] sm:$0xff]
    %v526 = vld [vmem:[#allocation2 + $0x8d8] sm:$0xff]
    %v527 = vld [vmem:[#allocation2 + $0x8e0] sm:$0xff]
    %v528 = vld [vmem:[#allocation2 + $0x8e8] sm:$0xff]
    %v529 = vld [vmem:[#allocation2 + $0x8f0] sm:$0xff]
    %v530 = vld [vmem:[#allocation2 + $0x8f8] sm:$0xff]
    %v531 = vld [vmem:[#allocation2 + $0x900] sm:$0xff]
    %v532 = vld [vmem:[#allocation2 + $0x908] sm:$0xff]
    %v533 = vld [vmem:[#allocation2 + $0x910] sm:$0xff]
    %v534 = vld [vmem:[#allocation2 + $0x918] sm:$0xff]
    %v535 = vld [vmem:[#allocation2 + $0x920] sm:$0xff]
    %v536 = vld [vmem:[#allocation2 + $0x928] sm:$0xff]
    %v537 = vld [vmem:[#allocation2 + $0x930] sm:$0xff]
    %v538 = vld [vmem:[#allocation2 + $0x938] sm:$0xff]
    %v539 = vld [vmem:[#allocation2 + $0x940] sm:$0xff]
    %v540 = vld [vmem:[#allocation2 + $0x948] sm:$0xff]
    %v541 = vld [vmem:[#allocation2 + $0x950] sm:$0xff]
    %v542 = vld [vmem:[#allocation2 + $0x958] sm:$0xff]
    %v543 = vld [vmem:[#allocation2 + $0x960] sm:$0xff]
    %v544 = vld [vmem:[#allocation2 + $0x968] sm:$0xff]
    %v545 = vld [vmem:[#allocation2 + $0x970] sm:$0xff]
    %v546 = vld [vmem:[#allocation2 + $0x978] sm:$0xff]
    %v547 = vld [vmem:[#allocation2 + $0x980] sm:$0xff]
    %v548 = vld [vmem:[#allocation2 + $0x988] sm:$0xff]
    %v549 = vld [vmem:[#allocation2 + $0x990] sm:$0xff]
    %v550 = vld [vmem:[#allocation2 + $0x998] sm:$0xff]
    %v551 = vld [vmem:[#allocation2 + $0x9a0] sm:$0xff]
    %v552 = vld [vmem:[#allocation2 + $0x9a8] sm:$0xff]
    %v553 = vld [vmem:[#allocation2 + $0x9b0] sm:$0xff]
    %v554 = vld [vmem:[#allocation2 + $0x9b8] sm:$0xff]
    %v555 = vld [vmem:[#allocation2 + $0x9c0] sm:$0xff]
    %v556 = vld [vmem:[#allocation2 + $0x9c8] sm:$0xff]
    %v557 = vld [vmem:[#allocation2 + $0x9d0] sm:$0xff]
    %v558 = vld [vmem:[#allocation2 + $0x9d8] sm:$0xff]
    %v559 = vld [vmem:[#allocation2 + $0x9e0] sm:$0xff]
    %v560 = vld [vmem:[#allocation2 + $0x9e8] sm:$0xff]
    %v561 = vld [vmem:[#allocation2 + $0x9f0] sm:$0xff]
    %v562 = vld [vmem:[#allocation2 + $0x9f8] sm:$0xff]
    %v563 = vld [vmem:[#allocation2 + $0xa00] sm:$0xff]
    %v564 = vld [vmem:[#allocation2 + $0xa08] sm:$0xff]
    %v565 = vld [vmem:[#allocation2 + $0xa10] sm:$0xff]
    %v566 = vld [vmem:[#allocation2 + $0xa18] sm:$0xff]
    %v567 = vld [vmem:[#allocation2 + $0xa20] sm:$0xff]
    %v568 = vld [vmem:[#allocation2 + $0xa28] sm:$0xff]
    %v569 = vld [vmem:[#allocation2 + $0xa30] sm:$0xff]
    %v570 = vld [vmem:[#allocation2 + $0xa38] sm:$0xff]
    %v571 = vld [vmem:[#allocation2 + $0xa40] sm:$0xff]
    %v572 = vld [vmem:[#allocation2 + $0xa48] sm:$0xff]
    %v573 = vld [vmem:[#allocation2 + $0xa50] sm:$0xff]
    %v574 = vld [vmem:[#allocation2 + $0xa58] sm:$0xff]
    %v575 = vld [vmem:[#allocation2 + $0xa60] sm:$0xff]
    %v576 = vld [vmem:[#allocation2 + $0xa68] sm:$0xff]
    %v577 = vld [vmem:[#allocation2 + $0xa70] sm:$0xff]
    %v578 = vld [vmem:[#allocation2 + $0xa78] sm:$0xff]
    %v579 = vld [vmem:[#allocation2 + $0xa80] sm:$0xff]
    %v580 = vld [vmem:[#allocation2 + $0xa88] sm:$0xff]
    %v581 = vld [vmem:[#allocation2 + $0xa90] sm:$0xff]
    %v582 = vld [vmem:[#allocation2 + $0xa98] sm:$0xff]
    %v583 = vld [vmem:[#allocation2 + $0xaa0] sm:$0xff]
    %v584 = vld [vmem:[#allocation2 + $0xaa8] sm:$0xff]
    %v585 = vld [vmem:[#allocation2 + $0xab0] sm:$0xff]
    %v586 = vld [vmem:[#allocation2 + $0xab8] sm:$0xff]
    %v587 = vld [vmem:[#allocation2 + $0xac0] sm:$0xff]
    %v588 = vld [vmem:[#allocation2 + $0xac8] sm:$0xff]
    %v589 = vld [vmem:[#allocation2 + $0xad0] sm:$0xff]
    %v590 = vld [vmem:[#allocation2 + $0xad8] sm:$0xff]
    %v591 = vld [vmem:[#allocation2 + $0xae0] sm:$0xff]
    %v592 = vld [vmem:[#allocation2 + $0xae8] sm:$0xff]
    %v593 = vld [vmem:[#allocation2 + $0xaf0] sm:$0xff]
    %v594 = vld [vmem:[#allocation2 + $0xaf8] sm:$0xff]
    %v595 = vld [vmem:[#allocation2 + $0xb00] sm:$0xff]
    %v596 = vld [vmem:[#allocation2 + $0xb08] sm:$0xff]
    %v597 = vld [vmem:[#allocation2 + $0xb10] sm:$0xff]
    %v598 = vld [vmem:[#allocation2 + $0xb18] sm:$0xff]
    %v599 = vld [vmem:[#allocation2 + $0xb20] sm:$0xff]
    %v600 = vld [vmem:[#allocation2 + $0xb28] sm:$0xff]
    %v601 = vld [vmem:[#allocation2 + $0xb30] sm:$0xff]
    %v602 = vld [vmem:[#allocation2 + $0xb38] sm:$0xff]
    %v603 = vld [vmem:[#allocation2 + $0xb40] sm:$0xff]
    %v604 = vld [vmem:[#allocation2 + $0xb48] sm:$0xff]
    %v605 = vld [vmem:[#allocation2 + $0xb50] sm:$0xff]
    %v606 = vld [vmem:[#allocation2 + $0xb58] sm:$0xff]
    %v607 = vld [vmem:[#allocation2 + $0xb60] sm:$0xff]
    %v608 = vld [vmem:[#allocation2 + $0xb68] sm:$0xff]
    %v609 = vld [vmem:[#allocation2 + $0xb70] sm:$0xff]
    %v610 = vld [vmem:[#allocation2 + $0xb78] sm:$0xff]
    %v611 = vld [vmem:[#allocation2 + $0xb80] sm:$0xff]
    %v612 = vld [vmem:[#allocation2 + $0xb88] sm:$0xff]
    %v613 = vld [vmem:[#allocation2 + $0xb90] sm:$0xff]
    %v614 = vld [vmem:[#allocation2 + $0xb98] sm:$0xff]
    %v615 = vld [vmem:[#allocation2 + $0xba0] sm:$0xff]
    %v616 = vld [vmem:[#allocation2 + $0xba8] sm:$0xff]
    %v617 = vld [vmem:[#allocation2 + $0xbb0] sm:$0xff]
    %v618 = vld [vmem:[#allocation2 + $0xbb8] sm:$0xff]
    %v619 = vld [vmem:[#allocation2 + $0xbc0] sm:$0xff]
    %v620 = vld [vmem:[#allocation2 + $0xbc8] sm:$0xff]
    %v621 = vld [vmem:[#allocation2 + $0xbd0] sm:$0xff]
    %v622 = vld [vmem:[#allocation2 + $0xbd8] sm:$0xff]
    %v623 = vld [vmem:[#allocation2 + $0xbe0] sm:$0xff]
    %v624 = vld [vmem:[#allocation2 + $0xbe8] sm:$0xff]
    %v625 = vld [vmem:[#allocation2 + $0xbf0] sm:$0xff]
    %v626 = vld [vmem:[#allocation2 + $0xbf8] sm:$0xff]
    %v627 = vld [vmem:[#allocation2 + $0xc00] sm:$0xff]
    %v628 = vld [vmem:[#allocation2 + $0xc08] sm:$0xff]
    %v629 = vld [vmem:[#allocation2 + $0xc10] sm:$0xff]
    %v630 = vld [vmem:[#allocation2 + $0xc18] sm:$0xff]
    %v631 = vld [vmem:[#allocation2 + $0xc20] sm:$0xff]
    %v632 = vld [vmem:[#allocation2 + $0xc28] sm:$0xff]
    %v633 = vld [vmem:[#allocation2 + $0xc30] sm:$0xff]
    %v634 = vld [vmem:[#allocation2 + $0xc38] sm:$0xff]
    %v635 = vld [vmem:[#allocation2 + $0xc40] sm:$0xff]
    %v636 = vld [vmem:[#allocation2 + $0xc48] sm:$0xff]
    %v637 = vld [vmem:[#allocation2 + $0xc50] sm:$0xff]
    %v638 = vld [vmem:[#allocation2 + $0xc58] sm:$0xff]
    %v639 = vld [vmem:[#allocation2 + $0xc60] sm:$0xff]
    %v640 = vld [vmem:[#allocation2 + $0xc68] sm:$0xff]
    %v641 = vld [vmem:[#allocation2 + $0xc70] sm:$0xff]
    %v642 = vld [vmem:[#allocation2 + $0xc78] sm:$0xff]
    %v643 = vld [vmem:[#allocation2 + $0xc80] sm:$0xff]
    %v644 = vld [vmem:[#allocation2 + $0xc88] sm:$0xff]
    %v645 = vld [vmem:[#allocation2 + $0xc90] sm:$0xff]
    %v646 = vld [vmem:[#allocation2 + $0xc98] sm:$0xff]
    %v647 = vld [vmem:[#allocation2 + $0xca0] sm:$0xff]
    %v648 = vld [vmem:[#allocation2 + $0xca8] sm:$0xff]
    %v649 = vld [vmem:[#allocation2 + $0xcb0] sm:$0xff]
    %v650 = vld [vmem:[#allocation2 + $0xcb8] sm:$0xff]
    %v651 = vld [vmem:[#allocation2 + $0xcc0] sm:$0xff]
    %v652 = vld [vmem:[#allocation2 + $0xcc8] sm:$0xff]
    %v653 = vld [vmem:[#allocation2 + $0xcd0] sm:$0xff]
    %v654 = vld [vmem:[#allocation2 + $0xcd8] sm:$0xff]
    %v655 = vld [vmem:[#allocation2 + $0xce0] sm:$0xff]
    %v656 = vld [vmem:[#allocation2 + $0xce8] sm:$0xff]
    %v657 = vld [vmem:[#allocation2 + $0xcf0] sm:$0xff]
    %v658 = vld [vmem:[#allocation2 + $0xcf8] sm:$0xff]
    %v659 = vld [vmem:[#allocation2 + $0xd00] sm:$0xff]
    %v660 = vld [vmem:[#allocation2 + $0xd08] sm:$0xff]
    %v661 = vld [vmem:[#allocation2 + $0xd10] sm:$0xff]
    %v662 = vld [vmem:[#allocation2 + $0xd18] sm:$0xff]
    %v663 = vld [vmem:[#allocation2 + $0xd20] sm:$0xff]
    %v664 = vld [vmem:[#allocation2 + $0xd28] sm:$0xff]
    %v665 = vld [vmem:[#allocation2 + $0xd30] sm:$0xff]
    %v666 = vld [vmem:[#allocation2 + $0xd38] sm:$0xff]
    %v667 = vld [vmem:[#allocation2 + $0xd40] sm:$0xff]
    %v668 = vld [vmem:[#allocation2 + $0xd48] sm:$0xff]
    %v669 = vld [vmem:[#allocation2 + $0xd50] sm:$0xff]
    %v670 = vld [vmem:[#allocation2 + $0xd58] sm:$0xff]
    %v671 = vld [vmem:[#allocation2 + $0xd60] sm:$0xff]
    %v672 = vld [vmem:[#allocation2 + $0xd68] sm:$0xff]
    %v673 = vld [vmem:[#allocation2 + $0xd70] sm:$0xff]
    %v674 = vld [vmem:[#allocation2 + $0xd78] sm:$0xff]
    %v675 = vld [vmem:[#allocation2 + $0xd80] sm:$0xff]
    %v676 = vld [vmem:[#allocation2 + $0xd88] sm:$0xff]
    %v677 = vld [vmem:[#allocation2 + $0xd90] sm:$0xff]
    %v678 = vld [vmem:[#allocation2 + $0xd98] sm:$0xff]
    %v679 = vld [vmem:[#allocation2 + $0xda0] sm:$0xff]
    %v680 = vld [vmem:[#allocation2 + $0xda8] sm:$0xff]
    %v681 = vld [vmem:[#allocation2 + $0xdb0] sm:$0xff]
    %v682 = vld [vmem:[#allocation2 + $0xdb8] sm:$0xff]
    %v683 = vld [vmem:[#allocation2 + $0xdc0] sm:$0xff]
    %v684 = vld [vmem:[#allocation2 + $0xdc8] sm:$0xff]
    %v685 = vld [vmem:[#allocation2 + $0xdd0] sm:$0xff]
    %v686 = vld [vmem:[#allocation2 + $0xdd8] sm:$0xff]
    %v687 = vld [vmem:[#allocation2 + $0xde0] sm:$0xff]
    %v688 = vld [vmem:[#allocation2 + $0xde8] sm:$0xff]
    %v689 = vld [vmem:[#allocation2 + $0xdf0] sm:$0xff]
    %v690 = vld [vmem:[#allocation2 + $0xdf8] sm:$0xff]
    %v691 = vld [vmem:[#allocation2 + $0xe00] sm:$0xff]
    %v692 = vld [vmem:[#allocation2 + $0xe08] sm:$0xff]
    %v693 = vld [vmem:[#allocation2 + $0xe10] sm:$0xff]
    %v694 = vld [vmem:[#allocation2 + $0xe18] sm:$0xff]
    %v695 = vld [vmem:[#allocation2 + $0xe20] sm:$0xff]
    %v696 = vld [vmem:[#allocation2 + $0xe28] sm:$0xff]
    %v697 = vld [vmem:[#allocation2 + $0xe30] sm:$0xff]
    %v698 = vld [vmem:[#allocation2 + $0xe38] sm:$0xff]
    %v699 = vld [vmem:[#allocation2 + $0xe40] sm:$0xff]
    %v700 = vld [vmem:[#allocation2 + $0xe48] sm:$0xff]
    %v701 = vld [vmem:[#allocation2 + $0xe50] sm:$0xff]
    %v702 = vld [vmem:[#allocation2 + $0xe58] sm:$0xff]
    %v703 = vld [vmem:[#allocation2 + $0xe60] sm:$0xff]
    %v704 = vld [vmem:[#allocation2 + $0xe68] sm:$0xff]
    %v705 = vld [vmem:[#allocation2 + $0xe70] sm:$0xff]
    %v706 = vld [vmem:[#allocation2 + $0xe78] sm:$0xff]
    %v707 = vld [vmem:[#allocation2 + $0xe80] sm:$0xff]
    %v708 = vld [vmem:[#allocation2 + $0xe88] sm:$0xff]
    %v709 = vld [vmem:[#allocation2 + $0xe90] sm:$0xff]
    %v710 = vld [vmem:[#allocation2 + $0xe98] sm:$0xff]
    %v711 = vld [vmem:[#allocation2 + $0xea0] sm:$0xff]
    %v712 = vld [vmem:[#allocation2 + $0xea8] sm:$0xff]
    %v713 = vld [vmem:[#allocation2 + $0xeb0] sm:$0xff]
    %v714 = vld [vmem:[#allocation2 + $0xeb8] sm:$0xff]
    %v715 = vld [vmem:[#allocation2 + $0xec0] sm:$0xff]
    %v716 = vld [vmem:[#allocation2 + $0xec8] sm:$0xff]
    %v717 = vld [vmem:[#allocation2 + $0xed0] sm:$0xff]
    %v718 = vld [vmem:[#allocation2 + $0xed8] sm:$0xff]
    %v719 = vld [vmem:[#allocation2 + $0xee0] sm:$0xff]
    %v720 = vld [vmem:[#allocation2 + $0xee8] sm:$0xff]
    %v721 = vld [vmem:[#allocation2 + $0xef0] sm:$0xff]
    %v722 = vld [vmem:[#allocation2 + $0xef8] sm:$0xff]
    %v723 = vld [vmem:[#allocation2 + $0xf00] sm:$0xff]
    %v724 = vld [vmem:[#allocation2 + $0xf08] sm:$0xff]
    %v725 = vld [vmem:[#allocation2 + $0xf10] sm:$0xff]
    %v726 = vld [vmem:[#allocation2 + $0xf18] sm:$0xff]
    %v727 = vld [vmem:[#allocation2 + $0xf20] sm:$0xff]
    %v728 = vld [vmem:[#allocation2 + $0xf28] sm:$0xff]
    %v729 = vld [vmem:[#allocation2 + $0xf30] sm:$0xff]
    %v730 = vld [vmem:[#allocation2 + $0xf38] sm:$0xff]
    %v731 = vld [vmem:[#allocation2 + $0xf40] sm:$0xff]
    %v732 = vld [vmem:[#allocation2 + $0xf48] sm:$0xff]
    %v733 = vld [vmem:[#allocation2 + $0xf50] sm:$0xff]
    %v734 = vld [vmem:[#allocation2 + $0xf58] sm:$0xff]
    %v735 = vld [vmem:[#allocation2 + $0xf60] sm:$0xff]
    %v736 = vld [vmem:[#allocation2 + $0xf68] sm:$0xff]
    %v737 = vld [vmem:[#allocation2 + $0xf70] sm:$0xff]
    %v738 = vld [vmem:[#allocation2 + $0xf78] sm:$0xff]
    %v739 = vld [vmem:[#allocation2 + $0xf80] sm:$0xff]
    %v740 = vld [vmem:[#allocation2 + $0xf88] sm:$0xff]
    %v741 = vld [vmem:[#allocation2 + $0xf90] sm:$0xff]
    %v742 = vld [vmem:[#allocation2 + $0xf98] sm:$0xff]
    %v743 = vld [vmem:[#allocation2 + $0xfa0] sm:$0xff]
    %v744 = vld [vmem:[#allocation2 + $0xfa8] sm:$0xff]
    %v745 = vld [vmem:[#allocation2 + $0xfb0] sm:$0xff]
    %v746 = vld [vmem:[#allocation2 + $0xfb8] sm:$0xff]
    %v747 = vld [vmem:[#allocation2 + $0xfc0] sm:$0xff]
    %v748 = vld [vmem:[#allocation2 + $0xfc8] sm:$0xff]
    %v749 = vld [vmem:[#allocation2 + $0xfd0] sm:$0xff]
    %v750 = vld [vmem:[#allocation2 + $0xfd8] sm:$0xff]
    %v751 = vld [vmem:[#allocation2 + $0xfe0] sm:$0xff]
    %v752 = vld [vmem:[#allocation2 + $0xfe8] sm:$0xff]
    %v753 = vld [vmem:[#allocation2 + $0xff0] sm:$0xff]
    %v754 = vld [vmem:[#allocation2 + $0xff8] sm:$0xff]
    %v755 = vpack.c.bf16 %v187, %v187
    %v756 = vpack.c.bf16 %v188, %v188
    %v757 = vpack.c.bf16 %v189, %v189
    %v758 = vpack.c.bf16 %v190, %v190
    %v759 = vpack.c.bf16 %v191, %v191
    %v760 = vpack.c.bf16 %v192, %v192
    %v761 = vpack.c.bf16 %v193, %v193
    %v762 = vpack.c.bf16 %v194, %v194
    %s763 = sshll.u32 %s204, 4
    %764 = dma.done %s152, %s763
    %s766 = sshll.u32 1, 14
    %s767 = sxor.u32 4294967295, %s766
    %s769 = sadd.s32 2, %s119
    %s771 = sshll.u32 7, 26
    %s772 = sxor.u32 4294967295, %s771
    %s773 = sand.u32 0, %s772
    %s774 = sshll.u32 %s769, 26
    %s775 = sor.u32 %s773, %s774
    %s776 = sshll.u32 [#allocation2], 4
    %s777 = int_to_ptr.vmem [resolvable:$true] %s776
    %780 = sst [smem:[#allocation24]] 256
    %s781 = scalar_lea.smem [#allocation24], 1
    %782 = sst [smem:[%s781]] 1024
    %s783 = scalar_lea.smem [#allocation24], 2
    %784 = sst [smem:[%s783]] 2
    %s785 = scalar_lea.smem [#allocation24], 3
    %786 = sst [smem:[%s785]] 64
    %s787 = scalar_lea.smem [#allocation24], 4
    %788 = sst [smem:[%s787]] 128
    %s789 = scalar_lea.smem [#allocation24], 5
    %790 = sst [smem:[%s789]] 2
    %s791 = scalar_lea.smem [#allocation24], 6
    %792 = sst [smem:[%s791]] 128
    %s793 = scalar_lea.smem [#allocation24], 7
    %794 = sst [smem:[%s793]] 64
    %s795 = scalar_lea.smem [#allocation24], 8
    %796 = sst [smem:[%s795]] 4
    %798 = dma.general %s3, 8192, %s777, [#allocation3], [#allocation23], [#allocation24], %s775, 0
    %v799 = vld [vmem:[%s151] sm:$0xff]
    %v800 = vld [vmem:[%s151 + $0x8] sm:$0xff]
    %v801 = vld [vmem:[%s151 + $0x10] sm:$0xff]
    %v802 = vld [vmem:[%s151 + $0x18] sm:$0xff]
    %v803 = vld [vmem:[%s151 + $0x20] sm:$0xff]
    %v804 = vld [vmem:[%s151 + $0x28] sm:$0xff]
    %v805 = vld [vmem:[%s151 + $0x30] sm:$0xff]
    %v806 = vld [vmem:[%s151 + $0x38] sm:$0xff]
    %v807 = vld [vmem:[%s151 + $0x40] sm:$0xff]
    %v808 = vld [vmem:[%s151 + $0x48] sm:$0xff]
    %v809 = vld [vmem:[%s151 + $0x50] sm:$0xff]
    %v810 = vld [vmem:[%s151 + $0x58] sm:$0xff]
    %v811 = vld [vmem:[%s151 + $0x60] sm:$0xff]
    %v812 = vld [vmem:[%s151 + $0x68] sm:$0xff]
    %v813 = vld [vmem:[%s151 + $0x70] sm:$0xff]
    %v814 = vld [vmem:[%s151 + $0x78] sm:$0xff]
    %v815 = vld [vmem:[%s151 + $0x80] sm:$0xff]
    %v816 = vld [vmem:[%s151 + $0x88] sm:$0xff]
    %v817 = vld [vmem:[%s151 + $0x90] sm:$0xff]
    %v818 = vld [vmem:[%s151 + $0x98] sm:$0xff]
    %v819 = vld [vmem:[%s151 + $0xa0] sm:$0xff]
    %v820 = vld [vmem:[%s151 + $0xa8] sm:$0xff]
    %v821 = vld [vmem:[%s151 + $0xb0] sm:$0xff]
    %v822 = vld [vmem:[%s151 + $0xb8] sm:$0xff]
    %v823 = vld [vmem:[%s151 + $0xc0] sm:$0xff]
    %v824 = vld [vmem:[%s151 + $0xc8] sm:$0xff]
    %v825 = vld [vmem:[%s151 + $0xd0] sm:$0xff]
    %v826 = vld [vmem:[%s151 + $0xd8] sm:$0xff]
    %v827 = vld [vmem:[%s151 + $0xe0] sm:$0xff]
    %v828 = vld [vmem:[%s151 + $0xe8] sm:$0xff]
    %v829 = vld [vmem:[%s151 + $0xf0] sm:$0xff]
    %v830 = vld [vmem:[%s151 + $0xf8] sm:$0xff]
    %v831 = vld [vmem:[%s151 + $0x100] sm:$0xff]
    %v832 = vld [vmem:[%s151 + $0x108] sm:$0xff]
    %v833 = vld [vmem:[%s151 + $0x110] sm:$0xff]
    %v834 = vld [vmem:[%s151 + $0x118] sm:$0xff]
    %v835 = vld [vmem:[%s151 + $0x120] sm:$0xff]
    %v836 = vld [vmem:[%s151 + $0x128] sm:$0xff]
    %v837 = vld [vmem:[%s151 + $0x130] sm:$0xff]
    %v838 = vld [vmem:[%s151 + $0x138] sm:$0xff]
    %v839 = vld [vmem:[%s151 + $0x140] sm:$0xff]
    %v840 = vld [vmem:[%s151 + $0x148] sm:$0xff]
    %v841 = vld [vmem:[%s151 + $0x150] sm:$0xff]
    %v842 = vld [vmem:[%s151 + $0x158] sm:$0xff]
    %v843 = vld [vmem:[%s151 + $0x160] sm:$0xff]
    %v844 = vld [vmem:[%s151 + $0x168] sm:$0xff]
    %v845 = vld [vmem:[%s151 + $0x170] sm:$0xff]
    %v846 = vld [vmem:[%s151 + $0x178] sm:$0xff]
    %v847 = vld [vmem:[%s151 + $0x180] sm:$0xff]
    %v848 = vld [vmem:[%s151 + $0x188] sm:$0xff]
    %v849 = vld [vmem:[%s151 + $0x190] sm:$0xff]
    %v850 = vld [vmem:[%s151 + $0x198] sm:$0xff]
    %v851 = vld [vmem:[%s151 + $0x1a0] sm:$0xff]
    %v852 = vld [vmem:[%s151 + $0x1a8] sm:$0xff]
    %v853 = vld [vmem:[%s151 + $0x1b0] sm:$0xff]
    %v854 = vld [vmem:[%s151 + $0x1b8] sm:$0xff]
    %v855 = vld [vmem:[%s151 + $0x1c0] sm:$0xff]
    %v856 = vld [vmem:[%s151 + $0x1c8] sm:$0xff]
    %v857 = vld [vmem:[%s151 + $0x1d0] sm:$0xff]
    %v858 = vld [vmem:[%s151 + $0x1d8] sm:$0xff]
    %v859 = vld [vmem:[%s151 + $0x1e0] sm:$0xff]
    %v860 = vld [vmem:[%s151 + $0x1e8] sm:$0xff]
    %v861 = vld [vmem:[%s151 + $0x1f0] sm:$0xff]
    %v862 = vld [vmem:[%s151 + $0x1f8] sm:$0xff]
    %v863 = vld [vmem:[%s151 + $0x200] sm:$0xff]
    %v864 = vld [vmem:[%s151 + $0x208] sm:$0xff]
    %v865 = vld [vmem:[%s151 + $0x210] sm:$0xff]
    %v866 = vld [vmem:[%s151 + $0x218] sm:$0xff]
    %v867 = vld [vmem:[%s151 + $0x220] sm:$0xff]
    %v868 = vld [vmem:[%s151 + $0x228] sm:$0xff]
    %v869 = vld [vmem:[%s151 + $0x230] sm:$0xff]
    %v870 = vld [vmem:[%s151 + $0x238] sm:$0xff]
    %v871 = vld [vmem:[%s151 + $0x240] sm:$0xff]
    %v872 = vld [vmem:[%s151 + $0x248] sm:$0xff]
    %v873 = vld [vmem:[%s151 + $0x250] sm:$0xff]
    %v874 = vld [vmem:[%s151 + $0x258] sm:$0xff]
    %v875 = vld [vmem:[%s151 + $0x260] sm:$0xff]
    %v876 = vld [vmem:[%s151 + $0x268] sm:$0xff]
    %v877 = vld [vmem:[%s151 + $0x270] sm:$0xff]
    %v878 = vld [vmem:[%s151 + $0x278] sm:$0xff]
    %v879 = vld [vmem:[%s151 + $0x280] sm:$0xff]
    %v880 = vld [vmem:[%s151 + $0x288] sm:$0xff]
    %v881 = vld [vmem:[%s151 + $0x290] sm:$0xff]
    %v882 = vld [vmem:[%s151 + $0x298] sm:$0xff]
    %v883 = vld [vmem:[%s151 + $0x2a0] sm:$0xff]
    %v884 = vld [vmem:[%s151 + $0x2a8] sm:$0xff]
    %v885 = vld [vmem:[%s151 + $0x2b0] sm:$0xff]
    %v886 = vld [vmem:[%s151 + $0x2b8] sm:$0xff]
    %v887 = vld [vmem:[%s151 + $0x2c0] sm:$0xff]
    %v888 = vld [vmem:[%s151 + $0x2c8] sm:$0xff]
    %v889 = vld [vmem:[%s151 + $0x2d0] sm:$0xff]
    %v890 = vld [vmem:[%s151 + $0x2d8] sm:$0xff]
    %v891 = vld [vmem:[%s151 + $0x2e0] sm:$0xff]
    %v892 = vld [vmem:[%s151 + $0x2e8] sm:$0xff]
    %v893 = vld [vmem:[%s151 + $0x2f0] sm:$0xff]
    %v894 = vld [vmem:[%s151 + $0x2f8] sm:$0xff]
    %v895 = vld [vmem:[%s151 + $0x300] sm:$0xff]
    %v896 = vld [vmem:[%s151 + $0x308] sm:$0xff]
    %v897 = vld [vmem:[%s151 + $0x310] sm:$0xff]
    %v898 = vld [vmem:[%s151 + $0x318] sm:$0xff]
    %v899 = vld [vmem:[%s151 + $0x320] sm:$0xff]
    %v900 = vld [vmem:[%s151 + $0x328] sm:$0xff]
    %v901 = vld [vmem:[%s151 + $0x330] sm:$0xff]
    %v902 = vld [vmem:[%s151 + $0x338] sm:$0xff]
    %v903 = vld [vmem:[%s151 + $0x340] sm:$0xff]
    %v904 = vld [vmem:[%s151 + $0x348] sm:$0xff]
    %v905 = vld [vmem:[%s151 + $0x350] sm:$0xff]
    %v906 = vld [vmem:[%s151 + $0x358] sm:$0xff]
    %v907 = vld [vmem:[%s151 + $0x360] sm:$0xff]
    %v908 = vld [vmem:[%s151 + $0x368] sm:$0xff]
    %v909 = vld [vmem:[%s151 + $0x370] sm:$0xff]
    %v910 = vld [vmem:[%s151 + $0x378] sm:$0xff]
    %v911 = vld [vmem:[%s151 + $0x380] sm:$0xff]
    %v912 = vld [vmem:[%s151 + $0x388] sm:$0xff]
    %v913 = vld [vmem:[%s151 + $0x390] sm:$0xff]
    %v914 = vld [vmem:[%s151 + $0x398] sm:$0xff]
    %v915 = vld [vmem:[%s151 + $0x3a0] sm:$0xff]
    %v916 = vld [vmem:[%s151 + $0x3a8] sm:$0xff]
    %v917 = vld [vmem:[%s151 + $0x3b0] sm:$0xff]
    %v918 = vld [vmem:[%s151 + $0x3b8] sm:$0xff]
    %v919 = vld [vmem:[%s151 + $0x3c0] sm:$0xff]
    %v920 = vld [vmem:[%s151 + $0x3c8] sm:$0xff]
    %v921 = vld [vmem:[%s151 + $0x3d0] sm:$0xff]
    %v922 = vld [vmem:[%s151 + $0x3d8] sm:$0xff]
    %v923 = vld [vmem:[%s151 + $0x3e0] sm:$0xff]
    %v924 = vld [vmem:[%s151 + $0x3e8] sm:$0xff]
    %v925 = vld [vmem:[%s151 + $0x3f0] sm:$0xff]
    %v926 = vld [vmem:[%s151 + $0x3f8] sm:$0xff]
    %v927 = vld [vmem:[%s151 + $0x400] sm:$0xff]
    %v928 = vld [vmem:[%s151 + $0x408] sm:$0xff]
    %v929 = vld [vmem:[%s151 + $0x410] sm:$0xff]
    %v930 = vld [vmem:[%s151 + $0x418] sm:$0xff]
    %v931 = vld [vmem:[%s151 + $0x420] sm:$0xff]
    %v932 = vld [vmem:[%s151 + $0x428] sm:$0xff]
    %v933 = vld [vmem:[%s151 + $0x430] sm:$0xff]
    %v934 = vld [vmem:[%s151 + $0x438] sm:$0xff]
    %v935 = vld [vmem:[%s151 + $0x440] sm:$0xff]
    %v936 = vld [vmem:[%s151 + $0x448] sm:$0xff]
    %v937 = vld [vmem:[%s151 + $0x450] sm:$0xff]
    %v938 = vld [vmem:[%s151 + $0x458] sm:$0xff]
    %v939 = vld [vmem:[%s151 + $0x460] sm:$0xff]
    %v940 = vld [vmem:[%s151 + $0x468] sm:$0xff]
    %v941 = vld [vmem:[%s151 + $0x470] sm:$0xff]
    %v942 = vld [vmem:[%s151 + $0x478] sm:$0xff]
    %v943 = vld [vmem:[%s151 + $0x480] sm:$0xff]
    %v944 = vld [vmem:[%s151 + $0x488] sm:$0xff]
    %v945 = vld [vmem:[%s151 + $0x490] sm:$0xff]
    %v946 = vld [vmem:[%s151 + $0x498] sm:$0xff]
    %v947 = vld [vmem:[%s151 + $0x4a0] sm:$0xff]
    %v948 = vld [vmem:[%s151 + $0x4a8] sm:$0xff]
    %v949 = vld [vmem:[%s151 + $0x4b0] sm:$0xff]
    %v950 = vld [vmem:[%s151 + $0x4b8] sm:$0xff]
    %v951 = vld [vmem:[%s151 + $0x4c0] sm:$0xff]
    %v952 = vld [vmem:[%s151 + $0x4c8] sm:$0xff]
    %v953 = vld [vmem:[%s151 + $0x4d0] sm:$0xff]
    %v954 = vld [vmem:[%s151 + $0x4d8] sm:$0xff]
    %v955 = vld [vmem:[%s151 + $0x4e0] sm:$0xff]
    %v956 = vld [vmem:[%s151 + $0x4e8] sm:$0xff]
    %v957 = vld [vmem:[%s151 + $0x4f0] sm:$0xff]
    %v958 = vld [vmem:[%s151 + $0x4f8] sm:$0xff]
    %v959 = vld [vmem:[%s151 + $0x500] sm:$0xff]
    %v960 = vld [vmem:[%s151 + $0x508] sm:$0xff]
    %v961 = vld [vmem:[%s151 + $0x510] sm:$0xff]
    %v962 = vld [vmem:[%s151 + $0x518] sm:$0xff]
    %v963 = vld [vmem:[%s151 + $0x520] sm:$0xff]
    %v964 = vld [vmem:[%s151 + $0x528] sm:$0xff]
    %v965 = vld [vmem:[%s151 + $0x530] sm:$0xff]
    %v966 = vld [vmem:[%s151 + $0x538] sm:$0xff]
    %v967 = vld [vmem:[%s151 + $0x540] sm:$0xff]
    %v968 = vld [vmem:[%s151 + $0x548] sm:$0xff]
    %v969 = vld [vmem:[%s151 + $0x550] sm:$0xff]
    %v970 = vld [vmem:[%s151 + $0x558] sm:$0xff]
    %v971 = vld [vmem:[%s151 + $0x560] sm:$0xff]
    %v972 = vld [vmem:[%s151 + $0x568] sm:$0xff]
    %v973 = vld [vmem:[%s151 + $0x570] sm:$0xff]
    %v974 = vld [vmem:[%s151 + $0x578] sm:$0xff]
    %v975 = vld [vmem:[%s151 + $0x580] sm:$0xff]
    %v976 = vld [vmem:[%s151 + $0x588] sm:$0xff]
    %v977 = vld [vmem:[%s151 + $0x590] sm:$0xff]
    %v978 = vld [vmem:[%s151 + $0x598] sm:$0xff]
    %v979 = vld [vmem:[%s151 + $0x5a0] sm:$0xff]
    %v980 = vld [vmem:[%s151 + $0x5a8] sm:$0xff]
    %v981 = vld [vmem:[%s151 + $0x5b0] sm:$0xff]
    %v982 = vld [vmem:[%s151 + $0x5b8] sm:$0xff]
    %v983 = vld [vmem:[%s151 + $0x5c0] sm:$0xff]
    %v984 = vld [vmem:[%s151 + $0x5c8] sm:$0xff]
    %v985 = vld [vmem:[%s151 + $0x5d0] sm:$0xff]
    %v986 = vld [vmem:[%s151 + $0x5d8] sm:$0xff]
    %v987 = vld [vmem:[%s151 + $0x5e0] sm:$0xff]
    %v988 = vld [vmem:[%s151 + $0x5e8] sm:$0xff]
    %v989 = vld [vmem:[%s151 + $0x5f0] sm:$0xff]
    %v990 = vld [vmem:[%s151 + $0x5f8] sm:$0xff]
    %v991 = vld [vmem:[%s151 + $0x600] sm:$0xff]
    %v992 = vld [vmem:[%s151 + $0x608] sm:$0xff]
    %v993 = vld [vmem:[%s151 + $0x610] sm:$0xff]
    %v994 = vld [vmem:[%s151 + $0x618] sm:$0xff]
    %v995 = vld [vmem:[%s151 + $0x620] sm:$0xff]
    %v996 = vld [vmem:[%s151 + $0x628] sm:$0xff]
    %v997 = vld [vmem:[%s151 + $0x630] sm:$0xff]
    %v998 = vld [vmem:[%s151 + $0x638] sm:$0xff]
    %v999 = vld [vmem:[%s151 + $0x640] sm:$0xff]
    %v1000 = vld [vmem:[%s151 + $0x648] sm:$0xff]
    %v1001 = vld [vmem:[%s151 + $0x650] sm:$0xff]
    %v1002 = vld [vmem:[%s151 + $0x658] sm:$0xff]
    %v1003 = vld [vmem:[%s151 + $0x660] sm:$0xff]
    %v1004 = vld [vmem:[%s151 + $0x668] sm:$0xff]
    %v1005 = vld [vmem:[%s151 + $0x670] sm:$0xff]
    %v1006 = vld [vmem:[%s151 + $0x678] sm:$0xff]
    %v1007 = vld [vmem:[%s151 + $0x680] sm:$0xff]
    %v1008 = vld [vmem:[%s151 + $0x688] sm:$0xff]
    %v1009 = vld [vmem:[%s151 + $0x690] sm:$0xff]
    %v1010 = vld [vmem:[%s151 + $0x698] sm:$0xff]
    %v1011 = vld [vmem:[%s151 + $0x6a0] sm:$0xff]
    %v1012 = vld [vmem:[%s151 + $0x6a8] sm:$0xff]
    %v1013 = vld [vmem:[%s151 + $0x6b0] sm:$0xff]
    %v1014 = vld [vmem:[%s151 + $0x6b8] sm:$0xff]
    %v1015 = vld [vmem:[%s151 + $0x6c0] sm:$0xff]
    %v1016 = vld [vmem:[%s151 + $0x6c8] sm:$0xff]
    %v1017 = vld [vmem:[%s151 + $0x6d0] sm:$0xff]
    %v1018 = vld [vmem:[%s151 + $0x6d8] sm:$0xff]
    %v1019 = vld [vmem:[%s151 + $0x6e0] sm:$0xff]
    %v1020 = vld [vmem:[%s151 + $0x6e8] sm:$0xff]
    %v1021 = vld [vmem:[%s151 + $0x6f0] sm:$0xff]
    %v1022 = vld [vmem:[%s151 + $0x6f8] sm:$0xff]
    %v1023 = vld [vmem:[%s151 + $0x700] sm:$0xff]
    %v1024 = vld [vmem:[%s151 + $0x708] sm:$0xff]
    %v1025 = vld [vmem:[%s151 + $0x710] sm:$0xff]
    %v1026 = vld [vmem:[%s151 + $0x718] sm:$0xff]
    %v1027 = vld [vmem:[%s151 + $0x720] sm:$0xff]
    %v1028 = vld [vmem:[%s151 + $0x728] sm:$0xff]
    %v1029 = vld [vmem:[%s151 + $0x730] sm:$0xff]
    %v1030 = vld [vmem:[%s151 + $0x738] sm:$0xff]
    %v1031 = vld [vmem:[%s151 + $0x740] sm:$0xff]
    %v1032 = vld [vmem:[%s151 + $0x748] sm:$0xff]
    %v1033 = vld [vmem:[%s151 + $0x750] sm:$0xff]
    %v1034 = vld [vmem:[%s151 + $0x758] sm:$0xff]
    %v1035 = vld [vmem:[%s151 + $0x760] sm:$0xff]
    %v1036 = vld [vmem:[%s151 + $0x768] sm:$0xff]
    %v1037 = vld [vmem:[%s151 + $0x770] sm:$0xff]
    %v1038 = vld [vmem:[%s151 + $0x778] sm:$0xff]
    %v1039 = vld [vmem:[%s151 + $0x780] sm:$0xff]
    %v1040 = vld [vmem:[%s151 + $0x788] sm:$0xff]
    %v1041 = vld [vmem:[%s151 + $0x790] sm:$0xff]
    %v1042 = vld [vmem:[%s151 + $0x798] sm:$0xff]
    %v1043 = vld [vmem:[%s151 + $0x7a0] sm:$0xff]
    %v1044 = vld [vmem:[%s151 + $0x7a8] sm:$0xff]
    %v1045 = vld [vmem:[%s151 + $0x7b0] sm:$0xff]
    %v1046 = vld [vmem:[%s151 + $0x7b8] sm:$0xff]
    %v1047 = vld [vmem:[%s151 + $0x7c0] sm:$0xff]
    %v1048 = vld [vmem:[%s151 + $0x7c8] sm:$0xff]
    %v1049 = vld [vmem:[%s151 + $0x7d0] sm:$0xff]
    %v1050 = vld [vmem:[%s151 + $0x7d8] sm:$0xff]
    %v1051 = vld [vmem:[%s151 + $0x7e0] sm:$0xff]
    %v1052 = vld [vmem:[%s151 + $0x7e8] sm:$0xff]
    %v1053 = vld [vmem:[%s151 + $0x7f0] sm:$0xff]
    %v1054 = vld [vmem:[%s151 + $0x7f8] sm:$0xff]
    %v1055 = vld [vmem:[%s151 + $0x800] sm:$0xff]
    %v1056 = vld [vmem:[%s151 + $0x808] sm:$0xff]
    %v1057 = vld [vmem:[%s151 + $0x810] sm:$0xff]
    %v1058 = vld [vmem:[%s151 + $0x818] sm:$0xff]
    %v1059 = vld [vmem:[%s151 + $0x820] sm:$0xff]
    %v1060 = vld [vmem:[%s151 + $0x828] sm:$0xff]
    %v1061 = vld [vmem:[%s151 + $0x830] sm:$0xff]
    %v1062 = vld [vmem:[%s151 + $0x838] sm:$0xff]
    %v1063 = vld [vmem:[%s151 + $0x840] sm:$0xff]
    %v1064 = vld [vmem:[%s151 + $0x848] sm:$0xff]
    %v1065 = vld [vmem:[%s151 + $0x850] sm:$0xff]
    %v1066 = vld [vmem:[%s151 + $0x858] sm:$0xff]
    %v1067 = vld [vmem:[%s151 + $0x860] sm:$0xff]
    %v1068 = vld [vmem:[%s151 + $0x868] sm:$0xff]
    %v1069 = vld [vmem:[%s151 + $0x870] sm:$0xff]
    %v1070 = vld [vmem:[%s151 + $0x878] sm:$0xff]
    %v1071 = vld [vmem:[%s151 + $0x880] sm:$0xff]
    %v1072 = vld [vmem:[%s151 + $0x888] sm:$0xff]
    %v1073 = vld [vmem:[%s151 + $0x890] sm:$0xff]
    %v1074 = vld [vmem:[%s151 + $0x898] sm:$0xff]
    %v1075 = vld [vmem:[%s151 + $0x8a0] sm:$0xff]
    %v1076 = vld [vmem:[%s151 + $0x8a8] sm:$0xff]
    %v1077 = vld [vmem:[%s151 + $0x8b0] sm:$0xff]
    %v1078 = vld [vmem:[%s151 + $0x8b8] sm:$0xff]
    %v1079 = vld [vmem:[%s151 + $0x8c0] sm:$0xff]
    %v1080 = vld [vmem:[%s151 + $0x8c8] sm:$0xff]
    %v1081 = vld [vmem:[%s151 + $0x8d0] sm:$0xff]
    %v1082 = vld [vmem:[%s151 + $0x8d8] sm:$0xff]
    %v1083 = vld [vmem:[%s151 + $0x8e0] sm:$0xff]
    %v1084 = vld [vmem:[%s151 + $0x8e8] sm:$0xff]
    %v1085 = vld [vmem:[%s151 + $0x8f0] sm:$0xff]
    %v1086 = vld [vmem:[%s151 + $0x8f8] sm:$0xff]
    %v1087 = vld [vmem:[%s151 + $0x900] sm:$0xff]
    %v1088 = vld [vmem:[%s151 + $0x908] sm:$0xff]
    %v1089 = vld [vmem:[%s151 + $0x910] sm:$0xff]
    %v1090 = vld [vmem:[%s151 + $0x918] sm:$0xff]
    %v1091 = vld [vmem:[%s151 + $0x920] sm:$0xff]
    %v1092 = vld [vmem:[%s151 + $0x928] sm:$0xff]
    %v1093 = vld [vmem:[%s151 + $0x930] sm:$0xff]
    %v1094 = vld [vmem:[%s151 + $0x938] sm:$0xff]
    %v1095 = vld [vmem:[%s151 + $0x940] sm:$0xff]
    %v1096 = vld [vmem:[%s151 + $0x948] sm:$0xff]
    %v1097 = vld [vmem:[%s151 + $0x950] sm:$0xff]
    %v1098 = vld [vmem:[%s151 + $0x958] sm:$0xff]
    %v1099 = vld [vmem:[%s151 + $0x960] sm:$0xff]
    %v1100 = vld [vmem:[%s151 + $0x968] sm:$0xff]
    %v1101 = vld [vmem:[%s151 + $0x970] sm:$0xff]
    %v1102 = vld [vmem:[%s151 + $0x978] sm:$0xff]
    %v1103 = vld [vmem:[%s151 + $0x980] sm:$0xff]
    %v1104 = vld [vmem:[%s151 + $0x988] sm:$0xff]
    %v1105 = vld [vmem:[%s151 + $0x990] sm:$0xff]
    %v1106 = vld [vmem:[%s151 + $0x998] sm:$0xff]
    %v1107 = vld [vmem:[%s151 + $0x9a0] sm:$0xff]
    %v1108 = vld [vmem:[%s151 + $0x9a8] sm:$0xff]
    %v1109 = vld [vmem:[%s151 + $0x9b0] sm:$0xff]
    %v1110 = vld [vmem:[%s151 + $0x9b8] sm:$0xff]
    %v1111 = vld [vmem:[%s151 + $0x9c0] sm:$0xff]
    %v1112 = vld [vmem:[%s151 + $0x9c8] sm:$0xff]
    %v1113 = vld [vmem:[%s151 + $0x9d0] sm:$0xff]
    %v1114 = vld [vmem:[%s151 + $0x9d8] sm:$0xff]
    %v1115 = vld [vmem:[%s151 + $0x9e0] sm:$0xff]
    %v1116 = vld [vmem:[%s151 + $0x9e8] sm:$0xff]
    %v1117 = vld [vmem:[%s151 + $0x9f0] sm:$0xff]
    %v1118 = vld [vmem:[%s151 + $0x9f8] sm:$0xff]
    %v1119 = vld [vmem:[%s151 + $0xa00] sm:$0xff]
    %v1120 = vld [vmem:[%s151 + $0xa08] sm:$0xff]
    %v1121 = vld [vmem:[%s151 + $0xa10] sm:$0xff]
    %v1122 = vld [vmem:[%s151 + $0xa18] sm:$0xff]
    %v1123 = vld [vmem:[%s151 + $0xa20] sm:$0xff]
    %v1124 = vld [vmem:[%s151 + $0xa28] sm:$0xff]
    %v1125 = vld [vmem:[%s151 + $0xa30] sm:$0xff]
    %v1126 = vld [vmem:[%s151 + $0xa38] sm:$0xff]
    %v1127 = vld [vmem:[%s151 + $0xa40] sm:$0xff]
    %v1128 = vld [vmem:[%s151 + $0xa48] sm:$0xff]
    %v1129 = vld [vmem:[%s151 + $0xa50] sm:$0xff]
    %v1130 = vld [vmem:[%s151 + $0xa58] sm:$0xff]
    %v1131 = vld [vmem:[%s151 + $0xa60] sm:$0xff]
    %v1132 = vld [vmem:[%s151 + $0xa68] sm:$0xff]
    %v1133 = vld [vmem:[%s151 + $0xa70] sm:$0xff]
    %v1134 = vld [vmem:[%s151 + $0xa78] sm:$0xff]
    %v1135 = vld [vmem:[%s151 + $0xa80] sm:$0xff]
    %v1136 = vld [vmem:[%s151 + $0xa88] sm:$0xff]
    %v1137 = vld [vmem:[%s151 + $0xa90] sm:$0xff]
    %v1138 = vld [vmem:[%s151 + $0xa98] sm:$0xff]
    %v1139 = vld [vmem:[%s151 + $0xaa0] sm:$0xff]
    %v1140 = vld [vmem:[%s151 + $0xaa8] sm:$0xff]
    %v1141 = vld [vmem:[%s151 + $0xab0] sm:$0xff]
    %v1142 = vld [vmem:[%s151 + $0xab8] sm:$0xff]
    %v1143 = vld [vmem:[%s151 + $0xac0] sm:$0xff]
    %v1144 = vld [vmem:[%s151 + $0xac8] sm:$0xff]
    %v1145 = vld [vmem:[%s151 + $0xad0] sm:$0xff]
    %v1146 = vld [vmem:[%s151 + $0xad8] sm:$0xff]
    %v1147 = vld [vmem:[%s151 + $0xae0] sm:$0xff]
    %v1148 = vld [vmem:[%s151 + $0xae8] sm:$0xff]
    %v1149 = vld [vmem:[%s151 + $0xaf0] sm:$0xff]
    %v1150 = vld [vmem:[%s151 + $0xaf8] sm:$0xff]
    %v1151 = vld [vmem:[%s151 + $0xb00] sm:$0xff]
    %v1152 = vld [vmem:[%s151 + $0xb08] sm:$0xff]
    %v1153 = vld [vmem:[%s151 + $0xb10] sm:$0xff]
    %v1154 = vld [vmem:[%s151 + $0xb18] sm:$0xff]
    %v1155 = vld [vmem:[%s151 + $0xb20] sm:$0xff]
    %v1156 = vld [vmem:[%s151 + $0xb28] sm:$0xff]
    %v1157 = vld [vmem:[%s151 + $0xb30] sm:$0xff]
    %v1158 = vld [vmem:[%s151 + $0xb38] sm:$0xff]
    %v1159 = vld [vmem:[%s151 + $0xb40] sm:$0xff]
    %v1160 = vld [vmem:[%s151 + $0xb48] sm:$0xff]
    %v1161 = vld [vmem:[%s151 + $0xb50] sm:$0xff]
    %v1162 = vld [vmem:[%s151 + $0xb58] sm:$0xff]
    %v1163 = vld [vmem:[%s151 + $0xb60] sm:$0xff]
    %v1164 = vld [vmem:[%s151 + $0xb68] sm:$0xff]
    %v1165 = vld [vmem:[%s151 + $0xb70] sm:$0xff]
    %v1166 = vld [vmem:[%s151 + $0xb78] sm:$0xff]
    %v1167 = vld [vmem:[%s151 + $0xb80] sm:$0xff]
    %v1168 = vld [vmem:[%s151 + $0xb88] sm:$0xff]
    %v1169 = vld [vmem:[%s151 + $0xb90] sm:$0xff]
    %v1170 = vld [vmem:[%s151 + $0xb98] sm:$0xff]
    %v1171 = vld [vmem:[%s151 + $0xba0] sm:$0xff]
    %v1172 = vld [vmem:[%s151 + $0xba8] sm:$0xff]
    %v1173 = vld [vmem:[%s151 + $0xbb0] sm:$0xff]
    %v1174 = vld [vmem:[%s151 + $0xbb8] sm:$0xff]
    %v1175 = vld [vmem:[%s151 + $0xbc0] sm:$0xff]
    %v1176 = vld [vmem:[%s151 + $0xbc8] sm:$0xff]
    %v1177 = vld [vmem:[%s151 + $0xbd0] sm:$0xff]
    %v1178 = vld [vmem:[%s151 + $0xbd8] sm:$0xff]
    %v1179 = vld [vmem:[%s151 + $0xbe0] sm:$0xff]
    %v1180 = vld [vmem:[%s151 + $0xbe8] sm:$0xff]
    %v1181 = vld [vmem:[%s151 + $0xbf0] sm:$0xff]
    %v1182 = vld [vmem:[%s151 + $0xbf8] sm:$0xff]
    %v1183 = vld [vmem:[%s151 + $0xc00] sm:$0xff]
    %v1184 = vld [vmem:[%s151 + $0xc08] sm:$0xff]
    %v1185 = vld [vmem:[%s151 + $0xc10] sm:$0xff]
    %v1186 = vld [vmem:[%s151 + $0xc18] sm:$0xff]
    %v1187 = vld [vmem:[%s151 + $0xc20] sm:$0xff]
    %v1188 = vld [vmem:[%s151 + $0xc28] sm:$0xff]
    %v1189 = vld [vmem:[%s151 + $0xc30] sm:$0xff]
    %v1190 = vld [vmem:[%s151 + $0xc38] sm:$0xff]
    %v1191 = vld [vmem:[%s151 + $0xc40] sm:$0xff]
    %v1192 = vld [vmem:[%s151 + $0xc48] sm:$0xff]
    %v1193 = vld [vmem:[%s151 + $0xc50] sm:$0xff]
    %v1194 = vld [vmem:[%s151 + $0xc58] sm:$0xff]
    %v1195 = vld [vmem:[%s151 + $0xc60] sm:$0xff]
    %v1196 = vld [vmem:[%s151 + $0xc68] sm:$0xff]
    %v1197 = vld [vmem:[%s151 + $0xc70] sm:$0xff]
    %v1198 = vld [vmem:[%s151 + $0xc78] sm:$0xff]
    %v1199 = vld [vmem:[%s151 + $0xc80] sm:$0xff]
    %v1200 = vld [vmem:[%s151 + $0xc88] sm:$0xff]
    %v1201 = vld [vmem:[%s151 + $0xc90] sm:$0xff]
    %v1202 = vld [vmem:[%s151 + $0xc98] sm:$0xff]
    %v1203 = vld [vmem:[%s151 + $0xca0] sm:$0xff]
    %v1204 = vld [vmem:[%s151 + $0xca8] sm:$0xff]
    %v1205 = vld [vmem:[%s151 + $0xcb0] sm:$0xff]
    %v1206 = vld [vmem:[%s151 + $0xcb8] sm:$0xff]
    %v1207 = vld [vmem:[%s151 + $0xcc0] sm:$0xff]
    %v1208 = vld [vmem:[%s151 + $0xcc8] sm:$0xff]
    %v1209 = vld [vmem:[%s151 + $0xcd0] sm:$0xff]
    %v1210 = vld [vmem:[%s151 + $0xcd8] sm:$0xff]
    %v1211 = vld [vmem:[%s151 + $0xce0] sm:$0xff]
    %v1212 = vld [vmem:[%s151 + $0xce8] sm:$0xff]
    %v1213 = vld [vmem:[%s151 + $0xcf0] sm:$0xff]
    %v1214 = vld [vmem:[%s151 + $0xcf8] sm:$0xff]
    %v1215 = vld [vmem:[%s151 + $0xd00] sm:$0xff]
    %v1216 = vld [vmem:[%s151 + $0xd08] sm:$0xff]
    %v1217 = vld [vmem:[%s151 + $0xd10] sm:$0xff]
    %v1218 = vld [vmem:[%s151 + $0xd18] sm:$0xff]
    %v1219 = vld [vmem:[%s151 + $0xd20] sm:$0xff]
    %v1220 = vld [vmem:[%s151 + $0xd28] sm:$0xff]
    %v1221 = vld [vmem:[%s151 + $0xd30] sm:$0xff]
    %v1222 = vld [vmem:[%s151 + $0xd38] sm:$0xff]
    %v1223 = vld [vmem:[%s151 + $0xd40] sm:$0xff]
    %v1224 = vld [vmem:[%s151 + $0xd48] sm:$0xff]
    %v1225 = vld [vmem:[%s151 + $0xd50] sm:$0xff]
    %v1226 = vld [vmem:[%s151 + $0xd58] sm:$0xff]
    %v1227 = vld [vmem:[%s151 + $0xd60] sm:$0xff]
    %v1228 = vld [vmem:[%s151 + $0xd68] sm:$0xff]
    %v1229 = vld [vmem:[%s151 + $0xd70] sm:$0xff]
    %v1230 = vld [vmem:[%s151 + $0xd78] sm:$0xff]
    %v1231 = vld [vmem:[%s151 + $0xd80] sm:$0xff]
    %v1232 = vld [vmem:[%s151 + $0xd88] sm:$0xff]
    %v1233 = vld [vmem:[%s151 + $0xd90] sm:$0xff]
    %v1234 = vld [vmem:[%s151 + $0xd98] sm:$0xff]
    %v1235 = vld [vmem:[%s151 + $0xda0] sm:$0xff]
    %v1236 = vld [vmem:[%s151 + $0xda8] sm:$0xff]
    %v1237 = vld [vmem:[%s151 + $0xdb0] sm:$0xff]
    %v1238 = vld [vmem:[%s151 + $0xdb8] sm:$0xff]
    %v1239 = vld [vmem:[%s151 + $0xdc0] sm:$0xff]
    %v1240 = vld [vmem:[%s151 + $0xdc8] sm:$0xff]
    %v1241 = vld [vmem:[%s151 + $0xdd0] sm:$0xff]
    %v1242 = vld [vmem:[%s151 + $0xdd8] sm:$0xff]
    %v1243 = vld [vmem:[%s151 + $0xde0] sm:$0xff]
    %v1244 = vld [vmem:[%s151 + $0xde8] sm:$0xff]
    %v1245 = vld [vmem:[%s151 + $0xdf0] sm:$0xff]
    %v1246 = vld [vmem:[%s151 + $0xdf8] sm:$0xff]
    %v1247 = vld [vmem:[%s151 + $0xe00] sm:$0xff]
    %v1248 = vld [vmem:[%s151 + $0xe08] sm:$0xff]
    %v1249 = vld [vmem:[%s151 + $0xe10] sm:$0xff]
    %v1250 = vld [vmem:[%s151 + $0xe18] sm:$0xff]
    %v1251 = vld [vmem:[%s151 + $0xe20] sm:$0xff]
    %v1252 = vld [vmem:[%s151 + $0xe28] sm:$0xff]
    %v1253 = vld [vmem:[%s151 + $0xe30] sm:$0xff]
    %v1254 = vld [vmem:[%s151 + $0xe38] sm:$0xff]
    %v1255 = vld [vmem:[%s151 + $0xe40] sm:$0xff]
    %v1256 = vld [vmem:[%s151 + $0xe48] sm:$0xff]
    %v1257 = vld [vmem:[%s151 + $0xe50] sm:$0xff]
    %v1258 = vld [vmem:[%s151 + $0xe58] sm:$0xff]
    %v1259 = vld [vmem:[%s151 + $0xe60] sm:$0xff]
    %v1260 = vld [vmem:[%s151 + $0xe68] sm:$0xff]
    %v1261 = vld [vmem:[%s151 + $0xe70] sm:$0xff]
    %v1262 = vld [vmem:[%s151 + $0xe78] sm:$0xff]
    %v1263 = vld [vmem:[%s151 + $0xe80] sm:$0xff]
    %v1264 = vld [vmem:[%s151 + $0xe88] sm:$0xff]
    %v1265 = vld [vmem:[%s151 + $0xe90] sm:$0xff]
    %v1266 = vld [vmem:[%s151 + $0xe98] sm:$0xff]
    %v1267 = vld [vmem:[%s151 + $0xea0] sm:$0xff]
    %v1268 = vld [vmem:[%s151 + $0xea8] sm:$0xff]
    %v1269 = vld [vmem:[%s151 + $0xeb0] sm:$0xff]
    %v1270 = vld [vmem:[%s151 + $0xeb8] sm:$0xff]
    %v1271 = vld [vmem:[%s151 + $0xec0] sm:$0xff]
    %v1272 = vld [vmem:[%s151 + $0xec8] sm:$0xff]
    %v1273 = vld [vmem:[%s151 + $0xed0] sm:$0xff]
    %v1274 = vld [vmem:[%s151 + $0xed8] sm:$0xff]
    %v1275 = vld [vmem:[%s151 + $0xee0] sm:$0xff]
    %v1276 = vld [vmem:[%s151 + $0xee8] sm:$0xff]
    %v1277 = vld [vmem:[%s151 + $0xef0] sm:$0xff]
    %v1278 = vld [vmem:[%s151 + $0xef8] sm:$0xff]
    %v1279 = vld [vmem:[%s151 + $0xf00] sm:$0xff]
    %v1280 = vld [vmem:[%s151 + $0xf08] sm:$0xff]
    %v1281 = vld [vmem:[%s151 + $0xf10] sm:$0xff]
    %v1282 = vld [vmem:[%s151 + $0xf18] sm:$0xff]
    %v1283 = vld [vmem:[%s151 + $0xf20] sm:$0xff]
    %v1284 = vld [vmem:[%s151 + $0xf28] sm:$0xff]
    %v1285 = vld [vmem:[%s151 + $0xf30] sm:$0xff]
    %v1286 = vld [vmem:[%s151 + $0xf38] sm:$0xff]
    %v1287 = vld [vmem:[%s151 + $0xf40] sm:$0xff]
    %v1288 = vld [vmem:[%s151 + $0xf48] sm:$0xff]
    %v1289 = vld [vmem:[%s151 + $0xf50] sm:$0xff]
    %v1290 = vld [vmem:[%s151 + $0xf58] sm:$0xff]
    %v1291 = vld [vmem:[%s151 + $0xf60] sm:$0xff]
    %v1292 = vld [vmem:[%s151 + $0xf68] sm:$0xff]
    %v1293 = vld [vmem:[%s151 + $0xf70] sm:$0xff]
    %v1294 = vld [vmem:[%s151 + $0xf78] sm:$0xff]
    %v1295 = vld [vmem:[%s151 + $0xf80] sm:$0xff]
    %v1296 = vld [vmem:[%s151 + $0xf88] sm:$0xff]
    %v1297 = vld [vmem:[%s151 + $0xf90] sm:$0xff]
    %v1298 = vld [vmem:[%s151 + $0xf98] sm:$0xff]
    %v1299 = vld [vmem:[%s151 + $0xfa0] sm:$0xff]
    %v1300 = vld [vmem:[%s151 + $0xfa8] sm:$0xff]
    %v1301 = vld [vmem:[%s151 + $0xfb0] sm:$0xff]
    %v1302 = vld [vmem:[%s151 + $0xfb8] sm:$0xff]
    %v1303 = vld [vmem:[%s151 + $0xfc0] sm:$0xff]
    %v1304 = vld [vmem:[%s151 + $0xfc8] sm:$0xff]
    %v1305 = vld [vmem:[%s151 + $0xfd0] sm:$0xff]
    %v1306 = vld [vmem:[%s151 + $0xfd8] sm:$0xff]
    %v1307 = vld [vmem:[%s151 + $0xfe0] sm:$0xff]
    %v1308 = vld [vmem:[%s151 + $0xfe8] sm:$0xff]
    %v1309 = vld [vmem:[%s151 + $0xff0] sm:$0xff]
    %v1310 = vld [vmem:[%s151 + $0xff8] sm:$0xff]
    %v1311 = vpack.c.bf16 %v195, %v195
    %v1312 = vpack.c.bf16 %v196, %v196
    %v1313 = vpack.c.bf16 %v197, %v197
    %v1314 = vpack.c.bf16 %v198, %v198
    %v1315 = vpack.c.bf16 %v199, %v199
    %v1316 = vpack.c.bf16 %v200, %v200
    %v1317 = vpack.c.bf16 %v201, %v201
    %v1318 = vpack.c.bf16 %v202, %v202
    %1319 = vmatprep.subr.bf16.mxu0 %v800
    %1320 = vmatpush1.bf16.msra.mxu0 %v799
    %1321 = vmatprep.subr.bf16.mxu0 %v808
    %1322 = vmatpush1.bf16.msra.mxu0 %v807
    %1323 = vmatprep.subr.bf16.mxu0 %v816
    %1324 = vmatpush1.bf16.msra.mxu0 %v815
    %1325 = vmatprep.subr.bf16.mxu0 %v824
    %1326 = vmatpush1.bf16.msra.mxu0 %v823
    %1327 = vmatprep.subr.bf16.mxu0 %v832
    %1328 = vmatpush1.bf16.msra.mxu0 %v831
    %1329 = vmatprep.subr.bf16.mxu0 %v840
    %1330 = vmatpush1.bf16.msra.mxu0 %v839
    %1331 = vmatprep.subr.bf16.mxu0 %v848
    %1332 = vmatpush1.bf16.msra.mxu0 %v847
    %1333 = vmatprep.subr.bf16.mxu0 %v856
    %1334 = vmatpush1.bf16.msra.mxu0 %v855
    %1335 = vmatprep.subr.bf16.mxu0 %v864
    %1336 = vmatpush1.bf16.msra.mxu0 %v863
    %1337 = vmatprep.subr.bf16.mxu0 %v872
    %1338 = vmatpush1.bf16.msra.mxu0 %v871
    %1339 = vmatprep.subr.bf16.mxu0 %v880
    %1340 = vmatpush1.bf16.msra.mxu0 %v879
    %1341 = vmatprep.subr.bf16.mxu0 %v888
    %1342 = vmatpush1.bf16.msra.mxu0 %v887
    %1343 = vmatprep.subr.bf16.mxu0 %v896
    %1344 = vmatpush1.bf16.msra.mxu0 %v895
    %1345 = vmatprep.subr.bf16.mxu0 %v904
    %1346 = vmatpush1.bf16.msra.mxu0 %v903
    %1347 = vmatprep.subr.bf16.mxu0 %v912
    %1348 = vmatpush1.bf16.msra.mxu0 %v911
    %1349 = vmatprep.subr.bf16.mxu0 %v920
    %1350 = vmatpush1.bf16.msra.mxu0 %v919
    %1351 = vmatprep.mubr.bf16.mxu0 %v1312
    %1352 = vmatmul.mubr.bf16.gmra.mrb[0].mxu0 %v1311
    %v1353 = vpop.f32.mrb[0].mxu0
    %v1354 = vadd.f32 0.0, %v1353
    %v1355 = vpop.f32.mrb[0].mxu0
    %v1356 = vadd.f32 0.0, %v1355
    %v1357 = vpop.f32.mrb[0].mxu0
    %v1358 = vpop.f32.mrb[0].mxu0
    %1359 = vdwg.mxu0
    %1360 = vmatprep.subr.bf16.mxu0 %v928
    %1361 = vmatpush1.bf16.msra.mxu0 %v927
    %1362 = vmatprep.subr.bf16.mxu0 %v936
    %1363 = vmatpush1.bf16.msra.mxu0 %v935
    %1364 = vmatprep.subr.bf16.mxu0 %v944
    %1365 = vmatpush1.bf16.msra.mxu0 %v943
    %1366 = vmatprep.subr.bf16.mxu0 %v952
    %1367 = vmatpush1.bf16.msra.mxu0 %v951
    %1368 = vmatprep.subr.bf16.mxu0 %v960
    %1369 = vmatpush1.bf16.msra.mxu0 %v959
    %1370 = vmatprep.subr.bf16.mxu0 %v968
    %1371 = vmatpush1.bf16.msra.mxu0 %v967
    %1372 = vmatprep.subr.bf16.mxu0 %v976
    %1373 = vmatpush1.bf16.msra.mxu0 %v975
    %1374 = vmatprep.subr.bf16.mxu0 %v984
    %1375 = vmatpush1.bf16.msra.mxu0 %v983
    %1376 = vmatprep.subr.bf16.mxu0 %v992
    %1377 = vmatpush1.bf16.msra.mxu0 %v991
    %1378 = vmatprep.subr.bf16.mxu0 %v1000
    %1379 = vmatpush1.bf16.msra.mxu0 %v999
    %1380 = vmatprep.subr.bf16.mxu0 %v1008
    %1381 = vmatpush1.bf16.msra.mxu0 %v1007
    %1382 = vmatprep.subr.bf16.mxu0 %v1016
    %1383 = vmatpush1.bf16.msra.mxu0 %v1015
    %1384 = vmatprep.subr.bf16.mxu0 %v1024
    %1385 = vmatpush1.bf16.msra.mxu0 %v1023
    %1386 = vmatprep.subr.bf16.mxu0 %v1032
    %1387 = vmatpush1.bf16.msra.mxu0 %v1031
    %1388 = vmatprep.subr.bf16.mxu0 %v1040
    %1389 = vmatpush1.bf16.msra.mxu0 %v1039
    %1390 = vmatprep.subr.bf16.mxu0 %v1048
    %1391 = vmatpush1.bf16.msra.mxu0 %v1047
    %1392 = vmatprep.mubr.bf16.mxu0 %v1314
    %1393 = vmatmul.mubr.bf16.gmra.mrb[0].mxu0 %v1313
    %v1394 = vpop.f32.mrb[0].mxu0
    %v1395 = vadd.f32 %v1354, %v1394
    %v1396 = vpop.f32.mrb[0].mxu0
    %v1397 = vadd.f32 %v1356, %v1396
    %v1398 = vpop.f32.mrb[0].mxu0
    %v1399 = vpop.f32.mrb[0].mxu0
    %1400 = vdwg.mxu0
    %1401 = vmatprep.subr.bf16.mxu0 %v1056
    %1402 = vmatpush1.bf16.msra.mxu0 %v1055
    %1403 = vmatprep.subr.bf16.mxu0 %v1064
    %1404 = vmatpush1.bf16.msra.mxu0 %v1063
    %1405 = vmatprep.subr.bf16.mxu0 %v1072
    %1406 = vmatpush1.bf16.msra.mxu0 %v1071
    %1407 = vmatprep.subr.bf16.mxu0 %v1080
    %1408 = vmatpush1.bf16.msra.mxu0 %v1079
    %1409 = vmatprep.subr.bf16.mxu0 %v1088
    %1410 = vmatpush1.bf16.msra.mxu0 %v1087
    %1411 = vmatprep.subr.bf16.mxu0 %v1096
    %1412 = vmatpush1.bf16.msra.mxu0 %v1095
    %1413 = vmatprep.subr.bf16.mxu0 %v1104
    %1414 = vmatpush1.bf16.msra.mxu0 %v1103
    %1415 = vmatprep.subr.bf16.mxu0 %v1112
    %1416 = vmatpush1.bf16.msra.mxu0 %v1111
    %1417 = vmatprep.subr.bf16.mxu0 %v1120
    %1418 = vmatpush1.bf16.msra.mxu0 %v1119
    %1419 = vmatprep.subr.bf16.mxu0 %v1128
    %1420 = vmatpush1.bf16.msra.mxu0 %v1127
    %1421 = vmatprep.subr.bf16.mxu0 %v1136
    %1422 = vmatpush1.bf16.msra.mxu0 %v1135
    %1423 = vmatprep.subr.bf16.mxu0 %v1144
    %1424 = vmatpush1.bf16.msra.mxu0 %v1143
    %1425 = vmatprep.subr.bf16.mxu0 %v1152
    %1426 = vmatpush1.bf16.msra.mxu0 %v1151
    %1427 = vmatprep.subr.bf16.mxu0 %v1160
    %1428 = vmatpush1.bf16.msra.mxu0 %v1159
    %1429 = vmatprep.subr.bf16.mxu0 %v1168
    %1430 = vmatpush1.bf16.msra.mxu0 %v1167
    %1431 = vmatprep.subr.bf16.mxu0 %v1176
    %1432 = vmatpush1.bf16.msra.mxu0 %v1175
    %1433 = vmatprep.mubr.bf16.mxu0 %v1316
    %1434 = vmatmul.mubr.bf16.gmra.mrb[0].mxu0 %v1315
    %v1435 = vpop.f32.mrb[0].mxu0
    %v1436 = vadd.f32 %v1395, %v1435
    %v1437 = vpop.f32.mrb[0].mxu0
    %v1438 = vadd.f32 %v1397, %v1437
    %v1439 = vpop.f32.mrb[0].mxu0
    %v1440 = vpop.f32.mrb[0].mxu0
    %1441 = vdwg.mxu0
    %1442 = vmatprep.subr.bf16.mxu0 %v1184
    %1443 = vmatpush1.bf16.msra.mxu0 %v1183
    %1444 = vmatprep.subr.bf16.mxu0 %v1192
    %1445 = vmatpush1.bf16.msra.mxu0 %v1191
    %1446 = vmatprep.subr.bf16.mxu0 %v1200
    %1447 = vmatpush1.bf16.msra.mxu0 %v1199
    %1448 = vmatprep.subr.bf16.mxu0 %v1208
    %1449 = vmatpush1.bf16.msra.mxu0 %v1207
    %1450 = vmatprep.subr.bf16.mxu0 %v1216
    %1451 = vmatpush1.bf16.msra.mxu0 %v1215
    %1452 = vmatprep.subr.bf16.mxu0 %v1224
    %1453 = vmatpush1.bf16.msra.mxu0 %v1223
    %1454 = vmatprep.subr.bf16.mxu0 %v1232
    %1455 = vmatpush1.bf16.msra.mxu0 %v1231
    %1456 = vmatprep.subr.bf16.mxu0 %v1240
    %1457 = vmatpush1.bf16.msra.mxu0 %v1239
    %1458 = vmatprep.subr.bf16.mxu0 %v1248
    %1459 = vmatpush1.bf16.msra.mxu0 %v1247
    %1460 = vmatprep.subr.bf16.mxu0 %v1256
    %1461 = vmatpush1.bf16.msra.mxu0 %v1255
    %1462 = vmatprep.subr.bf16.mxu0 %v1264
    %1463 = vmatpush1.bf16.msra.mxu0 %v1263
    %1464 = vmatprep.subr.bf16.mxu0 %v1272
    %1465 = vmatpush1.bf16.msra.mxu0 %v1271
    %1466 = vmatprep.subr.bf16.mxu0 %v1280
    %1467 = vmatpush1.bf16.msra.mxu0 %v1279
    %1468 = vmatprep.subr.bf16.mxu0 %v1288
    %1469 = vmatpush1.bf16.msra.mxu0 %v1287
    %1470 = vmatprep.subr.bf16.mxu0 %v1296
    %1471 = vmatpush1.bf16.msra.mxu0 %v1295
    %1472 = vmatprep.subr.bf16.mxu0 %v1304
    %1473 = vmatpush1.bf16.msra.mxu0 %v1303
    %1474 = vmatprep.mubr.bf16.mxu0 %v1318
    %1475 = vmatmul.mubr.bf16.gmra.mrb[0].mxu0 %v1317
    %v1476 = vpop.f32.mrb[0].mxu0
    %v1477 = vadd.f32 %v1436, %v1476
    %v1478 = vpop.f32.mrb[0].mxu0
    %v1479 = vadd.f32 %v1438, %v1478
    %v1480 = vpop.f32.mrb[0].mxu0
    %v1481 = vpop.f32.mrb[0].mxu0
    %1482 = vdwg.mxu0
    %1483 = vmatprep.subr.bf16.mxu0 %v802
    %1484 = vmatpush1.bf16.msra.mxu0 %v801
    %1485 = vmatprep.subr.bf16.mxu0 %v810
    %1486 = vmatpush1.bf16.msra.mxu0 %v809
    %1487 = vmatprep.subr.bf16.mxu0 %v818
    %1488 = vmatpush1.bf16.msra.mxu0 %v817
    %1489 = vmatprep.subr.bf16.mxu0 %v826
    %1490 = vmatpush1.bf16.msra.mxu0 %v825
    %1491 = vmatprep.subr.bf16.mxu0 %v834
    %1492 = vmatpush1.bf16.msra.mxu0 %v833
    %1493 = vmatprep.subr.bf16.mxu0 %v842
    %1494 = vmatpush1.bf16.msra.mxu0 %v841
    %1495 = vmatprep.subr.bf16.mxu0 %v850
    %1496 = vmatpush1.bf16.msra.mxu0 %v849
    %1497 = vmatprep.subr.bf16.mxu0 %v858
    %1498 = vmatpush1.bf16.msra.mxu0 %v857
    %1499 = vmatprep.subr.bf16.mxu0 %v866
    %1500 = vmatpush1.bf16.msra.mxu0 %v865
    %1501 = vmatprep.subr.bf16.mxu0 %v874
    %1502 = vmatpush1.bf16.msra.mxu0 %v873
    %1503 = vmatprep.subr.bf16.mxu0 %v882
    %1504 = vmatpush1.bf16.msra.mxu0 %v881
    %1505 = vmatprep.subr.bf16.mxu0 %v890
    %1506 = vmatpush1.bf16.msra.mxu0 %v889
    %1507 = vmatprep.subr.bf16.mxu0 %v898
    %1508 = vmatpush1.bf16.msra.mxu0 %v897
    %1509 = vmatprep.subr.bf16.mxu0 %v906
    %1510 = vmatpush1.bf16.msra.mxu0 %v905
    %1511 = vmatprep.subr.bf16.mxu0 %v914
    %1512 = vmatpush1.bf16.msra.mxu0 %v913
    %1513 = vmatprep.subr.bf16.mxu0 %v922
    %1514 = vmatpush1.bf16.msra.mxu0 %v921
    %1515 = vmatprep.mubr.bf16.mxu0 %v1312
    %1516 = vmatmul.mubr.bf16.gmra.mrb[0].mxu0 %v1311
    %v1517 = vpop.f32.mrb[0].mxu0
    %v1518 = vadd.f32 0.0, %v1517
    %v1519 = vpop.f32.mrb[0].mxu0
    %v1520 = vadd.f32 0.0, %v1519
    %v1521 = vpop.f32.mrb[0].mxu0
    %v1522 = vpop.f32.mrb[0].mxu0
    %1523 = vdwg.mxu0
    %1524 = vmatprep.subr.bf16.mxu0 %v930
    %1525 = vmatpush1.bf16.msra.mxu0 %v929
    %1526 = vmatprep.subr.bf16.mxu0 %v938
    %1527 = vmatpush1.bf16.msra.mxu0 %v937
    %1528 = vmatprep.subr.bf16.mxu0 %v946
    %1529 = vmatpush1.bf16.msra.mxu0 %v945
    %1530 = vmatprep.subr.bf16.mxu0 %v954
    %1531 = vmatpush1.bf16.msra.mxu0 %v953
    %1532 = vmatprep.subr.bf16.mxu0 %v962
    %1533 = vmatpush1.bf16.msra.mxu0 %v961
    %1534 = vmatprep.subr.bf16.mxu0 %v970
    %1535 = vmatpush1.bf16.msra.mxu0 %v969
    %1536 = vmatprep.subr.bf16.mxu0 %v978
    %1537 = vmatpush1.bf16.msra.mxu0 %v977
    %1538 = vmatprep.subr.bf16.mxu0 %v986
    %1539 = vmatpush1.bf16.msra.mxu0 %v985
    %1540 = vmatprep.subr.bf16.mxu0 %v994
    %1541 = vmatpush1.bf16.msra.mxu0 %v993
    %1542 = vmatprep.subr.bf16.mxu0 %v1002
    %1543 = vmatpush1.bf16.msra.mxu0 %v1001
    %1544 = vmatprep.subr.bf16.mxu0 %v1010
    %1545 = vmatpush1.bf16.msra.mxu0 %v1009
    %1546 = vmatprep.subr.bf16.mxu0 %v1018
    %1547 = vmatpush1.bf16.msra.mxu0 %v1017
    %1548 = vmatprep.subr.bf16.mxu0 %v1026
    %1549 = vmatpush1.bf16.msra.mxu0 %v1025
    %1550 = vmatprep.subr.bf16.mxu0 %v1034
    %1551 = vmatpush1.bf16.msra.mxu0 %v1033
    %1552 = vmatprep.subr.bf16.mxu0 %v1042
    %1553 = vmatpush1.bf16.msra.mxu0 %v1041
    %1554 = vmatprep.subr.bf16.mxu0 %v1050
    %1555 = vmatpush1.bf16.msra.mxu0 %v1049
    %1556 = vmatprep.mubr.bf16.mxu0 %v1314
    %1557 = vmatmul.mubr.bf16.gmra.mrb[0].mxu0 %v1313
    %v1558 = vpop.f32.mrb[0].mxu0
    %v1559 = vadd.f32 %v1518, %v1558
    %v1560 = vpop.f32.mrb[0].mxu0
    %v1561 = vadd.f32 %v1520, %v1560
    %v1562 = vpop.f32.mrb[0].mxu0
    %v1563 = vpop.f32.mrb[0].mxu0
    %1564 = vdwg.mxu0
    %1565 = vmatprep.subr.bf16.mxu0 %v1058
    %1566 = vmatpush1.bf16.msra.mxu0 %v1057
    %1567 = vmatprep.subr.bf16.mxu0 %v1066
    %1568 = vmatpush1.bf16.msra.mxu0 %v1065
    %1569 = vmatprep.subr.bf16.mxu0 %v1074
    %1570 = vmatpush1.bf16.msra.mxu0 %v1073
    %1571 = vmatprep.subr.bf16.mxu0 %v1082
    %1572 = vmatpush1.bf16.msra.mxu0 %v1081
    %1573 = vmatprep.subr.bf16.mxu0 %v1090
    %1574 = vmatpush1.bf16.msra.mxu0 %v1089
    %1575 = vmatprep.subr.bf16.mxu0 %v1098
    %1576 = vmatpush1.bf16.msra.mxu0 %v1097
    %1577 = vmatprep.subr.bf16.mxu0 %v1106
    %1578 = vmatpush1.bf16.msra.mxu0 %v1105
    %1579 = vmatprep.subr.bf16.mxu0 %v1114
    %1580 = vmatpush1.bf16.msra.mxu0 %v1113
    %1581 = vmatprep.subr.bf16.mxu0 %v1122
    %1582 = vmatpush1.bf16.msra.mxu0 %v1121
    %1583 = vmatprep.subr.bf16.mxu0 %v1130
    %1584 = vmatpush1.bf16.msra.mxu0 %v1129
    %1585 = vmatprep.subr.bf16.mxu0 %v1138
    %1586 = vmatpush1.bf16.msra.mxu0 %v1137
    %1587 = vmatprep.subr.bf16.mxu0 %v1146
    %1588 = vmatpush1.bf16.msra.mxu0 %v1145
    %1589 = vmatprep.subr.bf16.mxu0 %v1154
    %1590 = vmatpush1.bf16.msra.mxu0 %v1153
    %1591 = vmatprep.subr.bf16.mxu0 %v1162
    %1592 = vmatpush1.bf16.msra.mxu0 %v1161
    %1593 = vmatprep.subr.bf16.mxu0 %v1170
    %1594 = vmatpush1.bf16.msra.mxu0 %v1169
    %1595 = vmatprep.subr.bf16.mxu0 %v1178
    %1596 = vmatpush1.bf16.msra.mxu0 %v1177
    %1597 = vmatprep.mubr.bf16.mxu0 %v1316
    %1598 = vmatmul.mubr.bf16.gmra.mrb[0].mxu0 %v1315
    %v1599 = vpop.f32.mrb[0].mxu0
    %v1600 = vadd.f32 %v1559, %v1599
    %v1601 = vpop.f32.mrb[0].mxu0
    %v1602 = vadd.f32 %v1561, %v1601
    %v1603 = vpop.f32.mrb[0].mxu0
    %v1604 = vpop.f32.mrb[0].mxu0
    %1605 = vdwg.mxu0
    %1606 = vmatprep.subr.bf16.mxu0 %v1186
    %1607 = vmatpush1.bf16.msra.mxu0 %v1185
    %1608 = vmatprep.subr.bf16.mxu0 %v1194
    %1609 = vmatpush1.bf16.msra.mxu0 %v1193
    %1610 = vmatprep.subr.bf16.mxu0 %v1202
    %1611 = vmatpush1.bf16.msra.mxu0 %v1201
    %1612 = vmatprep.subr.bf16.mxu0 %v1210
    %1613 = vmatpush1.bf16.msra.mxu0 %v1209
    %1614 = vmatprep.subr.bf16.mxu0 %v1218
    %1615 = vmatpush1.bf16.msra.mxu0 %v1217
    %1616 = vmatprep.subr.bf16.mxu0 %v1226
    %1617 = vmatpush1.bf16.msra.mxu0 %v1225
    %1618 = vmatprep.subr.bf16.mxu0 %v1234
    %1619 = vmatpush1.bf16.msra.mxu0 %v1233
    %1620 = vmatprep.subr.bf16.mxu0 %v1242
    %1621 = vmatpush1.bf16.msra.mxu0 %v1241
    %1622 = vmatprep.subr.bf16.mxu0 %v1250
    %1623 = vmatpush1.bf16.msra.mxu0 %v1249
    %1624 = vmatprep.subr.bf16.mxu0 %v1258
    %1625 = vmatpush1.bf16.msra.mxu0 %v1257
    %1626 = vmatprep.subr.bf16.mxu0 %v1266
    %1627 = vmatpush1.bf16.msra.mxu0 %v1265
    %1628 = vmatprep.subr.bf16.mxu0 %v1274
    %1629 = vmatpush1.bf16.msra.mxu0 %v1273
    %1630 = vmatprep.subr.bf16.mxu0 %v1282
    %1631 = vmatpush1.bf16.msra.mxu0 %v1281
    %1632 = vmatprep.subr.bf16.mxu0 %v1290
    %1633 = vmatpush1.bf16.msra.mxu0 %v1289
    %1634 = vmatprep.subr.bf16.mxu0 %v1298
    %1635 = vmatpush1.bf16.msra.mxu0 %v1297
    %1636 = vmatprep.subr.bf16.mxu0 %v1306
    %1637 = vmatpush1.bf16.msra.mxu0 %v1305
    %1638 = vmatprep.mubr.bf16.mxu0 %v1318
    %1639 = vmatmul.mubr.bf16.gmra.mrb[0].mxu0 %v1317
    %v1640 = vpop.f32.mrb[0].mxu0
    %v1641 = vadd.f32 %v1600, %v1640
    %v1642 = vpop.f32.mrb[0].mxu0
    %v1643 = vadd.f32 %v1602, %v1642
    %v1644 = vpop.f32.mrb[0].mxu0
    %v1645 = vpop.f32.mrb[0].mxu0
    %1646 = vdwg.mxu0
    %1647 = vmatprep.subr.bf16.mxu0 %v804
    %1648 = vmatpush1.bf16.msra.mxu0 %v803
    %1649 = vmatprep.subr.bf16.mxu0 %v812
    %1650 = vmatpush1.bf16.msra.mxu0 %v811
    %1651 = vmatprep.subr.bf16.mxu0 %v820
    %1652 = vmatpush1.bf16.msra.mxu0 %v819
    %1653 = vmatprep.subr.bf16.mxu0 %v828
    %1654 = vmatpush1.bf16.msra.mxu0 %v827
    %1655 = vmatprep.subr.bf16.mxu0 %v836
    %1656 = vmatpush1.bf16.msra.mxu0 %v835
    %1657 = vmatprep.subr.bf16.mxu0 %v844
    %1658 = vmatpush1.bf16.msra.mxu0 %v843
    %1659 = vmatprep.subr.bf16.mxu0 %v852
    %1660 = vmatpush1.bf16.msra.mxu0 %v851
    %1661 = vmatprep.subr.bf16.mxu0 %v860
    %1662 = vmatpush1.bf16.msra.mxu0 %v859
    %1663 = vmatprep.subr.bf16.mxu0 %v868
    %1664 = vmatpush1.bf16.msra.mxu0 %v867
    %1665 = vmatprep.subr.bf16.mxu0 %v876
    %1666 = vmatpush1.bf16.msra.mxu0 %v875
    %1667 = vmatprep.subr.bf16.mxu0 %v884
    %1668 = vmatpush1.bf16.msra.mxu0 %v883
    %1669 = vmatprep.subr.bf16.mxu0 %v892
    %1670 = vmatpush1.bf16.msra.mxu0 %v891
    %1671 = vmatprep.subr.bf16.mxu0 %v900
    %1672 = vmatpush1.bf16.msra.mxu0 %v899
    %1673 = vmatprep.subr.bf16.mxu0 %v908
    %1674 = vmatpush1.bf16.msra.mxu0 %v907
    %1675 = vmatprep.subr.bf16.mxu0 %v916
    %1676 = vmatpush1.bf16.msra.mxu0 %v915
    %1677 = vmatprep.subr.bf16.mxu0 %v924
    %1678 = vmatpush1.bf16.msra.mxu0 %v923
    %1679 = vmatprep.mubr.bf16.mxu0 %v1312
    %1680 = vmatmul.mubr.bf16.gmra.mrb[0].mxu0 %v1311
    %v1681 = vpop.f32.mrb[0].mxu0
    %v1682 = vadd.f32 0.0, %v1681
    %v1683 = vpop.f32.mrb[0].mxu0
    %v1684 = vadd.f32 0.0, %v1683
    %v1685 = vpop.f32.mrb[0].mxu0
    %v1686 = vpop.f32.mrb[0].mxu0
    %1687 = vdwg.mxu0
    %1688 = vmatprep.subr.bf16.mxu0 %v932
    %1689 = vmatpush1.bf16.msra.mxu0 %v931
    %1690 = vmatprep.subr.bf16.mxu0 %v940
    %1691 = vmatpush1.bf16.msra.mxu0 %v939
    %1692 = vmatprep.subr.bf16.mxu0 %v948
    %1693 = vmatpush1.bf16.msra.mxu0 %v947
    %1694 = vmatprep.subr.bf16.mxu0 %v956
    %1695 = vmatpush1.bf16.msra.mxu0 %v955
    %1696 = vmatprep.subr.bf16.mxu0 %v964
    %1697 = vmatpush1.bf16.msra.mxu0 %v963
    %1698 = vmatprep.subr.bf16.mxu0 %v972
    %1699 = vmatpush1.bf16.msra.mxu0 %v971
    %1700 = vmatprep.subr.bf16.mxu0 %v980
    %1701 = vmatpush1.bf16.msra.mxu0 %v979
    %1702 = vmatprep.subr.bf16.mxu0 %v988
    %1703 = vmatpush1.bf16.msra.mxu0 %v987
    %1704 = vmatprep.subr.bf16.mxu0 %v996
    %1705 = vmatpush1.bf16.msra.mxu0 %v995
    %1706 = vmatprep.subr.bf16.mxu0 %v1004
    %1707 = vmatpush1.bf16.msra.mxu0 %v1003
    %1708 = vmatprep.subr.bf16.mxu0 %v1012
    %1709 = vmatpush1.bf16.msra.mxu0 %v1011
    %1710 = vmatprep.subr.bf16.mxu0 %v1020
    %1711 = vmatpush1.bf16.msra.mxu0 %v1019
    %1712 = vmatprep.subr.bf16.mxu0 %v1028
    %1713 = vmatpush1.bf16.msra.mxu0 %v1027
    %1714 = vmatprep.subr.bf16.mxu0 %v1036
    %1715 = vmatpush1.bf16.msra.mxu0 %v1035
    %1716 = vmatprep.subr.bf16.mxu0 %v1044
    %1717 = vmatpush1.bf16.msra.mxu0 %v1043
    %1718 = vmatprep.subr.bf16.mxu0 %v1052
    %1719 = vmatpush1.bf16.msra.mxu0 %v1051
    %1720 = vmatprep.mubr.bf16.mxu0 %v1314
    %1721 = vmatmul.mubr.bf16.gmra.mrb[0].mxu0 %v1313
    %v1722 = vpop.f32.mrb[0].mxu0
    %v1723 = vadd.f32 %v1682, %v1722
    %v1724 = vpop.f32.mrb[0].mxu0
    %v1725 = vadd.f32 %v1684, %v1724
    %v1726 = vpop.f32.mrb[0].mxu0
    %v1727 = vpop.f32.mrb[0].mxu0
    %1728 = vdwg.mxu0
    %1729 = vmatprep.subr.bf16.mxu0 %v1060
    %1730 = vmatpush1.bf16.msra.mxu0 %v1059
    %1731 = vmatprep.subr.bf16.mxu0 %v1068
    %1732 = vmatpush1.bf16.msra.mxu0 %v1067
    %1733 = vmatprep.subr.bf16.mxu0 %v1076
    %1734 = vmatpush1.bf16.msra.mxu0 %v1075
    %1735 = vmatprep.subr.bf16.mxu0 %v1084
    %1736 = vmatpush1.bf16.msra.mxu0 %v1083
    %1737 = vmatprep.subr.bf16.mxu0 %v1092
    %1738 = vmatpush1.bf16.msra.mxu0 %v1091
    %1739 = vmatprep.subr.bf16.mxu0 %v1100
    %1740 = vmatpush1.bf16.msra.mxu0 %v1099
    %1741 = vmatprep.subr.bf16.mxu0 %v1108
    %1742 = vmatpush1.bf16.msra.mxu0 %v1107
    %1743 = vmatprep.subr.bf16.mxu0 %v1116
    %1744 = vmatpush1.bf16.msra.mxu0 %v1115
    %1745 = vmatprep.subr.bf16.mxu0 %v1124
    %1746 = vmatpush1.bf16.msra.mxu0 %v1123
    %1747 = vmatprep.subr.bf16.mxu0 %v1132
    %1748 = vmatpush1.bf16.msra.mxu0 %v1131
    %1749 = vmatprep.subr.bf16.mxu0 %v1140
    %1750 = vmatpush1.bf16.msra.mxu0 %v1139
    %1751 = vmatprep.subr.bf16.mxu0 %v1148
    %1752 = vmatpush1.bf16.msra.mxu0 %v1147
    %1753 = vmatprep.subr.bf16.mxu0 %v1156
    %1754 = vmatpush1.bf16.msra.mxu0 %v1155
    %1755 = vmatprep.subr.bf16.mxu0 %v1164
    %1756 = vmatpush1.bf16.msra.mxu0 %v1163
    %1757 = vmatprep.subr.bf16.mxu0 %v1172
    %1758 = vmatpush1.bf16.msra.mxu0 %v1171
    %1759 = vmatprep.subr.bf16.mxu0 %v1180
    %1760 = vmatpush1.bf16.msra.mxu0 %v1179
    %1761 = vmatprep.mubr.bf16.mxu0 %v1316
    %1762 = vmatmul.mubr.bf16.gmra.mrb[0].mxu0 %v1315
    %v1763 = vpop.f32.mrb[0].mxu0
    %v1764 = vadd.f32 %v1723, %v1763
    %v1765 = vpop.f32.mrb[0].mxu0
    %v1766 = vadd.f32 %v1725, %v1765
    %v1767 = vpop.f32.mrb[0].mxu0
    %v1768 = vpop.f32.mrb[0].mxu0
    %1769 = vdwg.mxu0
    %1770 = vmatprep.subr.bf16.mxu0 %v1188
    %1771 = vmatpush1.bf16.msra.mxu0 %v1187
    %1772 = vmatprep.subr.bf16.mxu0 %v1196
    %1773 = vmatpush1.bf16.msra.mxu0 %v1195
    %1774 = vmatprep.subr.bf16.mxu0 %v1204
    %1775 = vmatpush1.bf16.msra.mxu0 %v1203
    %1776 = vmatprep.subr.bf16.mxu0 %v1212
    %1777 = vmatpush1.bf16.msra.mxu0 %v1211
    %1778 = vmatprep.subr.bf16.mxu0 %v1220
    %1779 = vmatpush1.bf16.msra.mxu0 %v1219
    %1780 = vmatprep.subr.bf16.mxu0 %v1228
    %1781 = vmatpush1.bf16.msra.mxu0 %v1227
    %1782 = vmatprep.subr.bf16.mxu0 %v1236
    %1783 = vmatpush1.bf16.msra.mxu0 %v1235
    %1784 = vmatprep.subr.bf16.mxu0 %v1244
    %1785 = vmatpush1.bf16.msra.mxu0 %v1243
    %1786 = vmatprep.subr.bf16.mxu0 %v1252
    %1787 = vmatpush1.bf16.msra.mxu0 %v1251
    %1788 = vmatprep.subr.bf16.mxu0 %v1260
    %1789 = vmatpush1.bf16.msra.mxu0 %v1259
    %1790 = vmatprep.subr.bf16.mxu0 %v1268
    %1791 = vmatpush1.bf16.msra.mxu0 %v1267
    %1792 = vmatprep.subr.bf16.mxu0 %v1276
    %1793 = vmatpush1.bf16.msra.mxu0 %v1275
    %1794 = vmatprep.subr.bf16.mxu0 %v1284
    %1795 = vmatpush1.bf16.msra.mxu0 %v1283
    %1796 = vmatprep.subr.bf16.mxu0 %v1292
    %1797 = vmatpush1.bf16.msra.mxu0 %v1291
    %1798 = vmatprep.subr.bf16.mxu0 %v1300
    %1799 = vmatpush1.bf16.msra.mxu0 %v1299
    %1800 = vmatprep.subr.bf16.mxu0 %v1308
    %1801 = vmatpush1.bf16.msra.mxu0 %v1307
    %1802 = vmatprep.mubr.bf16.mxu0 %v1318
    %1803 = vmatmul.mubr.bf16.gmra.mrb[0].mxu0 %v1317
    %v1804 = vpop.f32.mrb[0].mxu0
    %v1805 = vadd.f32 %v1764, %v1804
    %v1806 = vpop.f32.mrb[0].mxu0
    %v1807 = vadd.f32 %v1766, %v1806
    %v1808 = vpop.f32.mrb[0].mxu0
    %v1809 = vpop.f32.mrb[0].mxu0
    %1810 = vdwg.mxu0
    %1811 = vmatprep.subr.bf16.mxu0 %v806
    %1812 = vmatpush1.bf16.msra.mxu0 %v805
    %1813 = vmatprep.subr.bf16.mxu0 %v814
    %1814 = vmatpush1.bf16.msra.mxu0 %v813
    %1815 = vmatprep.subr.bf16.mxu0 %v822
    %1816 = vmatpush1.bf16.msra.mxu0 %v821
    %1817 = vmatprep.subr.bf16.mxu0 %v830
    %1818 = vmatpush1.bf16.msra.mxu0 %v829
    %1819 = vmatprep.subr.bf16.mxu0 %v838
    %1820 = vmatpush1.bf16.msra.mxu0 %v837
    %1821 = vmatprep.subr.bf16.mxu0 %v846
    %1822 = vmatpush1.bf16.msra.mxu0 %v845
    %1823 = vmatprep.subr.bf16.mxu0 %v854
    %1824 = vmatpush1.bf16.msra.mxu0 %v853
    %1825 = vmatprep.subr.bf16.mxu0 %v862
    %1826 = vmatpush1.bf16.msra.mxu0 %v861
    %1827 = vmatprep.subr.bf16.mxu0 %v870
    %1828 = vmatpush1.bf16.msra.mxu0 %v869
    %1829 = vmatprep.subr.bf16.mxu0 %v878
    %1830 = vmatpush1.bf16.msra.mxu0 %v877
    %1831 = vmatprep.subr.bf16.mxu0 %v886
    %1832 = vmatpush1.bf16.msra.mxu0 %v885
    %1833 = vmatprep.subr.bf16.mxu0 %v894
    %1834 = vmatpush1.bf16.msra.mxu0 %v893
    %1835 = vmatprep.subr.bf16.mxu0 %v902
    %1836 = vmatpush1.bf16.msra.mxu0 %v901
    %1837 = vmatprep.subr.bf16.mxu0 %v910
    %1838 = vmatpush1.bf16.msra.mxu0 %v909
    %1839 = vmatprep.subr.bf16.mxu0 %v918
    %1840 = vmatpush1.bf16.msra.mxu0 %v917
    %1841 = vmatprep.subr.bf16.mxu0 %v926
    %1842 = vmatpush1.bf16.msra.mxu0 %v925
    %1843 = vmatprep.mubr.bf16.mxu0 %v1312
    %1844 = vmatmul.mubr.bf16.gmra.mrb[0].mxu0 %v1311
    %v1845 = vpop.f32.mrb[0].mxu0
    %v1846 = vadd.f32 0.0, %v1845
    %v1847 = vpop.f32.mrb[0].mxu0
    %v1848 = vadd.f32 0.0, %v1847
    %v1849 = vpop.f32.mrb[0].mxu0
    %v1850 = vpop.f32.mrb[0].mxu0
    %1851 = vdwg.mxu0
    %1852 = vmatprep.subr.bf16.mxu0 %v934
    %1853 = vmatpush1.bf16.msra.mxu0 %v933
    %1854 = vmatprep.subr.bf16.mxu0 %v942
    %1855 = vmatpush1.bf16.msra.mxu0 %v941
    %1856 = vmatprep.subr.bf16.mxu0 %v950
    %1857 = vmatpush1.bf16.msra.mxu0 %v949
    %1858 = vmatprep.subr.bf16.mxu0 %v958
    %1859 = vmatpush1.bf16.msra.mxu0 %v957
    %1860 = vmatprep.subr.bf16.mxu0 %v966
    %1861 = vmatpush1.bf16.msra.mxu0 %v965
    %1862 = vmatprep.subr.bf16.mxu0 %v974
    %1863 = vmatpush1.bf16.msra.mxu0 %v973
    %1864 = vmatprep.subr.bf16.mxu0 %v982
    %1865 = vmatpush1.bf16.msra.mxu0 %v981
    %1866 = vmatprep.subr.bf16.mxu0 %v990
    %1867 = vmatpush1.bf16.msra.mxu0 %v989
    %1868 = vmatprep.subr.bf16.mxu0 %v998
    %1869 = vmatpush1.bf16.msra.mxu0 %v997
    %1870 = vmatprep.subr.bf16.mxu0 %v1006
    %1871 = vmatpush1.bf16.msra.mxu0 %v1005
    %1872 = vmatprep.subr.bf16.mxu0 %v1014
    %1873 = vmatpush1.bf16.msra.mxu0 %v1013
    %1874 = vmatprep.subr.bf16.mxu0 %v1022
    %1875 = vmatpush1.bf16.msra.mxu0 %v1021
    %1876 = vmatprep.subr.bf16.mxu0 %v1030
    %1877 = vmatpush1.bf16.msra.mxu0 %v1029
    %1878 = vmatprep.subr.bf16.mxu0 %v1038
    %1879 = vmatpush1.bf16.msra.mxu0 %v1037
    %1880 = vmatprep.subr.bf16.mxu0 %v1046
    %1881 = vmatpush1.bf16.msra.mxu0 %v1045
    %1882 = vmatprep.subr.bf16.mxu0 %v1054
    %1883 = vmatpush1.bf16.msra.mxu0 %v1053
    %1884 = vmatprep.mubr.bf16.mxu0 %v1314
    %1885 = vmatmul.mubr.bf16.gmra.mrb[0].mxu0 %v1313
    %v1886 = vpop.f32.mrb[0].mxu0
    %v1887 = vadd.f32 %v1846, %v1886
    %v1888 = vpop.f32.mrb[0].mxu0
    %v1889 = vadd.f32 %v1848, %v1888
    %v1890 = vpop.f32.mrb[0].mxu0
    %v1891 = vpop.f32.mrb[0].mxu0
    %1892 = vdwg.mxu0
    %1893 = vmatprep.subr.bf16.mxu0 %v1062
    %1894 = vmatpush1.bf16.msra.mxu0 %v1061
    %1895 = vmatprep.subr.bf16.mxu0 %v1070
    %1896 = vmatpush1.bf16.msra.mxu0 %v1069
    %1897 = vmatprep.subr.bf16.mxu0 %v1078
    %1898 = vmatpush1.bf16.msra.mxu0 %v1077
    %1899 = vmatprep.subr.bf16.mxu0 %v1086
    %1900 = vmatpush1.bf16.msra.mxu0 %v1085
    %1901 = vmatprep.subr.bf16.mxu0 %v1094
    %1902 = vmatpush1.bf16.msra.mxu0 %v1093
    %1903 = vmatprep.subr.bf16.mxu0 %v1102
    %1904 = vmatpush1.bf16.msra.mxu0 %v1101
    %1905 = vmatprep.subr.bf16.mxu0 %v1110
    %1906 = vmatpush1.bf16.msra.mxu0 %v1109
    %1907 = vmatprep.subr.bf16.mxu0 %v1118
    %1908 = vmatpush1.bf16.msra.mxu0 %v1117
    %1909 = vmatprep.subr.bf16.mxu0 %v1126
    %1910 = vmatpush1.bf16.msra.mxu0 %v1125
    %1911 = vmatprep.subr.bf16.mxu0 %v1134
    %1912 = vmatpush1.bf16.msra.mxu0 %v1133
    %1913 = vmatprep.subr.bf16.mxu0 %v1142
    %1914 = vmatpush1.bf16.msra.mxu0 %v1141
    %1915 = vmatprep.subr.bf16.mxu0 %v1150
    %1916 = vmatpush1.bf16.msra.mxu0 %v1149
    %1917 = vmatprep.subr.bf16.mxu0 %v1158
    %1918 = vmatpush1.bf16.msra.mxu0 %v1157
    %1919 = vmatprep.subr.bf16.mxu0 %v1166
    %1920 = vmatpush1.bf16.msra.mxu0 %v1165
    %1921 = vmatprep.subr.bf16.mxu0 %v1174
    %1922 = vmatpush1.bf16.msra.mxu0 %v1173
    %1923 = vmatprep.subr.bf16.mxu0 %v1182
    %1924 = vmatpush1.bf16.msra.mxu0 %v1181
    %1925 = vmatprep.mubr.bf16.mxu0 %v1316
    %1926 = vmatmul.mubr.bf16.gmra.mrb[0].mxu0 %v1315
    %v1927 = vpop.f32.mrb[0].mxu0
    %v1928 = vadd.f32 %v1887, %v1927
    %v1929 = vpop.f32.mrb[0].mxu0
    %v1930 = vadd.f32 %v1889, %v1929
    %v1931 = vpop.f32.mrb[0].mxu0
    %v1932 = vpop.f32.mrb[0].mxu0
    %1933 = vdwg.mxu0
    %1934 = vmatprep.subr.bf16.mxu0 %v1190
    %1935 = vmatpush1.bf16.msra.mxu0 %v1189
    %1936 = vmatprep.subr.bf16.mxu0 %v1198
    %1937 = vmatpush1.bf16.msra.mxu0 %v1197
    %1938 = vmatprep.subr.bf16.mxu0 %v1206
    %1939 = vmatpush1.bf16.msra.mxu0 %v1205
    %1940 = vmatprep.subr.bf16.mxu0 %v1214
    %1941 = vmatpush1.bf16.msra.mxu0 %v1213
    %1942 = vmatprep.subr.bf16.mxu0 %v1222
    %1943 = vmatpush1.bf16.msra.mxu0 %v1221
    %1944 = vmatprep.subr.bf16.mxu0 %v1230
    %1945 = vmatpush1.bf16.msra.mxu0 %v1229
    %1946 = vmatprep.subr.bf16.mxu0 %v1238
    %1947 = vmatpush1.bf16.msra.mxu0 %v1237
    %1948 = vmatprep.subr.bf16.mxu0 %v1246
    %1949 = vmatpush1.bf16.msra.mxu0 %v1245
    %1950 = vmatprep.subr.bf16.mxu0 %v1254
    %1951 = vmatpush1.bf16.msra.mxu0 %v1253
    %1952 = vmatprep.subr.bf16.mxu0 %v1262
    %1953 = vmatpush1.bf16.msra.mxu0 %v1261
    %1954 = vmatprep.subr.bf16.mxu0 %v1270
    %1955 = vmatpush1.bf16.msra.mxu0 %v1269
    %1956 = vmatprep.subr.bf16.mxu0 %v1278
    %1957 = vmatpush1.bf16.msra.mxu0 %v1277
    %1958 = vmatprep.subr.bf16.mxu0 %v1286
    %1959 = vmatpush1.bf16.msra.mxu0 %v1285
    %1960 = vmatprep.subr.bf16.mxu0 %v1294
    %1961 = vmatpush1.bf16.msra.mxu0 %v1293
    %1962 = vmatprep.subr.bf16.mxu0 %v1302
    %1963 = vmatpush1.bf16.msra.mxu0 %v1301
    %1964 = vmatprep.subr.bf16.mxu0 %v1310
    %1965 = vmatpush1.bf16.msra.mxu0 %v1309
    %1966 = vmatprep.mubr.bf16.mxu0 %v1318
    %1967 = vmatmul.mubr.bf16.gmra.mrb[0].mxu0 %v1317
    %v1968 = vpop.f32.mrb[0].mxu0
    %v1969 = vadd.f32 %v1928, %v1968
    %v1970 = vpop.f32.mrb[0].mxu0
    %v1971 = vadd.f32 %v1930, %v1970
    %v1972 = vpop.f32.mrb[0].mxu0
    %v1973 = vpop.f32.mrb[0].mxu0
    %1974 = vdwg.mxu0
    %1975 = vmatprep.subr.bf16.mxu0 %v244
    %1976 = vmatpush1.bf16.msra.mxu0 %v243
    %1977 = vmatprep.subr.bf16.mxu0 %v252
    %1978 = vmatpush1.bf16.msra.mxu0 %v251
    %1979 = vmatprep.subr.bf16.mxu0 %v260
    %1980 = vmatpush1.bf16.msra.mxu0 %v259
    %1981 = vmatprep.subr.bf16.mxu0 %v268
    %1982 = vmatpush1.bf16.msra.mxu0 %v267
    %1983 = vmatprep.subr.bf16.mxu0 %v276
    %1984 = vmatpush1.bf16.msra.mxu0 %v275
    %1985 = vmatprep.subr.bf16.mxu0 %v284
    %1986 = vmatpush1.bf16.msra.mxu0 %v283
    %1987 = vmatprep.subr.bf16.mxu0 %v292
    %1988 = vmatpush1.bf16.msra.mxu0 %v291
    %1989 = vmatprep.subr.bf16.mxu0 %v300
    %1990 = vmatpush1.bf16.msra.mxu0 %v299
    %1991 = vmatprep.subr.bf16.mxu0 %v308
    %1992 = vmatpush1.bf16.msra.mxu0 %v307
    %1993 = vmatprep.subr.bf16.mxu0 %v316
    %1994 = vmatpush1.bf16.msra.mxu0 %v315
    %1995 = vmatprep.subr.bf16.mxu0 %v324
    %1996 = vmatpush1.bf16.msra.mxu0 %v323
    %1997 = vmatprep.subr.bf16.mxu0 %v332
    %1998 = vmatpush1.bf16.msra.mxu0 %v331
    %1999 = vmatprep.subr.bf16.mxu0 %v340
    %2000 = vmatpush1.bf16.msra.mxu0 %v339
    %2001 = vmatprep.subr.bf16.mxu0 %v348
    %2002 = vmatpush1.bf16.msra.mxu0 %v347
    %2003 = vmatprep.subr.bf16.mxu0 %v356
    %2004 = vmatpush1.bf16.msra.mxu0 %v355
    %2005 = vmatprep.subr.bf16.mxu0 %v364
    %2006 = vmatpush1.bf16.msra.mxu0 %v363
    %2007 = vmatprep.mubr.bf16.mxu0 %v756
    %2008 = vmatmul.mubr.bf16.gmra.mrb[0].mxu0 %v755
    %v2009 = vpop.f32.mrb[0].mxu0
    %v2010 = vadd.f32 %v1477, %v2009
    %v2011 = vpop.f32.mrb[0].mxu0
    %v2012 = vadd.f32 %v1479, %v2011
    %v2013 = vpop.f32.mrb[0].mxu0
    %v2014 = vpop.f32.mrb[0].mxu0
    %2015 = vdwg.mxu0
    %2016 = vmatprep.subr.bf16.mxu0 %v372
    %2017 = vmatpush1.bf16.msra.mxu0 %v371
    %2018 = vmatprep.subr.bf16.mxu0 %v380
    %2019 = vmatpush1.bf16.msra.mxu0 %v379
    %2020 = vmatprep.subr.bf16.mxu0 %v388
    %2021 = vmatpush1.bf16.msra.mxu0 %v387
    %2022 = vmatprep.subr.bf16.mxu0 %v396
    %2023 = vmatpush1.bf16.msra.mxu0 %v395
    %2024 = vmatprep.subr.bf16.mxu0 %v404
    %2025 = vmatpush1.bf16.msra.mxu0 %v403
    %2026 = vmatprep.subr.bf16.mxu0 %v412
    %2027 = vmatpush1.bf16.msra.mxu0 %v411
    %2028 = vmatprep.subr.bf16.mxu0 %v420
    %2029 = vmatpush1.bf16.msra.mxu0 %v419
    %2030 = vmatprep.subr.bf16.mxu0 %v428
    %2031 = vmatpush1.bf16.msra.mxu0 %v427
    %2032 = vmatprep.subr.bf16.mxu0 %v436
    %2033 = vmatpush1.bf16.msra.mxu0 %v435
    %2034 = vmatprep.subr.bf16.mxu0 %v444
    %2035 = vmatpush1.bf16.msra.mxu0 %v443
    %2036 = vmatprep.subr.bf16.mxu0 %v452
    %2037 = vmatpush1.bf16.msra.mxu0 %v451
    %2038 = vmatprep.subr.bf16.mxu0 %v460
    %2039 = vmatpush1.bf16.msra.mxu0 %v459
    %2040 = vmatprep.subr.bf16.mxu0 %v468
    %2041 = vmatpush1.bf16.msra.mxu0 %v467
    %2042 = vmatprep.subr.bf16.mxu0 %v476
    %2043 = vmatpush1.bf16.msra.mxu0 %v475
    %2044 = vmatprep.subr.bf16.mxu0 %v484
    %2045 = vmatpush1.bf16.msra.mxu0 %v483
    %2046 = vmatprep.subr.bf16.mxu0 %v492
    %2047 = vmatpush1.bf16.msra.mxu0 %v491
    %2048 = vmatprep.mubr.bf16.mxu0 %v758
    %2049 = vmatmul.mubr.bf16.gmra.mrb[0].mxu0 %v757
    %v2050 = vpop.f32.mrb[0].mxu0
    %v2051 = vadd.f32 %v2010, %v2050
    %v2052 = vpop.f32.mrb[0].mxu0
    %v2053 = vadd.f32 %v2012, %v2052
    %v2054 = vpop.f32.mrb[0].mxu0
    %v2055 = vpop.f32.mrb[0].mxu0
    %2056 = vdwg.mxu0
    %2057 = vmatprep.subr.bf16.mxu0 %v500
    %2058 = vmatpush1.bf16.msra.mxu0 %v499
    %2059 = vmatprep.subr.bf16.mxu0 %v508
    %2060 = vmatpush1.bf16.msra.mxu0 %v507
    %2061 = vmatprep.subr.bf16.mxu0 %v516
    %2062 = vmatpush1.bf16.msra.mxu0 %v515
    %2063 = vmatprep.subr.bf16.mxu0 %v524
    %2064 = vmatpush1.bf16.msra.mxu0 %v523
    %2065 = vmatprep.subr.bf16.mxu0 %v532
    %2066 = vmatpush1.bf16.msra.mxu0 %v531
    %2067 = vmatprep.subr.bf16.mxu0 %v540
    %2068 = vmatpush1.bf16.msra.mxu0 %v539
    %2069 = vmatprep.subr.bf16.mxu0 %v548
    %2070 = vmatpush1.bf16.msra.mxu0 %v547
    %2071 = vmatprep.subr.bf16.mxu0 %v556
    %2072 = vmatpush1.bf16.msra.mxu0 %v555
    %2073 = vmatprep.subr.bf16.mxu0 %v564
    %2074 = vmatpush1.bf16.msra.mxu0 %v563
    %2075 = vmatprep.subr.bf16.mxu0 %v572
    %2076 = vmatpush1.bf16.msra.mxu0 %v571
    %2077 = vmatprep.subr.bf16.mxu0 %v580
    %2078 = vmatpush1.bf16.msra.mxu0 %v579
    %2079 = vmatprep.subr.bf16.mxu0 %v588
    %2080 = vmatpush1.bf16.msra.mxu0 %v587
    %2081 = vmatprep.subr.bf16.mxu0 %v596
    %2082 = vmatpush1.bf16.msra.mxu0 %v595
    %2083 = vmatprep.subr.bf16.mxu0 %v604
    %2084 = vmatpush1.bf16.msra.mxu0 %v603
    %2085 = vmatprep.subr.bf16.mxu0 %v612
    %2086 = vmatpush1.bf16.msra.mxu0 %v611
    %2087 = vmatprep.subr.bf16.mxu0 %v620
    %2088 = vmatpush1.bf16.msra.mxu0 %v619
    %2089 = vmatprep.mubr.bf16.mxu0 %v760
    %2090 = vmatmul.mubr.bf16.gmra.mrb[0].mxu0 %v759
    %v2091 = vpop.f32.mrb[0].mxu0
    %v2092 = vadd.f32 %v2051, %v2091
    %v2093 = vpop.f32.mrb[0].mxu0
    %v2094 = vadd.f32 %v2053, %v2093
    %v2095 = vpop.f32.mrb[0].mxu0
    %v2096 = vpop.f32.mrb[0].mxu0
    %2097 = vdwg.mxu0
    %2098 = vmatprep.subr.bf16.mxu0 %v628
    %2099 = vmatpush1.bf16.msra.mxu0 %v627
    %2100 = vmatprep.subr.bf16.mxu0 %v636
    %2101 = vmatpush1.bf16.msra.mxu0 %v635
    %2102 = vmatprep.subr.bf16.mxu0 %v644
    %2103 = vmatpush1.bf16.msra.mxu0 %v643
    %2104 = vmatprep.subr.bf16.mxu0 %v652
    %2105 = vmatpush1.bf16.msra.mxu0 %v651
    %2106 = vmatprep.subr.bf16.mxu0 %v660
    %2107 = vmatpush1.bf16.msra.mxu0 %v659
    %2108 = vmatprep.subr.bf16.mxu0 %v668
    %2109 = vmatpush1.bf16.msra.mxu0 %v667
    %2110 = vmatprep.subr.bf16.mxu0 %v676
    %2111 = vmatpush1.bf16.msra.mxu0 %v675
    %2112 = vmatprep.subr.bf16.mxu0 %v684
    %2113 = vmatpush1.bf16.msra.mxu0 %v683
    %2114 = vmatprep.subr.bf16.mxu0 %v692
    %2115 = vmatpush1.bf16.msra.mxu0 %v691
    %2116 = vmatprep.subr.bf16.mxu0 %v700
    %2117 = vmatpush1.bf16.msra.mxu0 %v699
    %2118 = vmatprep.subr.bf16.mxu0 %v708
    %2119 = vmatpush1.bf16.msra.mxu0 %v707
    %2120 = vmatprep.subr.bf16.mxu0 %v716
    %2121 = vmatpush1.bf16.msra.mxu0 %v715
    %2122 = vmatprep.subr.bf16.mxu0 %v724
    %2123 = vmatpush1.bf16.msra.mxu0 %v723
    %2124 = vmatprep.subr.bf16.mxu0 %v732
    %2125 = vmatpush1.bf16.msra.mxu0 %v731
    %2126 = vmatprep.subr.bf16.mxu0 %v740
    %2127 = vmatpush1.bf16.msra.mxu0 %v739
    %2128 = vmatprep.subr.bf16.mxu0 %v748
    %2129 = vmatpush1.bf16.msra.mxu0 %v747
    %2130 = vmatprep.mubr.bf16.mxu0 %v762
    %2131 = vmatmul.mubr.bf16.gmra.mrb[0].mxu0 %v761
    %v2132 = vpop.f32.mrb[0].mxu0
    %v2133 = vadd.f32 %v2092, %v2132
    %v2134 = vpop.f32.mrb[0].mxu0
    %v2135 = vadd.f32 %v2094, %v2134
    %v2136 = vpop.f32.mrb[0].mxu0
    %v2137 = vpop.f32.mrb[0].mxu0
    %2138 = vdwg.mxu0
    %2139 = vmatprep.subr.bf16.mxu0 %v246
    %2140 = vmatpush1.bf16.msra.mxu0 %v245
    %2141 = vmatprep.subr.bf16.mxu0 %v254
    %2142 = vmatpush1.bf16.msra.mxu0 %v253
    %2143 = vmatprep.subr.bf16.mxu0 %v262
    %2144 = vmatpush1.bf16.msra.mxu0 %v261
    %2145 = vmatprep.subr.bf16.mxu0 %v270
    %2146 = vmatpush1.bf16.msra.mxu0 %v269
    %2147 = vmatprep.subr.bf16.mxu0 %v278
    %2148 = vmatpush1.bf16.msra.mxu0 %v277
    %2149 = vmatprep.subr.bf16.mxu0 %v286
    %2150 = vmatpush1.bf16.msra.mxu0 %v285
    %2151 = vmatprep.subr.bf16.mxu0 %v294
    %2152 = vmatpush1.bf16.msra.mxu0 %v293
    %2153 = vmatprep.subr.bf16.mxu0 %v302
    %2154 = vmatpush1.bf16.msra.mxu0 %v301
    %2155 = vmatprep.subr.bf16.mxu0 %v310
    %2156 = vmatpush1.bf16.msra.mxu0 %v309
    %2157 = vmatprep.subr.bf16.mxu0 %v318
    %2158 = vmatpush1.bf16.msra.mxu0 %v317
    %2159 = vmatprep.subr.bf16.mxu0 %v326
    %2160 = vmatpush1.bf16.msra.mxu0 %v325
    %2161 = vmatprep.subr.bf16.mxu0 %v334
    %2162 = vmatpush1.bf16.msra.mxu0 %v333
    %2163 = vmatprep.subr.bf16.mxu0 %v342
    %2164 = vmatpush1.bf16.msra.mxu0 %v341
    %2165 = vmatprep.subr.bf16.mxu0 %v350
    %2166 = vmatpush1.bf16.msra.mxu0 %v349
    %2167 = vmatprep.subr.bf16.mxu0 %v358
    %2168 = vmatpush1.bf16.msra.mxu0 %v357
    %2169 = vmatprep.subr.bf16.mxu0 %v366
    %2170 = vmatpush1.bf16.msra.mxu0 %v365
    %2171 = vmatprep.mubr.bf16.mxu0 %v756
    %2172 = vmatmul.mubr.bf16.gmra.mrb[0].mxu0 %v755
    %v2173 = vpop.f32.mrb[0].mxu0
    %v2174 = vadd.f32 %v1641, %v2173
    %v2175 = vpop.f32.mrb[0].mxu0
    %v2176 = vadd.f32 %v1643, %v2175
    %v2177 = vpop.f32.mrb[0].mxu0
    %v2178 = vpop.f32.mrb[0].mxu0
    %2179 = vdwg.mxu0
    %2180 = vmatprep.subr.bf16.mxu0 %v374
    %2181 = vmatpush1.bf16.msra.mxu0 %v373
    %2182 = vmatprep.subr.bf16.mxu0 %v382
    %2183 = vmatpush1.bf16.msra.mxu0 %v381
    %2184 = vmatprep.subr.bf16.mxu0 %v390
    %2185 = vmatpush1.bf16.msra.mxu0 %v389
    %2186 = vmatprep.subr.bf16.mxu0 %v398
    %2187 = vmatpush1.bf16.msra.mxu0 %v397
    %2188 = vmatprep.subr.bf16.mxu0 %v406
    %2189 = vmatpush1.bf16.msra.mxu0 %v405
    %2190 = vmatprep.subr.bf16.mxu0 %v414
    %2191 = vmatpush1.bf16.msra.mxu0 %v413
    %2192 = vmatprep.subr.bf16.mxu0 %v422
    %2193 = vmatpush1.bf16.msra.mxu0 %v421
    %2194 = vmatprep.subr.bf16.mxu0 %v430
    %2195 = vmatpush1.bf16.msra.mxu0 %v429
    %2196 = vmatprep.subr.bf16.mxu0 %v438
    %2197 = vmatpush1.bf16.msra.mxu0 %v437
    %2198 = vmatprep.subr.bf16.mxu0 %v446
    %2199 = vmatpush1.bf16.msra.mxu0 %v445
    %2200 = vmatprep.subr.bf16.mxu0 %v454
    %2201 = vmatpush1.bf16.msra.mxu0 %v453
    %2202 = vmatprep.subr.bf16.mxu0 %v462
    %2203 = vmatpush1.bf16.msra.mxu0 %v461
    %2204 = vmatprep.subr.bf16.mxu0 %v470
    %2205 = vmatpush1.bf16.msra.mxu0 %v469
    %2206 = vmatprep.subr.bf16.mxu0 %v478
    %2207 = vmatpush1.bf16.msra.mxu0 %v477
    %2208 = vmatprep.subr.bf16.mxu0 %v486
    %2209 = vmatpush1.bf16.msra.mxu0 %v485
    %2210 = vmatprep.subr.bf16.mxu0 %v494
    %2211 = vmatpush1.bf16.msra.mxu0 %v493
    %2212 = vmatprep.mubr.bf16.mxu0 %v758
    %2213 = vmatmul.mubr.bf16.gmra.mrb[0].mxu0 %v757
    %v2214 = vpop.f32.mrb[0].mxu0
    %v2215 = vadd.f32 %v2174, %v2214
    %v2216 = vpop.f32.mrb[0].mxu0
    %v2217 = vadd.f32 %v2176, %v2216
    %v2218 = vpop.f32.mrb[0].mxu0
    %v2219 = vpop.f32.mrb[0].mxu0
    %2220 = vdwg.mxu0
    %2221 = vmatprep.subr.bf16.mxu0 %v502
    %2222 = vmatpush1.bf16.msra.mxu0 %v501
    %2223 = vmatprep.subr.bf16.mxu0 %v510
    %2224 = vmatpush1.bf16.msra.mxu0 %v509
    %2225 = vmatprep.subr.bf16.mxu0 %v518
    %2226 = vmatpush1.bf16.msra.mxu0 %v517
    %2227 = vmatprep.subr.bf16.mxu0 %v526
    %2228 = vmatpush1.bf16.msra.mxu0 %v525
    %2229 = vmatprep.subr.bf16.mxu0 %v534
    %2230 = vmatpush1.bf16.msra.mxu0 %v533
    %2231 = vmatprep.subr.bf16.mxu0 %v542
    %2232 = vmatpush1.bf16.msra.mxu0 %v541
    %2233 = vmatprep.subr.bf16.mxu0 %v550
    %2234 = vmatpush1.bf16.msra.mxu0 %v549
    %2235 = vmatprep.subr.bf16.mxu0 %v558
    %2236 = vmatpush1.bf16.msra.mxu0 %v557
    %2237 = vmatprep.subr.bf16.mxu0 %v566
    %2238 = vmatpush1.bf16.msra.mxu0 %v565
    %2239 = vmatprep.subr.bf16.mxu0 %v574
    %2240 = vmatpush1.bf16.msra.mxu0 %v573
    %2241 = vmatprep.subr.bf16.mxu0 %v582
    %2242 = vmatpush1.bf16.msra.mxu0 %v581
    %2243 = vmatprep.subr.bf16.mxu0 %v590
    %2244 = vmatpush1.bf16.msra.mxu0 %v589
    %2245 = vmatprep.subr.bf16.mxu0 %v598
    %2246 = vmatpush1.bf16.msra.mxu0 %v597
    %2247 = vmatprep.subr.bf16.mxu0 %v606
    %2248 = vmatpush1.bf16.msra.mxu0 %v605
    %2249 = vmatprep.subr.bf16.mxu0 %v614
    %2250 = vmatpush1.bf16.msra.mxu0 %v613
    %2251 = vmatprep.subr.bf16.mxu0 %v622
    %2252 = vmatpush1.bf16.msra.mxu0 %v621
    %2253 = vmatprep.mubr.bf16.mxu0 %v760
    %2254 = vmatmul.mubr.bf16.gmra.mrb[0].mxu0 %v759
    %v2255 = vpop.f32.mrb[0].mxu0
    %v2256 = vadd.f32 %v2215, %v2255
    %v2257 = vpop.f32.mrb[0].mxu0
    %v2258 = vadd.f32 %v2217, %v2257
    %v2259 = vpop.f32.mrb[0].mxu0
    %v2260 = vpop.f32.mrb[0].mxu0
    %2261 = vdwg.mxu0
    %2262 = vmatprep.subr.bf16.mxu0 %v630
    %2263 = vmatpush1.bf16.msra.mxu0 %v629
    %2264 = vmatprep.subr.bf16.mxu0 %v638
    %2265 = vmatpush1.bf16.msra.mxu0 %v637
    %2266 = vmatprep.subr.bf16.mxu0 %v646
    %2267 = vmatpush1.bf16.msra.mxu0 %v645
    %2268 = vmatprep.subr.bf16.mxu0 %v654
    %2269 = vmatpush1.bf16.msra.mxu0 %v653
    %2270 = vmatprep.subr.bf16.mxu0 %v662
    %2271 = vmatpush1.bf16.msra.mxu0 %v661
    %2272 = vmatprep.subr.bf16.mxu0 %v670
    %2273 = vmatpush1.bf16.msra.mxu0 %v669
    %2274 = vmatprep.subr.bf16.mxu0 %v678
    %2275 = vmatpush1.bf16.msra.mxu0 %v677
    %2276 = vmatprep.subr.bf16.mxu0 %v686
    %2277 = vmatpush1.bf16.msra.mxu0 %v685
    %2278 = vmatprep.subr.bf16.mxu0 %v694
    %2279 = vmatpush1.bf16.msra.mxu0 %v693
    %2280 = vmatprep.subr.bf16.mxu0 %v702
    %2281 = vmatpush1.bf16.msra.mxu0 %v701
    %2282 = vmatprep.subr.bf16.mxu0 %v710
    %2283 = vmatpush1.bf16.msra.mxu0 %v709
    %2284 = vmatprep.subr.bf16.mxu0 %v718
    %2285 = vmatpush1.bf16.msra.mxu0 %v717
    %2286 = vmatprep.subr.bf16.mxu0 %v726
    %2287 = vmatpush1.bf16.msra.mxu0 %v725
    %2288 = vmatprep.subr.bf16.mxu0 %v734
    %2289 = vmatpush1.bf16.msra.mxu0 %v733
    %2290 = vmatprep.subr.bf16.mxu0 %v742
    %2291 = vmatpush1.bf16.msra.mxu0 %v741
    %2292 = vmatprep.subr.bf16.mxu0 %v750
    %2293 = vmatpush1.bf16.msra.mxu0 %v749
    %2294 = vmatprep.mubr.bf16.mxu0 %v762
    %2295 = vmatmul.mubr.bf16.gmra.mrb[0].mxu0 %v761
    %v2296 = vpop.f32.mrb[0].mxu0
    %v2297 = vadd.f32 %v2256, %v2296
    %v2298 = vpop.f32.mrb[0].mxu0
    %v2299 = vadd.f32 %v2258, %v2298
    %v2300 = vpop.f32.mrb[0].mxu0
    %v2301 = vpop.f32.mrb[0].mxu0
    %2302 = vdwg.mxu0
    %2303 = vmatprep.subr.bf16.mxu0 %v248
    %2304 = vmatpush1.bf16.msra.mxu0 %v247
    %2305 = vmatprep.subr.bf16.mxu0 %v256
    %2306 = vmatpush1.bf16.msra.mxu0 %v255
    %2307 = vmatprep.subr.bf16.mxu0 %v264
    %2308 = vmatpush1.bf16.msra.mxu0 %v263
    %2309 = vmatprep.subr.bf16.mxu0 %v272
    %2310 = vmatpush1.bf16.msra.mxu0 %v271
    %2311 = vmatprep.subr.bf16.mxu0 %v280
    %2312 = vmatpush1.bf16.msra.mxu0 %v279
    %2313 = vmatprep.subr.bf16.mxu0 %v288
    %2314 = vmatpush1.bf16.msra.mxu0 %v287
    %2315 = vmatprep.subr.bf16.mxu0 %v296
    %2316 = vmatpush1.bf16.msra.mxu0 %v295
    %2317 = vmatprep.subr.bf16.mxu0 %v304
    %2318 = vmatpush1.bf16.msra.mxu0 %v303
    %2319 = vmatprep.subr.bf16.mxu0 %v312
    %2320 = vmatpush1.bf16.msra.mxu0 %v311
    %2321 = vmatprep.subr.bf16.mxu0 %v320
    %2322 = vmatpush1.bf16.msra.mxu0 %v319
    %2323 = vmatprep.subr.bf16.mxu0 %v328
    %2324 = vmatpush1.bf16.msra.mxu0 %v327
    %2325 = vmatprep.subr.bf16.mxu0 %v336
    %2326 = vmatpush1.bf16.msra.mxu0 %v335
    %2327 = vmatprep.subr.bf16.mxu0 %v344
    %2328 = vmatpush1.bf16.msra.mxu0 %v343
    %2329 = vmatprep.subr.bf16.mxu0 %v352
    %2330 = vmatpush1.bf16.msra.mxu0 %v351
    %2331 = vmatprep.subr.bf16.mxu0 %v360
    %2332 = vmatpush1.bf16.msra.mxu0 %v359
    %2333 = vmatprep.subr.bf16.mxu0 %v368
    %2334 = vmatpush1.bf16.msra.mxu0 %v367
    %2335 = vmatprep.mubr.bf16.mxu0 %v756
    %2336 = vmatmul.mubr.bf16.gmra.mrb[0].mxu0 %v755
    %v2337 = vpop.f32.mrb[0].mxu0
    %v2338 = vadd.f32 %v1805, %v2337
    %v2339 = vpop.f32.mrb[0].mxu0
    %v2340 = vadd.f32 %v1807, %v2339
    %v2341 = vpop.f32.mrb[0].mxu0
    %v2342 = vpop.f32.mrb[0].mxu0
    %2343 = vdwg.mxu0
    %2344 = vmatprep.subr.bf16.mxu0 %v376
    %2345 = vmatpush1.bf16.msra.mxu0 %v375
    %2346 = vmatprep.subr.bf16.mxu0 %v384
    %2347 = vmatpush1.bf16.msra.mxu0 %v383
    %2348 = vmatprep.subr.bf16.mxu0 %v392
    %2349 = vmatpush1.bf16.msra.mxu0 %v391
    %2350 = vmatprep.subr.bf16.mxu0 %v400
    %2351 = vmatpush1.bf16.msra.mxu0 %v399
    %2352 = vmatprep.subr.bf16.mxu0 %v408
    %2353 = vmatpush1.bf16.msra.mxu0 %v407
    %2354 = vmatprep.subr.bf16.mxu0 %v416
    %2355 = vmatpush1.bf16.msra.mxu0 %v415
    %2356 = vmatprep.subr.bf16.mxu0 %v424
    %2357 = vmatpush1.bf16.msra.mxu0 %v423
    %2358 = vmatprep.subr.bf16.mxu0 %v432
    %2359 = vmatpush1.bf16.msra.mxu0 %v431
    %2360 = vmatprep.subr.bf16.mxu0 %v440
    %2361 = vmatpush1.bf16.msra.mxu0 %v439
    %2362 = vmatprep.subr.bf16.mxu0 %v448
    %2363 = vmatpush1.bf16.msra.mxu0 %v447
    %2364 = vmatprep.subr.bf16.mxu0 %v456
    %2365 = vmatpush1.bf16.msra.mxu0 %v455
    %2366 = vmatprep.subr.bf16.mxu0 %v464
    %2367 = vmatpush1.bf16.msra.mxu0 %v463
    %2368 = vmatprep.subr.bf16.mxu0 %v472
    %2369 = vmatpush1.bf16.msra.mxu0 %v471
    %2370 = vmatprep.subr.bf16.mxu0 %v480
    %2371 = vmatpush1.bf16.msra.mxu0 %v479
    %2372 = vmatprep.subr.bf16.mxu0 %v488
    %2373 = vmatpush1.bf16.msra.mxu0 %v487
    %2374 = vmatprep.subr.bf16.mxu0 %v496
    %2375 = vmatpush1.bf16.msra.mxu0 %v495
    %2376 = vmatprep.mubr.bf16.mxu0 %v758
    %2377 = vmatmul.mubr.bf16.gmra.mrb[0].mxu0 %v757
    %v2378 = vpop.f32.mrb[0].mxu0
    %v2379 = vadd.f32 %v2338, %v2378
    %v2380 = vpop.f32.mrb[0].mxu0
    %v2381 = vadd.f32 %v2340, %v2380
    %v2382 = vpop.f32.mrb[0].mxu0
    %v2383 = vpop.f32.mrb[0].mxu0
    %2384 = vdwg.mxu0
    %2385 = vmatprep.subr.bf16.mxu0 %v504
    %2386 = vmatpush1.bf16.msra.mxu0 %v503
    %2387 = vmatprep.subr.bf16.mxu0 %v512
    %2388 = vmatpush1.bf16.msra.mxu0 %v511
    %2389 = vmatprep.subr.bf16.mxu0 %v520
    %2390 = vmatpush1.bf16.msra.mxu0 %v519
    %2391 = vmatprep.subr.bf16.mxu0 %v528
    %2392 = vmatpush1.bf16.msra.mxu0 %v527
    %2393 = vmatprep.subr.bf16.mxu0 %v536
    %2394 = vmatpush1.bf16.msra.mxu0 %v535
    %2395 = vmatprep.subr.bf16.mxu0 %v544
    %2396 = vmatpush1.bf16.msra.mxu0 %v543
    %2397 = vmatprep.subr.bf16.mxu0 %v552
    %2398 = vmatpush1.bf16.msra.mxu0 %v551
    %2399 = vmatprep.subr.bf16.mxu0 %v560
    %2400 = vmatpush1.bf16.msra.mxu0 %v559
    %2401 = vmatprep.subr.bf16.mxu0 %v568
    %2402 = vmatpush1.bf16.msra.mxu0 %v567
    %2403 = vmatprep.subr.bf16.mxu0 %v576
    %2404 = vmatpush1.bf16.msra.mxu0 %v575
    %2405 = vmatprep.subr.bf16.mxu0 %v584
    %2406 = vmatpush1.bf16.msra.mxu0 %v583
    %2407 = vmatprep.subr.bf16.mxu0 %v592
    %2408 = vmatpush1.bf16.msra.mxu0 %v591
    %2409 = vmatprep.subr.bf16.mxu0 %v600
    %2410 = vmatpush1.bf16.msra.mxu0 %v599
    %2411 = vmatprep.subr.bf16.mxu0 %v608
    %2412 = vmatpush1.bf16.msra.mxu0 %v607
    %2413 = vmatprep.subr.bf16.mxu0 %v616
    %2414 = vmatpush1.bf16.msra.mxu0 %v615
    %2415 = vmatprep.subr.bf16.mxu0 %v624
    %2416 = vmatpush1.bf16.msra.mxu0 %v623
    %2417 = vmatprep.mubr.bf16.mxu0 %v760
    %2418 = vmatmul.mubr.bf16.gmra.mrb[0].mxu0 %v759
    %v2419 = vpop.f32.mrb[0].mxu0
    %v2420 = vadd.f32 %v2379, %v2419
    %v2421 = vpop.f32.mrb[0].mxu0
    %v2422 = vadd.f32 %v2381, %v2421
    %v2423 = vpop.f32.mrb[0].mxu0
    %v2424 = vpop.f32.mrb[0].mxu0
    %2425 = vdwg.mxu0
    %2426 = vmatprep.subr.bf16.mxu0 %v632
    %2427 = vmatpush1.bf16.msra.mxu0 %v631
    %2428 = vmatprep.subr.bf16.mxu0 %v640
    %2429 = vmatpush1.bf16.msra.mxu0 %v639
    %2430 = vmatprep.subr.bf16.mxu0 %v648
    %2431 = vmatpush1.bf16.msra.mxu0 %v647
    %2432 = vmatprep.subr.bf16.mxu0 %v656
    %2433 = vmatpush1.bf16.msra.mxu0 %v655
    %2434 = vmatprep.subr.bf16.mxu0 %v664
    %2435 = vmatpush1.bf16.msra.mxu0 %v663
    %2436 = vmatprep.subr.bf16.mxu0 %v672
    %2437 = vmatpush1.bf16.msra.mxu0 %v671
    %2438 = vmatprep.subr.bf16.mxu0 %v680
    %2439 = vmatpush1.bf16.msra.mxu0 %v679
    %2440 = vmatprep.subr.bf16.mxu0 %v688
    %2441 = vmatpush1.bf16.msra.mxu0 %v687
    %2442 = vmatprep.subr.bf16.mxu0 %v696
    %2443 = vmatpush1.bf16.msra.mxu0 %v695
    %2444 = vmatprep.subr.bf16.mxu0 %v704
    %2445 = vmatpush1.bf16.msra.mxu0 %v703
    %2446 = vmatprep.subr.bf16.mxu0 %v712
    %2447 = vmatpush1.bf16.msra.mxu0 %v711
    %2448 = vmatprep.subr.bf16.mxu0 %v720
    %2449 = vmatpush1.bf16.msra.mxu0 %v719
    %2450 = vmatprep.subr.bf16.mxu0 %v728
    %2451 = vmatpush1.bf16.msra.mxu0 %v727
    %2452 = vmatprep.subr.bf16.mxu0 %v736
    %2453 = vmatpush1.bf16.msra.mxu0 %v735
    %2454 = vmatprep.subr.bf16.mxu0 %v744
    %2455 = vmatpush1.bf16.msra.mxu0 %v743
    %2456 = vmatprep.subr.bf16.mxu0 %v752
    %2457 = vmatpush1.bf16.msra.mxu0 %v751
    %2458 = vmatprep.mubr.bf16.mxu0 %v762
    %2459 = vmatmul.mubr.bf16.gmra.mrb[0].mxu0 %v761
    %v2460 = vpop.f32.mrb[0].mxu0
    %v2461 = vadd.f32 %v2420, %v2460
    %v2462 = vpop.f32.mrb[0].mxu0
    %v2463 = vadd.f32 %v2422, %v2462
    %v2464 = vpop.f32.mrb[0].mxu0
    %v2465 = vpop.f32.mrb[0].mxu0
    %2466 = vdwg.mxu0
    %2467 = vmatprep.subr.bf16.mxu0 %v250
    %2468 = vmatpush1.bf16.msra.mxu0 %v249
    %2469 = vmatprep.subr.bf16.mxu0 %v258
    %2470 = vmatpush1.bf16.msra.mxu0 %v257
    %2471 = vmatprep.subr.bf16.mxu0 %v266
    %2472 = vmatpush1.bf16.msra.mxu0 %v265
    %2473 = vmatprep.subr.bf16.mxu0 %v274
    %2474 = vmatpush1.bf16.msra.mxu0 %v273
    %2475 = vmatprep.subr.bf16.mxu0 %v282
    %2476 = vmatpush1.bf16.msra.mxu0 %v281
    %2477 = vmatprep.subr.bf16.mxu0 %v290
    %2478 = vmatpush1.bf16.msra.mxu0 %v289
    %2479 = vmatprep.subr.bf16.mxu0 %v298
    %2480 = vmatpush1.bf16.msra.mxu0 %v297
    %2481 = vmatprep.subr.bf16.mxu0 %v306
    %2482 = vmatpush1.bf16.msra.mxu0 %v305
    %2483 = vmatprep.subr.bf16.mxu0 %v314
    %2484 = vmatpush1.bf16.msra.mxu0 %v313
    %2485 = vmatprep.subr.bf16.mxu0 %v322
    %2486 = vmatpush1.bf16.msra.mxu0 %v321
    %2487 = vmatprep.subr.bf16.mxu0 %v330
    %2488 = vmatpush1.bf16.msra.mxu0 %v329
    %2489 = vmatprep.subr.bf16.mxu0 %v338
    %2490 = vmatpush1.bf16.msra.mxu0 %v337
    %2491 = vmatprep.subr.bf16.mxu0 %v346
    %2492 = vmatpush1.bf16.msra.mxu0 %v345
    %2493 = vmatprep.subr.bf16.mxu0 %v354
    %2494 = vmatpush1.bf16.msra.mxu0 %v353
    %2495 = vmatprep.subr.bf16.mxu0 %v362
    %2496 = vmatpush1.bf16.msra.mxu0 %v361
    %2497 = vmatprep.subr.bf16.mxu0 %v370
    %2498 = vmatpush1.bf16.msra.mxu0 %v369
    %2499 = vmatprep.mubr.bf16.mxu0 %v756
    %2500 = vmatmul.mubr.bf16.gmra.mrb[0].mxu0 %v755
    %v2501 = vpop.f32.mrb[0].mxu0
    %v2502 = vadd.f32 %v1969, %v2501
    %v2503 = vpop.f32.mrb[0].mxu0
    %v2504 = vadd.f32 %v1971, %v2503
    %v2505 = vpop.f32.mrb[0].mxu0
    %v2506 = vpop.f32.mrb[0].mxu0
    %2507 = vdwg.mxu0
    %2508 = vmatprep.subr.bf16.mxu0 %v378
    %2509 = vmatpush1.bf16.msra.mxu0 %v377
    %2510 = vmatprep.subr.bf16.mxu0 %v386
    %2511 = vmatpush1.bf16.msra.mxu0 %v385
    %2512 = vmatprep.subr.bf16.mxu0 %v394
    %2513 = vmatpush1.bf16.msra.mxu0 %v393
    %2514 = vmatprep.subr.bf16.mxu0 %v402
    %2515 = vmatpush1.bf16.msra.mxu0 %v401
    %2516 = vmatprep.subr.bf16.mxu0 %v410
    %2517 = vmatpush1.bf16.msra.mxu0 %v409
    %2518 = vmatprep.subr.bf16.mxu0 %v418
    %2519 = vmatpush1.bf16.msra.mxu0 %v417
    %2520 = vmatprep.subr.bf16.mxu0 %v426
    %2521 = vmatpush1.bf16.msra.mxu0 %v425
    %2522 = vmatprep.subr.bf16.mxu0 %v434
    %2523 = vmatpush1.bf16.msra.mxu0 %v433
    %2524 = vmatprep.subr.bf16.mxu0 %v442
    %2525 = vmatpush1.bf16.msra.mxu0 %v441
    %2526 = vmatprep.subr.bf16.mxu0 %v450
    %2527 = vmatpush1.bf16.msra.mxu0 %v449
    %2528 = vmatprep.subr.bf16.mxu0 %v458
    %2529 = vmatpush1.bf16.msra.mxu0 %v457
    %2530 = vmatprep.subr.bf16.mxu0 %v466
    %2531 = vmatpush1.bf16.msra.mxu0 %v465
    %2532 = vmatprep.subr.bf16.mxu0 %v474
    %2533 = vmatpush1.bf16.msra.mxu0 %v473
    %2534 = vmatprep.subr.bf16.mxu0 %v482
    %2535 = vmatpush1.bf16.msra.mxu0 %v481
    %2536 = vmatprep.subr.bf16.mxu0 %v490
    %2537 = vmatpush1.bf16.msra.mxu0 %v489
    %2538 = vmatprep.subr.bf16.mxu0 %v498
    %2539 = vmatpush1.bf16.msra.mxu0 %v497
    %2540 = vmatprep.mubr.bf16.mxu0 %v758
    %2541 = vmatmul.mubr.bf16.gmra.mrb[0].mxu0 %v757
    %v2542 = vpop.f32.mrb[0].mxu0
    %v2543 = vadd.f32 %v2502, %v2542
    %v2544 = vpop.f32.mrb[0].mxu0
    %v2545 = vadd.f32 %v2504, %v2544
    %v2546 = vpop.f32.mrb[0].mxu0
    %v2547 = vpop.f32.mrb[0].mxu0
    %2548 = vdwg.mxu0
    %2549 = vmatprep.subr.bf16.mxu0 %v506
    %2550 = vmatpush1.bf16.msra.mxu0 %v505
    %2551 = vmatprep.subr.bf16.mxu0 %v514
    %2552 = vmatpush1.bf16.msra.mxu0 %v513
    %2553 = vmatprep.subr.bf16.mxu0 %v522
    %2554 = vmatpush1.bf16.msra.mxu0 %v521
    %2555 = vmatprep.subr.bf16.mxu0 %v530
    %2556 = vmatpush1.bf16.msra.mxu0 %v529
    %2557 = vmatprep.subr.bf16.mxu0 %v538
    %2558 = vmatpush1.bf16.msra.mxu0 %v537
    %2559 = vmatprep.subr.bf16.mxu0 %v546
    %2560 = vmatpush1.bf16.msra.mxu0 %v545
    %2561 = vmatprep.subr.bf16.mxu0 %v554
    %2562 = vmatpush1.bf16.msra.mxu0 %v553
    %2563 = vmatprep.subr.bf16.mxu0 %v562
    %2564 = vmatpush1.bf16.msra.mxu0 %v561
    %2565 = vmatprep.subr.bf16.mxu0 %v570
    %2566 = vmatpush1.bf16.msra.mxu0 %v569
    %2567 = vmatprep.subr.bf16.mxu0 %v578
    %2568 = vmatpush1.bf16.msra.mxu0 %v577
    %2569 = vmatprep.subr.bf16.mxu0 %v586
    %2570 = vmatpush1.bf16.msra.mxu0 %v585
    %2571 = vmatprep.subr.bf16.mxu0 %v594
    %2572 = vmatpush1.bf16.msra.mxu0 %v593
    %2573 = vmatprep.subr.bf16.mxu0 %v602
    %2574 = vmatpush1.bf16.msra.mxu0 %v601
    %2575 = vmatprep.subr.bf16.mxu0 %v610
    %2576 = vmatpush1.bf16.msra.mxu0 %v609
    %2577 = vmatprep.subr.bf16.mxu0 %v618
    %2578 = vmatpush1.bf16.msra.mxu0 %v617
    %2579 = vmatprep.subr.bf16.mxu0 %v626
    %2580 = vmatpush1.bf16.msra.mxu0 %v625
    %2581 = vmatprep.mubr.bf16.mxu0 %v760
    %2582 = vmatmul.mubr.bf16.gmra.mrb[0].mxu0 %v759
    %v2583 = vpop.f32.mrb[0].mxu0
    %v2584 = vadd.f32 %v2543, %v2583
    %v2585 = vpop.f32.mrb[0].mxu0
    %v2586 = vadd.f32 %v2545, %v2585
    %v2587 = vpop.f32.mrb[0].mxu0
    %v2588 = vpop.f32.mrb[0].mxu0
    %2589 = vdwg.mxu0
    %2590 = vmatprep.subr.bf16.mxu0 %v634
    %2591 = vmatpush1.bf16.msra.mxu0 %v633
    %2592 = vmatprep.subr.bf16.mxu0 %v642
    %2593 = vmatpush1.bf16.msra.mxu0 %v641
    %2594 = vmatprep.subr.bf16.mxu0 %v650
    %2595 = vmatpush1.bf16.msra.mxu0 %v649
    %2596 = vmatprep.subr.bf16.mxu0 %v658
    %2597 = vmatpush1.bf16.msra.mxu0 %v657
    %2598 = vmatprep.subr.bf16.mxu0 %v666
    %2599 = vmatpush1.bf16.msra.mxu0 %v665
    %2600 = vmatprep.subr.bf16.mxu0 %v674
    %2601 = vmatpush1.bf16.msra.mxu0 %v673
    %2602 = vmatprep.subr.bf16.mxu0 %v682
    %2603 = vmatpush1.bf16.msra.mxu0 %v681
    %2604 = vmatprep.subr.bf16.mxu0 %v690
    %2605 = vmatpush1.bf16.msra.mxu0 %v689
    %2606 = vmatprep.subr.bf16.mxu0 %v698
    %2607 = vmatpush1.bf16.msra.mxu0 %v697
    %2608 = vmatprep.subr.bf16.mxu0 %v706
    %2609 = vmatpush1.bf16.msra.mxu0 %v705
    %2610 = vmatprep.subr.bf16.mxu0 %v714
    %2611 = vmatpush1.bf16.msra.mxu0 %v713
    %2612 = vmatprep.subr.bf16.mxu0 %v722
    %2613 = vmatpush1.bf16.msra.mxu0 %v721
    %2614 = vmatprep.subr.bf16.mxu0 %v730
    %2615 = vmatpush1.bf16.msra.mxu0 %v729
    %2616 = vmatprep.subr.bf16.mxu0 %v738
    %2617 = vmatpush1.bf16.msra.mxu0 %v737
    %2618 = vmatprep.subr.bf16.mxu0 %v746
    %2619 = vmatpush1.bf16.msra.mxu0 %v745
    %2620 = vmatprep.subr.bf16.mxu0 %v754
    %2621 = vmatpush1.bf16.msra.mxu0 %v753
    %2622 = vmatprep.mubr.bf16.mxu0 %v762
    %2623 = vmatmul.mubr.bf16.gmra.mrb[0].mxu0 %v761
    %v2624 = vpop.f32.mrb[0].mxu0
    %v2625 = vadd.f32 %v2584, %v2624
    %v2626 = vpop.f32.mrb[0].mxu0
    %v2627 = vadd.f32 %v2586, %v2626
    %v2628 = vpop.f32.mrb[0].mxu0
    %v2629 = vpop.f32.mrb[0].mxu0
    %2630 = vdwg.mxu0
    %v2631 = vld [vmem:[#allocation7] sm:$0xff]
    %v2633 = vlaneseq
    %v2634 = vshrl.u32 %v2633, 7
    %v2635 = vsub.s32 0, %v2634
    %v2636 = vrot.slane %v2631, %v2635
    %v2637 = vlaneseq
    %v2638 = vshrl.u32 %v2637, 7
    %v2639 = vsub.s32 1, %v2638
    %v2640 = vrot.slane %v2631, %v2639
    %v2641 = vlaneseq
    %v2642 = vshrl.u32 %v2641, 7
    %v2643 = vsub.s32 2, %v2642
    %v2644 = vrot.slane %v2631, %v2643
    %v2645 = vlaneseq
    %v2646 = vshrl.u32 %v2645, 7
    %v2647 = vsub.s32 3, %v2646
    %v2648 = vrot.slane %v2631, %v2647
    %v2649 = vlaneseq
    %v2650 = vshrl.u32 %v2649, 7
    %v2651 = vsub.s32 4, %v2650
    %v2652 = vrot.slane %v2631, %v2651
    %v2653 = vlaneseq
    %v2654 = vshrl.u32 %v2653, 7
    %v2655 = vsub.s32 5, %v2654
    %v2656 = vrot.slane %v2631, %v2655
    %v2657 = vlaneseq
    %v2658 = vshrl.u32 %v2657, 7
    %v2659 = vsub.s32 6, %v2658
    %v2660 = vrot.slane %v2631, %v2659
    %v2661 = vlaneseq
    %v2662 = vshrl.u32 %v2661, 7
    %v2663 = vsub.s32 7, %v2662
    %v2664 = vrot.slane %v2631, %v2663
    %v2673 = vadd.f32 %v2133, %v2636
    %v2674 = vadd.f32 %v2135, %v2640
    %v2675 = vadd.f32 %v2297, %v2644
    %v2676 = vadd.f32 %v2299, %v2648
    %v2677 = vadd.f32 %v2461, %v2652
    %v2678 = vadd.f32 %v2463, %v2656
    %v2679 = vadd.f32 %v2625, %v2660
    %v2680 = vadd.f32 %v2627, %v2664
    %v2681 = vmax.f32 %v2673, 0.0
    %v2682 = vmax.f32 %v2674, 0.0
    %v2683 = vmax.f32 %v2675, 0.0
    %v2684 = vmax.f32 %v2676, 0.0
    %v2685 = vmax.f32 %v2677, 0.0
    %v2686 = vmax.f32 %v2678, 0.0
    %v2687 = vmax.f32 %v2679, 0.0
    %v2688 = vmax.f32 %v2680, 0.0
    %s2689 = smul.u32 %s203, 4
    %s2690 = sshll.u32 %s2689, 4
    %2691 = dma.done %s208, %s2690
    %s2693 = sshll.u32 1, 14
    %s2694 = sxor.u32 4294967295, %s2693
    %s2696 = sadd.s32 2, %s119
    %s2698 = sshll.u32 7, 26
    %s2699 = sxor.u32 4294967295, %s2698
    %s2700 = sand.u32 0, %s2699
    %s2701 = sshll.u32 %s2696, 26
    %s2702 = sor.u32 %s2700, %s2701
    %s2703 = sshll.u32 %s151, 4
    %s2704 = int_to_ptr.vmem [resolvable:$true] %s2703
    %2707 = sst [smem:[#allocation26]] 512
    %s2708 = scalar_lea.smem [#allocation26], 1
    %2709 = sst [smem:[%s2708]] 1024
    %s2710 = scalar_lea.smem [#allocation26], 2
    %2711 = sst [smem:[%s2710]] 4
    %s2712 = scalar_lea.smem [#allocation26], 3
    %2713 = sst [smem:[%s2712]] 64
    %s2714 = scalar_lea.smem [#allocation26], 4
    %2715 = sst [smem:[%s2714]] 128
    %s2716 = scalar_lea.smem [#allocation26], 5
    %2717 = sst [smem:[%s2716]] 2
    %s2718 = scalar_lea.smem [#allocation26], 6
    %2719 = sst [smem:[%s2718]] 256
    %s2720 = scalar_lea.smem [#allocation26], 7
    %2721 = sst [smem:[%s2720]] 64
    %s2722 = scalar_lea.smem [#allocation26], 8
    %2723 = sst [smem:[%s2722]] 4
    %2725 = dma.general %s4, 8192, %s2704, %s152, [#allocation25], [#allocation26], %s2702, 0
    %v2726 = vld [vmem:[%s207] sm:$0xff]
    %v2727 = vld [vmem:[%s207 + $0x8] sm:$0xff]
    %v2728 = vld [vmem:[%s207 + $0x10] sm:$0xff]
    %v2729 = vld [vmem:[%s207 + $0x18] sm:$0xff]
    %v2730 = vld [vmem:[%s207 + $0x40] sm:$0xff]
    %v2731 = vld [vmem:[%s207 + $0x48] sm:$0xff]
    %v2732 = vld [vmem:[%s207 + $0x50] sm:$0xff]
    %v2733 = vld [vmem:[%s207 + $0x58] sm:$0xff]
    %v2734 = vld [vmem:[%s207 + $0x80] sm:$0xff]
    %v2735 = vld [vmem:[%s207 + $0x88] sm:$0xff]
    %v2736 = vld [vmem:[%s207 + $0x90] sm:$0xff]
    %v2737 = vld [vmem:[%s207 + $0x98] sm:$0xff]
    %v2738 = vld [vmem:[%s207 + $0xc0] sm:$0xff]
    %v2739 = vld [vmem:[%s207 + $0xc8] sm:$0xff]
    %v2740 = vld [vmem:[%s207 + $0xd0] sm:$0xff]
    %v2741 = vld [vmem:[%s207 + $0xd8] sm:$0xff]
    %v2742 = vld [vmem:[%s207 + $0x100] sm:$0xff]
    %v2743 = vld [vmem:[%s207 + $0x108] sm:$0xff]
    %v2744 = vld [vmem:[%s207 + $0x110] sm:$0xff]
    %v2745 = vld [vmem:[%s207 + $0x118] sm:$0xff]
    %v2746 = vld [vmem:[%s207 + $0x140] sm:$0xff]
    %v2747 = vld [vmem:[%s207 + $0x148] sm:$0xff]
    %v2748 = vld [vmem:[%s207 + $0x150] sm:$0xff]
    %v2749 = vld [vmem:[%s207 + $0x158] sm:$0xff]
    %v2750 = vld [vmem:[%s207 + $0x180] sm:$0xff]
    %v2751 = vld [vmem:[%s207 + $0x188] sm:$0xff]
    %v2752 = vld [vmem:[%s207 + $0x190] sm:$0xff]
    %v2753 = vld [vmem:[%s207 + $0x198] sm:$0xff]
    %v2754 = vld [vmem:[%s207 + $0x1c0] sm:$0xff]
    %v2755 = vld [vmem:[%s207 + $0x1c8] sm:$0xff]
    %v2756 = vld [vmem:[%s207 + $0x1d0] sm:$0xff]
    %v2757 = vld [vmem:[%s207 + $0x1d8] sm:$0xff]
    %v2758 = vld [vmem:[%s207 + $0x200] sm:$0xff]
    %v2759 = vld [vmem:[%s207 + $0x208] sm:$0xff]
    %v2760 = vld [vmem:[%s207 + $0x210] sm:$0xff]
    %v2761 = vld [vmem:[%s207 + $0x218] sm:$0xff]
    %v2762 = vld [vmem:[%s207 + $0x240] sm:$0xff]
    %v2763 = vld [vmem:[%s207 + $0x248] sm:$0xff]
    %v2764 = vld [vmem:[%s207 + $0x250] sm:$0xff]
    %v2765 = vld [vmem:[%s207 + $0x258] sm:$0xff]
    %v2766 = vld [vmem:[%s207 + $0x280] sm:$0xff]
    %v2767 = vld [vmem:[%s207 + $0x288] sm:$0xff]
    %v2768 = vld [vmem:[%s207 + $0x290] sm:$0xff]
    %v2769 = vld [vmem:[%s207 + $0x298] sm:$0xff]
    %v2770 = vld [vmem:[%s207 + $0x2c0] sm:$0xff]
    %v2771 = vld [vmem:[%s207 + $0x2c8] sm:$0xff]
    %v2772 = vld [vmem:[%s207 + $0x2d0] sm:$0xff]
    %v2773 = vld [vmem:[%s207 + $0x2d8] sm:$0xff]
    %v2774 = vld [vmem:[%s207 + $0x300] sm:$0xff]
    %v2775 = vld [vmem:[%s207 + $0x308] sm:$0xff]
    %v2776 = vld [vmem:[%s207 + $0x310] sm:$0xff]
    %v2777 = vld [vmem:[%s207 + $0x318] sm:$0xff]
    %v2778 = vld [vmem:[%s207 + $0x340] sm:$0xff]
    %v2779 = vld [vmem:[%s207 + $0x348] sm:$0xff]
    %v2780 = vld [vmem:[%s207 + $0x350] sm:$0xff]
    %v2781 = vld [vmem:[%s207 + $0x358] sm:$0xff]
    %v2782 = vld [vmem:[%s207 + $0x380] sm:$0xff]
    %v2783 = vld [vmem:[%s207 + $0x388] sm:$0xff]
    %v2784 = vld [vmem:[%s207 + $0x390] sm:$0xff]
    %v2785 = vld [vmem:[%s207 + $0x398] sm:$0xff]
    %v2786 = vld [vmem:[%s207 + $0x3c0] sm:$0xff]
    %v2787 = vld [vmem:[%s207 + $0x3c8] sm:$0xff]
    %v2788 = vld [vmem:[%s207 + $0x3d0] sm:$0xff]
    %v2789 = vld [vmem:[%s207 + $0x3d8] sm:$0xff]
    %v2790 = vld [vmem:[%s207 + $0x400] sm:$0xff]
    %v2791 = vld [vmem:[%s207 + $0x408] sm:$0xff]
    %v2792 = vld [vmem:[%s207 + $0x410] sm:$0xff]
    %v2793 = vld [vmem:[%s207 + $0x418] sm:$0xff]
    %v2794 = vld [vmem:[%s207 + $0x440] sm:$0xff]
    %v2795 = vld [vmem:[%s207 + $0x448] sm:$0xff]
    %v2796 = vld [vmem:[%s207 + $0x450] sm:$0xff]
    %v2797 = vld [vmem:[%s207 + $0x458] sm:$0xff]
    %v2798 = vld [vmem:[%s207 + $0x480] sm:$0xff]
    %v2799 = vld [vmem:[%s207 + $0x488] sm:$0xff]
    %v2800 = vld [vmem:[%s207 + $0x490] sm:$0xff]
    %v2801 = vld [vmem:[%s207 + $0x498] sm:$0xff]
    %v2802 = vld [vmem:[%s207 + $0x4c0] sm:$0xff]
    %v2803 = vld [vmem:[%s207 + $0x4c8] sm:$0xff]
    %v2804 = vld [vmem:[%s207 + $0x4d0] sm:$0xff]
    %v2805 = vld [vmem:[%s207 + $0x4d8] sm:$0xff]
    %v2806 = vld [vmem:[%s207 + $0x500] sm:$0xff]
    %v2807 = vld [vmem:[%s207 + $0x508] sm:$0xff]
    %v2808 = vld [vmem:[%s207 + $0x510] sm:$0xff]
    %v2809 = vld [vmem:[%s207 + $0x518] sm:$0xff]
    %v2810 = vld [vmem:[%s207 + $0x540] sm:$0xff]
    %v2811 = vld [vmem:[%s207 + $0x548] sm:$0xff]
    %v2812 = vld [vmem:[%s207 + $0x550] sm:$0xff]
    %v2813 = vld [vmem:[%s207 + $0x558] sm:$0xff]
    %v2814 = vld [vmem:[%s207 + $0x580] sm:$0xff]
    %v2815 = vld [vmem:[%s207 + $0x588] sm:$0xff]
    %v2816 = vld [vmem:[%s207 + $0x590] sm:$0xff]
    %v2817 = vld [vmem:[%s207 + $0x598] sm:$0xff]
    %v2818 = vld [vmem:[%s207 + $0x5c0] sm:$0xff]
    %v2819 = vld [vmem:[%s207 + $0x5c8] sm:$0xff]
    %v2820 = vld [vmem:[%s207 + $0x5d0] sm:$0xff]
    %v2821 = vld [vmem:[%s207 + $0x5d8] sm:$0xff]
    %v2822 = vld [vmem:[%s207 + $0x600] sm:$0xff]
    %v2823 = vld [vmem:[%s207 + $0x608] sm:$0xff]
    %v2824 = vld [vmem:[%s207 + $0x610] sm:$0xff]
    %v2825 = vld [vmem:[%s207 + $0x618] sm:$0xff]
    %v2826 = vld [vmem:[%s207 + $0x640] sm:$0xff]
    %v2827 = vld [vmem:[%s207 + $0x648] sm:$0xff]
    %v2828 = vld [vmem:[%s207 + $0x650] sm:$0xff]
    %v2829 = vld [vmem:[%s207 + $0x658] sm:$0xff]
    %v2830 = vld [vmem:[%s207 + $0x680] sm:$0xff]
    %v2831 = vld [vmem:[%s207 + $0x688] sm:$0xff]
    %v2832 = vld [vmem:[%s207 + $0x690] sm:$0xff]
    %v2833 = vld [vmem:[%s207 + $0x698] sm:$0xff]
    %v2834 = vld [vmem:[%s207 + $0x6c0] sm:$0xff]
    %v2835 = vld [vmem:[%s207 + $0x6c8] sm:$0xff]
    %v2836 = vld [vmem:[%s207 + $0x6d0] sm:$0xff]
    %v2837 = vld [vmem:[%s207 + $0x6d8] sm:$0xff]
    %v2838 = vld [vmem:[%s207 + $0x700] sm:$0xff]
    %v2839 = vld [vmem:[%s207 + $0x708] sm:$0xff]
    %v2840 = vld [vmem:[%s207 + $0x710] sm:$0xff]
    %v2841 = vld [vmem:[%s207 + $0x718] sm:$0xff]
    %v2842 = vld [vmem:[%s207 + $0x740] sm:$0xff]
    %v2843 = vld [vmem:[%s207 + $0x748] sm:$0xff]
    %v2844 = vld [vmem:[%s207 + $0x750] sm:$0xff]
    %v2845 = vld [vmem:[%s207 + $0x758] sm:$0xff]
    %v2846 = vld [vmem:[%s207 + $0x780] sm:$0xff]
    %v2847 = vld [vmem:[%s207 + $0x788] sm:$0xff]
    %v2848 = vld [vmem:[%s207 + $0x790] sm:$0xff]
    %v2849 = vld [vmem:[%s207 + $0x798] sm:$0xff]
    %v2850 = vld [vmem:[%s207 + $0x7c0] sm:$0xff]
    %v2851 = vld [vmem:[%s207 + $0x7c8] sm:$0xff]
    %v2852 = vld [vmem:[%s207 + $0x7d0] sm:$0xff]
    %v2853 = vld [vmem:[%s207 + $0x7d8] sm:$0xff]
    %v2854 = vld [vmem:[%s207 + $0x800] sm:$0xff]
    %v2855 = vld [vmem:[%s207 + $0x808] sm:$0xff]
    %v2856 = vld [vmem:[%s207 + $0x810] sm:$0xff]
    %v2857 = vld [vmem:[%s207 + $0x818] sm:$0xff]
    %v2858 = vld [vmem:[%s207 + $0x840] sm:$0xff]
    %v2859 = vld [vmem:[%s207 + $0x848] sm:$0xff]
    %v2860 = vld [vmem:[%s207 + $0x850] sm:$0xff]
    %v2861 = vld [vmem:[%s207 + $0x858] sm:$0xff]
    %v2862 = vld [vmem:[%s207 + $0x880] sm:$0xff]
    %v2863 = vld [vmem:[%s207 + $0x888] sm:$0xff]
    %v2864 = vld [vmem:[%s207 + $0x890] sm:$0xff]
    %v2865 = vld [vmem:[%s207 + $0x898] sm:$0xff]
    %v2866 = vld [vmem:[%s207 + $0x8c0] sm:$0xff]
    %v2867 = vld [vmem:[%s207 + $0x8c8] sm:$0xff]
    %v2868 = vld [vmem:[%s207 + $0x8d0] sm:$0xff]
    %v2869 = vld [vmem:[%s207 + $0x8d8] sm:$0xff]
    %v2870 = vld [vmem:[%s207 + $0x900] sm:$0xff]
    %v2871 = vld [vmem:[%s207 + $0x908] sm:$0xff]
    %v2872 = vld [vmem:[%s207 + $0x910] sm:$0xff]
    %v2873 = vld [vmem:[%s207 + $0x918] sm:$0xff]
    %v2874 = vld [vmem:[%s207 + $0x940] sm:$0xff]
    %v2875 = vld [vmem:[%s207 + $0x948] sm:$0xff]
    %v2876 = vld [vmem:[%s207 + $0x950] sm:$0xff]
    %v2877 = vld [vmem:[%s207 + $0x958] sm:$0xff]
    %v2878 = vld [vmem:[%s207 + $0x980] sm:$0xff]
    %v2879 = vld [vmem:[%s207 + $0x988] sm:$0xff]
    %v2880 = vld [vmem:[%s207 + $0x990] sm:$0xff]
    %v2881 = vld [vmem:[%s207 + $0x998] sm:$0xff]
    %v2882 = vld [vmem:[%s207 + $0x9c0] sm:$0xff]
    %v2883 = vld [vmem:[%s207 + $0x9c8] sm:$0xff]
    %v2884 = vld [vmem:[%s207 + $0x9d0] sm:$0xff]
    %v2885 = vld [vmem:[%s207 + $0x9d8] sm:$0xff]
    %v2886 = vld [vmem:[%s207 + $0xa00] sm:$0xff]
    %v2887 = vld [vmem:[%s207 + $0xa08] sm:$0xff]
    %v2888 = vld [vmem:[%s207 + $0xa10] sm:$0xff]
    %v2889 = vld [vmem:[%s207 + $0xa18] sm:$0xff]
    %v2890 = vld [vmem:[%s207 + $0xa40] sm:$0xff]
    %v2891 = vld [vmem:[%s207 + $0xa48] sm:$0xff]
    %v2892 = vld [vmem:[%s207 + $0xa50] sm:$0xff]
    %v2893 = vld [vmem:[%s207 + $0xa58] sm:$0xff]
    %v2894 = vld [vmem:[%s207 + $0xa80] sm:$0xff]
    %v2895 = vld [vmem:[%s207 + $0xa88] sm:$0xff]
    %v2896 = vld [vmem:[%s207 + $0xa90] sm:$0xff]
    %v2897 = vld [vmem:[%s207 + $0xa98] sm:$0xff]
    %v2898 = vld [vmem:[%s207 + $0xac0] sm:$0xff]
    %v2899 = vld [vmem:[%s207 + $0xac8] sm:$0xff]
    %v2900 = vld [vmem:[%s207 + $0xad0] sm:$0xff]
    %v2901 = vld [vmem:[%s207 + $0xad8] sm:$0xff]
    %v2902 = vld [vmem:[%s207 + $0xb00] sm:$0xff]
    %v2903 = vld [vmem:[%s207 + $0xb08] sm:$0xff]
    %v2904 = vld [vmem:[%s207 + $0xb10] sm:$0xff]
    %v2905 = vld [vmem:[%s207 + $0xb18] sm:$0xff]
    %v2906 = vld [vmem:[%s207 + $0xb40] sm:$0xff]
    %v2907 = vld [vmem:[%s207 + $0xb48] sm:$0xff]
    %v2908 = vld [vmem:[%s207 + $0xb50] sm:$0xff]
    %v2909 = vld [vmem:[%s207 + $0xb58] sm:$0xff]
    %v2910 = vld [vmem:[%s207 + $0xb80] sm:$0xff]
    %v2911 = vld [vmem:[%s207 + $0xb88] sm:$0xff]
    %v2912 = vld [vmem:[%s207 + $0xb90] sm:$0xff]
    %v2913 = vld [vmem:[%s207 + $0xb98] sm:$0xff]
    %v2914 = vld [vmem:[%s207 + $0xbc0] sm:$0xff]
    %v2915 = vld [vmem:[%s207 + $0xbc8] sm:$0xff]
    %v2916 = vld [vmem:[%s207 + $0xbd0] sm:$0xff]
    %v2917 = vld [vmem:[%s207 + $0xbd8] sm:$0xff]
    %v2918 = vld [vmem:[%s207 + $0xc00] sm:$0xff]
    %v2919 = vld [vmem:[%s207 + $0xc08] sm:$0xff]
    %v2920 = vld [vmem:[%s207 + $0xc10] sm:$0xff]
    %v2921 = vld [vmem:[%s207 + $0xc18] sm:$0xff]
    %v2922 = vld [vmem:[%s207 + $0xc40] sm:$0xff]
    %v2923 = vld [vmem:[%s207 + $0xc48] sm:$0xff]
    %v2924 = vld [vmem:[%s207 + $0xc50] sm:$0xff]
    %v2925 = vld [vmem:[%s207 + $0xc58] sm:$0xff]
    %v2926 = vld [vmem:[%s207 + $0xc80] sm:$0xff]
    %v2927 = vld [vmem:[%s207 + $0xc88] sm:$0xff]
    %v2928 = vld [vmem:[%s207 + $0xc90] sm:$0xff]
    %v2929 = vld [vmem:[%s207 + $0xc98] sm:$0xff]
    %v2930 = vld [vmem:[%s207 + $0xcc0] sm:$0xff]
    %v2931 = vld [vmem:[%s207 + $0xcc8] sm:$0xff]
    %v2932 = vld [vmem:[%s207 + $0xcd0] sm:$0xff]
    %v2933 = vld [vmem:[%s207 + $0xcd8] sm:$0xff]
    %v2934 = vld [vmem:[%s207 + $0xd00] sm:$0xff]
    %v2935 = vld [vmem:[%s207 + $0xd08] sm:$0xff]
    %v2936 = vld [vmem:[%s207 + $0xd10] sm:$0xff]
    %v2937 = vld [vmem:[%s207 + $0xd18] sm:$0xff]
    %v2938 = vld [vmem:[%s207 + $0xd40] sm:$0xff]
    %v2939 = vld [vmem:[%s207 + $0xd48] sm:$0xff]
    %v2940 = vld [vmem:[%s207 + $0xd50] sm:$0xff]
    %v2941 = vld [vmem:[%s207 + $0xd58] sm:$0xff]
    %v2942 = vld [vmem:[%s207 + $0xd80] sm:$0xff]
    %v2943 = vld [vmem:[%s207 + $0xd88] sm:$0xff]
    %v2944 = vld [vmem:[%s207 + $0xd90] sm:$0xff]
    %v2945 = vld [vmem:[%s207 + $0xd98] sm:$0xff]
    %v2946 = vld [vmem:[%s207 + $0xdc0] sm:$0xff]
    %v2947 = vld [vmem:[%s207 + $0xdc8] sm:$0xff]
    %v2948 = vld [vmem:[%s207 + $0xdd0] sm:$0xff]
    %v2949 = vld [vmem:[%s207 + $0xdd8] sm:$0xff]
    %v2950 = vld [vmem:[%s207 + $0xe00] sm:$0xff]
    %v2951 = vld [vmem:[%s207 + $0xe08] sm:$0xff]
    %v2952 = vld [vmem:[%s207 + $0xe10] sm:$0xff]
    %v2953 = vld [vmem:[%s207 + $0xe18] sm:$0xff]
    %v2954 = vld [vmem:[%s207 + $0xe40] sm:$0xff]
    %v2955 = vld [vmem:[%s207 + $0xe48] sm:$0xff]
    %v2956 = vld [vmem:[%s207 + $0xe50] sm:$0xff]
    %v2957 = vld [vmem:[%s207 + $0xe58] sm:$0xff]
    %v2958 = vld [vmem:[%s207 + $0xe80] sm:$0xff]
    %v2959 = vld [vmem:[%s207 + $0xe88] sm:$0xff]
    %v2960 = vld [vmem:[%s207 + $0xe90] sm:$0xff]
    %v2961 = vld [vmem:[%s207 + $0xe98] sm:$0xff]
    %v2962 = vld [vmem:[%s207 + $0xec0] sm:$0xff]
    %v2963 = vld [vmem:[%s207 + $0xec8] sm:$0xff]
    %v2964 = vld [vmem:[%s207 + $0xed0] sm:$0xff]
    %v2965 = vld [vmem:[%s207 + $0xed8] sm:$0xff]
    %v2966 = vld [vmem:[%s207 + $0xf00] sm:$0xff]
    %v2967 = vld [vmem:[%s207 + $0xf08] sm:$0xff]
    %v2968 = vld [vmem:[%s207 + $0xf10] sm:$0xff]
    %v2969 = vld [vmem:[%s207 + $0xf18] sm:$0xff]
    %v2970 = vld [vmem:[%s207 + $0xf40] sm:$0xff]
    %v2971 = vld [vmem:[%s207 + $0xf48] sm:$0xff]
    %v2972 = vld [vmem:[%s207 + $0xf50] sm:$0xff]
    %v2973 = vld [vmem:[%s207 + $0xf58] sm:$0xff]
    %v2974 = vld [vmem:[%s207 + $0xf80] sm:$0xff]
    %v2975 = vld [vmem:[%s207 + $0xf88] sm:$0xff]
    %v2976 = vld [vmem:[%s207 + $0xf90] sm:$0xff]
    %v2977 = vld [vmem:[%s207 + $0xf98] sm:$0xff]
    %v2978 = vld [vmem:[%s207 + $0xfc0] sm:$0xff]
    %v2979 = vld [vmem:[%s207 + $0xfc8] sm:$0xff]
    %v2980 = vld [vmem:[%s207 + $0xfd0] sm:$0xff]
    %v2981 = vld [vmem:[%s207 + $0xfd8] sm:$0xff]
    %v2982 = vpack.c.bf16 %v2681, %v2681
    %v2983 = vpack.c.bf16 %v2682, %v2682
    %v2984 = vpack.c.bf16 %v2683, %v2683
    %v2985 = vpack.c.bf16 %v2684, %v2684
    %v2986 = vpack.c.bf16 %v2685, %v2685
    %v2987 = vpack.c.bf16 %v2686, %v2686
    %v2988 = vpack.c.bf16 %v2687, %v2687
    %v2989 = vpack.c.bf16 %v2688, %v2688
    %v2990 = vld [vmem:[#allocation9] sm:$0xf]
    %v2992 = vlaneseq
    %v2993 = vshrl.u32 %v2992, 7
    %v2994 = vsub.s32 0, %v2993
    %v2995 = vrot.slane %v2990, %v2994
    %v2996 = vlaneseq
    %v2997 = vshrl.u32 %v2996, 7
    %v2998 = vsub.s32 1, %v2997
    %v2999 = vrot.slane %v2990, %v2998
    %v3000 = vlaneseq
    %v3001 = vshrl.u32 %v3000, 7
    %v3002 = vsub.s32 2, %v3001
    %v3003 = vrot.slane %v2990, %v3002
    %v3004 = vlaneseq
    %v3005 = vshrl.u32 %v3004, 7
    %v3006 = vsub.s32 3, %v3005
    %v3007 = vrot.slane %v2990, %v3006
    %3012 = vmatprep.subr.bf16.mxu0 %v2727
    %3013 = vmatpush1.bf16.msra.mxu0 %v2726
    %3014 = vmatprep.subr.bf16.mxu0 %v2731
    %3015 = vmatpush1.bf16.msra.mxu0 %v2730
    %3016 = vmatprep.subr.bf16.mxu0 %v2735
    %3017 = vmatpush1.bf16.msra.mxu0 %v2734
    %3018 = vmatprep.subr.bf16.mxu0 %v2739
    %3019 = vmatpush1.bf16.msra.mxu0 %v2738
    %3020 = vmatprep.subr.bf16.mxu0 %v2743
    %3021 = vmatpush1.bf16.msra.mxu0 %v2742
    %3022 = vmatprep.subr.bf16.mxu0 %v2747
    %3023 = vmatpush1.bf16.msra.mxu0 %v2746
    %3024 = vmatprep.subr.bf16.mxu0 %v2751
    %3025 = vmatpush1.bf16.msra.mxu0 %v2750
    %3026 = vmatprep.subr.bf16.mxu0 %v2755
    %3027 = vmatpush1.bf16.msra.mxu0 %v2754
    %3028 = vmatprep.subr.bf16.mxu0 %v2759
    %3029 = vmatpush1.bf16.msra.mxu0 %v2758
    %3030 = vmatprep.subr.bf16.mxu0 %v2763
    %3031 = vmatpush1.bf16.msra.mxu0 %v2762
    %3032 = vmatprep.subr.bf16.mxu0 %v2767
    %3033 = vmatpush1.bf16.msra.mxu0 %v2766
    %3034 = vmatprep.subr.bf16.mxu0 %v2771
    %3035 = vmatpush1.bf16.msra.mxu0 %v2770
    %3036 = vmatprep.subr.bf16.mxu0 %v2775
    %3037 = vmatpush1.bf16.msra.mxu0 %v2774
    %3038 = vmatprep.subr.bf16.mxu0 %v2779
    %3039 = vmatpush1.bf16.msra.mxu0 %v2778
    %3040 = vmatprep.subr.bf16.mxu0 %v2783
    %3041 = vmatpush1.bf16.msra.mxu0 %v2782
    %3042 = vmatprep.subr.bf16.mxu0 %v2787
    %3043 = vmatpush1.bf16.msra.mxu0 %v2786
    %3044 = vmatprep.mubr.bf16.mxu0 %v2983
    %3045 = vmatmul.mubr.bf16.gmra.mrb[0].mxu0 %v2982
    %v3046 = vpop.f32.mrb[0].mxu0
    %v3047 = vadd.f32 %v2995, %v3046
    %v3048 = vpop.f32.mrb[0].mxu0
    %v3049 = vadd.f32 %v2999, %v3048
    %v3050 = vpop.f32.mrb[0].mxu0
    %v3051 = vpop.f32.mrb[0].mxu0
    %3052 = vdwg.mxu0
    %3053 = vmatprep.subr.bf16.mxu0 %v2791
    %3054 = vmatpush1.bf16.msra.mxu0 %v2790
    %3055 = vmatprep.subr.bf16.mxu0 %v2795
    %3056 = vmatpush1.bf16.msra.mxu0 %v2794
    %3057 = vmatprep.subr.bf16.mxu0 %v2799
    %3058 = vmatpush1.bf16.msra.mxu0 %v2798
    %3059 = vmatprep.subr.bf16.mxu0 %v2803
    %3060 = vmatpush1.bf16.msra.mxu0 %v2802
    %3061 = vmatprep.subr.bf16.mxu0 %v2807
    %3062 = vmatpush1.bf16.msra.mxu0 %v2806
    %3063 = vmatprep.subr.bf16.mxu0 %v2811
    %3064 = vmatpush1.bf16.msra.mxu0 %v2810
    %3065 = vmatprep.subr.bf16.mxu0 %v2815
    %3066 = vmatpush1.bf16.msra.mxu0 %v2814
    %3067 = vmatprep.subr.bf16.mxu0 %v2819
    %3068 = vmatpush1.bf16.msra.mxu0 %v2818
    %3069 = vmatprep.subr.bf16.mxu0 %v2823
    %3070 = vmatpush1.bf16.msra.mxu0 %v2822
    %3071 = vmatprep.subr.bf16.mxu0 %v2827
    %3072 = vmatpush1.bf16.msra.mxu0 %v2826
    %3073 = vmatprep.subr.bf16.mxu0 %v2831
    %3074 = vmatpush1.bf16.msra.mxu0 %v2830
    %3075 = vmatprep.subr.bf16.mxu0 %v2835
    %3076 = vmatpush1.bf16.msra.mxu0 %v2834
    %3077 = vmatprep.subr.bf16.mxu0 %v2839
    %3078 = vmatpush1.bf16.msra.mxu0 %v2838
    %3079 = vmatprep.subr.bf16.mxu0 %v2843
    %3080 = vmatpush1.bf16.msra.mxu0 %v2842
    %3081 = vmatprep.subr.bf16.mxu0 %v2847
    %3082 = vmatpush1.bf16.msra.mxu0 %v2846
    %3083 = vmatprep.subr.bf16.mxu0 %v2851
    %3084 = vmatpush1.bf16.msra.mxu0 %v2850
    %3085 = vmatprep.mubr.bf16.mxu0 %v2985
    %3086 = vmatmul.mubr.bf16.gmra.mrb[0].mxu0 %v2984
    %v3087 = vpop.f32.mrb[0].mxu0
    %v3088 = vadd.f32 %v3047, %v3087
    %v3089 = vpop.f32.mrb[0].mxu0
    %v3090 = vadd.f32 %v3049, %v3089
    %v3091 = vpop.f32.mrb[0].mxu0
    %v3092 = vpop.f32.mrb[0].mxu0
    %3093 = vdwg.mxu0
    %3094 = vmatprep.subr.bf16.mxu0 %v2855
    %3095 = vmatpush1.bf16.msra.mxu0 %v2854
    %3096 = vmatprep.subr.bf16.mxu0 %v2859
    %3097 = vmatpush1.bf16.msra.mxu0 %v2858
    %3098 = vmatprep.subr.bf16.mxu0 %v2863
    %3099 = vmatpush1.bf16.msra.mxu0 %v2862
    %3100 = vmatprep.subr.bf16.mxu0 %v2867
    %3101 = vmatpush1.bf16.msra.mxu0 %v2866
    %3102 = vmatprep.subr.bf16.mxu0 %v2871
    %3103 = vmatpush1.bf16.msra.mxu0 %v2870
    %3104 = vmatprep.subr.bf16.mxu0 %v2875
    %3105 = vmatpush1.bf16.msra.mxu0 %v2874
    %3106 = vmatprep.subr.bf16.mxu0 %v2879
    %3107 = vmatpush1.bf16.msra.mxu0 %v2878
    %3108 = vmatprep.subr.bf16.mxu0 %v2883
    %3109 = vmatpush1.bf16.msra.mxu0 %v2882
    %3110 = vmatprep.subr.bf16.mxu0 %v2887
    %3111 = vmatpush1.bf16.msra.mxu0 %v2886
    %3112 = vmatprep.subr.bf16.mxu0 %v2891
    %3113 = vmatpush1.bf16.msra.mxu0 %v2890
    %3114 = vmatprep.subr.bf16.mxu0 %v2895
    %3115 = vmatpush1.bf16.msra.mxu0 %v2894
    %3116 = vmatprep.subr.bf16.mxu0 %v2899
    %3117 = vmatpush1.bf16.msra.mxu0 %v2898
    %3118 = vmatprep.subr.bf16.mxu0 %v2903
    %3119 = vmatpush1.bf16.msra.mxu0 %v2902
    %3120 = vmatprep.subr.bf16.mxu0 %v2907
    %3121 = vmatpush1.bf16.msra.mxu0 %v2906
    %3122 = vmatprep.subr.bf16.mxu0 %v2911
    %3123 = vmatpush1.bf16.msra.mxu0 %v2910
    %3124 = vmatprep.subr.bf16.mxu0 %v2915
    %3125 = vmatpush1.bf16.msra.mxu0 %v2914
    %3126 = vmatprep.mubr.bf16.mxu0 %v2987
    %3127 = vmatmul.mubr.bf16.gmra.mrb[0].mxu0 %v2986
    %v3128 = vpop.f32.mrb[0].mxu0
    %v3129 = vadd.f32 %v3088, %v3128
    %v3130 = vpop.f32.mrb[0].mxu0
    %v3131 = vadd.f32 %v3090, %v3130
    %v3132 = vpop.f32.mrb[0].mxu0
    %v3133 = vpop.f32.mrb[0].mxu0
    %3134 = vdwg.mxu0
    %3135 = vmatprep.subr.bf16.mxu0 %v2919
    %3136 = vmatpush1.bf16.msra.mxu0 %v2918
    %3137 = vmatprep.subr.bf16.mxu0 %v2923
    %3138 = vmatpush1.bf16.msra.mxu0 %v2922
    %3139 = vmatprep.subr.bf16.mxu0 %v2927
    %3140 = vmatpush1.bf16.msra.mxu0 %v2926
    %3141 = vmatprep.subr.bf16.mxu0 %v2931
    %3142 = vmatpush1.bf16.msra.mxu0 %v2930
    %3143 = vmatprep.subr.bf16.mxu0 %v2935
    %3144 = vmatpush1.bf16.msra.mxu0 %v2934
    %3145 = vmatprep.subr.bf16.mxu0 %v2939
    %3146 = vmatpush1.bf16.msra.mxu0 %v2938
    %3147 = vmatprep.subr.bf16.mxu0 %v2943
    %3148 = vmatpush1.bf16.msra.mxu0 %v2942
    %3149 = vmatprep.subr.bf16.mxu0 %v2947
    %3150 = vmatpush1.bf16.msra.mxu0 %v2946
    %3151 = vmatprep.subr.bf16.mxu0 %v2951
    %3152 = vmatpush1.bf16.msra.mxu0 %v2950
    %3153 = vmatprep.subr.bf16.mxu0 %v2955
    %3154 = vmatpush1.bf16.msra.mxu0 %v2954
    %3155 = vmatprep.subr.bf16.mxu0 %v2959
    %3156 = vmatpush1.bf16.msra.mxu0 %v2958
    %3157 = vmatprep.subr.bf16.mxu0 %v2963
    %3158 = vmatpush1.bf16.msra.mxu0 %v2962
    %3159 = vmatprep.subr.bf16.mxu0 %v2967
    %3160 = vmatpush1.bf16.msra.mxu0 %v2966
    %3161 = vmatprep.subr.bf16.mxu0 %v2971
    %3162 = vmatpush1.bf16.msra.mxu0 %v2970
    %3163 = vmatprep.subr.bf16.mxu0 %v2975
    %3164 = vmatpush1.bf16.msra.mxu0 %v2974
    %3165 = vmatprep.subr.bf16.mxu0 %v2979
    %3166 = vmatpush1.bf16.msra.mxu0 %v2978
    %3167 = vmatprep.mubr.bf16.mxu0 %v2989
    %3168 = vmatmul.mubr.bf16.gmra.mrb[0].mxu0 %v2988
    %v3169 = vpop.f32.mrb[0].mxu0
    %v3170 = vadd.f32 %v3129, %v3169
    %v3171 = vpop.f32.mrb[0].mxu0
    %v3172 = vadd.f32 %v3131, %v3171
    %v3173 = vpop.f32.mrb[0].mxu0
    %v3174 = vpop.f32.mrb[0].mxu0
    %3175 = vdwg.mxu0
    %3176 = vmatprep.subr.bf16.mxu0 %v2729
    %3177 = vmatpush1.bf16.msra.mxu0 %v2728
    %3178 = vmatprep.subr.bf16.mxu0 %v2733
    %3179 = vmatpush1.bf16.msra.mxu0 %v2732
    %3180 = vmatprep.subr.bf16.mxu0 %v2737
    %3181 = vmatpush1.bf16.msra.mxu0 %v2736
    %3182 = vmatprep.subr.bf16.mxu0 %v2741
    %3183 = vmatpush1.bf16.msra.mxu0 %v2740
    %3184 = vmatprep.subr.bf16.mxu0 %v2745
    %3185 = vmatpush1.bf16.msra.mxu0 %v2744
    %3186 = vmatprep.subr.bf16.mxu0 %v2749
    %3187 = vmatpush1.bf16.msra.mxu0 %v2748
    %3188 = vmatprep.subr.bf16.mxu0 %v2753
    %3189 = vmatpush1.bf16.msra.mxu0 %v2752
    %3190 = vmatprep.subr.bf16.mxu0 %v2757
    %3191 = vmatpush1.bf16.msra.mxu0 %v2756
    %3192 = vmatprep.subr.bf16.mxu0 %v2761
    %3193 = vmatpush1.bf16.msra.mxu0 %v2760
    %3194 = vmatprep.subr.bf16.mxu0 %v2765
    %3195 = vmatpush1.bf16.msra.mxu0 %v2764
    %3196 = vmatprep.subr.bf16.mxu0 %v2769
    %3197 = vmatpush1.bf16.msra.mxu0 %v2768
    %3198 = vmatprep.subr.bf16.mxu0 %v2773
    %3199 = vmatpush1.bf16.msra.mxu0 %v2772
    %3200 = vmatprep.subr.bf16.mxu0 %v2777
    %3201 = vmatpush1.bf16.msra.mxu0 %v2776
    %3202 = vmatprep.subr.bf16.mxu0 %v2781
    %3203 = vmatpush1.bf16.msra.mxu0 %v2780
    %3204 = vmatprep.subr.bf16.mxu0 %v2785
    %3205 = vmatpush1.bf16.msra.mxu0 %v2784
    %3206 = vmatprep.subr.bf16.mxu0 %v2789
    %3207 = vmatpush1.bf16.msra.mxu0 %v2788
    %3208 = vmatprep.mubr.bf16.mxu0 %v2983
    %3209 = vmatmul.mubr.bf16.gmra.mrb[0].mxu0 %v2982
    %v3210 = vpop.f32.mrb[0].mxu0
    %v3211 = vadd.f32 %v3003, %v3210
    %v3212 = vpop.f32.mrb[0].mxu0
    %v3213 = vadd.f32 %v3007, %v3212
    %v3214 = vpop.f32.mrb[0].mxu0
    %v3215 = vpop.f32.mrb[0].mxu0
    %3216 = vdwg.mxu0
    %3217 = vmatprep.subr.bf16.mxu0 %v2793
    %3218 = vmatpush1.bf16.msra.mxu0 %v2792
    %3219 = vmatprep.subr.bf16.mxu0 %v2797
    %3220 = vmatpush1.bf16.msra.mxu0 %v2796
    %3221 = vmatprep.subr.bf16.mxu0 %v2801
    %3222 = vmatpush1.bf16.msra.mxu0 %v2800
    %3223 = vmatprep.subr.bf16.mxu0 %v2805
    %3224 = vmatpush1.bf16.msra.mxu0 %v2804
    %3225 = vmatprep.subr.bf16.mxu0 %v2809
    %3226 = vmatpush1.bf16.msra.mxu0 %v2808
    %3227 = vmatprep.subr.bf16.mxu0 %v2813
    %3228 = vmatpush1.bf16.msra.mxu0 %v2812
    %3229 = vmatprep.subr.bf16.mxu0 %v2817
    %3230 = vmatpush1.bf16.msra.mxu0 %v2816
    %3231 = vmatprep.subr.bf16.mxu0 %v2821
    %3232 = vmatpush1.bf16.msra.mxu0 %v2820
    %3233 = vmatprep.subr.bf16.mxu0 %v2825
    %3234 = vmatpush1.bf16.msra.mxu0 %v2824
    %3235 = vmatprep.subr.bf16.mxu0 %v2829
    %3236 = vmatpush1.bf16.msra.mxu0 %v2828
    %3237 = vmatprep.subr.bf16.mxu0 %v2833
    %3238 = vmatpush1.bf16.msra.mxu0 %v2832
    %3239 = vmatprep.subr.bf16.mxu0 %v2837
    %3240 = vmatpush1.bf16.msra.mxu0 %v2836
    %3241 = vmatprep.subr.bf16.mxu0 %v2841
    %3242 = vmatpush1.bf16.msra.mxu0 %v2840
    %3243 = vmatprep.subr.bf16.mxu0 %v2845
    %3244 = vmatpush1.bf16.msra.mxu0 %v2844
    %3245 = vmatprep.subr.bf16.mxu0 %v2849
    %3246 = vmatpush1.bf16.msra.mxu0 %v2848
    %3247 = vmatprep.subr.bf16.mxu0 %v2853
    %3248 = vmatpush1.bf16.msra.mxu0 %v2852
    %3249 = vmatprep.mubr.bf16.mxu0 %v2985
    %3250 = vmatmul.mubr.bf16.gmra.mrb[0].mxu0 %v2984
    %v3251 = vpop.f32.mrb[0].mxu0
    %v3252 = vadd.f32 %v3211, %v3251
    %v3253 = vpop.f32.mrb[0].mxu0
    %v3254 = vadd.f32 %v3213, %v3253
    %v3255 = vpop.f32.mrb[0].mxu0
    %v3256 = vpop.f32.mrb[0].mxu0
    %3257 = vdwg.mxu0
    %3258 = vmatprep.subr.bf16.mxu0 %v2857
    %3259 = vmatpush1.bf16.msra.mxu0 %v2856
    %3260 = vmatprep.subr.bf16.mxu0 %v2861
    %3261 = vmatpush1.bf16.msra.mxu0 %v2860
    %3262 = vmatprep.subr.bf16.mxu0 %v2865
    %3263 = vmatpush1.bf16.msra.mxu0 %v2864
    %3264 = vmatprep.subr.bf16.mxu0 %v2869
    %3265 = vmatpush1.bf16.msra.mxu0 %v2868
    %3266 = vmatprep.subr.bf16.mxu0 %v2873
    %3267 = vmatpush1.bf16.msra.mxu0 %v2872
    %3268 = vmatprep.subr.bf16.mxu0 %v2877
    %3269 = vmatpush1.bf16.msra.mxu0 %v2876
    %3270 = vmatprep.subr.bf16.mxu0 %v2881
    %3271 = vmatpush1.bf16.msra.mxu0 %v2880
    %3272 = vmatprep.subr.bf16.mxu0 %v2885
    %3273 = vmatpush1.bf16.msra.mxu0 %v2884
    %3274 = vmatprep.subr.bf16.mxu0 %v2889
    %3275 = vmatpush1.bf16.msra.mxu0 %v2888
    %3276 = vmatprep.subr.bf16.mxu0 %v2893
    %3277 = vmatpush1.bf16.msra.mxu0 %v2892
    %3278 = vmatprep.subr.bf16.mxu0 %v2897
    %3279 = vmatpush1.bf16.msra.mxu0 %v2896
    %3280 = vmatprep.subr.bf16.mxu0 %v2901
    %3281 = vmatpush1.bf16.msra.mxu0 %v2900
    %3282 = vmatprep.subr.bf16.mxu0 %v2905
    %3283 = vmatpush1.bf16.msra.mxu0 %v2904
    %3284 = vmatprep.subr.bf16.mxu0 %v2909
    %3285 = vmatpush1.bf16.msra.mxu0 %v2908
    %3286 = vmatprep.subr.bf16.mxu0 %v2913
    %3287 = vmatpush1.bf16.msra.mxu0 %v2912
    %3288 = vmatprep.subr.bf16.mxu0 %v2917
    %3289 = vmatpush1.bf16.msra.mxu0 %v2916
    %3290 = vmatprep.mubr.bf16.mxu0 %v2987
    %3291 = vmatmul.mubr.bf16.gmra.mrb[0].mxu0 %v2986
    %v3292 = vpop.f32.mrb[0].mxu0
    %v3293 = vadd.f32 %v3252, %v3292
    %v3294 = vpop.f32.mrb[0].mxu0
    %v3295 = vadd.f32 %v3254, %v3294
    %v3296 = vpop.f32.mrb[0].mxu0
    %v3297 = vpop.f32.mrb[0].mxu0
    %3298 = vdwg.mxu0
    %3299 = vmatprep.subr.bf16.mxu0 %v2921
    %3300 = vmatpush1.bf16.msra.mxu0 %v2920
    %3301 = vmatprep.subr.bf16.mxu0 %v2925
    %3302 = vmatpush1.bf16.msra.mxu0 %v2924
    %3303 = vmatprep.subr.bf16.mxu0 %v2929
    %3304 = vmatpush1.bf16.msra.mxu0 %v2928
    %3305 = vmatprep.subr.bf16.mxu0 %v2933
    %3306 = vmatpush1.bf16.msra.mxu0 %v2932
    %3307 = vmatprep.subr.bf16.mxu0 %v2937
    %3308 = vmatpush1.bf16.msra.mxu0 %v2936
    %3309 = vmatprep.subr.bf16.mxu0 %v2941
    %3310 = vmatpush1.bf16.msra.mxu0 %v2940
    %3311 = vmatprep.subr.bf16.mxu0 %v2945
    %3312 = vmatpush1.bf16.msra.mxu0 %v2944
    %3313 = vmatprep.subr.bf16.mxu0 %v2949
    %3314 = vmatpush1.bf16.msra.mxu0 %v2948
    %3315 = vmatprep.subr.bf16.mxu0 %v2953
    %3316 = vmatpush1.bf16.msra.mxu0 %v2952
    %3317 = vmatprep.subr.bf16.mxu0 %v2957
    %3318 = vmatpush1.bf16.msra.mxu0 %v2956
    %3319 = vmatprep.subr.bf16.mxu0 %v2961
    %3320 = vmatpush1.bf16.msra.mxu0 %v2960
    %3321 = vmatprep.subr.bf16.mxu0 %v2965
    %3322 = vmatpush1.bf16.msra.mxu0 %v2964
    %3323 = vmatprep.subr.bf16.mxu0 %v2969
    %3324 = vmatpush1.bf16.msra.mxu0 %v2968
    %3325 = vmatprep.subr.bf16.mxu0 %v2973
    %3326 = vmatpush1.bf16.msra.mxu0 %v2972
    %3327 = vmatprep.subr.bf16.mxu0 %v2977
    %3328 = vmatpush1.bf16.msra.mxu0 %v2976
    %3329 = vmatprep.subr.bf16.mxu0 %v2981
    %3330 = vmatpush1.bf16.msra.mxu0 %v2980
    %3331 = vmatprep.mubr.bf16.mxu0 %v2989
    %3332 = vmatmul.mubr.bf16.gmra.mrb[0].mxu0 %v2988
    %v3333 = vpop.f32.mrb[0].mxu0
    %v3334 = vadd.f32 %v3293, %v3333
    %v3335 = vpop.f32.mrb[0].mxu0
    %v3336 = vadd.f32 %v3295, %v3335
    %v3337 = vpop.f32.mrb[0].mxu0
    %v3338 = vpop.f32.mrb[0].mxu0
    %3339 = vdwg.mxu0
    %v3340 = vmax.f32 %v3170, 0.0
    %v3341 = vmax.f32 %v3172, 0.0
    %v3342 = vmax.f32 %v3334, 0.0
    %v3343 = vmax.f32 %v3336, 0.0
    %s3344 = smul.u32 4, 64
    %s3345 = smul.u32 %s3344, 2
    %s3346 = sshll.u32 %s3345, 4
    %3347 = dma.done [#allocation3], %s3346
    %s3349 = sshll.u32 1, 14
    %s3350 = sxor.u32 4294967295, %s3349
    %s3352 = sadd.s32 2, %s119
    %s3354 = sshll.u32 7, 26
    %s3355 = sxor.u32 4294967295, %s3354
    %s3356 = sand.u32 0, %s3355
    %s3357 = sshll.u32 %s3352, 26
    %s3358 = sor.u32 %s3356, %s3357
    %s3359 = sshll.u32 %s207, 4
    %s3360 = int_to_ptr.vmem [resolvable:$true] %s3359
    %3363 = sst [smem:[#allocation28]] 1024
    %s3364 = scalar_lea.smem [#allocation28], 1
    %3365 = sst [smem:[%s3364]] 1024
    %s3366 = scalar_lea.smem [#allocation28], 2
    %3367 = sst [smem:[%s3366]] 8
    %s3368 = scalar_lea.smem [#allocation28], 3
    %3369 = sst [smem:[%s3368]] 64
    %s3370 = scalar_lea.smem [#allocation28], 4
    %3371 = sst [smem:[%s3370]] 128
    %s3372 = scalar_lea.smem [#allocation28], 5
    %3373 = sst [smem:[%s3372]] 2
    %s3374 = scalar_lea.smem [#allocation28], 6
    %3375 = sst [smem:[%s3374]] 512
    %s3376 = scalar_lea.smem [#allocation28], 7
    %3377 = sst [smem:[%s3376]] 64
    %s3378 = scalar_lea.smem [#allocation28], 8
    %3379 = sst [smem:[%s3378]] 4
    %3381 = dma.general %s5, 32768, %s3360, %s208, [#allocation27], [#allocation28], %s3358, 0
    %v3382 = vld [vmem:[#allocation2] sm:$0xff]
    %v3383 = vld [vmem:[#allocation2 + $0x8] sm:$0xff]
    %v3384 = vld [vmem:[#allocation2 + $0x40] sm:$0xff]
    %v3385 = vld [vmem:[#allocation2 + $0x48] sm:$0xff]
    %v3386 = vld [vmem:[#allocation2 + $0x80] sm:$0xff]
    %v3387 = vld [vmem:[#allocation2 + $0x88] sm:$0xff]
    %v3388 = vld [vmem:[#allocation2 + $0xc0] sm:$0xff]
    %v3389 = vld [vmem:[#allocation2 + $0xc8] sm:$0xff]
    %v3390 = vld [vmem:[#allocation2 + $0x100] sm:$0xff]
    %v3391 = vld [vmem:[#allocation2 + $0x108] sm:$0xff]
    %v3392 = vld [vmem:[#allocation2 + $0x140] sm:$0xff]
    %v3393 = vld [vmem:[#allocation2 + $0x148] sm:$0xff]
    %v3394 = vld [vmem:[#allocation2 + $0x180] sm:$0xff]
    %v3395 = vld [vmem:[#allocation2 + $0x188] sm:$0xff]
    %v3396 = vld [vmem:[#allocation2 + $0x1c0] sm:$0xff]
    %v3397 = vld [vmem:[#allocation2 + $0x1c8] sm:$0xff]
    %v3398 = vld [vmem:[#allocation2 + $0x200] sm:$0xff]
    %v3399 = vld [vmem:[#allocation2 + $0x208] sm:$0xff]
    %v3400 = vld [vmem:[#allocation2 + $0x240] sm:$0xff]
    %v3401 = vld [vmem:[#allocation2 + $0x248] sm:$0xff]
    %v3402 = vld [vmem:[#allocation2 + $0x280] sm:$0xff]
    %v3403 = vld [vmem:[#allocation2 + $0x288] sm:$0xff]
    %v3404 = vld [vmem:[#allocation2 + $0x2c0] sm:$0xff]
    %v3405 = vld [vmem:[#allocation2 + $0x2c8] sm:$0xff]
    %v3406 = vld [vmem:[#allocation2 + $0x300] sm:$0xff]
    %v3407 = vld [vmem:[#allocation2 + $0x308] sm:$0xff]
    %v3408 = vld [vmem:[#allocation2 + $0x340] sm:$0xff]
    %v3409 = vld [vmem:[#allocation2 + $0x348] sm:$0xff]
    %v3410 = vld [vmem:[#allocation2 + $0x380] sm:$0xff]
    %v3411 = vld [vmem:[#allocation2 + $0x388] sm:$0xff]
    %v3412 = vld [vmem:[#allocation2 + $0x3c0] sm:$0xff]
    %v3413 = vld [vmem:[#allocation2 + $0x3c8] sm:$0xff]
    %v3414 = vld [vmem:[#allocation2 + $0x400] sm:$0xff]
    %v3415 = vld [vmem:[#allocation2 + $0x408] sm:$0xff]
    %v3416 = vld [vmem:[#allocation2 + $0x440] sm:$0xff]
    %v3417 = vld [vmem:[#allocation2 + $0x448] sm:$0xff]
    %v3418 = vld [vmem:[#allocation2 + $0x480] sm:$0xff]
    %v3419 = vld [vmem:[#allocation2 + $0x488] sm:$0xff]
    %v3420 = vld [vmem:[#allocation2 + $0x4c0] sm:$0xff]
    %v3421 = vld [vmem:[#allocation2 + $0x4c8] sm:$0xff]
    %v3422 = vld [vmem:[#allocation2 + $0x500] sm:$0xff]
    %v3423 = vld [vmem:[#allocation2 + $0x508] sm:$0xff]
    %v3424 = vld [vmem:[#allocation2 + $0x540] sm:$0xff]
    %v3425 = vld [vmem:[#allocation2 + $0x548] sm:$0xff]
    %v3426 = vld [vmem:[#allocation2 + $0x580] sm:$0xff]
    %v3427 = vld [vmem:[#allocation2 + $0x588] sm:$0xff]
    %v3428 = vld [vmem:[#allocation2 + $0x5c0] sm:$0xff]
    %v3429 = vld [vmem:[#allocation2 + $0x5c8] sm:$0xff]
    %v3430 = vld [vmem:[#allocation2 + $0x600] sm:$0xff]
    %v3431 = vld [vmem:[#allocation2 + $0x608] sm:$0xff]
    %v3432 = vld [vmem:[#allocation2 + $0x640] sm:$0xff]
    %v3433 = vld [vmem:[#allocation2 + $0x648] sm:$0xff]
    %v3434 = vld [vmem:[#allocation2 + $0x680] sm:$0xff]
    %v3435 = vld [vmem:[#allocation2 + $0x688] sm:$0xff]
    %v3436 = vld [vmem:[#allocation2 + $0x6c0] sm:$0xff]
    %v3437 = vld [vmem:[#allocation2 + $0x6c8] sm:$0xff]
    %v3438 = vld [vmem:[#allocation2 + $0x700] sm:$0xff]
    %v3439 = vld [vmem:[#allocation2 + $0x708] sm:$0xff]
    %v3440 = vld [vmem:[#allocation2 + $0x740] sm:$0xff]
    %v3441 = vld [vmem:[#allocation2 + $0x748] sm:$0xff]
    %v3442 = vld [vmem:[#allocation2 + $0x780] sm:$0xff]
    %v3443 = vld [vmem:[#allocation2 + $0x788] sm:$0xff]
    %v3444 = vld [vmem:[#allocation2 + $0x7c0] sm:$0xff]
    %v3445 = vld [vmem:[#allocation2 + $0x7c8] sm:$0xff]
    %v3446 = vpack.c.bf16 %v3340, %v3340
    %v3447 = vpack.c.bf16 %v3341, %v3341
    %v3448 = vpack.c.bf16 %v3342, %v3342
    %v3449 = vpack.c.bf16 %v3343, %v3343
    %v3450 = vld [vmem:[#allocation10] sm:$0x3]
    %v3452 = vlaneseq
    %v3453 = vshrl.u32 %v3452, 7
    %v3454 = vsub.s32 0, %v3453
    %v3455 = vrot.slane %v3450, %v3454
    %v3456 = vlaneseq
    %v3457 = vshrl.u32 %v3456, 7
    %v3458 = vsub.s32 1, %v3457
    %v3459 = vrot.slane %v3450, %v3458
    %3462 = vmatprep.subr.bf16.mxu0 %v3383
    %3463 = vmatpush1.bf16.msra.mxu0 %v3382
    %3464 = vmatprep.subr.bf16.mxu0 %v3385
    %3465 = vmatpush1.bf16.msra.mxu0 %v3384
    %3466 = vmatprep.subr.bf16.mxu0 %v3387
    %3467 = vmatpush1.bf16.msra.mxu0 %v3386
    %3468 = vmatprep.subr.bf16.mxu0 %v3389
    %3469 = vmatpush1.bf16.msra.mxu0 %v3388
    %3470 = vmatprep.subr.bf16.mxu0 %v3391
    %3471 = vmatpush1.bf16.msra.mxu0 %v3390
    %3472 = vmatprep.subr.bf16.mxu0 %v3393
    %3473 = vmatpush1.bf16.msra.mxu0 %v3392
    %3474 = vmatprep.subr.bf16.mxu0 %v3395
    %3475 = vmatpush1.bf16.msra.mxu0 %v3394
    %3476 = vmatprep.subr.bf16.mxu0 %v3397
    %3477 = vmatpush1.bf16.msra.mxu0 %v3396
    %3478 = vmatprep.subr.bf16.mxu0 %v3399
    %3479 = vmatpush1.bf16.msra.mxu0 %v3398
    %3480 = vmatprep.subr.bf16.mxu0 %v3401
    %3481 = vmatpush1.bf16.msra.mxu0 %v3400
    %3482 = vmatprep.subr.bf16.mxu0 %v3403
    %3483 = vmatpush1.bf16.msra.mxu0 %v3402
    %3484 = vmatprep.subr.bf16.mxu0 %v3405
    %3485 = vmatpush1.bf16.msra.mxu0 %v3404
    %3486 = vmatprep.subr.bf16.mxu0 %v3407
    %3487 = vmatpush1.bf16.msra.mxu0 %v3406
    %3488 = vmatprep.subr.bf16.mxu0 %v3409
    %3489 = vmatpush1.bf16.msra.mxu0 %v3408
    %3490 = vmatprep.subr.bf16.mxu0 %v3411
    %3491 = vmatpush1.bf16.msra.mxu0 %v3410
    %3492 = vmatprep.subr.bf16.mxu0 %v3413
    %3493 = vmatpush1.bf16.msra.mxu0 %v3412
    %3494 = vmatprep.mubr.bf16.mxu0 %v3447
    %3495 = vmatmul.mubr.bf16.gmra.mrb[0].mxu0 %v3446
    %v3496 = vpop.f32.mrb[0].mxu0
    %v3497 = vadd.f32 %v3455, %v3496
    %v3498 = vpop.f32.mrb[0].mxu0
    %v3499 = vadd.f32 %v3459, %v3498
    %v3500 = vpop.f32.mrb[0].mxu0
    %v3501 = vpop.f32.mrb[0].mxu0
    %3502 = vdwg.mxu0
    %3503 = vmatprep.subr.bf16.mxu0 %v3415
    %3504 = vmatpush1.bf16.msra.mxu0 %v3414
    %3505 = vmatprep.subr.bf16.mxu0 %v3417
    %3506 = vmatpush1.bf16.msra.mxu0 %v3416
    %3507 = vmatprep.subr.bf16.mxu0 %v3419
    %3508 = vmatpush1.bf16.msra.mxu0 %v3418
    %3509 = vmatprep.subr.bf16.mxu0 %v3421
    %3510 = vmatpush1.bf16.msra.mxu0 %v3420
    %3511 = vmatprep.subr.bf16.mxu0 %v3423
    %3512 = vmatpush1.bf16.msra.mxu0 %v3422
    %3513 = vmatprep.subr.bf16.mxu0 %v3425
    %3514 = vmatpush1.bf16.msra.mxu0 %v3424
    %3515 = vmatprep.subr.bf16.mxu0 %v3427
    %3516 = vmatpush1.bf16.msra.mxu0 %v3426
    %3517 = vmatprep.subr.bf16.mxu0 %v3429
    %3518 = vmatpush1.bf16.msra.mxu0 %v3428
    %3519 = vmatprep.subr.bf16.mxu0 %v3431
    %3520 = vmatpush1.bf16.msra.mxu0 %v3430
    %3521 = vmatprep.subr.bf16.mxu0 %v3433
    %3522 = vmatpush1.bf16.msra.mxu0 %v3432
    %3523 = vmatprep.subr.bf16.mxu0 %v3435
    %3524 = vmatpush1.bf16.msra.mxu0 %v3434
    %3525 = vmatprep.subr.bf16.mxu0 %v3437
    %3526 = vmatpush1.bf16.msra.mxu0 %v3436
    %3527 = vmatprep.subr.bf16.mxu0 %v3439
    %3528 = vmatpush1.bf16.msra.mxu0 %v3438
    %3529 = vmatprep.subr.bf16.mxu0 %v3441
    %3530 = vmatpush1.bf16.msra.mxu0 %v3440
    %3531 = vmatprep.subr.bf16.mxu0 %v3443
    %3532 = vmatpush1.bf16.msra.mxu0 %v3442
    %3533 = vmatprep.subr.bf16.mxu0 %v3445
    %3534 = vmatpush1.bf16.msra.mxu0 %v3444
    %3535 = vmatprep.mubr.bf16.mxu0 %v3449
    %3536 = vmatmul.mubr.bf16.gmra.mrb[0].mxu0 %v3448
    %v3537 = vpop.f32.mrb[0].mxu0
    %v3538 = vadd.f32 %v3497, %v3537
    %v3539 = vpop.f32.mrb[0].mxu0
    %v3540 = vadd.f32 %v3499, %v3539
    %v3541 = vpop.f32.mrb[0].mxu0
    %v3542 = vpop.f32.mrb[0].mxu0
    %3543 = vdwg.mxu0
    %s3544 = smul.u32 4, 32
    %s3545 = smul.u32 %s3544, 4
    %s3546 = sshll.u32 %s3545, 4
    %3547 = dma.done %s152, %s3546
    %s3549 = sshll.u32 1, 14
    %s3550 = sxor.u32 4294967295, %s3549
    %s3552 = sadd.s32 2, %s119
    %s3554 = sshll.u32 7, 26
    %s3555 = sxor.u32 4294967295, %s3554
    %s3556 = sand.u32 0, %s3555
    %s3557 = sshll.u32 %s3552, 26
    %s3558 = sor.u32 %s3556, %s3557
    %s3559 = sshll.u32 [#allocation2], 4
    %s3560 = int_to_ptr.vmem [resolvable:$true] %s3559
    %3563 = sst [smem:[#allocation30]] 1024
    %s3564 = scalar_lea.smem [#allocation30], 1
    %3565 = sst [smem:[%s3564]] 1024
    %s3566 = scalar_lea.smem [#allocation30], 2
    %3567 = sst [smem:[%s3566]] 8
    %s3568 = scalar_lea.smem [#allocation30], 3
    %3569 = sst [smem:[%s3568]] 64
    %s3570 = scalar_lea.smem [#allocation30], 4
    %3571 = sst [smem:[%s3570]] 128
    %s3572 = scalar_lea.smem [#allocation30], 5
    %3573 = sst [smem:[%s3572]] 2
    %s3574 = scalar_lea.smem [#allocation30], 6
    %3575 = sst [smem:[%s3574]] 512
    %s3576 = scalar_lea.smem [#allocation30], 7
    %3577 = sst [smem:[%s3576]] 64
    %s3578 = scalar_lea.smem [#allocation30], 8
    %3579 = sst [smem:[%s3578]] 4
    %3581 = dma.general %s6, 65536, %s3560, [#allocation3], [#allocation29], [#allocation30], %s3558, 0
    %v3582 = vld [vmem:[%s151] sm:$0xff]
    %v3583 = vld [vmem:[%s151 + $0x8] sm:$0xff]
    %v3584 = vld [vmem:[%s151 + $0x10] sm:$0xff]
    %v3585 = vld [vmem:[%s151 + $0x18] sm:$0xff]
    %v3586 = vld [vmem:[%s151 + $0x40] sm:$0xff]
    %v3587 = vld [vmem:[%s151 + $0x48] sm:$0xff]
    %v3588 = vld [vmem:[%s151 + $0x50] sm:$0xff]
    %v3589 = vld [vmem:[%s151 + $0x58] sm:$0xff]
    %v3590 = vld [vmem:[%s151 + $0x80] sm:$0xff]
    %v3591 = vld [vmem:[%s151 + $0x88] sm:$0xff]
    %v3592 = vld [vmem:[%s151 + $0x90] sm:$0xff]
    %v3593 = vld [vmem:[%s151 + $0x98] sm:$0xff]
    %v3594 = vld [vmem:[%s151 + $0xc0] sm:$0xff]
    %v3595 = vld [vmem:[%s151 + $0xc8] sm:$0xff]
    %v3596 = vld [vmem:[%s151 + $0xd0] sm:$0xff]
    %v3597 = vld [vmem:[%s151 + $0xd8] sm:$0xff]
    %v3598 = vld [vmem:[%s151 + $0x100] sm:$0xff]
    %v3599 = vld [vmem:[%s151 + $0x108] sm:$0xff]
    %v3600 = vld [vmem:[%s151 + $0x110] sm:$0xff]
    %v3601 = vld [vmem:[%s151 + $0x118] sm:$0xff]
    %v3602 = vld [vmem:[%s151 + $0x140] sm:$0xff]
    %v3603 = vld [vmem:[%s151 + $0x148] sm:$0xff]
    %v3604 = vld [vmem:[%s151 + $0x150] sm:$0xff]
    %v3605 = vld [vmem:[%s151 + $0x158] sm:$0xff]
    %v3606 = vld [vmem:[%s151 + $0x180] sm:$0xff]
    %v3607 = vld [vmem:[%s151 + $0x188] sm:$0xff]
    %v3608 = vld [vmem:[%s151 + $0x190] sm:$0xff]
    %v3609 = vld [vmem:[%s151 + $0x198] sm:$0xff]
    %v3610 = vld [vmem:[%s151 + $0x1c0] sm:$0xff]
    %v3611 = vld [vmem:[%s151 + $0x1c8] sm:$0xff]
    %v3612 = vld [vmem:[%s151 + $0x1d0] sm:$0xff]
    %v3613 = vld [vmem:[%s151 + $0x1d8] sm:$0xff]
    %v3614 = vld [vmem:[%s151 + $0x200] sm:$0xff]
    %v3615 = vld [vmem:[%s151 + $0x208] sm:$0xff]
    %v3616 = vld [vmem:[%s151 + $0x210] sm:$0xff]
    %v3617 = vld [vmem:[%s151 + $0x218] sm:$0xff]
    %v3618 = vld [vmem:[%s151 + $0x240] sm:$0xff]
    %v3619 = vld [vmem:[%s151 + $0x248] sm:$0xff]
    %v3620 = vld [vmem:[%s151 + $0x250] sm:$0xff]
    %v3621 = vld [vmem:[%s151 + $0x258] sm:$0xff]
    %v3622 = vld [vmem:[%s151 + $0x280] sm:$0xff]
    %v3623 = vld [vmem:[%s151 + $0x288] sm:$0xff]
    %v3624 = vld [vmem:[%s151 + $0x290] sm:$0xff]
    %v3625 = vld [vmem:[%s151 + $0x298] sm:$0xff]
    %v3626 = vld [vmem:[%s151 + $0x2c0] sm:$0xff]
    %v3627 = vld [vmem:[%s151 + $0x2c8] sm:$0xff]
    %v3628 = vld [vmem:[%s151 + $0x2d0] sm:$0xff]
    %v3629 = vld [vmem:[%s151 + $0x2d8] sm:$0xff]
    %v3630 = vld [vmem:[%s151 + $0x300] sm:$0xff]
    %v3631 = vld [vmem:[%s151 + $0x308] sm:$0xff]
    %v3632 = vld [vmem:[%s151 + $0x310] sm:$0xff]
    %v3633 = vld [vmem:[%s151 + $0x318] sm:$0xff]
    %v3634 = vld [vmem:[%s151 + $0x340] sm:$0xff]
    %v3635 = vld [vmem:[%s151 + $0x348] sm:$0xff]
    %v3636 = vld [vmem:[%s151 + $0x350] sm:$0xff]
    %v3637 = vld [vmem:[%s151 + $0x358] sm:$0xff]
    %v3638 = vld [vmem:[%s151 + $0x380] sm:$0xff]
    %v3639 = vld [vmem:[%s151 + $0x388] sm:$0xff]
    %v3640 = vld [vmem:[%s151 + $0x390] sm:$0xff]
    %v3641 = vld [vmem:[%s151 + $0x398] sm:$0xff]
    %v3642 = vld [vmem:[%s151 + $0x3c0] sm:$0xff]
    %v3643 = vld [vmem:[%s151 + $0x3c8] sm:$0xff]
    %v3644 = vld [vmem:[%s151 + $0x3d0] sm:$0xff]
    %v3645 = vld [vmem:[%s151 + $0x3d8] sm:$0xff]
    %v3646 = vpack.c.bf16 %v3538, %v3538
    %v3647 = vpack.c.bf16 %v3540, %v3540
    %v3648 = vld [vmem:[#allocation12] sm:$0xf]
    %v3650 = vlaneseq
    %v3651 = vshrl.u32 %v3650, 7
    %v3652 = vsub.s32 0, %v3651
    %v3653 = vrot.slane %v3648, %v3652
    %v3654 = vlaneseq
    %v3655 = vshrl.u32 %v3654, 7
    %v3656 = vsub.s32 1, %v3655
    %v3657 = vrot.slane %v3648, %v3656
    %v3658 = vlaneseq
    %v3659 = vshrl.u32 %v3658, 7
    %v3660 = vsub.s32 2, %v3659
    %v3661 = vrot.slane %v3648, %v3660
    %v3662 = vlaneseq
    %v3663 = vshrl.u32 %v3662, 7
    %v3664 = vsub.s32 3, %v3663
    %v3665 = vrot.slane %v3648, %v3664
    %3670 = vmatprep.subr.bf16.mxu0 %v3583
    %3671 = vmatpush1.bf16.msra.mxu0 %v3582
    %3672 = vmatprep.subr.bf16.mxu0 %v3587
    %3673 = vmatpush1.bf16.msra.mxu0 %v3586
    %3674 = vmatprep.subr.bf16.mxu0 %v3591
    %3675 = vmatpush1.bf16.msra.mxu0 %v3590
    %3676 = vmatprep.subr.bf16.mxu0 %v3595
    %3677 = vmatpush1.bf16.msra.mxu0 %v3594
    %3678 = vmatprep.subr.bf16.mxu0 %v3599
    %3679 = vmatpush1.bf16.msra.mxu0 %v3598
    %3680 = vmatprep.subr.bf16.mxu0 %v3603
    %3681 = vmatpush1.bf16.msra.mxu0 %v3602
    %3682 = vmatprep.subr.bf16.mxu0 %v3607
    %3683 = vmatpush1.bf16.msra.mxu0 %v3606
    %3684 = vmatprep.subr.bf16.mxu0 %v3611
    %3685 = vmatpush1.bf16.msra.mxu0 %v3610
    %3686 = vmatprep.subr.bf16.mxu0 %v3615
    %3687 = vmatpush1.bf16.msra.mxu0 %v3614
    %3688 = vmatprep.subr.bf16.mxu0 %v3619
    %3689 = vmatpush1.bf16.msra.mxu0 %v3618
    %3690 = vmatprep.subr.bf16.mxu0 %v3623
    %3691 = vmatpush1.bf16.msra.mxu0 %v3622
    %3692 = vmatprep.subr.bf16.mxu0 %v3627
    %3693 = vmatpush1.bf16.msra.mxu0 %v3626
    %3694 = vmatprep.subr.bf16.mxu0 %v3631
    %3695 = vmatpush1.bf16.msra.mxu0 %v3630
    %3696 = vmatprep.subr.bf16.mxu0 %v3635
    %3697 = vmatpush1.bf16.msra.mxu0 %v3634
    %3698 = vmatprep.subr.bf16.mxu0 %v3639
    %3699 = vmatpush1.bf16.msra.mxu0 %v3638
    %3700 = vmatprep.subr.bf16.mxu0 %v3643
    %3701 = vmatpush1.bf16.msra.mxu0 %v3642
    %3702 = vmatprep.mubr.bf16.mxu0 %v3647
    %3703 = vmatmul.mubr.bf16.gmra.mrb[0].mxu0 %v3646
    %v3704 = vpop.f32.mrb[0].mxu0
    %v3705 = vadd.f32 %v3653, %v3704
    %v3706 = vpop.f32.mrb[0].mxu0
    %v3707 = vadd.f32 %v3657, %v3706
    %v3708 = vpop.f32.mrb[0].mxu0
    %v3709 = vpop.f32.mrb[0].mxu0
    %3710 = vdwg.mxu0
    %3711 = vmatprep.subr.bf16.mxu0 %v3585
    %3712 = vmatpush1.bf16.msra.mxu0 %v3584
    %3713 = vmatprep.subr.bf16.mxu0 %v3589
    %3714 = vmatpush1.bf16.msra.mxu0 %v3588
    %3715 = vmatprep.subr.bf16.mxu0 %v3593
    %3716 = vmatpush1.bf16.msra.mxu0 %v3592
    %3717 = vmatprep.subr.bf16.mxu0 %v3597
    %3718 = vmatpush1.bf16.msra.mxu0 %v3596
    %3719 = vmatprep.subr.bf16.mxu0 %v3601
    %3720 = vmatpush1.bf16.msra.mxu0 %v3600
    %3721 = vmatprep.subr.bf16.mxu0 %v3605
    %3722 = vmatpush1.bf16.msra.mxu0 %v3604
    %3723 = vmatprep.subr.bf16.mxu0 %v3609
    %3724 = vmatpush1.bf16.msra.mxu0 %v3608
    %3725 = vmatprep.subr.bf16.mxu0 %v3613
    %3726 = vmatpush1.bf16.msra.mxu0 %v3612
    %3727 = vmatprep.subr.bf16.mxu0 %v3617
    %3728 = vmatpush1.bf16.msra.mxu0 %v3616
    %3729 = vmatprep.subr.bf16.mxu0 %v3621
    %3730 = vmatpush1.bf16.msra.mxu0 %v3620
    %3731 = vmatprep.subr.bf16.mxu0 %v3625
    %3732 = vmatpush1.bf16.msra.mxu0 %v3624
    %3733 = vmatprep.subr.bf16.mxu0 %v3629
    %3734 = vmatpush1.bf16.msra.mxu0 %v3628
    %3735 = vmatprep.subr.bf16.mxu0 %v3633
    %3736 = vmatpush1.bf16.msra.mxu0 %v3632
    %3737 = vmatprep.subr.bf16.mxu0 %v3637
    %3738 = vmatpush1.bf16.msra.mxu0 %v3636
    %3739 = vmatprep.subr.bf16.mxu0 %v3641
    %3740 = vmatpush1.bf16.msra.mxu0 %v3640
    %3741 = vmatprep.subr.bf16.mxu0 %v3645
    %3742 = vmatpush1.bf16.msra.mxu0 %v3644
    %3743 = vmatprep.mubr.bf16.mxu0 %v3647
    %3744 = vmatmul.mubr.bf16.gmra.mrb[0].mxu0 %v3646
    %v3745 = vpop.f32.mrb[0].mxu0
    %v3746 = vadd.f32 %v3661, %v3745
    %v3747 = vpop.f32.mrb[0].mxu0
    %v3748 = vadd.f32 %v3665, %v3747
    %v3749 = vpop.f32.mrb[0].mxu0
    %v3750 = vpop.f32.mrb[0].mxu0
    %3751 = vdwg.mxu0
    %vm3752 = vcmp.gt.f32.partialorder %v3705, 0.0
    %vm3753 = vcmp.gt.f32.partialorder %v3707, 0.0
    %vm3754 = vcmp.gt.f32.partialorder %v3746, 0.0
    %vm3755 = vcmp.gt.f32.partialorder %v3748, 0.0
    %v3756 = vmul.f32 %v3705, 0.3
    %v3757 = vmul.f32 %v3707, 0.3
    %v3758 = vmul.f32 %v3746, 0.3
    %v3759 = vmul.f32 %v3748, 0.3
    %v3760 = vsel %vm3752, %v3705, %v3756
    %v3761 = vsel %vm3753, %v3707, %v3757
    %v3762 = vsel %vm3754, %v3746, %v3758
    %v3763 = vsel %vm3755, %v3748, %v3759
    %s3764 = smul.u32 %s3344, 8
    %s3765 = sshll.u32 %s3764, 4
    %3766 = dma.done %s208, %s3765
    %s3768 = sshll.u32 1, 14
    %s3769 = sxor.u32 4294967295, %s3768
    %s3771 = sadd.s32 2, %s119
    %s3773 = sshll.u32 7, 26
    %s3774 = sxor.u32 4294967295, %s3773
    %s3775 = sand.u32 0, %s3774
    %s3776 = sshll.u32 %s3771, 26
    %s3777 = sor.u32 %s3775, %s3776
    %s3778 = sshll.u32 %s151, 4
    %s3779 = int_to_ptr.vmem [resolvable:$true] %s3778
    %3782 = sst [smem:[#allocation32]] 1024
    %s3783 = scalar_lea.smem [#allocation32], 1
    %3784 = sst [smem:[%s3783]] 1024
    %s3785 = scalar_lea.smem [#allocation32], 2
    %3786 = sst [smem:[%s3785]] 8
    %s3787 = scalar_lea.smem [#allocation32], 3
    %3788 = sst [smem:[%s3787]] 64
    %s3789 = scalar_lea.smem [#allocation32], 4
    %3790 = sst [smem:[%s3789]] 128
    %s3791 = scalar_lea.smem [#allocation32], 5
    %3792 = sst [smem:[%s3791]] 2
    %s3793 = scalar_lea.smem [#allocation32], 6
    %3794 = sst [smem:[%s3793]] 512
    %s3795 = scalar_lea.smem [#allocation32], 7
    %3796 = sst [smem:[%s3795]] 64
    %s3797 = scalar_lea.smem [#allocation32], 8
    %3798 = sst [smem:[%s3797]] 4
    %3800 = dma.general %s7, 65536, %s3779, %s152, [#allocation31], [#allocation32], %s3777, 0
    %v3801 = vld [vmem:[%s207] sm:$0xff]
    %v3802 = vld [vmem:[%s207 + $0x8] sm:$0xff]
    %v3803 = vld [vmem:[%s207 + $0x10] sm:$0xff]
    %v3804 = vld [vmem:[%s207 + $0x18] sm:$0xff]
    %v3805 = vld [vmem:[%s207 + $0x20] sm:$0xff]
    %v3806 = vld [vmem:[%s207 + $0x28] sm:$0xff]
    %v3807 = vld [vmem:[%s207 + $0x30] sm:$0xff]
    %v3808 = vld [vmem:[%s207 + $0x38] sm:$0xff]
    %v3809 = vld [vmem:[%s207 + $0x40] sm:$0xff]
    %v3810 = vld [vmem:[%s207 + $0x48] sm:$0xff]
    %v3811 = vld [vmem:[%s207 + $0x50] sm:$0xff]
    %v3812 = vld [vmem:[%s207 + $0x58] sm:$0xff]
    %v3813 = vld [vmem:[%s207 + $0x60] sm:$0xff]
    %v3814 = vld [vmem:[%s207 + $0x68] sm:$0xff]
    %v3815 = vld [vmem:[%s207 + $0x70] sm:$0xff]
    %v3816 = vld [vmem:[%s207 + $0x78] sm:$0xff]
    %v3817 = vld [vmem:[%s207 + $0x80] sm:$0xff]
    %v3818 = vld [vmem:[%s207 + $0x88] sm:$0xff]
    %v3819 = vld [vmem:[%s207 + $0x90] sm:$0xff]
    %v3820 = vld [vmem:[%s207 + $0x98] sm:$0xff]
    %v3821 = vld [vmem:[%s207 + $0xa0] sm:$0xff]
    %v3822 = vld [vmem:[%s207 + $0xa8] sm:$0xff]
    %v3823 = vld [vmem:[%s207 + $0xb0] sm:$0xff]
    %v3824 = vld [vmem:[%s207 + $0xb8] sm:$0xff]
    %v3825 = vld [vmem:[%s207 + $0xc0] sm:$0xff]
    %v3826 = vld [vmem:[%s207 + $0xc8] sm:$0xff]
    %v3827 = vld [vmem:[%s207 + $0xd0] sm:$0xff]
    %v3828 = vld [vmem:[%s207 + $0xd8] sm:$0xff]
    %v3829 = vld [vmem:[%s207 + $0xe0] sm:$0xff]
    %v3830 = vld [vmem:[%s207 + $0xe8] sm:$0xff]
    %v3831 = vld [vmem:[%s207 + $0xf0] sm:$0xff]
    %v3832 = vld [vmem:[%s207 + $0xf8] sm:$0xff]
    %v3833 = vld [vmem:[%s207 + $0x100] sm:$0xff]
    %v3834 = vld [vmem:[%s207 + $0x108] sm:$0xff]
    %v3835 = vld [vmem:[%s207 + $0x110] sm:$0xff]
    %v3836 = vld [vmem:[%s207 + $0x118] sm:$0xff]
    %v3837 = vld [vmem:[%s207 + $0x120] sm:$0xff]
    %v3838 = vld [vmem:[%s207 + $0x128] sm:$0xff]
    %v3839 = vld [vmem:[%s207 + $0x130] sm:$0xff]
    %v3840 = vld [vmem:[%s207 + $0x138] sm:$0xff]
    %v3841 = vld [vmem:[%s207 + $0x140] sm:$0xff]
    %v3842 = vld [vmem:[%s207 + $0x148] sm:$0xff]
    %v3843 = vld [vmem:[%s207 + $0x150] sm:$0xff]
    %v3844 = vld [vmem:[%s207 + $0x158] sm:$0xff]
    %v3845 = vld [vmem:[%s207 + $0x160] sm:$0xff]
    %v3846 = vld [vmem:[%s207 + $0x168] sm:$0xff]
    %v3847 = vld [vmem:[%s207 + $0x170] sm:$0xff]
    %v3848 = vld [vmem:[%s207 + $0x178] sm:$0xff]
    %v3849 = vld [vmem:[%s207 + $0x180] sm:$0xff]
    %v3850 = vld [vmem:[%s207 + $0x188] sm:$0xff]
    %v3851 = vld [vmem:[%s207 + $0x190] sm:$0xff]
    %v3852 = vld [vmem:[%s207 + $0x198] sm:$0xff]
    %v3853 = vld [vmem:[%s207 + $0x1a0] sm:$0xff]
    %v3854 = vld [vmem:[%s207 + $0x1a8] sm:$0xff]
    %v3855 = vld [vmem:[%s207 + $0x1b0] sm:$0xff]
    %v3856 = vld [vmem:[%s207 + $0x1b8] sm:$0xff]
    %v3857 = vld [vmem:[%s207 + $0x1c0] sm:$0xff]
    %v3858 = vld [vmem:[%s207 + $0x1c8] sm:$0xff]
    %v3859 = vld [vmem:[%s207 + $0x1d0] sm:$0xff]
    %v3860 = vld [vmem:[%s207 + $0x1d8] sm:$0xff]
    %v3861 = vld [vmem:[%s207 + $0x1e0] sm:$0xff]
    %v3862 = vld [vmem:[%s207 + $0x1e8] sm:$0xff]
    %v3863 = vld [vmem:[%s207 + $0x1f0] sm:$0xff]
    %v3864 = vld [vmem:[%s207 + $0x1f8] sm:$0xff]
    %v3865 = vld [vmem:[%s207 + $0x200] sm:$0xff]
    %v3866 = vld [vmem:[%s207 + $0x208] sm:$0xff]
    %v3867 = vld [vmem:[%s207 + $0x210] sm:$0xff]
    %v3868 = vld [vmem:[%s207 + $0x218] sm:$0xff]
    %v3869 = vld [vmem:[%s207 + $0x220] sm:$0xff]
    %v3870 = vld [vmem:[%s207 + $0x228] sm:$0xff]
    %v3871 = vld [vmem:[%s207 + $0x230] sm:$0xff]
    %v3872 = vld [vmem:[%s207 + $0x238] sm:$0xff]
    %v3873 = vld [vmem:[%s207 + $0x240] sm:$0xff]
    %v3874 = vld [vmem:[%s207 + $0x248] sm:$0xff]
    %v3875 = vld [vmem:[%s207 + $0x250] sm:$0xff]
    %v3876 = vld [vmem:[%s207 + $0x258] sm:$0xff]
    %v3877 = vld [vmem:[%s207 + $0x260] sm:$0xff]
    %v3878 = vld [vmem:[%s207 + $0x268] sm:$0xff]
    %v3879 = vld [vmem:[%s207 + $0x270] sm:$0xff]
    %v3880 = vld [vmem:[%s207 + $0x278] sm:$0xff]
    %v3881 = vld [vmem:[%s207 + $0x280] sm:$0xff]
    %v3882 = vld [vmem:[%s207 + $0x288] sm:$0xff]
    %v3883 = vld [vmem:[%s207 + $0x290] sm:$0xff]
    %v3884 = vld [vmem:[%s207 + $0x298] sm:$0xff]
    %v3885 = vld [vmem:[%s207 + $0x2a0] sm:$0xff]
    %v3886 = vld [vmem:[%s207 + $0x2a8] sm:$0xff]
    %v3887 = vld [vmem:[%s207 + $0x2b0] sm:$0xff]
    %v3888 = vld [vmem:[%s207 + $0x2b8] sm:$0xff]
    %v3889 = vld [vmem:[%s207 + $0x2c0] sm:$0xff]
    %v3890 = vld [vmem:[%s207 + $0x2c8] sm:$0xff]
    %v3891 = vld [vmem:[%s207 + $0x2d0] sm:$0xff]
    %v3892 = vld [vmem:[%s207 + $0x2d8] sm:$0xff]
    %v3893 = vld [vmem:[%s207 + $0x2e0] sm:$0xff]
    %v3894 = vld [vmem:[%s207 + $0x2e8] sm:$0xff]
    %v3895 = vld [vmem:[%s207 + $0x2f0] sm:$0xff]
    %v3896 = vld [vmem:[%s207 + $0x2f8] sm:$0xff]
    %v3897 = vld [vmem:[%s207 + $0x300] sm:$0xff]
    %v3898 = vld [vmem:[%s207 + $0x308] sm:$0xff]
    %v3899 = vld [vmem:[%s207 + $0x310] sm:$0xff]
    %v3900 = vld [vmem:[%s207 + $0x318] sm:$0xff]
    %v3901 = vld [vmem:[%s207 + $0x320] sm:$0xff]
    %v3902 = vld [vmem:[%s207 + $0x328] sm:$0xff]
    %v3903 = vld [vmem:[%s207 + $0x330] sm:$0xff]
    %v3904 = vld [vmem:[%s207 + $0x338] sm:$0xff]
    %v3905 = vld [vmem:[%s207 + $0x340] sm:$0xff]
    %v3906 = vld [vmem:[%s207 + $0x348] sm:$0xff]
    %v3907 = vld [vmem:[%s207 + $0x350] sm:$0xff]
    %v3908 = vld [vmem:[%s207 + $0x358] sm:$0xff]
    %v3909 = vld [vmem:[%s207 + $0x360] sm:$0xff]
    %v3910 = vld [vmem:[%s207 + $0x368] sm:$0xff]
    %v3911 = vld [vmem:[%s207 + $0x370] sm:$0xff]
    %v3912 = vld [vmem:[%s207 + $0x378] sm:$0xff]
    %v3913 = vld [vmem:[%s207 + $0x380] sm:$0xff]
    %v3914 = vld [vmem:[%s207 + $0x388] sm:$0xff]
    %v3915 = vld [vmem:[%s207 + $0x390] sm:$0xff]
    %v3916 = vld [vmem:[%s207 + $0x398] sm:$0xff]
    %v3917 = vld [vmem:[%s207 + $0x3a0] sm:$0xff]
    %v3918 = vld [vmem:[%s207 + $0x3a8] sm:$0xff]
    %v3919 = vld [vmem:[%s207 + $0x3b0] sm:$0xff]
    %v3920 = vld [vmem:[%s207 + $0x3b8] sm:$0xff]
    %v3921 = vld [vmem:[%s207 + $0x3c0] sm:$0xff]
    %v3922 = vld [vmem:[%s207 + $0x3c8] sm:$0xff]
    %v3923 = vld [vmem:[%s207 + $0x3d0] sm:$0xff]
    %v3924 = vld [vmem:[%s207 + $0x3d8] sm:$0xff]
    %v3925 = vld [vmem:[%s207 + $0x3e0] sm:$0xff]
    %v3926 = vld [vmem:[%s207 + $0x3e8] sm:$0xff]
    %v3927 = vld [vmem:[%s207 + $0x3f0] sm:$0xff]
    %v3928 = vld [vmem:[%s207 + $0x3f8] sm:$0xff]
    %v3929 = vld [vmem:[%s207 + $0x400] sm:$0xff]
    %v3930 = vld [vmem:[%s207 + $0x408] sm:$0xff]
    %v3931 = vld [vmem:[%s207 + $0x410] sm:$0xff]
    %v3932 = vld [vmem:[%s207 + $0x418] sm:$0xff]
    %v3933 = vld [vmem:[%s207 + $0x420] sm:$0xff]
    %v3934 = vld [vmem:[%s207 + $0x428] sm:$0xff]
    %v3935 = vld [vmem:[%s207 + $0x430] sm:$0xff]
    %v3936 = vld [vmem:[%s207 + $0x438] sm:$0xff]
    %v3937 = vld [vmem:[%s207 + $0x440] sm:$0xff]
    %v3938 = vld [vmem:[%s207 + $0x448] sm:$0xff]
    %v3939 = vld [vmem:[%s207 + $0x450] sm:$0xff]
    %v3940 = vld [vmem:[%s207 + $0x458] sm:$0xff]
    %v3941 = vld [vmem:[%s207 + $0x460] sm:$0xff]
    %v3942 = vld [vmem:[%s207 + $0x468] sm:$0xff]
    %v3943 = vld [vmem:[%s207 + $0x470] sm:$0xff]
    %v3944 = vld [vmem:[%s207 + $0x478] sm:$0xff]
    %v3945 = vld [vmem:[%s207 + $0x480] sm:$0xff]
    %v3946 = vld [vmem:[%s207 + $0x488] sm:$0xff]
    %v3947 = vld [vmem:[%s207 + $0x490] sm:$0xff]
    %v3948 = vld [vmem:[%s207 + $0x498] sm:$0xff]
    %v3949 = vld [vmem:[%s207 + $0x4a0] sm:$0xff]
    %v3950 = vld [vmem:[%s207 + $0x4a8] sm:$0xff]
    %v3951 = vld [vmem:[%s207 + $0x4b0] sm:$0xff]
    %v3952 = vld [vmem:[%s207 + $0x4b8] sm:$0xff]
    %v3953 = vld [vmem:[%s207 + $0x4c0] sm:$0xff]
    %v3954 = vld [vmem:[%s207 + $0x4c8] sm:$0xff]
    %v3955 = vld [vmem:[%s207 + $0x4d0] sm:$0xff]
    %v3956 = vld [vmem:[%s207 + $0x4d8] sm:$0xff]
    %v3957 = vld [vmem:[%s207 + $0x4e0] sm:$0xff]
    %v3958 = vld [vmem:[%s207 + $0x4e8] sm:$0xff]
    %v3959 = vld [vmem:[%s207 + $0x4f0] sm:$0xff]
    %v3960 = vld [vmem:[%s207 + $0x4f8] sm:$0xff]
    %v3961 = vld [vmem:[%s207 + $0x500] sm:$0xff]
    %v3962 = vld [vmem:[%s207 + $0x508] sm:$0xff]
    %v3963 = vld [vmem:[%s207 + $0x510] sm:$0xff]
    %v3964 = vld [vmem:[%s207 + $0x518] sm:$0xff]
    %v3965 = vld [vmem:[%s207 + $0x520] sm:$0xff]
    %v3966 = vld [vmem:[%s207 + $0x528] sm:$0xff]
    %v3967 = vld [vmem:[%s207 + $0x530] sm:$0xff]
    %v3968 = vld [vmem:[%s207 + $0x538] sm:$0xff]
    %v3969 = vld [vmem:[%s207 + $0x540] sm:$0xff]
    %v3970 = vld [vmem:[%s207 + $0x548] sm:$0xff]
    %v3971 = vld [vmem:[%s207 + $0x550] sm:$0xff]
    %v3972 = vld [vmem:[%s207 + $0x558] sm:$0xff]
    %v3973 = vld [vmem:[%s207 + $0x560] sm:$0xff]
    %v3974 = vld [vmem:[%s207 + $0x568] sm:$0xff]
    %v3975 = vld [vmem:[%s207 + $0x570] sm:$0xff]
    %v3976 = vld [vmem:[%s207 + $0x578] sm:$0xff]
    %v3977 = vld [vmem:[%s207 + $0x580] sm:$0xff]
    %v3978 = vld [vmem:[%s207 + $0x588] sm:$0xff]
    %v3979 = vld [vmem:[%s207 + $0x590] sm:$0xff]
    %v3980 = vld [vmem:[%s207 + $0x598] sm:$0xff]
    %v3981 = vld [vmem:[%s207 + $0x5a0] sm:$0xff]
    %v3982 = vld [vmem:[%s207 + $0x5a8] sm:$0xff]
    %v3983 = vld [vmem:[%s207 + $0x5b0] sm:$0xff]
    %v3984 = vld [vmem:[%s207 + $0x5b8] sm:$0xff]
    %v3985 = vld [vmem:[%s207 + $0x5c0] sm:$0xff]
    %v3986 = vld [vmem:[%s207 + $0x5c8] sm:$0xff]
    %v3987 = vld [vmem:[%s207 + $0x5d0] sm:$0xff]
    %v3988 = vld [vmem:[%s207 + $0x5d8] sm:$0xff]
    %v3989 = vld [vmem:[%s207 + $0x5e0] sm:$0xff]
    %v3990 = vld [vmem:[%s207 + $0x5e8] sm:$0xff]
    %v3991 = vld [vmem:[%s207 + $0x5f0] sm:$0xff]
    %v3992 = vld [vmem:[%s207 + $0x5f8] sm:$0xff]
    %v3993 = vld [vmem:[%s207 + $0x600] sm:$0xff]
    %v3994 = vld [vmem:[%s207 + $0x608] sm:$0xff]
    %v3995 = vld [vmem:[%s207 + $0x610] sm:$0xff]
    %v3996 = vld [vmem:[%s207 + $0x618] sm:$0xff]
    %v3997 = vld [vmem:[%s207 + $0x620] sm:$0xff]
    %v3998 = vld [vmem:[%s207 + $0x628] sm:$0xff]
    %v3999 = vld [vmem:[%s207 + $0x630] sm:$0xff]
    %v4000 = vld [vmem:[%s207 + $0x638] sm:$0xff]
    %v4001 = vld [vmem:[%s207 + $0x640] sm:$0xff]
    %v4002 = vld [vmem:[%s207 + $0x648] sm:$0xff]
    %v4003 = vld [vmem:[%s207 + $0x650] sm:$0xff]
    %v4004 = vld [vmem:[%s207 + $0x658] sm:$0xff]
    %v4005 = vld [vmem:[%s207 + $0x660] sm:$0xff]
    %v4006 = vld [vmem:[%s207 + $0x668] sm:$0xff]
    %v4007 = vld [vmem:[%s207 + $0x670] sm:$0xff]
    %v4008 = vld [vmem:[%s207 + $0x678] sm:$0xff]
    %v4009 = vld [vmem:[%s207 + $0x680] sm:$0xff]
    %v4010 = vld [vmem:[%s207 + $0x688] sm:$0xff]
    %v4011 = vld [vmem:[%s207 + $0x690] sm:$0xff]
    %v4012 = vld [vmem:[%s207 + $0x698] sm:$0xff]
    %v4013 = vld [vmem:[%s207 + $0x6a0] sm:$0xff]
    %v4014 = vld [vmem:[%s207 + $0x6a8] sm:$0xff]
    %v4015 = vld [vmem:[%s207 + $0x6b0] sm:$0xff]
    %v4016 = vld [vmem:[%s207 + $0x6b8] sm:$0xff]
    %v4017 = vld [vmem:[%s207 + $0x6c0] sm:$0xff]
    %v4018 = vld [vmem:[%s207 + $0x6c8] sm:$0xff]
    %v4019 = vld [vmem:[%s207 + $0x6d0] sm:$0xff]
    %v4020 = vld [vmem:[%s207 + $0x6d8] sm:$0xff]
    %v4021 = vld [vmem:[%s207 + $0x6e0] sm:$0xff]
    %v4022 = vld [vmem:[%s207 + $0x6e8] sm:$0xff]
    %v4023 = vld [vmem:[%s207 + $0x6f0] sm:$0xff]
    %v4024 = vld [vmem:[%s207 + $0x6f8] sm:$0xff]
    %v4025 = vld [vmem:[%s207 + $0x700] sm:$0xff]
    %v4026 = vld [vmem:[%s207 + $0x708] sm:$0xff]
    %v4027 = vld [vmem:[%s207 + $0x710] sm:$0xff]
    %v4028 = vld [vmem:[%s207 + $0x718] sm:$0xff]
    %v4029 = vld [vmem:[%s207 + $0x720] sm:$0xff]
    %v4030 = vld [vmem:[%s207 + $0x728] sm:$0xff]
    %v4031 = vld [vmem:[%s207 + $0x730] sm:$0xff]
    %v4032 = vld [vmem:[%s207 + $0x738] sm:$0xff]
    %v4033 = vld [vmem:[%s207 + $0x740] sm:$0xff]
    %v4034 = vld [vmem:[%s207 + $0x748] sm:$0xff]
    %v4035 = vld [vmem:[%s207 + $0x750] sm:$0xff]
    %v4036 = vld [vmem:[%s207 + $0x758] sm:$0xff]
    %v4037 = vld [vmem:[%s207 + $0x760] sm:$0xff]
    %v4038 = vld [vmem:[%s207 + $0x768] sm:$0xff]
    %v4039 = vld [vmem:[%s207 + $0x770] sm:$0xff]
    %v4040 = vld [vmem:[%s207 + $0x778] sm:$0xff]
    %v4041 = vld [vmem:[%s207 + $0x780] sm:$0xff]
    %v4042 = vld [vmem:[%s207 + $0x788] sm:$0xff]
    %v4043 = vld [vmem:[%s207 + $0x790] sm:$0xff]
    %v4044 = vld [vmem:[%s207 + $0x798] sm:$0xff]
    %v4045 = vld [vmem:[%s207 + $0x7a0] sm:$0xff]
    %v4046 = vld [vmem:[%s207 + $0x7a8] sm:$0xff]
    %v4047 = vld [vmem:[%s207 + $0x7b0] sm:$0xff]
    %v4048 = vld [vmem:[%s207 + $0x7b8] sm:$0xff]
    %v4049 = vld [vmem:[%s207 + $0x7c0] sm:$0xff]
    %v4050 = vld [vmem:[%s207 + $0x7c8] sm:$0xff]
    %v4051 = vld [vmem:[%s207 + $0x7d0] sm:$0xff]
    %v4052 = vld [vmem:[%s207 + $0x7d8] sm:$0xff]
    %v4053 = vld [vmem:[%s207 + $0x7e0] sm:$0xff]
    %v4054 = vld [vmem:[%s207 + $0x7e8] sm:$0xff]
    %v4055 = vld [vmem:[%s207 + $0x7f0] sm:$0xff]
    %v4056 = vld [vmem:[%s207 + $0x7f8] sm:$0xff]
    %v4057 = vpack.c.bf16 %v3760, %v3760
    %v4058 = vpack.c.bf16 %v3761, %v3761
    %v4059 = vpack.c.bf16 %v3762, %v3762
    %v4060 = vpack.c.bf16 %v3763, %v3763
    %v4061 = vld [vmem:[#allocation13] sm:$0xff]
    %v4063 = vlaneseq
    %v4064 = vshrl.u32 %v4063, 7
    %v4065 = vsub.s32 0, %v4064
    %v4066 = vrot.slane %v4061, %v4065
    %v4067 = vlaneseq
    %v4068 = vshrl.u32 %v4067, 7
    %v4069 = vsub.s32 1, %v4068
    %v4070 = vrot.slane %v4061, %v4069
    %v4071 = vlaneseq
    %v4072 = vshrl.u32 %v4071, 7
    %v4073 = vsub.s32 2, %v4072
    %v4074 = vrot.slane %v4061, %v4073
    %v4075 = vlaneseq
    %v4076 = vshrl.u32 %v4075, 7
    %v4077 = vsub.s32 3, %v4076
    %v4078 = vrot.slane %v4061, %v4077
    %v4079 = vlaneseq
    %v4080 = vshrl.u32 %v4079, 7
    %v4081 = vsub.s32 4, %v4080
    %v4082 = vrot.slane %v4061, %v4081
    %v4083 = vlaneseq
    %v4084 = vshrl.u32 %v4083, 7
    %v4085 = vsub.s32 5, %v4084
    %v4086 = vrot.slane %v4061, %v4085
    %v4087 = vlaneseq
    %v4088 = vshrl.u32 %v4087, 7
    %v4089 = vsub.s32 6, %v4088
    %v4090 = vrot.slane %v4061, %v4089
    %v4091 = vlaneseq
    %v4092 = vshrl.u32 %v4091, 7
    %v4093 = vsub.s32 7, %v4092
    %v4094 = vrot.slane %v4061, %v4093
    %4103 = vmatprep.subr.bf16.mxu0 %v3802
    %4104 = vmatpush1.bf16.msra.mxu0 %v3801
    %4105 = vmatprep.subr.bf16.mxu0 %v3810
    %4106 = vmatpush1.bf16.msra.mxu0 %v3809
    %4107 = vmatprep.subr.bf16.mxu0 %v3818
    %4108 = vmatpush1.bf16.msra.mxu0 %v3817
    %4109 = vmatprep.subr.bf16.mxu0 %v3826
    %4110 = vmatpush1.bf16.msra.mxu0 %v3825
    %4111 = vmatprep.subr.bf16.mxu0 %v3834
    %4112 = vmatpush1.bf16.msra.mxu0 %v3833
    %4113 = vmatprep.subr.bf16.mxu0 %v3842
    %4114 = vmatpush1.bf16.msra.mxu0 %v3841
    %4115 = vmatprep.subr.bf16.mxu0 %v3850
    %4116 = vmatpush1.bf16.msra.mxu0 %v3849
    %4117 = vmatprep.subr.bf16.mxu0 %v3858
    %4118 = vmatpush1.bf16.msra.mxu0 %v3857
    %4119 = vmatprep.subr.bf16.mxu0 %v3866
    %4120 = vmatpush1.bf16.msra.mxu0 %v3865
    %4121 = vmatprep.subr.bf16.mxu0 %v3874
    %4122 = vmatpush1.bf16.msra.mxu0 %v3873
    %4123 = vmatprep.subr.bf16.mxu0 %v3882
    %4124 = vmatpush1.bf16.msra.mxu0 %v3881
    %4125 = vmatprep.subr.bf16.mxu0 %v3890
    %4126 = vmatpush1.bf16.msra.mxu0 %v3889
    %4127 = vmatprep.subr.bf16.mxu0 %v3898
    %4128 = vmatpush1.bf16.msra.mxu0 %v3897
    %4129 = vmatprep.subr.bf16.mxu0 %v3906
    %4130 = vmatpush1.bf16.msra.mxu0 %v3905
    %4131 = vmatprep.subr.bf16.mxu0 %v3914
    %4132 = vmatpush1.bf16.msra.mxu0 %v3913
    %4133 = vmatprep.subr.bf16.mxu0 %v3922
    %4134 = vmatpush1.bf16.msra.mxu0 %v3921
    %4135 = vmatprep.mubr.bf16.mxu0 %v4058
    %4136 = vmatmul.mubr.bf16.gmra.mrb[0].mxu0 %v4057
    %v4137 = vpop.f32.mrb[0].mxu0
    %v4138 = vadd.f32 %v4066, %v4137
    %v4139 = vpop.f32.mrb[0].mxu0
    %v4140 = vadd.f32 %v4070, %v4139
    %v4141 = vpop.f32.mrb[0].mxu0
    %v4142 = vpop.f32.mrb[0].mxu0
    %4143 = vdwg.mxu0
    %4144 = vmatprep.subr.bf16.mxu0 %v3930
    %4145 = vmatpush1.bf16.msra.mxu0 %v3929
    %4146 = vmatprep.subr.bf16.mxu0 %v3938
    %4147 = vmatpush1.bf16.msra.mxu0 %v3937
    %4148 = vmatprep.subr.bf16.mxu0 %v3946
    %4149 = vmatpush1.bf16.msra.mxu0 %v3945
    %4150 = vmatprep.subr.bf16.mxu0 %v3954
    %4151 = vmatpush1.bf16.msra.mxu0 %v3953
    %4152 = vmatprep.subr.bf16.mxu0 %v3962
    %4153 = vmatpush1.bf16.msra.mxu0 %v3961
    %4154 = vmatprep.subr.bf16.mxu0 %v3970
    %4155 = vmatpush1.bf16.msra.mxu0 %v3969
    %4156 = vmatprep.subr.bf16.mxu0 %v3978
    %4157 = vmatpush1.bf16.msra.mxu0 %v3977
    %4158 = vmatprep.subr.bf16.mxu0 %v3986
    %4159 = vmatpush1.bf16.msra.mxu0 %v3985
    %4160 = vmatprep.subr.bf16.mxu0 %v3994
    %4161 = vmatpush1.bf16.msra.mxu0 %v3993
    %4162 = vmatprep.subr.bf16.mxu0 %v4002
    %4163 = vmatpush1.bf16.msra.mxu0 %v4001
    %4164 = vmatprep.subr.bf16.mxu0 %v4010
    %4165 = vmatpush1.bf16.msra.mxu0 %v4009
    %4166 = vmatprep.subr.bf16.mxu0 %v4018
    %4167 = vmatpush1.bf16.msra.mxu0 %v4017
    %4168 = vmatprep.subr.bf16.mxu0 %v4026
    %4169 = vmatpush1.bf16.msra.mxu0 %v4025
    %4170 = vmatprep.subr.bf16.mxu0 %v4034
    %4171 = vmatpush1.bf16.msra.mxu0 %v4033
    %4172 = vmatprep.subr.bf16.mxu0 %v4042
    %4173 = vmatpush1.bf16.msra.mxu0 %v4041
    %4174 = vmatprep.subr.bf16.mxu0 %v4050
    %4175 = vmatpush1.bf16.msra.mxu0 %v4049
    %4176 = vmatprep.mubr.bf16.mxu0 %v4060
    %4177 = vmatmul.mubr.bf16.gmra.mrb[0].mxu0 %v4059
    %v4178 = vpop.f32.mrb[0].mxu0
    %v4179 = vadd.f32 %v4138, %v4178
    %v4180 = vpop.f32.mrb[0].mxu0
    %v4181 = vadd.f32 %v4140, %v4180
    %v4182 = vpop.f32.mrb[0].mxu0
    %v4183 = vpop.f32.mrb[0].mxu0
    %4184 = vdwg.mxu0
    %4185 = vmatprep.subr.bf16.mxu0 %v3804
    %4186 = vmatpush1.bf16.msra.mxu0 %v3803
    %4187 = vmatprep.subr.bf16.mxu0 %v3812
    %4188 = vmatpush1.bf16.msra.mxu0 %v3811
    %4189 = vmatprep.subr.bf16.mxu0 %v3820
    %4190 = vmatpush1.bf16.msra.mxu0 %v3819
    %4191 = vmatprep.subr.bf16.mxu0 %v3828
    %4192 = vmatpush1.bf16.msra.mxu0 %v3827
    %4193 = vmatprep.subr.bf16.mxu0 %v3836
    %4194 = vmatpush1.bf16.msra.mxu0 %v3835
    %4195 = vmatprep.subr.bf16.mxu0 %v3844
    %4196 = vmatpush1.bf16.msra.mxu0 %v3843
    %4197 = vmatprep.subr.bf16.mxu0 %v3852
    %4198 = vmatpush1.bf16.msra.mxu0 %v3851
    %4199 = vmatprep.subr.bf16.mxu0 %v3860
    %4200 = vmatpush1.bf16.msra.mxu0 %v3859
    %4201 = vmatprep.subr.bf16.mxu0 %v3868
    %4202 = vmatpush1.bf16.msra.mxu0 %v3867
    %4203 = vmatprep.subr.bf16.mxu0 %v3876
    %4204 = vmatpush1.bf16.msra.mxu0 %v3875
    %4205 = vmatprep.subr.bf16.mxu0 %v3884
    %4206 = vmatpush1.bf16.msra.mxu0 %v3883
    %4207 = vmatprep.subr.bf16.mxu0 %v3892
    %4208 = vmatpush1.bf16.msra.mxu0 %v3891
    %4209 = vmatprep.subr.bf16.mxu0 %v3900
    %4210 = vmatpush1.bf16.msra.mxu0 %v3899
    %4211 = vmatprep.subr.bf16.mxu0 %v3908
    %4212 = vmatpush1.bf16.msra.mxu0 %v3907
    %4213 = vmatprep.subr.bf16.mxu0 %v3916
    %4214 = vmatpush1.bf16.msra.mxu0 %v3915
    %4215 = vmatprep.subr.bf16.mxu0 %v3924
    %4216 = vmatpush1.bf16.msra.mxu0 %v3923
    %4217 = vmatprep.mubr.bf16.mxu0 %v4058
    %4218 = vmatmul.mubr.bf16.gmra.mrb[0].mxu0 %v4057
    %v4219 = vpop.f32.mrb[0].mxu0
    %v4220 = vadd.f32 %v4074, %v4219
    %v4221 = vpop.f32.mrb[0].mxu0
    %v4222 = vadd.f32 %v4078, %v4221
    %v4223 = vpop.f32.mrb[0].mxu0
    %v4224 = vpop.f32.mrb[0].mxu0
    %4225 = vdwg.mxu0
    %4226 = vmatprep.subr.bf16.mxu0 %v3932
    %4227 = vmatpush1.bf16.msra.mxu0 %v3931
    %4228 = vmatprep.subr.bf16.mxu0 %v3940
    %4229 = vmatpush1.bf16.msra.mxu0 %v3939
    %4230 = vmatprep.subr.bf16.mxu0 %v3948
    %4231 = vmatpush1.bf16.msra.mxu0 %v3947
    %4232 = vmatprep.subr.bf16.mxu0 %v3956
    %4233 = vmatpush1.bf16.msra.mxu0 %v3955
    %4234 = vmatprep.subr.bf16.mxu0 %v3964
    %4235 = vmatpush1.bf16.msra.mxu0 %v3963
    %4236 = vmatprep.subr.bf16.mxu0 %v3972
    %4237 = vmatpush1.bf16.msra.mxu0 %v3971
    %4238 = vmatprep.subr.bf16.mxu0 %v3980
    %4239 = vmatpush1.bf16.msra.mxu0 %v3979
    %4240 = vmatprep.subr.bf16.mxu0 %v3988
    %4241 = vmatpush1.bf16.msra.mxu0 %v3987
    %4242 = vmatprep.subr.bf16.mxu0 %v3996
    %4243 = vmatpush1.bf16.msra.mxu0 %v3995
    %4244 = vmatprep.subr.bf16.mxu0 %v4004
    %4245 = vmatpush1.bf16.msra.mxu0 %v4003
    %4246 = vmatprep.subr.bf16.mxu0 %v4012
    %4247 = vmatpush1.bf16.msra.mxu0 %v4011
    %4248 = vmatprep.subr.bf16.mxu0 %v4020
    %4249 = vmatpush1.bf16.msra.mxu0 %v4019
    %4250 = vmatprep.subr.bf16.mxu0 %v4028
    %4251 = vmatpush1.bf16.msra.mxu0 %v4027
    %4252 = vmatprep.subr.bf16.mxu0 %v4036
    %4253 = vmatpush1.bf16.msra.mxu0 %v4035
    %4254 = vmatprep.subr.bf16.mxu0 %v4044
    %4255 = vmatpush1.bf16.msra.mxu0 %v4043
    %4256 = vmatprep.subr.bf16.mxu0 %v4052
    %4257 = vmatpush1.bf16.msra.mxu0 %v4051
    %4258 = vmatprep.mubr.bf16.mxu0 %v4060
    %4259 = vmatmul.mubr.bf16.gmra.mrb[0].mxu0 %v4059
    %v4260 = vpop.f32.mrb[0].mxu0
    %v4261 = vadd.f32 %v4220, %v4260
    %v4262 = vpop.f32.mrb[0].mxu0
    %v4263 = vadd.f32 %v4222, %v4262
    %v4264 = vpop.f32.mrb[0].mxu0
    %v4265 = vpop.f32.mrb[0].mxu0
    %4266 = vdwg.mxu0
    %4267 = vmatprep.subr.bf16.mxu0 %v3806
    %4268 = vmatpush1.bf16.msra.mxu0 %v3805
    %4269 = vmatprep.subr.bf16.mxu0 %v3814
    %4270 = vmatpush1.bf16.msra.mxu0 %v3813
    %4271 = vmatprep.subr.bf16.mxu0 %v3822
    %4272 = vmatpush1.bf16.msra.mxu0 %v3821
    %4273 = vmatprep.subr.bf16.mxu0 %v3830
    %4274 = vmatpush1.bf16.msra.mxu0 %v3829
    %4275 = vmatprep.subr.bf16.mxu0 %v3838
    %4276 = vmatpush1.bf16.msra.mxu0 %v3837
    %4277 = vmatprep.subr.bf16.mxu0 %v3846
    %4278 = vmatpush1.bf16.msra.mxu0 %v3845
    %4279 = vmatprep.subr.bf16.mxu0 %v3854
    %4280 = vmatpush1.bf16.msra.mxu0 %v3853
    %4281 = vmatprep.subr.bf16.mxu0 %v3862
    %4282 = vmatpush1.bf16.msra.mxu0 %v3861
    %4283 = vmatprep.subr.bf16.mxu0 %v3870
    %4284 = vmatpush1.bf16.msra.mxu0 %v3869
    %4285 = vmatprep.subr.bf16.mxu0 %v3878
    %4286 = vmatpush1.bf16.msra.mxu0 %v3877
    %4287 = vmatprep.subr.bf16.mxu0 %v3886
    %4288 = vmatpush1.bf16.msra.mxu0 %v3885
    %4289 = vmatprep.subr.bf16.mxu0 %v3894
    %4290 = vmatpush1.bf16.msra.mxu0 %v3893
    %4291 = vmatprep.subr.bf16.mxu0 %v3902
    %4292 = vmatpush1.bf16.msra.mxu0 %v3901
    %4293 = vmatprep.subr.bf16.mxu0 %v3910
    %4294 = vmatpush1.bf16.msra.mxu0 %v3909
    %4295 = vmatprep.subr.bf16.mxu0 %v3918
    %4296 = vmatpush1.bf16.msra.mxu0 %v3917
    %4297 = vmatprep.subr.bf16.mxu0 %v3926
    %4298 = vmatpush1.bf16.msra.mxu0 %v3925
    %4299 = vmatprep.mubr.bf16.mxu0 %v4058
    %4300 = vmatmul.mubr.bf16.gmra.mrb[0].mxu0 %v4057
    %v4301 = vpop.f32.mrb[0].mxu0
    %v4302 = vadd.f32 %v4082, %v4301
    %v4303 = vpop.f32.mrb[0].mxu0
    %v4304 = vadd.f32 %v4086, %v4303
    %v4305 = vpop.f32.mrb[0].mxu0
    %v4306 = vpop.f32.mrb[0].mxu0
    %4307 = vdwg.mxu0
    %4308 = vmatprep.subr.bf16.mxu0 %v3934
    %4309 = vmatpush1.bf16.msra.mxu0 %v3933
    %4310 = vmatprep.subr.bf16.mxu0 %v3942
    %4311 = vmatpush1.bf16.msra.mxu0 %v3941
    %4312 = vmatprep.subr.bf16.mxu0 %v3950
    %4313 = vmatpush1.bf16.msra.mxu0 %v3949
    %4314 = vmatprep.subr.bf16.mxu0 %v3958
    %4315 = vmatpush1.bf16.msra.mxu0 %v3957
    %4316 = vmatprep.subr.bf16.mxu0 %v3966
    %4317 = vmatpush1.bf16.msra.mxu0 %v3965
    %4318 = vmatprep.subr.bf16.mxu0 %v3974
    %4319 = vmatpush1.bf16.msra.mxu0 %v3973
    %4320 = vmatprep.subr.bf16.mxu0 %v3982
    %4321 = vmatpush1.bf16.msra.mxu0 %v3981
    %4322 = vmatprep.subr.bf16.mxu0 %v3990
    %4323 = vmatpush1.bf16.msra.mxu0 %v3989
    %4324 = vmatprep.subr.bf16.mxu0 %v3998
    %4325 = vmatpush1.bf16.msra.mxu0 %v3997
    %4326 = vmatprep.subr.bf16.mxu0 %v4006
    %4327 = vmatpush1.bf16.msra.mxu0 %v4005
    %4328 = vmatprep.subr.bf16.mxu0 %v4014
    %4329 = vmatpush1.bf16.msra.mxu0 %v4013
    %4330 = vmatprep.subr.bf16.mxu0 %v4022
    %4331 = vmatpush1.bf16.msra.mxu0 %v4021
    %4332 = vmatprep.subr.bf16.mxu0 %v4030
    %4333 = vmatpush1.bf16.msra.mxu0 %v4029
    %4334 = vmatprep.subr.bf16.mxu0 %v4038
    %4335 = vmatpush1.bf16.msra.mxu0 %v4037
    %4336 = vmatprep.subr.bf16.mxu0 %v4046
    %4337 = vmatpush1.bf16.msra.mxu0 %v4045
    %4338 = vmatprep.subr.bf16.mxu0 %v4054
    %4339 = vmatpush1.bf16.msra.mxu0 %v4053
    %4340 = vmatprep.mubr.bf16.mxu0 %v4060
    %4341 = vmatmul.mubr.bf16.gmra.mrb[0].mxu0 %v4059
    %v4342 = vpop.f32.mrb[0].mxu0
    %v4343 = vadd.f32 %v4302, %v4342
    %v4344 = vpop.f32.mrb[0].mxu0
    %v4345 = vadd.f32 %v4304, %v4344
    %v4346 = vpop.f32.mrb[0].mxu0
    %v4347 = vpop.f32.mrb[0].mxu0
    %4348 = vdwg.mxu0
    %4349 = vmatprep.subr.bf16.mxu0 %v3808
    %4350 = vmatpush1.bf16.msra.mxu0 %v3807
    %4351 = vmatprep.subr.bf16.mxu0 %v3816
    %4352 = vmatpush1.bf16.msra.mxu0 %v3815
    %4353 = vmatprep.subr.bf16.mxu0 %v3824
    %4354 = vmatpush1.bf16.msra.mxu0 %v3823
    %4355 = vmatprep.subr.bf16.mxu0 %v3832
    %4356 = vmatpush1.bf16.msra.mxu0 %v3831
    %4357 = vmatprep.subr.bf16.mxu0 %v3840
    %4358 = vmatpush1.bf16.msra.mxu0 %v3839
    %4359 = vmatprep.subr.bf16.mxu0 %v3848
    %4360 = vmatpush1.bf16.msra.mxu0 %v3847
    %4361 = vmatprep.subr.bf16.mxu0 %v3856
    %4362 = vmatpush1.bf16.msra.mxu0 %v3855
    %4363 = vmatprep.subr.bf16.mxu0 %v3864
    %4364 = vmatpush1.bf16.msra.mxu0 %v3863
    %4365 = vmatprep.subr.bf16.mxu0 %v3872
    %4366 = vmatpush1.bf16.msra.mxu0 %v3871
    %4367 = vmatprep.subr.bf16.mxu0 %v3880
    %4368 = vmatpush1.bf16.msra.mxu0 %v3879
    %4369 = vmatprep.subr.bf16.mxu0 %v3888
    %4370 = vmatpush1.bf16.msra.mxu0 %v3887
    %4371 = vmatprep.subr.bf16.mxu0 %v3896
    %4372 = vmatpush1.bf16.msra.mxu0 %v3895
    %4373 = vmatprep.subr.bf16.mxu0 %v3904
    %4374 = vmatpush1.bf16.msra.mxu0 %v3903
    %4375 = vmatprep.subr.bf16.mxu0 %v3912
    %4376 = vmatpush1.bf16.msra.mxu0 %v3911
    %4377 = vmatprep.subr.bf16.mxu0 %v3920
    %4378 = vmatpush1.bf16.msra.mxu0 %v3919
    %4379 = vmatprep.subr.bf16.mxu0 %v3928
    %4380 = vmatpush1.bf16.msra.mxu0 %v3927
    %4381 = vmatprep.mubr.bf16.mxu0 %v4058
    %4382 = vmatmul.mubr.bf16.gmra.mrb[0].mxu0 %v4057
    %v4383 = vpop.f32.mrb[0].mxu0
    %v4384 = vadd.f32 %v4090, %v4383
    %v4385 = vpop.f32.mrb[0].mxu0
    %v4386 = vadd.f32 %v4094, %v4385
    %v4387 = vpop.f32.mrb[0].mxu0
    %v4388 = vpop.f32.mrb[0].mxu0
    %4389 = vdwg.mxu0
    %4390 = vmatprep.subr.bf16.mxu0 %v3936
    %4391 = vmatpush1.bf16.msra.mxu0 %v3935
    %4392 = vmatprep.subr.bf16.mxu0 %v3944
    %4393 = vmatpush1.bf16.msra.mxu0 %v3943
    %4394 = vmatprep.subr.bf16.mxu0 %v3952
    %4395 = vmatpush1.bf16.msra.mxu0 %v3951
    %4396 = vmatprep.subr.bf16.mxu0 %v3960
    %4397 = vmatpush1.bf16.msra.mxu0 %v3959
    %4398 = vmatprep.subr.bf16.mxu0 %v3968
    %4399 = vmatpush1.bf16.msra.mxu0 %v3967
    %4400 = vmatprep.subr.bf16.mxu0 %v3976
    %4401 = vmatpush1.bf16.msra.mxu0 %v3975
    %4402 = vmatprep.subr.bf16.mxu0 %v3984
    %4403 = vmatpush1.bf16.msra.mxu0 %v3983
    %4404 = vmatprep.subr.bf16.mxu0 %v3992
    %4405 = vmatpush1.bf16.msra.mxu0 %v3991
    %4406 = vmatprep.subr.bf16.mxu0 %v4000
    %4407 = vmatpush1.bf16.msra.mxu0 %v3999
    %4408 = vmatprep.subr.bf16.mxu0 %v4008
    %4409 = vmatpush1.bf16.msra.mxu0 %v4007
    %4410 = vmatprep.subr.bf16.mxu0 %v4016
    %4411 = vmatpush1.bf16.msra.mxu0 %v4015
    %4412 = vmatprep.subr.bf16.mxu0 %v4024
    %4413 = vmatpush1.bf16.msra.mxu0 %v4023
    %4414 = vmatprep.subr.bf16.mxu0 %v4032
    %4415 = vmatpush1.bf16.msra.mxu0 %v4031
    %4416 = vmatprep.subr.bf16.mxu0 %v4040
    %4417 = vmatpush1.bf16.msra.mxu0 %v4039
    %4418 = vmatprep.subr.bf16.mxu0 %v4048
    %4419 = vmatpush1.bf16.msra.mxu0 %v4047
    %4420 = vmatprep.subr.bf16.mxu0 %v4056
    %4421 = vmatpush1.bf16.msra.mxu0 %v4055
    %4422 = vmatprep.mubr.bf16.mxu0 %v4060
    %4423 = vmatmul.mubr.bf16.gmra.mrb[0].mxu0 %v4059
    %v4424 = vpop.f32.mrb[0].mxu0
    %v4425 = vadd.f32 %v4384, %v4424
    %v4426 = vpop.f32.mrb[0].mxu0
    %v4427 = vadd.f32 %v4386, %v4426
    %v4428 = vpop.f32.mrb[0].mxu0
    %v4429 = vpop.f32.mrb[0].mxu0
    %4430 = vdwg.mxu0
    %vm4431 = vcmp.gt.f32.partialorder %v4179, 0.0
    %vm4432 = vcmp.gt.f32.partialorder %v4181, 0.0
    %vm4433 = vcmp.gt.f32.partialorder %v4261, 0.0
    %vm4434 = vcmp.gt.f32.partialorder %v4263, 0.0
    %vm4435 = vcmp.gt.f32.partialorder %v4343, 0.0
    %vm4436 = vcmp.gt.f32.partialorder %v4345, 0.0
    %vm4437 = vcmp.gt.f32.partialorder %v4425, 0.0
    %vm4438 = vcmp.gt.f32.partialorder %v4427, 0.0
    %v4439 = vmul.f32 %v4179, 0.3
    %v4440 = vmul.f32 %v4181, 0.3
    %v4441 = vmul.f32 %v4261, 0.3
    %v4442 = vmul.f32 %v4263, 0.3
    %v4443 = vmul.f32 %v4343, 0.3
    %v4444 = vmul.f32 %v4345, 0.3
    %v4445 = vmul.f32 %v4425, 0.3
    %v4446 = vmul.f32 %v4427, 0.3
    %v4447 = vsel %vm4431, %v4179, %v4439
    %v4448 = vsel %vm4432, %v4181, %v4440
    %v4449 = vsel %vm4433, %v4261, %v4441
    %v4450 = vsel %vm4434, %v4263, %v4442
    %v4451 = vsel %vm4435, %v4343, %v4443
    %v4452 = vsel %vm4436, %v4345, %v4444
    %v4453 = vsel %vm4437, %v4425, %v4445
    %v4454 = vsel %vm4438, %v4427, %v4446
    %s4455 = sshll.u32 %s204, 4
    %4456 = dma.done [#allocation3], %s4455
    %v4457 = vld [vmem:[#allocation2] sm:$0xff]
    %v4458 = vld [vmem:[#allocation2 + $0x8] sm:$0xff]
    %v4459 = vld [vmem:[#allocation2 + $0x10] sm:$0xff]
    %v4460 = vld [vmem:[#allocation2 + $0x18] sm:$0xff]
    %v4461 = vld [vmem:[#allocation2 + $0x20] sm:$0xff]
    %v4462 = vld [vmem:[#allocation2 + $0x28] sm:$0xff]
    %v4463 = vld [vmem:[#allocation2 + $0x30] sm:$0xff]
    %v4464 = vld [vmem:[#allocation2 + $0x38] sm:$0xff]
    %v4465 = vld [vmem:[#allocation2 + $0x40] sm:$0xff]
    %v4466 = vld [vmem:[#allocation2 + $0x48] sm:$0xff]
    %v4467 = vld [vmem:[#allocation2 + $0x50] sm:$0xff]
    %v4468 = vld [vmem:[#allocation2 + $0x58] sm:$0xff]
    %v4469 = vld [vmem:[#allocation2 + $0x60] sm:$0xff]
    %v4470 = vld [vmem:[#allocation2 + $0x68] sm:$0xff]
    %v4471 = vld [vmem:[#allocation2 + $0x70] sm:$0xff]
    %v4472 = vld [vmem:[#allocation2 + $0x78] sm:$0xff]
    %v4473 = vld [vmem:[#allocation2 + $0x80] sm:$0xff]
    %v4474 = vld [vmem:[#allocation2 + $0x88] sm:$0xff]
    %v4475 = vld [vmem:[#allocation2 + $0x90] sm:$0xff]
    %v4476 = vld [vmem:[#allocation2 + $0x98] sm:$0xff]
    %v4477 = vld [vmem:[#allocation2 + $0xa0] sm:$0xff]
    %v4478 = vld [vmem:[#allocation2 + $0xa8] sm:$0xff]
    %v4479 = vld [vmem:[#allocation2 + $0xb0] sm:$0xff]
    %v4480 = vld [vmem:[#allocation2 + $0xb8] sm:$0xff]
    %v4481 = vld [vmem:[#allocation2 + $0xc0] sm:$0xff]
    %v4482 = vld [vmem:[#allocation2 + $0xc8] sm:$0xff]
    %v4483 = vld [vmem:[#allocation2 + $0xd0] sm:$0xff]
    %v4484 = vld [vmem:[#allocation2 + $0xd8] sm:$0xff]
    %v4485 = vld [vmem:[#allocation2 + $0xe0] sm:$0xff]
    %v4486 = vld [vmem:[#allocation2 + $0xe8] sm:$0xff]
    %v4487 = vld [vmem:[#allocation2 + $0xf0] sm:$0xff]
    %v4488 = vld [vmem:[#allocation2 + $0xf8] sm:$0xff]
    %v4489 = vld [vmem:[#allocation2 + $0x100] sm:$0xff]
    %v4490 = vld [vmem:[#allocation2 + $0x108] sm:$0xff]
    %v4491 = vld [vmem:[#allocation2 + $0x110] sm:$0xff]
    %v4492 = vld [vmem:[#allocation2 + $0x118] sm:$0xff]
    %v4493 = vld [vmem:[#allocation2 + $0x120] sm:$0xff]
    %v4494 = vld [vmem:[#allocation2 + $0x128] sm:$0xff]
    %v4495 = vld [vmem:[#allocation2 + $0x130] sm:$0xff]
    %v4496 = vld [vmem:[#allocation2 + $0x138] sm:$0xff]
    %v4497 = vld [vmem:[#allocation2 + $0x140] sm:$0xff]
    %v4498 = vld [vmem:[#allocation2 + $0x148] sm:$0xff]
    %v4499 = vld [vmem:[#allocation2 + $0x150] sm:$0xff]
    %v4500 = vld [vmem:[#allocation2 + $0x158] sm:$0xff]
    %v4501 = vld [vmem:[#allocation2 + $0x160] sm:$0xff]
    %v4502 = vld [vmem:[#allocation2 + $0x168] sm:$0xff]
    %v4503 = vld [vmem:[#allocation2 + $0x170] sm:$0xff]
    %v4504 = vld [vmem:[#allocation2 + $0x178] sm:$0xff]
    %v4505 = vld [vmem:[#allocation2 + $0x180] sm:$0xff]
    %v4506 = vld [vmem:[#allocation2 + $0x188] sm:$0xff]
    %v4507 = vld [vmem:[#allocation2 + $0x190] sm:$0xff]
    %v4508 = vld [vmem:[#allocation2 + $0x198] sm:$0xff]
    %v4509 = vld [vmem:[#allocation2 + $0x1a0] sm:$0xff]
    %v4510 = vld [vmem:[#allocation2 + $0x1a8] sm:$0xff]
    %v4511 = vld [vmem:[#allocation2 + $0x1b0] sm:$0xff]
    %v4512 = vld [vmem:[#allocation2 + $0x1b8] sm:$0xff]
    %v4513 = vld [vmem:[#allocation2 + $0x1c0] sm:$0xff]
    %v4514 = vld [vmem:[#allocation2 + $0x1c8] sm:$0xff]
    %v4515 = vld [vmem:[#allocation2 + $0x1d0] sm:$0xff]
    %v4516 = vld [vmem:[#allocation2 + $0x1d8] sm:$0xff]
    %v4517 = vld [vmem:[#allocation2 + $0x1e0] sm:$0xff]
    %v4518 = vld [vmem:[#allocation2 + $0x1e8] sm:$0xff]
    %v4519 = vld [vmem:[#allocation2 + $0x1f0] sm:$0xff]
    %v4520 = vld [vmem:[#allocation2 + $0x1f8] sm:$0xff]
    %v4521 = vld [vmem:[#allocation2 + $0x200] sm:$0xff]
    %v4522 = vld [vmem:[#allocation2 + $0x208] sm:$0xff]
    %v4523 = vld [vmem:[#allocation2 + $0x210] sm:$0xff]
    %v4524 = vld [vmem:[#allocation2 + $0x218] sm:$0xff]
    %v4525 = vld [vmem:[#allocation2 + $0x220] sm:$0xff]
    %v4526 = vld [vmem:[#allocation2 + $0x228] sm:$0xff]
    %v4527 = vld [vmem:[#allocation2 + $0x230] sm:$0xff]
    %v4528 = vld [vmem:[#allocation2 + $0x238] sm:$0xff]
    %v4529 = vld [vmem:[#allocation2 + $0x240] sm:$0xff]
    %v4530 = vld [vmem:[#allocation2 + $0x248] sm:$0xff]
    %v4531 = vld [vmem:[#allocation2 + $0x250] sm:$0xff]
    %v4532 = vld [vmem:[#allocation2 + $0x258] sm:$0xff]
    %v4533 = vld [vmem:[#allocation2 + $0x260] sm:$0xff]
    %v4534 = vld [vmem:[#allocation2 + $0x268] sm:$0xff]
    %v4535 = vld [vmem:[#allocation2 + $0x270] sm:$0xff]
    %v4536 = vld [vmem:[#allocation2 + $0x278] sm:$0xff]
    %v4537 = vld [vmem:[#allocation2 + $0x280] sm:$0xff]
    %v4538 = vld [vmem:[#allocation2 + $0x288] sm:$0xff]
    %v4539 = vld [vmem:[#allocation2 + $0x290] sm:$0xff]
    %v4540 = vld [vmem:[#allocation2 + $0x298] sm:$0xff]
    %v4541 = vld [vmem:[#allocation2 + $0x2a0] sm:$0xff]
    %v4542 = vld [vmem:[#allocation2 + $0x2a8] sm:$0xff]
    %v4543 = vld [vmem:[#allocation2 + $0x2b0] sm:$0xff]
    %v4544 = vld [vmem:[#allocation2 + $0x2b8] sm:$0xff]
    %v4545 = vld [vmem:[#allocation2 + $0x2c0] sm:$0xff]
    %v4546 = vld [vmem:[#allocation2 + $0x2c8] sm:$0xff]
    %v4547 = vld [vmem:[#allocation2 + $0x2d0] sm:$0xff]
    %v4548 = vld [vmem:[#allocation2 + $0x2d8] sm:$0xff]
    %v4549 = vld [vmem:[#allocation2 + $0x2e0] sm:$0xff]
    %v4550 = vld [vmem:[#allocation2 + $0x2e8] sm:$0xff]
    %v4551 = vld [vmem:[#allocation2 + $0x2f0] sm:$0xff]
    %v4552 = vld [vmem:[#allocation2 + $0x2f8] sm:$0xff]
    %v4553 = vld [vmem:[#allocation2 + $0x300] sm:$0xff]
    %v4554 = vld [vmem:[#allocation2 + $0x308] sm:$0xff]
    %v4555 = vld [vmem:[#allocation2 + $0x310] sm:$0xff]
    %v4556 = vld [vmem:[#allocation2 + $0x318] sm:$0xff]
    %v4557 = vld [vmem:[#allocation2 + $0x320] sm:$0xff]
    %v4558 = vld [vmem:[#allocation2 + $0x328] sm:$0xff]
    %v4559 = vld [vmem:[#allocation2 + $0x330] sm:$0xff]
    %v4560 = vld [vmem:[#allocation2 + $0x338] sm:$0xff]
    %v4561 = vld [vmem:[#allocation2 + $0x340] sm:$0xff]
    %v4562 = vld [vmem:[#allocation2 + $0x348] sm:$0xff]
    %v4563 = vld [vmem:[#allocation2 + $0x350] sm:$0xff]
    %v4564 = vld [vmem:[#allocation2 + $0x358] sm:$0xff]
    %v4565 = vld [vmem:[#allocation2 + $0x360] sm:$0xff]
    %v4566 = vld [vmem:[#allocation2 + $0x368] sm:$0xff]
    %v4567 = vld [vmem:[#allocation2 + $0x370] sm:$0xff]
    %v4568 = vld [vmem:[#allocation2 + $0x378] sm:$0xff]
    %v4569 = vld [vmem:[#allocation2 + $0x380] sm:$0xff]
    %v4570 = vld [vmem:[#allocation2 + $0x388] sm:$0xff]
    %v4571 = vld [vmem:[#allocation2 + $0x390] sm:$0xff]
    %v4572 = vld [vmem:[#allocation2 + $0x398] sm:$0xff]
    %v4573 = vld [vmem:[#allocation2 + $0x3a0] sm:$0xff]
    %v4574 = vld [vmem:[#allocation2 + $0x3a8] sm:$0xff]
    %v4575 = vld [vmem:[#allocation2 + $0x3b0] sm:$0xff]
    %v4576 = vld [vmem:[#allocation2 + $0x3b8] sm:$0xff]
    %v4577 = vld [vmem:[#allocation2 + $0x3c0] sm:$0xff]
    %v4578 = vld [vmem:[#allocation2 + $0x3c8] sm:$0xff]
    %v4579 = vld [vmem:[#allocation2 + $0x3d0] sm:$0xff]
    %v4580 = vld [vmem:[#allocation2 + $0x3d8] sm:$0xff]
    %v4581 = vld [vmem:[#allocation2 + $0x3e0] sm:$0xff]
    %v4582 = vld [vmem:[#allocation2 + $0x3e8] sm:$0xff]
    %v4583 = vld [vmem:[#allocation2 + $0x3f0] sm:$0xff]
    %v4584 = vld [vmem:[#allocation2 + $0x3f8] sm:$0xff]
    %v4585 = vld [vmem:[#allocation2 + $0x400] sm:$0xff]
    %v4586 = vld [vmem:[#allocation2 + $0x408] sm:$0xff]
    %v4587 = vld [vmem:[#allocation2 + $0x410] sm:$0xff]
    %v4588 = vld [vmem:[#allocation2 + $0x418] sm:$0xff]
    %v4589 = vld [vmem:[#allocation2 + $0x420] sm:$0xff]
    %v4590 = vld [vmem:[#allocation2 + $0x428] sm:$0xff]
    %v4591 = vld [vmem:[#allocation2 + $0x430] sm:$0xff]
    %v4592 = vld [vmem:[#allocation2 + $0x438] sm:$0xff]
    %v4593 = vld [vmem:[#allocation2 + $0x440] sm:$0xff]
    %v4594 = vld [vmem:[#allocation2 + $0x448] sm:$0xff]
    %v4595 = vld [vmem:[#allocation2 + $0x450] sm:$0xff]
    %v4596 = vld [vmem:[#allocation2 + $0x458] sm:$0xff]
    %v4597 = vld [vmem:[#allocation2 + $0x460] sm:$0xff]
    %v4598 = vld [vmem:[#allocation2 + $0x468] sm:$0xff]
    %v4599 = vld [vmem:[#allocation2 + $0x470] sm:$0xff]
    %v4600 = vld [vmem:[#allocation2 + $0x478] sm:$0xff]
    %v4601 = vld [vmem:[#allocation2 + $0x480] sm:$0xff]
    %v4602 = vld [vmem:[#allocation2 + $0x488] sm:$0xff]
    %v4603 = vld [vmem:[#allocation2 + $0x490] sm:$0xff]
    %v4604 = vld [vmem:[#allocation2 + $0x498] sm:$0xff]
    %v4605 = vld [vmem:[#allocation2 + $0x4a0] sm:$0xff]
    %v4606 = vld [vmem:[#allocation2 + $0x4a8] sm:$0xff]
    %v4607 = vld [vmem:[#allocation2 + $0x4b0] sm:$0xff]
    %v4608 = vld [vmem:[#allocation2 + $0x4b8] sm:$0xff]
    %v4609 = vld [vmem:[#allocation2 + $0x4c0] sm:$0xff]
    %v4610 = vld [vmem:[#allocation2 + $0x4c8] sm:$0xff]
    %v4611 = vld [vmem:[#allocation2 + $0x4d0] sm:$0xff]
    %v4612 = vld [vmem:[#allocation2 + $0x4d8] sm:$0xff]
    %v4613 = vld [vmem:[#allocation2 + $0x4e0] sm:$0xff]
    %v4614 = vld [vmem:[#allocation2 + $0x4e8] sm:$0xff]
    %v4615 = vld [vmem:[#allocation2 + $0x4f0] sm:$0xff]
    %v4616 = vld [vmem:[#allocation2 + $0x4f8] sm:$0xff]
    %v4617 = vld [vmem:[#allocation2 + $0x500] sm:$0xff]
    %v4618 = vld [vmem:[#allocation2 + $0x508] sm:$0xff]
    %v4619 = vld [vmem:[#allocation2 + $0x510] sm:$0xff]
    %v4620 = vld [vmem:[#allocation2 + $0x518] sm:$0xff]
    %v4621 = vld [vmem:[#allocation2 + $0x520] sm:$0xff]
    %v4622 = vld [vmem:[#allocation2 + $0x528] sm:$0xff]
    %v4623 = vld [vmem:[#allocation2 + $0x530] sm:$0xff]
    %v4624 = vld [vmem:[#allocation2 + $0x538] sm:$0xff]
    %v4625 = vld [vmem:[#allocation2 + $0x540] sm:$0xff]
    %v4626 = vld [vmem:[#allocation2 + $0x548] sm:$0xff]
    %v4627 = vld [vmem:[#allocation2 + $0x550] sm:$0xff]
    %v4628 = vld [vmem:[#allocation2 + $0x558] sm:$0xff]
    %v4629 = vld [vmem:[#allocation2 + $0x560] sm:$0xff]
    %v4630 = vld [vmem:[#allocation2 + $0x568] sm:$0xff]
    %v4631 = vld [vmem:[#allocation2 + $0x570] sm:$0xff]
    %v4632 = vld [vmem:[#allocation2 + $0x578] sm:$0xff]
    %v4633 = vld [vmem:[#allocation2 + $0x580] sm:$0xff]
    %v4634 = vld [vmem:[#allocation2 + $0x588] sm:$0xff]
    %v4635 = vld [vmem:[#allocation2 + $0x590] sm:$0xff]
    %v4636 = vld [vmem:[#allocation2 + $0x598] sm:$0xff]
    %v4637 = vld [vmem:[#allocation2 + $0x5a0] sm:$0xff]
    %v4638 = vld [vmem:[#allocation2 + $0x5a8] sm:$0xff]
    %v4639 = vld [vmem:[#allocation2 + $0x5b0] sm:$0xff]
    %v4640 = vld [vmem:[#allocation2 + $0x5b8] sm:$0xff]
    %v4641 = vld [vmem:[#allocation2 + $0x5c0] sm:$0xff]
    %v4642 = vld [vmem:[#allocation2 + $0x5c8] sm:$0xff]
    %v4643 = vld [vmem:[#allocation2 + $0x5d0] sm:$0xff]
    %v4644 = vld [vmem:[#allocation2 + $0x5d8] sm:$0xff]
    %v4645 = vld [vmem:[#allocation2 + $0x5e0] sm:$0xff]
    %v4646 = vld [vmem:[#allocation2 + $0x5e8] sm:$0xff]
    %v4647 = vld [vmem:[#allocation2 + $0x5f0] sm:$0xff]
    %v4648 = vld [vmem:[#allocation2 + $0x5f8] sm:$0xff]
    %v4649 = vld [vmem:[#allocation2 + $0x600] sm:$0xff]
    %v4650 = vld [vmem:[#allocation2 + $0x608] sm:$0xff]
    %v4651 = vld [vmem:[#allocation2 + $0x610] sm:$0xff]
    %v4652 = vld [vmem:[#allocation2 + $0x618] sm:$0xff]
    %v4653 = vld [vmem:[#allocation2 + $0x620] sm:$0xff]
    %v4654 = vld [vmem:[#allocation2 + $0x628] sm:$0xff]
    %v4655 = vld [vmem:[#allocation2 + $0x630] sm:$0xff]
    %v4656 = vld [vmem:[#allocation2 + $0x638] sm:$0xff]
    %v4657 = vld [vmem:[#allocation2 + $0x640] sm:$0xff]
    %v4658 = vld [vmem:[#allocation2 + $0x648] sm:$0xff]
    %v4659 = vld [vmem:[#allocation2 + $0x650] sm:$0xff]
    %v4660 = vld [vmem:[#allocation2 + $0x658] sm:$0xff]
    %v4661 = vld [vmem:[#allocation2 + $0x660] sm:$0xff]
    %v4662 = vld [vmem:[#allocation2 + $0x668] sm:$0xff]
    %v4663 = vld [vmem:[#allocation2 + $0x670] sm:$0xff]
    %v4664 = vld [vmem:[#allocation2 + $0x678] sm:$0xff]
    %v4665 = vld [vmem:[#allocation2 + $0x680] sm:$0xff]
    %v4666 = vld [vmem:[#allocation2 + $0x688] sm:$0xff]
    %v4667 = vld [vmem:[#allocation2 + $0x690] sm:$0xff]
    %v4668 = vld [vmem:[#allocation2 + $0x698] sm:$0xff]
    %v4669 = vld [vmem:[#allocation2 + $0x6a0] sm:$0xff]
    %v4670 = vld [vmem:[#allocation2 + $0x6a8] sm:$0xff]
    %v4671 = vld [vmem:[#allocation2 + $0x6b0] sm:$0xff]
    %v4672 = vld [vmem:[#allocation2 + $0x6b8] sm:$0xff]
    %v4673 = vld [vmem:[#allocation2 + $0x6c0] sm:$0xff]
    %v4674 = vld [vmem:[#allocation2 + $0x6c8] sm:$0xff]
    %v4675 = vld [vmem:[#allocation2 + $0x6d0] sm:$0xff]
    %v4676 = vld [vmem:[#allocation2 + $0x6d8] sm:$0xff]
    %v4677 = vld [vmem:[#allocation2 + $0x6e0] sm:$0xff]
    %v4678 = vld [vmem:[#allocation2 + $0x6e8] sm:$0xff]
    %v4679 = vld [vmem:[#allocation2 + $0x6f0] sm:$0xff]
    %v4680 = vld [vmem:[#allocation2 + $0x6f8] sm:$0xff]
    %v4681 = vld [vmem:[#allocation2 + $0x700] sm:$0xff]
    %v4682 = vld [vmem:[#allocation2 + $0x708] sm:$0xff]
    %v4683 = vld [vmem:[#allocation2 + $0x710] sm:$0xff]
    %v4684 = vld [vmem:[#allocation2 + $0x718] sm:$0xff]
    %v4685 = vld [vmem:[#allocation2 + $0x720] sm:$0xff]
    %v4686 = vld [vmem:[#allocation2 + $0x728] sm:$0xff]
    %v4687 = vld [vmem:[#allocation2 + $0x730] sm:$0xff]
    %v4688 = vld [vmem:[#allocation2 + $0x738] sm:$0xff]
    %v4689 = vld [vmem:[#allocation2 + $0x740] sm:$0xff]
    %v4690 = vld [vmem:[#allocation2 + $0x748] sm:$0xff]
    %v4691 = vld [vmem:[#allocation2 + $0x750] sm:$0xff]
    %v4692 = vld [vmem:[#allocation2 + $0x758] sm:$0xff]
    %v4693 = vld [vmem:[#allocation2 + $0x760] sm:$0xff]
    %v4694 = vld [vmem:[#allocation2 + $0x768] sm:$0xff]
    %v4695 = vld [vmem:[#allocation2 + $0x770] sm:$0xff]
    %v4696 = vld [vmem:[#allocation2 + $0x778] sm:$0xff]
    %v4697 = vld [vmem:[#allocation2 + $0x780] sm:$0xff]
    %v4698 = vld [vmem:[#allocation2 + $0x788] sm:$0xff]
    %v4699 = vld [vmem:[#allocation2 + $0x790] sm:$0xff]
    %v4700 = vld [vmem:[#allocation2 + $0x798] sm:$0xff]
    %v4701 = vld [vmem:[#allocation2 + $0x7a0] sm:$0xff]
    %v4702 = vld [vmem:[#allocation2 + $0x7a8] sm:$0xff]
    %v4703 = vld [vmem:[#allocation2 + $0x7b0] sm:$0xff]
    %v4704 = vld [vmem:[#allocation2 + $0x7b8] sm:$0xff]
    %v4705 = vld [vmem:[#allocation2 + $0x7c0] sm:$0xff]
    %v4706 = vld [vmem:[#allocation2 + $0x7c8] sm:$0xff]
    %v4707 = vld [vmem:[#allocation2 + $0x7d0] sm:$0xff]
    %v4708 = vld [vmem:[#allocation2 + $0x7d8] sm:$0xff]
    %v4709 = vld [vmem:[#allocation2 + $0x7e0] sm:$0xff]
    %v4710 = vld [vmem:[#allocation2 + $0x7e8] sm:$0xff]
    %v4711 = vld [vmem:[#allocation2 + $0x7f0] sm:$0xff]
    %v4712 = vld [vmem:[#allocation2 + $0x7f8] sm:$0xff]
    %v4713 = vld [vmem:[#allocation2 + $0x800] sm:$0xff]
    %v4714 = vld [vmem:[#allocation2 + $0x808] sm:$0xff]
    %v4715 = vld [vmem:[#allocation2 + $0x810] sm:$0xff]
    %v4716 = vld [vmem:[#allocation2 + $0x818] sm:$0xff]
    %v4717 = vld [vmem:[#allocation2 + $0x820] sm:$0xff]
    %v4718 = vld [vmem:[#allocation2 + $0x828] sm:$0xff]
    %v4719 = vld [vmem:[#allocation2 + $0x830] sm:$0xff]
    %v4720 = vld [vmem:[#allocation2 + $0x838] sm:$0xff]
    %v4721 = vld [vmem:[#allocation2 + $0x840] sm:$0xff]
    %v4722 = vld [vmem:[#allocation2 + $0x848] sm:$0xff]
    %v4723 = vld [vmem:[#allocation2 + $0x850] sm:$0xff]
    %v4724 = vld [vmem:[#allocation2 + $0x858] sm:$0xff]
    %v4725 = vld [vmem:[#allocation2 + $0x860] sm:$0xff]
    %v4726 = vld [vmem:[#allocation2 + $0x868] sm:$0xff]
    %v4727 = vld [vmem:[#allocation2 + $0x870] sm:$0xff]
    %v4728 = vld [vmem:[#allocation2 + $0x878] sm:$0xff]
    %v4729 = vld [vmem:[#allocation2 + $0x880] sm:$0xff]
    %v4730 = vld [vmem:[#allocation2 + $0x888] sm:$0xff]
    %v4731 = vld [vmem:[#allocation2 + $0x890] sm:$0xff]
    %v4732 = vld [vmem:[#allocation2 + $0x898] sm:$0xff]
    %v4733 = vld [vmem:[#allocation2 + $0x8a0] sm:$0xff]
    %v4734 = vld [vmem:[#allocation2 + $0x8a8] sm:$0xff]
    %v4735 = vld [vmem:[#allocation2 + $0x8b0] sm:$0xff]
    %v4736 = vld [vmem:[#allocation2 + $0x8b8] sm:$0xff]
    %v4737 = vld [vmem:[#allocation2 + $0x8c0] sm:$0xff]
    %v4738 = vld [vmem:[#allocation2 + $0x8c8] sm:$0xff]
    %v4739 = vld [vmem:[#allocation2 + $0x8d0] sm:$0xff]
    %v4740 = vld [vmem:[#allocation2 + $0x8d8] sm:$0xff]
    %v4741 = vld [vmem:[#allocation2 + $0x8e0] sm:$0xff]
    %v4742 = vld [vmem:[#allocation2 + $0x8e8] sm:$0xff]
    %v4743 = vld [vmem:[#allocation2 + $0x8f0] sm:$0xff]
    %v4744 = vld [vmem:[#allocation2 + $0x8f8] sm:$0xff]
    %v4745 = vld [vmem:[#allocation2 + $0x900] sm:$0xff]
    %v4746 = vld [vmem:[#allocation2 + $0x908] sm:$0xff]
    %v4747 = vld [vmem:[#allocation2 + $0x910] sm:$0xff]
    %v4748 = vld [vmem:[#allocation2 + $0x918] sm:$0xff]
    %v4749 = vld [vmem:[#allocation2 + $0x920] sm:$0xff]
    %v4750 = vld [vmem:[#allocation2 + $0x928] sm:$0xff]
    %v4751 = vld [vmem:[#allocation2 + $0x930] sm:$0xff]
    %v4752 = vld [vmem:[#allocation2 + $0x938] sm:$0xff]
    %v4753 = vld [vmem:[#allocation2 + $0x940] sm:$0xff]
    %v4754 = vld [vmem:[#allocation2 + $0x948] sm:$0xff]
    %v4755 = vld [vmem:[#allocation2 + $0x950] sm:$0xff]
    %v4756 = vld [vmem:[#allocation2 + $0x958] sm:$0xff]
    %v4757 = vld [vmem:[#allocation2 + $0x960] sm:$0xff]
    %v4758 = vld [vmem:[#allocation2 + $0x968] sm:$0xff]
    %v4759 = vld [vmem:[#allocation2 + $0x970] sm:$0xff]
    %v4760 = vld [vmem:[#allocation2 + $0x978] sm:$0xff]
    %v4761 = vld [vmem:[#allocation2 + $0x980] sm:$0xff]
    %v4762 = vld [vmem:[#allocation2 + $0x988] sm:$0xff]
    %v4763 = vld [vmem:[#allocation2 + $0x990] sm:$0xff]
    %v4764 = vld [vmem:[#allocation2 + $0x998] sm:$0xff]
    %v4765 = vld [vmem:[#allocation2 + $0x9a0] sm:$0xff]
    %v4766 = vld [vmem:[#allocation2 + $0x9a8] sm:$0xff]
    %v4767 = vld [vmem:[#allocation2 + $0x9b0] sm:$0xff]
    %v4768 = vld [vmem:[#allocation2 + $0x9b8] sm:$0xff]
    %v4769 = vld [vmem:[#allocation2 + $0x9c0] sm:$0xff]
    %v4770 = vld [vmem:[#allocation2 + $0x9c8] sm:$0xff]
    %v4771 = vld [vmem:[#allocation2 + $0x9d0] sm:$0xff]
    %v4772 = vld [vmem:[#allocation2 + $0x9d8] sm:$0xff]
    %v4773 = vld [vmem:[#allocation2 + $0x9e0] sm:$0xff]
    %v4774 = vld [vmem:[#allocation2 + $0x9e8] sm:$0xff]
    %v4775 = vld [vmem:[#allocation2 + $0x9f0] sm:$0xff]
    %v4776 = vld [vmem:[#allocation2 + $0x9f8] sm:$0xff]
    %v4777 = vld [vmem:[#allocation2 + $0xa00] sm:$0xff]
    %v4778 = vld [vmem:[#allocation2 + $0xa08] sm:$0xff]
    %v4779 = vld [vmem:[#allocation2 + $0xa10] sm:$0xff]
    %v4780 = vld [vmem:[#allocation2 + $0xa18] sm:$0xff]
    %v4781 = vld [vmem:[#allocation2 + $0xa20] sm:$0xff]
    %v4782 = vld [vmem:[#allocation2 + $0xa28] sm:$0xff]
    %v4783 = vld [vmem:[#allocation2 + $0xa30] sm:$0xff]
    %v4784 = vld [vmem:[#allocation2 + $0xa38] sm:$0xff]
    %v4785 = vld [vmem:[#allocation2 + $0xa40] sm:$0xff]
    %v4786 = vld [vmem:[#allocation2 + $0xa48] sm:$0xff]
    %v4787 = vld [vmem:[#allocation2 + $0xa50] sm:$0xff]
    %v4788 = vld [vmem:[#allocation2 + $0xa58] sm:$0xff]
    %v4789 = vld [vmem:[#allocation2 + $0xa60] sm:$0xff]
    %v4790 = vld [vmem:[#allocation2 + $0xa68] sm:$0xff]
    %v4791 = vld [vmem:[#allocation2 + $0xa70] sm:$0xff]
    %v4792 = vld [vmem:[#allocation2 + $0xa78] sm:$0xff]
    %v4793 = vld [vmem:[#allocation2 + $0xa80] sm:$0xff]
    %v4794 = vld [vmem:[#allocation2 + $0xa88] sm:$0xff]
    %v4795 = vld [vmem:[#allocation2 + $0xa90] sm:$0xff]
    %v4796 = vld [vmem:[#allocation2 + $0xa98] sm:$0xff]
    %v4797 = vld [vmem:[#allocation2 + $0xaa0] sm:$0xff]
    %v4798 = vld [vmem:[#allocation2 + $0xaa8] sm:$0xff]
    %v4799 = vld [vmem:[#allocation2 + $0xab0] sm:$0xff]
    %v4800 = vld [vmem:[#allocation2 + $0xab8] sm:$0xff]
    %v4801 = vld [vmem:[#allocation2 + $0xac0] sm:$0xff]
    %v4802 = vld [vmem:[#allocation2 + $0xac8] sm:$0xff]
    %v4803 = vld [vmem:[#allocation2 + $0xad0] sm:$0xff]
    %v4804 = vld [vmem:[#allocation2 + $0xad8] sm:$0xff]
    %v4805 = vld [vmem:[#allocation2 + $0xae0] sm:$0xff]
    %v4806 = vld [vmem:[#allocation2 + $0xae8] sm:$0xff]
    %v4807 = vld [vmem:[#allocation2 + $0xaf0] sm:$0xff]
    %v4808 = vld [vmem:[#allocation2 + $0xaf8] sm:$0xff]
    %v4809 = vld [vmem:[#allocation2 + $0xb00] sm:$0xff]
    %v4810 = vld [vmem:[#allocation2 + $0xb08] sm:$0xff]
    %v4811 = vld [vmem:[#allocation2 + $0xb10] sm:$0xff]
    %v4812 = vld [vmem:[#allocation2 + $0xb18] sm:$0xff]
    %v4813 = vld [vmem:[#allocation2 + $0xb20] sm:$0xff]
    %v4814 = vld [vmem:[#allocation2 + $0xb28] sm:$0xff]
    %v4815 = vld [vmem:[#allocation2 + $0xb30] sm:$0xff]
    %v4816 = vld [vmem:[#allocation2 + $0xb38] sm:$0xff]
    %v4817 = vld [vmem:[#allocation2 + $0xb40] sm:$0xff]
    %v4818 = vld [vmem:[#allocation2 + $0xb48] sm:$0xff]
    %v4819 = vld [vmem:[#allocation2 + $0xb50] sm:$0xff]
    %v4820 = vld [vmem:[#allocation2 + $0xb58] sm:$0xff]
    %v4821 = vld [vmem:[#allocation2 + $0xb60] sm:$0xff]
    %v4822 = vld [vmem:[#allocation2 + $0xb68] sm:$0xff]
    %v4823 = vld [vmem:[#allocation2 + $0xb70] sm:$0xff]
    %v4824 = vld [vmem:[#allocation2 + $0xb78] sm:$0xff]
    %v4825 = vld [vmem:[#allocation2 + $0xb80] sm:$0xff]
    %v4826 = vld [vmem:[#allocation2 + $0xb88] sm:$0xff]
    %v4827 = vld [vmem:[#allocation2 + $0xb90] sm:$0xff]
    %v4828 = vld [vmem:[#allocation2 + $0xb98] sm:$0xff]
    %v4829 = vld [vmem:[#allocation2 + $0xba0] sm:$0xff]
    %v4830 = vld [vmem:[#allocation2 + $0xba8] sm:$0xff]
    %v4831 = vld [vmem:[#allocation2 + $0xbb0] sm:$0xff]
    %v4832 = vld [vmem:[#allocation2 + $0xbb8] sm:$0xff]
    %v4833 = vld [vmem:[#allocation2 + $0xbc0] sm:$0xff]
    %v4834 = vld [vmem:[#allocation2 + $0xbc8] sm:$0xff]
    %v4835 = vld [vmem:[#allocation2 + $0xbd0] sm:$0xff]
    %v4836 = vld [vmem:[#allocation2 + $0xbd8] sm:$0xff]
    %v4837 = vld [vmem:[#allocation2 + $0xbe0] sm:$0xff]
    %v4838 = vld [vmem:[#allocation2 + $0xbe8] sm:$0xff]
    %v4839 = vld [vmem:[#allocation2 + $0xbf0] sm:$0xff]
    %v4840 = vld [vmem:[#allocation2 + $0xbf8] sm:$0xff]
    %v4841 = vld [vmem:[#allocation2 + $0xc00] sm:$0xff]
    %v4842 = vld [vmem:[#allocation2 + $0xc08] sm:$0xff]
    %v4843 = vld [vmem:[#allocation2 + $0xc10] sm:$0xff]
    %v4844 = vld [vmem:[#allocation2 + $0xc18] sm:$0xff]
    %v4845 = vld [vmem:[#allocation2 + $0xc20] sm:$0xff]
    %v4846 = vld [vmem:[#allocation2 + $0xc28] sm:$0xff]
    %v4847 = vld [vmem:[#allocation2 + $0xc30] sm:$0xff]
    %v4848 = vld [vmem:[#allocation2 + $0xc38] sm:$0xff]
    %v4849 = vld [vmem:[#allocation2 + $0xc40] sm:$0xff]
    %v4850 = vld [vmem:[#allocation2 + $0xc48] sm:$0xff]
    %v4851 = vld [vmem:[#allocation2 + $0xc50] sm:$0xff]
    %v4852 = vld [vmem:[#allocation2 + $0xc58] sm:$0xff]
    %v4853 = vld [vmem:[#allocation2 + $0xc60] sm:$0xff]
    %v4854 = vld [vmem:[#allocation2 + $0xc68] sm:$0xff]
    %v4855 = vld [vmem:[#allocation2 + $0xc70] sm:$0xff]
    %v4856 = vld [vmem:[#allocation2 + $0xc78] sm:$0xff]
    %v4857 = vld [vmem:[#allocation2 + $0xc80] sm:$0xff]
    %v4858 = vld [vmem:[#allocation2 + $0xc88] sm:$0xff]
    %v4859 = vld [vmem:[#allocation2 + $0xc90] sm:$0xff]
    %v4860 = vld [vmem:[#allocation2 + $0xc98] sm:$0xff]
    %v4861 = vld [vmem:[#allocation2 + $0xca0] sm:$0xff]
    %v4862 = vld [vmem:[#allocation2 + $0xca8] sm:$0xff]
    %v4863 = vld [vmem:[#allocation2 + $0xcb0] sm:$0xff]
    %v4864 = vld [vmem:[#allocation2 + $0xcb8] sm:$0xff]
    %v4865 = vld [vmem:[#allocation2 + $0xcc0] sm:$0xff]
    %v4866 = vld [vmem:[#allocation2 + $0xcc8] sm:$0xff]
    %v4867 = vld [vmem:[#allocation2 + $0xcd0] sm:$0xff]
    %v4868 = vld [vmem:[#allocation2 + $0xcd8] sm:$0xff]
    %v4869 = vld [vmem:[#allocation2 + $0xce0] sm:$0xff]
    %v4870 = vld [vmem:[#allocation2 + $0xce8] sm:$0xff]
    %v4871 = vld [vmem:[#allocation2 + $0xcf0] sm:$0xff]
    %v4872 = vld [vmem:[#allocation2 + $0xcf8] sm:$0xff]
    %v4873 = vld [vmem:[#allocation2 + $0xd00] sm:$0xff]
    %v4874 = vld [vmem:[#allocation2 + $0xd08] sm:$0xff]
    %v4875 = vld [vmem:[#allocation2 + $0xd10] sm:$0xff]
    %v4876 = vld [vmem:[#allocation2 + $0xd18] sm:$0xff]
    %v4877 = vld [vmem:[#allocation2 + $0xd20] sm:$0xff]
    %v4878 = vld [vmem:[#allocation2 + $0xd28] sm:$0xff]
    %v4879 = vld [vmem:[#allocation2 + $0xd30] sm:$0xff]
    %v4880 = vld [vmem:[#allocation2 + $0xd38] sm:$0xff]
    %v4881 = vld [vmem:[#allocation2 + $0xd40] sm:$0xff]
    %v4882 = vld [vmem:[#allocation2 + $0xd48] sm:$0xff]
    %v4883 = vld [vmem:[#allocation2 + $0xd50] sm:$0xff]
    %v4884 = vld [vmem:[#allocation2 + $0xd58] sm:$0xff]
    %v4885 = vld [vmem:[#allocation2 + $0xd60] sm:$0xff]
    %v4886 = vld [vmem:[#allocation2 + $0xd68] sm:$0xff]
    %v4887 = vld [vmem:[#allocation2 + $0xd70] sm:$0xff]
    %v4888 = vld [vmem:[#allocation2 + $0xd78] sm:$0xff]
    %v4889 = vld [vmem:[#allocation2 + $0xd80] sm:$0xff]
    %v4890 = vld [vmem:[#allocation2 + $0xd88] sm:$0xff]
    %v4891 = vld [vmem:[#allocation2 + $0xd90] sm:$0xff]
    %v4892 = vld [vmem:[#allocation2 + $0xd98] sm:$0xff]
    %v4893 = vld [vmem:[#allocation2 + $0xda0] sm:$0xff]
    %v4894 = vld [vmem:[#allocation2 + $0xda8] sm:$0xff]
    %v4895 = vld [vmem:[#allocation2 + $0xdb0] sm:$0xff]
    %v4896 = vld [vmem:[#allocation2 + $0xdb8] sm:$0xff]
    %v4897 = vld [vmem:[#allocation2 + $0xdc0] sm:$0xff]
    %v4898 = vld [vmem:[#allocation2 + $0xdc8] sm:$0xff]
    %v4899 = vld [vmem:[#allocation2 + $0xdd0] sm:$0xff]
    %v4900 = vld [vmem:[#allocation2 + $0xdd8] sm:$0xff]
    %v4901 = vld [vmem:[#allocation2 + $0xde0] sm:$0xff]
    %v4902 = vld [vmem:[#allocation2 + $0xde8] sm:$0xff]
    %v4903 = vld [vmem:[#allocation2 + $0xdf0] sm:$0xff]
    %v4904 = vld [vmem:[#allocation2 + $0xdf8] sm:$0xff]
    %v4905 = vld [vmem:[#allocation2 + $0xe00] sm:$0xff]
    %v4906 = vld [vmem:[#allocation2 + $0xe08] sm:$0xff]
    %v4907 = vld [vmem:[#allocation2 + $0xe10] sm:$0xff]
    %v4908 = vld [vmem:[#allocation2 + $0xe18] sm:$0xff]
    %v4909 = vld [vmem:[#allocation2 + $0xe20] sm:$0xff]
    %v4910 = vld [vmem:[#allocation2 + $0xe28] sm:$0xff]
    %v4911 = vld [vmem:[#allocation2 + $0xe30] sm:$0xff]
    %v4912 = vld [vmem:[#allocation2 + $0xe38] sm:$0xff]
    %v4913 = vld [vmem:[#allocation2 + $0xe40] sm:$0xff]
    %v4914 = vld [vmem:[#allocation2 + $0xe48] sm:$0xff]
    %v4915 = vld [vmem:[#allocation2 + $0xe50] sm:$0xff]
    %v4916 = vld [vmem:[#allocation2 + $0xe58] sm:$0xff]
    %v4917 = vld [vmem:[#allocation2 + $0xe60] sm:$0xff]
    %v4918 = vld [vmem:[#allocation2 + $0xe68] sm:$0xff]
    %v4919 = vld [vmem:[#allocation2 + $0xe70] sm:$0xff]
    %v4920 = vld [vmem:[#allocation2 + $0xe78] sm:$0xff]
    %v4921 = vld [vmem:[#allocation2 + $0xe80] sm:$0xff]
    %v4922 = vld [vmem:[#allocation2 + $0xe88] sm:$0xff]
    %v4923 = vld [vmem:[#allocation2 + $0xe90] sm:$0xff]
    %v4924 = vld [vmem:[#allocation2 + $0xe98] sm:$0xff]
    %v4925 = vld [vmem:[#allocation2 + $0xea0] sm:$0xff]
    %v4926 = vld [vmem:[#allocation2 + $0xea8] sm:$0xff]
    %v4927 = vld [vmem:[#allocation2 + $0xeb0] sm:$0xff]
    %v4928 = vld [vmem:[#allocation2 + $0xeb8] sm:$0xff]
    %v4929 = vld [vmem:[#allocation2 + $0xec0] sm:$0xff]
    %v4930 = vld [vmem:[#allocation2 + $0xec8] sm:$0xff]
    %v4931 = vld [vmem:[#allocation2 + $0xed0] sm:$0xff]
    %v4932 = vld [vmem:[#allocation2 + $0xed8] sm:$0xff]
    %v4933 = vld [vmem:[#allocation2 + $0xee0] sm:$0xff]
    %v4934 = vld [vmem:[#allocation2 + $0xee8] sm:$0xff]
    %v4935 = vld [vmem:[#allocation2 + $0xef0] sm:$0xff]
    %v4936 = vld [vmem:[#allocation2 + $0xef8] sm:$0xff]
    %v4937 = vld [vmem:[#allocation2 + $0xf00] sm:$0xff]
    %v4938 = vld [vmem:[#allocation2 + $0xf08] sm:$0xff]
    %v4939 = vld [vmem:[#allocation2 + $0xf10] sm:$0xff]
    %v4940 = vld [vmem:[#allocation2 + $0xf18] sm:$0xff]
    %v4941 = vld [vmem:[#allocation2 + $0xf20] sm:$0xff]
    %v4942 = vld [vmem:[#allocation2 + $0xf28] sm:$0xff]
    %v4943 = vld [vmem:[#allocation2 + $0xf30] sm:$0xff]
    %v4944 = vld [vmem:[#allocation2 + $0xf38] sm:$0xff]
    %v4945 = vld [vmem:[#allocation2 + $0xf40] sm:$0xff]
    %v4946 = vld [vmem:[#allocation2 + $0xf48] sm:$0xff]
    %v4947 = vld [vmem:[#allocation2 + $0xf50] sm:$0xff]
    %v4948 = vld [vmem:[#allocation2 + $0xf58] sm:$0xff]
    %v4949 = vld [vmem:[#allocation2 + $0xf60] sm:$0xff]
    %v4950 = vld [vmem:[#allocation2 + $0xf68] sm:$0xff]
    %v4951 = vld [vmem:[#allocation2 + $0xf70] sm:$0xff]
    %v4952 = vld [vmem:[#allocation2 + $0xf78] sm:$0xff]
    %v4953 = vld [vmem:[#allocation2 + $0xf80] sm:$0xff]
    %v4954 = vld [vmem:[#allocation2 + $0xf88] sm:$0xff]
    %v4955 = vld [vmem:[#allocation2 + $0xf90] sm:$0xff]
    %v4956 = vld [vmem:[#allocation2 + $0xf98] sm:$0xff]
    %v4957 = vld [vmem:[#allocation2 + $0xfa0] sm:$0xff]
    %v4958 = vld [vmem:[#allocation2 + $0xfa8] sm:$0xff]
    %v4959 = vld [vmem:[#allocation2 + $0xfb0] sm:$0xff]
    %v4960 = vld [vmem:[#allocation2 + $0xfb8] sm:$0xff]
    %v4961 = vld [vmem:[#allocation2 + $0xfc0] sm:$0xff]
    %v4962 = vld [vmem:[#allocation2 + $0xfc8] sm:$0xff]
    %v4963 = vld [vmem:[#allocation2 + $0xfd0] sm:$0xff]
    %v4964 = vld [vmem:[#allocation2 + $0xfd8] sm:$0xff]
    %v4965 = vld [vmem:[#allocation2 + $0xfe0] sm:$0xff]
    %v4966 = vld [vmem:[#allocation2 + $0xfe8] sm:$0xff]
    %v4967 = vld [vmem:[#allocation2 + $0xff0] sm:$0xff]
    %v4968 = vld [vmem:[#allocation2 + $0xff8] sm:$0xff]
    %v4969 = vpack.c.bf16 %v4447, %v4447
    %v4970 = vpack.c.bf16 %v4448, %v4448
    %v4971 = vpack.c.bf16 %v4449, %v4449
    %v4972 = vpack.c.bf16 %v4450, %v4450
    %v4973 = vpack.c.bf16 %v4451, %v4451
    %v4974 = vpack.c.bf16 %v4452, %v4452
    %v4975 = vpack.c.bf16 %v4453, %v4453
    %v4976 = vpack.c.bf16 %v4454, %v4454
    %v4977 = vld [vmem:[#allocation15] sm:$0xff]
    %v4979 = vlaneseq
    %v4980 = vshrl.u32 %v4979, 7
    %v4981 = vsub.s32 0, %v4980
    %v4982 = vrot.slane %v4977, %v4981
    %v4983 = vlaneseq
    %v4984 = vshrl.u32 %v4983, 7
    %v4985 = vsub.s32 1, %v4984
    %v4986 = vrot.slane %v4977, %v4985
    %v4987 = vlaneseq
    %v4988 = vshrl.u32 %v4987, 7
    %v4989 = vsub.s32 2, %v4988
    %v4990 = vrot.slane %v4977, %v4989
    %v4991 = vlaneseq
    %v4992 = vshrl.u32 %v4991, 7
    %v4993 = vsub.s32 3, %v4992
    %v4994 = vrot.slane %v4977, %v4993
    %v4995 = vlaneseq
    %v4996 = vshrl.u32 %v4995, 7
    %v4997 = vsub.s32 4, %v4996
    %v4998 = vrot.slane %v4977, %v4997
    %v4999 = vlaneseq
    %v5000 = vshrl.u32 %v4999, 7
    %v5001 = vsub.s32 5, %v5000
    %v5002 = vrot.slane %v4977, %v5001
    %v5003 = vlaneseq
    %v5004 = vshrl.u32 %v5003, 7
    %v5005 = vsub.s32 6, %v5004
    %v5006 = vrot.slane %v4977, %v5005
    %v5007 = vlaneseq
    %v5008 = vshrl.u32 %v5007, 7
    %v5009 = vsub.s32 7, %v5008
    %v5010 = vrot.slane %v4977, %v5009
    %5019 = vmatprep.subr.bf16.mxu0 %v4458
    %5020 = vmatpush1.bf16.msra.mxu0 %v4457
    %5021 = vmatprep.subr.bf16.mxu0 %v4466
    %5022 = vmatpush1.bf16.msra.mxu0 %v4465
    %5023 = vmatprep.subr.bf16.mxu0 %v4474
    %5024 = vmatpush1.bf16.msra.mxu0 %v4473
    %5025 = vmatprep.subr.bf16.mxu0 %v4482
    %5026 = vmatpush1.bf16.msra.mxu0 %v4481
    %5027 = vmatprep.subr.bf16.mxu0 %v4490
    %5028 = vmatpush1.bf16.msra.mxu0 %v4489
    %5029 = vmatprep.subr.bf16.mxu0 %v4498
    %5030 = vmatpush1.bf16.msra.mxu0 %v4497
    %5031 = vmatprep.subr.bf16.mxu0 %v4506
    %5032 = vmatpush1.bf16.msra.mxu0 %v4505
    %5033 = vmatprep.subr.bf16.mxu0 %v4514
    %5034 = vmatpush1.bf16.msra.mxu0 %v4513
    %5035 = vmatprep.subr.bf16.mxu0 %v4522
    %5036 = vmatpush1.bf16.msra.mxu0 %v4521
    %5037 = vmatprep.subr.bf16.mxu0 %v4530
    %5038 = vmatpush1.bf16.msra.mxu0 %v4529
    %5039 = vmatprep.subr.bf16.mxu0 %v4538
    %5040 = vmatpush1.bf16.msra.mxu0 %v4537
    %5041 = vmatprep.subr.bf16.mxu0 %v4546
    %5042 = vmatpush1.bf16.msra.mxu0 %v4545
    %5043 = vmatprep.subr.bf16.mxu0 %v4554
    %5044 = vmatpush1.bf16.msra.mxu0 %v4553
    %5045 = vmatprep.subr.bf16.mxu0 %v4562
    %5046 = vmatpush1.bf16.msra.mxu0 %v4561
    %5047 = vmatprep.subr.bf16.mxu0 %v4570
    %5048 = vmatpush1.bf16.msra.mxu0 %v4569
    %5049 = vmatprep.subr.bf16.mxu0 %v4578
    %5050 = vmatpush1.bf16.msra.mxu0 %v4577
    %5051 = vmatprep.mubr.bf16.mxu0 %v4970
    %5052 = vmatmul.mubr.bf16.gmra.mrb[0].mxu0 %v4969
    %v5053 = vpop.f32.mrb[0].mxu0
    %v5054 = vadd.f32 %v4982, %v5053
    %v5055 = vpop.f32.mrb[0].mxu0
    %v5056 = vadd.f32 %v4986, %v5055
    %v5057 = vpop.f32.mrb[0].mxu0
    %v5058 = vpop.f32.mrb[0].mxu0
    %5059 = vdwg.mxu0
    %5060 = vmatprep.subr.bf16.mxu0 %v4586
    %5061 = vmatpush1.bf16.msra.mxu0 %v4585
    %5062 = vmatprep.subr.bf16.mxu0 %v4594
    %5063 = vmatpush1.bf16.msra.mxu0 %v4593
    %5064 = vmatprep.subr.bf16.mxu0 %v4602
    %5065 = vmatpush1.bf16.msra.mxu0 %v4601
    %5066 = vmatprep.subr.bf16.mxu0 %v4610
    %5067 = vmatpush1.bf16.msra.mxu0 %v4609
    %5068 = vmatprep.subr.bf16.mxu0 %v4618
    %5069 = vmatpush1.bf16.msra.mxu0 %v4617
    %5070 = vmatprep.subr.bf16.mxu0 %v4626
    %5071 = vmatpush1.bf16.msra.mxu0 %v4625
    %5072 = vmatprep.subr.bf16.mxu0 %v4634
    %5073 = vmatpush1.bf16.msra.mxu0 %v4633
    %5074 = vmatprep.subr.bf16.mxu0 %v4642
    %5075 = vmatpush1.bf16.msra.mxu0 %v4641
    %5076 = vmatprep.subr.bf16.mxu0 %v4650
    %5077 = vmatpush1.bf16.msra.mxu0 %v4649
    %5078 = vmatprep.subr.bf16.mxu0 %v4658
    %5079 = vmatpush1.bf16.msra.mxu0 %v4657
    %5080 = vmatprep.subr.bf16.mxu0 %v4666
    %5081 = vmatpush1.bf16.msra.mxu0 %v4665
    %5082 = vmatprep.subr.bf16.mxu0 %v4674
    %5083 = vmatpush1.bf16.msra.mxu0 %v4673
    %5084 = vmatprep.subr.bf16.mxu0 %v4682
    %5085 = vmatpush1.bf16.msra.mxu0 %v4681
    %5086 = vmatprep.subr.bf16.mxu0 %v4690
    %5087 = vmatpush1.bf16.msra.mxu0 %v4689
    %5088 = vmatprep.subr.bf16.mxu0 %v4698
    %5089 = vmatpush1.bf16.msra.mxu0 %v4697
    %5090 = vmatprep.subr.bf16.mxu0 %v4706
    %5091 = vmatpush1.bf16.msra.mxu0 %v4705
    %5092 = vmatprep.mubr.bf16.mxu0 %v4972
    %5093 = vmatmul.mubr.bf16.gmra.mrb[0].mxu0 %v4971
    %v5094 = vpop.f32.mrb[0].mxu0
    %v5095 = vadd.f32 %v5054, %v5094
    %v5096 = vpop.f32.mrb[0].mxu0
    %v5097 = vadd.f32 %v5056, %v5096
    %v5098 = vpop.f32.mrb[0].mxu0
    %v5099 = vpop.f32.mrb[0].mxu0
    %5100 = vdwg.mxu0
    %5101 = vmatprep.subr.bf16.mxu0 %v4714
    %5102 = vmatpush1.bf16.msra.mxu0 %v4713
    %5103 = vmatprep.subr.bf16.mxu0 %v4722
    %5104 = vmatpush1.bf16.msra.mxu0 %v4721
    %5105 = vmatprep.subr.bf16.mxu0 %v4730
    %5106 = vmatpush1.bf16.msra.mxu0 %v4729
    %5107 = vmatprep.subr.bf16.mxu0 %v4738
    %5108 = vmatpush1.bf16.msra.mxu0 %v4737
    %5109 = vmatprep.subr.bf16.mxu0 %v4746
    %5110 = vmatpush1.bf16.msra.mxu0 %v4745
    %5111 = vmatprep.subr.bf16.mxu0 %v4754
    %5112 = vmatpush1.bf16.msra.mxu0 %v4753
    %5113 = vmatprep.subr.bf16.mxu0 %v4762
    %5114 = vmatpush1.bf16.msra.mxu0 %v4761
    %5115 = vmatprep.subr.bf16.mxu0 %v4770
    %5116 = vmatpush1.bf16.msra.mxu0 %v4769
    %5117 = vmatprep.subr.bf16.mxu0 %v4778
    %5118 = vmatpush1.bf16.msra.mxu0 %v4777
    %5119 = vmatprep.subr.bf16.mxu0 %v4786
    %5120 = vmatpush1.bf16.msra.mxu0 %v4785
    %5121 = vmatprep.subr.bf16.mxu0 %v4794
    %5122 = vmatpush1.bf16.msra.mxu0 %v4793
    %5123 = vmatprep.subr.bf16.mxu0 %v4802
    %5124 = vmatpush1.bf16.msra.mxu0 %v4801
    %5125 = vmatprep.subr.bf16.mxu0 %v4810
    %5126 = vmatpush1.bf16.msra.mxu0 %v4809
    %5127 = vmatprep.subr.bf16.mxu0 %v4818
    %5128 = vmatpush1.bf16.msra.mxu0 %v4817
    %5129 = vmatprep.subr.bf16.mxu0 %v4826
    %5130 = vmatpush1.bf16.msra.mxu0 %v4825
    %5131 = vmatprep.subr.bf16.mxu0 %v4834
    %5132 = vmatpush1.bf16.msra.mxu0 %v4833
    %5133 = vmatprep.mubr.bf16.mxu0 %v4974
    %5134 = vmatmul.mubr.bf16.gmra.mrb[0].mxu0 %v4973
    %v5135 = vpop.f32.mrb[0].mxu0
    %v5136 = vadd.f32 %v5095, %v5135
    %v5137 = vpop.f32.mrb[0].mxu0
    %v5138 = vadd.f32 %v5097, %v5137
    %v5139 = vpop.f32.mrb[0].mxu0
    %v5140 = vpop.f32.mrb[0].mxu0
    %5141 = vdwg.mxu0
    %5142 = vmatprep.subr.bf16.mxu0 %v4842
    %5143 = vmatpush1.bf16.msra.mxu0 %v4841
    %5144 = vmatprep.subr.bf16.mxu0 %v4850
    %5145 = vmatpush1.bf16.msra.mxu0 %v4849
    %5146 = vmatprep.subr.bf16.mxu0 %v4858
    %5147 = vmatpush1.bf16.msra.mxu0 %v4857
    %5148 = vmatprep.subr.bf16.mxu0 %v4866
    %5149 = vmatpush1.bf16.msra.mxu0 %v4865
    %5150 = vmatprep.subr.bf16.mxu0 %v4874
    %5151 = vmatpush1.bf16.msra.mxu0 %v4873
    %5152 = vmatprep.subr.bf16.mxu0 %v4882
    %5153 = vmatpush1.bf16.msra.mxu0 %v4881
    %5154 = vmatprep.subr.bf16.mxu0 %v4890
    %5155 = vmatpush1.bf16.msra.mxu0 %v4889
    %5156 = vmatprep.subr.bf16.mxu0 %v4898
    %5157 = vmatpush1.bf16.msra.mxu0 %v4897
    %5158 = vmatprep.subr.bf16.mxu0 %v4906
    %5159 = vmatpush1.bf16.msra.mxu0 %v4905
    %5160 = vmatprep.subr.bf16.mxu0 %v4914
    %5161 = vmatpush1.bf16.msra.mxu0 %v4913
    %5162 = vmatprep.subr.bf16.mxu0 %v4922
    %5163 = vmatpush1.bf16.msra.mxu0 %v4921
    %5164 = vmatprep.subr.bf16.mxu0 %v4930
    %5165 = vmatpush1.bf16.msra.mxu0 %v4929
    %5166 = vmatprep.subr.bf16.mxu0 %v4938
    %5167 = vmatpush1.bf16.msra.mxu0 %v4937
    %5168 = vmatprep.subr.bf16.mxu0 %v4946
    %5169 = vmatpush1.bf16.msra.mxu0 %v4945
    %5170 = vmatprep.subr.bf16.mxu0 %v4954
    %5171 = vmatpush1.bf16.msra.mxu0 %v4953
    %5172 = vmatprep.subr.bf16.mxu0 %v4962
    %5173 = vmatpush1.bf16.msra.mxu0 %v4961
    %5174 = vmatprep.mubr.bf16.mxu0 %v4976
    %5175 = vmatmul.mubr.bf16.gmra.mrb[0].mxu0 %v4975
    %v5176 = vpop.f32.mrb[0].mxu0
    %v5177 = vadd.f32 %v5136, %v5176
    %v5178 = vpop.f32.mrb[0].mxu0
    %v5179 = vadd.f32 %v5138, %v5178
    %v5180 = vpop.f32.mrb[0].mxu0
    %v5181 = vpop.f32.mrb[0].mxu0
    %5182 = vdwg.mxu0
    %5183 = vmatprep.subr.bf16.mxu0 %v4460
    %5184 = vmatpush1.bf16.msra.mxu0 %v4459
    %5185 = vmatprep.subr.bf16.mxu0 %v4468
    %5186 = vmatpush1.bf16.msra.mxu0 %v4467
    %5187 = vmatprep.subr.bf16.mxu0 %v4476
    %5188 = vmatpush1.bf16.msra.mxu0 %v4475
    %5189 = vmatprep.subr.bf16.mxu0 %v4484
    %5190 = vmatpush1.bf16.msra.mxu0 %v4483
    %5191 = vmatprep.subr.bf16.mxu0 %v4492
    %5192 = vmatpush1.bf16.msra.mxu0 %v4491
    %5193 = vmatprep.subr.bf16.mxu0 %v4500
    %5194 = vmatpush1.bf16.msra.mxu0 %v4499
    %5195 = vmatprep.subr.bf16.mxu0 %v4508
    %5196 = vmatpush1.bf16.msra.mxu0 %v4507
    %5197 = vmatprep.subr.bf16.mxu0 %v4516
    %5198 = vmatpush1.bf16.msra.mxu0 %v4515
    %5199 = vmatprep.subr.bf16.mxu0 %v4524
    %5200 = vmatpush1.bf16.msra.mxu0 %v4523
    %5201 = vmatprep.subr.bf16.mxu0 %v4532
    %5202 = vmatpush1.bf16.msra.mxu0 %v4531
    %5203 = vmatprep.subr.bf16.mxu0 %v4540
    %5204 = vmatpush1.bf16.msra.mxu0 %v4539
    %5205 = vmatprep.subr.bf16.mxu0 %v4548
    %5206 = vmatpush1.bf16.msra.mxu0 %v4547
    %5207 = vmatprep.subr.bf16.mxu0 %v4556
    %5208 = vmatpush1.bf16.msra.mxu0 %v4555
    %5209 = vmatprep.subr.bf16.mxu0 %v4564
    %5210 = vmatpush1.bf16.msra.mxu0 %v4563
    %5211 = vmatprep.subr.bf16.mxu0 %v4572
    %5212 = vmatpush1.bf16.msra.mxu0 %v4571
    %5213 = vmatprep.subr.bf16.mxu0 %v4580
    %5214 = vmatpush1.bf16.msra.mxu0 %v4579
    %5215 = vmatprep.mubr.bf16.mxu0 %v4970
    %5216 = vmatmul.mubr.bf16.gmra.mrb[0].mxu0 %v4969
    %v5217 = vpop.f32.mrb[0].mxu0
    %v5218 = vadd.f32 %v4990, %v5217
    %v5219 = vpop.f32.mrb[0].mxu0
    %v5220 = vadd.f32 %v4994, %v5219
    %v5221 = vpop.f32.mrb[0].mxu0
    %v5222 = vpop.f32.mrb[0].mxu0
    %5223 = vdwg.mxu0
    %5224 = vmatprep.subr.bf16.mxu0 %v4588
    %5225 = vmatpush1.bf16.msra.mxu0 %v4587
    %5226 = vmatprep.subr.bf16.mxu0 %v4596
    %5227 = vmatpush1.bf16.msra.mxu0 %v4595
    %5228 = vmatprep.subr.bf16.mxu0 %v4604
    %5229 = vmatpush1.bf16.msra.mxu0 %v4603
    %5230 = vmatprep.subr.bf16.mxu0 %v4612
    %5231 = vmatpush1.bf16.msra.mxu0 %v4611
    %5232 = vmatprep.subr.bf16.mxu0 %v4620
    %5233 = vmatpush1.bf16.msra.mxu0 %v4619
    %5234 = vmatprep.subr.bf16.mxu0 %v4628
    %5235 = vmatpush1.bf16.msra.mxu0 %v4627
    %5236 = vmatprep.subr.bf16.mxu0 %v4636
    %5237 = vmatpush1.bf16.msra.mxu0 %v4635
    %5238 = vmatprep.subr.bf16.mxu0 %v4644
    %5239 = vmatpush1.bf16.msra.mxu0 %v4643
    %5240 = vmatprep.subr.bf16.mxu0 %v4652
    %5241 = vmatpush1.bf16.msra.mxu0 %v4651
    %5242 = vmatprep.subr.bf16.mxu0 %v4660
    %5243 = vmatpush1.bf16.msra.mxu0 %v4659
    %5244 = vmatprep.subr.bf16.mxu0 %v4668
    %5245 = vmatpush1.bf16.msra.mxu0 %v4667
    %5246 = vmatprep.subr.bf16.mxu0 %v4676
    %5247 = vmatpush1.bf16.msra.mxu0 %v4675
    %5248 = vmatprep.subr.bf16.mxu0 %v4684
    %5249 = vmatpush1.bf16.msra.mxu0 %v4683
    %5250 = vmatprep.subr.bf16.mxu0 %v4692
    %5251 = vmatpush1.bf16.msra.mxu0 %v4691
    %5252 = vmatprep.subr.bf16.mxu0 %v4700
    %5253 = vmatpush1.bf16.msra.mxu0 %v4699
    %5254 = vmatprep.subr.bf16.mxu0 %v4708
    %5255 = vmatpush1.bf16.msra.mxu0 %v4707
    %5256 = vmatprep.mubr.bf16.mxu0 %v4972
    %5257 = vmatmul.mubr.bf16.gmra.mrb[0].mxu0 %v4971
    %v5258 = vpop.f32.mrb[0].mxu0
    %v5259 = vadd.f32 %v5218, %v5258
    %v5260 = vpop.f32.mrb[0].mxu0
    %v5261 = vadd.f32 %v5220, %v5260
    %v5262 = vpop.f32.mrb[0].mxu0
    %v5263 = vpop.f32.mrb[0].mxu0
    %5264 = vdwg.mxu0
    %5265 = vmatprep.subr.bf16.mxu0 %v4716
    %5266 = vmatpush1.bf16.msra.mxu0 %v4715
    %5267 = vmatprep.subr.bf16.mxu0 %v4724
    %5268 = vmatpush1.bf16.msra.mxu0 %v4723
    %5269 = vmatprep.subr.bf16.mxu0 %v4732
    %5270 = vmatpush1.bf16.msra.mxu0 %v4731
    %5271 = vmatprep.subr.bf16.mxu0 %v4740
    %5272 = vmatpush1.bf16.msra.mxu0 %v4739
    %5273 = vmatprep.subr.bf16.mxu0 %v4748
    %5274 = vmatpush1.bf16.msra.mxu0 %v4747
    %5275 = vmatprep.subr.bf16.mxu0 %v4756
    %5276 = vmatpush1.bf16.msra.mxu0 %v4755
    %5277 = vmatprep.subr.bf16.mxu0 %v4764
    %5278 = vmatpush1.bf16.msra.mxu0 %v4763
    %5279 = vmatprep.subr.bf16.mxu0 %v4772
    %5280 = vmatpush1.bf16.msra.mxu0 %v4771
    %5281 = vmatprep.subr.bf16.mxu0 %v4780
    %5282 = vmatpush1.bf16.msra.mxu0 %v4779
    %5283 = vmatprep.subr.bf16.mxu0 %v4788
    %5284 = vmatpush1.bf16.msra.mxu0 %v4787
    %5285 = vmatprep.subr.bf16.mxu0 %v4796
    %5286 = vmatpush1.bf16.msra.mxu0 %v4795
    %5287 = vmatprep.subr.bf16.mxu0 %v4804
    %5288 = vmatpush1.bf16.msra.mxu0 %v4803
    %5289 = vmatprep.subr.bf16.mxu0 %v4812
    %5290 = vmatpush1.bf16.msra.mxu0 %v4811
    %5291 = vmatprep.subr.bf16.mxu0 %v4820
    %5292 = vmatpush1.bf16.msra.mxu0 %v4819
    %5293 = vmatprep.subr.bf16.mxu0 %v4828
    %5294 = vmatpush1.bf16.msra.mxu0 %v4827
    %5295 = vmatprep.subr.bf16.mxu0 %v4836
    %5296 = vmatpush1.bf16.msra.mxu0 %v4835
    %5297 = vmatprep.mubr.bf16.mxu0 %v4974
    %5298 = vmatmul.mubr.bf16.gmra.mrb[0].mxu0 %v4973
    %v5299 = vpop.f32.mrb[0].mxu0
    %v5300 = vadd.f32 %v5259, %v5299
    %v5301 = vpop.f32.mrb[0].mxu0
    %v5302 = vadd.f32 %v5261, %v5301
    %v5303 = vpop.f32.mrb[0].mxu0
    %v5304 = vpop.f32.mrb[0].mxu0
    %5305 = vdwg.mxu0
    %5306 = vmatprep.subr.bf16.mxu0 %v4844
    %5307 = vmatpush1.bf16.msra.mxu0 %v4843
    %5308 = vmatprep.subr.bf16.mxu0 %v4852
    %5309 = vmatpush1.bf16.msra.mxu0 %v4851
    %5310 = vmatprep.subr.bf16.mxu0 %v4860
    %5311 = vmatpush1.bf16.msra.mxu0 %v4859
    %5312 = vmatprep.subr.bf16.mxu0 %v4868
    %5313 = vmatpush1.bf16.msra.mxu0 %v4867
    %5314 = vmatprep.subr.bf16.mxu0 %v4876
    %5315 = vmatpush1.bf16.msra.mxu0 %v4875
    %5316 = vmatprep.subr.bf16.mxu0 %v4884
    %5317 = vmatpush1.bf16.msra.mxu0 %v4883
    %5318 = vmatprep.subr.bf16.mxu0 %v4892
    %5319 = vmatpush1.bf16.msra.mxu0 %v4891
    %5320 = vmatprep.subr.bf16.mxu0 %v4900
    %5321 = vmatpush1.bf16.msra.mxu0 %v4899
    %5322 = vmatprep.subr.bf16.mxu0 %v4908
    %5323 = vmatpush1.bf16.msra.mxu0 %v4907
    %5324 = vmatprep.subr.bf16.mxu0 %v4916
    %5325 = vmatpush1.bf16.msra.mxu0 %v4915
    %5326 = vmatprep.subr.bf16.mxu0 %v4924
    %5327 = vmatpush1.bf16.msra.mxu0 %v4923
    %5328 = vmatprep.subr.bf16.mxu0 %v4932
    %5329 = vmatpush1.bf16.msra.mxu0 %v4931
    %5330 = vmatprep.subr.bf16.mxu0 %v4940
    %5331 = vmatpush1.bf16.msra.mxu0 %v4939
    %5332 = vmatprep.subr.bf16.mxu0 %v4948
    %5333 = vmatpush1.bf16.msra.mxu0 %v4947
    %5334 = vmatprep.subr.bf16.mxu0 %v4956
    %5335 = vmatpush1.bf16.msra.mxu0 %v4955
    %5336 = vmatprep.subr.bf16.mxu0 %v4964
    %5337 = vmatpush1.bf16.msra.mxu0 %v4963
    %5338 = vmatprep.mubr.bf16.mxu0 %v4976
    %5339 = vmatmul.mubr.bf16.gmra.mrb[0].mxu0 %v4975
    %v5340 = vpop.f32.mrb[0].mxu0
    %v5341 = vadd.f32 %v5300, %v5340
    %v5342 = vpop.f32.mrb[0].mxu0
    %v5343 = vadd.f32 %v5302, %v5342
    %v5344 = vpop.f32.mrb[0].mxu0
    %v5345 = vpop.f32.mrb[0].mxu0
    %5346 = vdwg.mxu0
    %5347 = vmatprep.subr.bf16.mxu0 %v4462
    %5348 = vmatpush1.bf16.msra.mxu0 %v4461
    %5349 = vmatprep.subr.bf16.mxu0 %v4470
    %5350 = vmatpush1.bf16.msra.mxu0 %v4469
    %5351 = vmatprep.subr.bf16.mxu0 %v4478
    %5352 = vmatpush1.bf16.msra.mxu0 %v4477
    %5353 = vmatprep.subr.bf16.mxu0 %v4486
    %5354 = vmatpush1.bf16.msra.mxu0 %v4485
    %5355 = vmatprep.subr.bf16.mxu0 %v4494
    %5356 = vmatpush1.bf16.msra.mxu0 %v4493
    %5357 = vmatprep.subr.bf16.mxu0 %v4502
    %5358 = vmatpush1.bf16.msra.mxu0 %v4501
    %5359 = vmatprep.subr.bf16.mxu0 %v4510
    %5360 = vmatpush1.bf16.msra.mxu0 %v4509
    %5361 = vmatprep.subr.bf16.mxu0 %v4518
    %5362 = vmatpush1.bf16.msra.mxu0 %v4517
    %5363 = vmatprep.subr.bf16.mxu0 %v4526
    %5364 = vmatpush1.bf16.msra.mxu0 %v4525
    %5365 = vmatprep.subr.bf16.mxu0 %v4534
    %5366 = vmatpush1.bf16.msra.mxu0 %v4533
    %5367 = vmatprep.subr.bf16.mxu0 %v4542
    %5368 = vmatpush1.bf16.msra.mxu0 %v4541
    %5369 = vmatprep.subr.bf16.mxu0 %v4550
    %5370 = vmatpush1.bf16.msra.mxu0 %v4549
    %5371 = vmatprep.subr.bf16.mxu0 %v4558
    %5372 = vmatpush1.bf16.msra.mxu0 %v4557
    %5373 = vmatprep.subr.bf16.mxu0 %v4566
    %5374 = vmatpush1.bf16.msra.mxu0 %v4565
    %5375 = vmatprep.subr.bf16.mxu0 %v4574
    %5376 = vmatpush1.bf16.msra.mxu0 %v4573
    %5377 = vmatprep.subr.bf16.mxu0 %v4582
    %5378 = vmatpush1.bf16.msra.mxu0 %v4581
    %5379 = vmatprep.mubr.bf16.mxu0 %v4970
    %5380 = vmatmul.mubr.bf16.gmra.mrb[0].mxu0 %v4969
    %v5381 = vpop.f32.mrb[0].mxu0
    %v5382 = vadd.f32 %v4998, %v5381
    %v5383 = vpop.f32.mrb[0].mxu0
    %v5384 = vadd.f32 %v5002, %v5383
    %v5385 = vpop.f32.mrb[0].mxu0
    %v5386 = vpop.f32.mrb[0].mxu0
    %5387 = vdwg.mxu0
    %5388 = vmatprep.subr.bf16.mxu0 %v4590
    %5389 = vmatpush1.bf16.msra.mxu0 %v4589
    %5390 = vmatprep.subr.bf16.mxu0 %v4598
    %5391 = vmatpush1.bf16.msra.mxu0 %v4597
    %5392 = vmatprep.subr.bf16.mxu0 %v4606
    %5393 = vmatpush1.bf16.msra.mxu0 %v4605
    %5394 = vmatprep.subr.bf16.mxu0 %v4614
    %5395 = vmatpush1.bf16.msra.mxu0 %v4613
    %5396 = vmatprep.subr.bf16.mxu0 %v4622
    %5397 = vmatpush1.bf16.msra.mxu0 %v4621
    %5398 = vmatprep.subr.bf16.mxu0 %v4630
    %5399 = vmatpush1.bf16.msra.mxu0 %v4629
    %5400 = vmatprep.subr.bf16.mxu0 %v4638
    %5401 = vmatpush1.bf16.msra.mxu0 %v4637
    %5402 = vmatprep.subr.bf16.mxu0 %v4646
    %5403 = vmatpush1.bf16.msra.mxu0 %v4645
    %5404 = vmatprep.subr.bf16.mxu0 %v4654
    %5405 = vmatpush1.bf16.msra.mxu0 %v4653
    %5406 = vmatprep.subr.bf16.mxu0 %v4662
    %5407 = vmatpush1.bf16.msra.mxu0 %v4661
    %5408 = vmatprep.subr.bf16.mxu0 %v4670
    %5409 = vmatpush1.bf16.msra.mxu0 %v4669
    %5410 = vmatprep.subr.bf16.mxu0 %v4678
    %5411 = vmatpush1.bf16.msra.mxu0 %v4677
    %5412 = vmatprep.subr.bf16.mxu0 %v4686
    %5413 = vmatpush1.bf16.msra.mxu0 %v4685
    %5414 = vmatprep.subr.bf16.mxu0 %v4694
    %5415 = vmatpush1.bf16.msra.mxu0 %v4693
    %5416 = vmatprep.subr.bf16.mxu0 %v4702
    %5417 = vmatpush1.bf16.msra.mxu0 %v4701
    %5418 = vmatprep.subr.bf16.mxu0 %v4710
    %5419 = vmatpush1.bf16.msra.mxu0 %v4709
    %5420 = vmatprep.mubr.bf16.mxu0 %v4972
    %5421 = vmatmul.mubr.bf16.gmra.mrb[0].mxu0 %v4971
    %v5422 = vpop.f32.mrb[0].mxu0
    %v5423 = vadd.f32 %v5382, %v5422
    %v5424 = vpop.f32.mrb[0].mxu0
    %v5425 = vadd.f32 %v5384, %v5424
    %v5426 = vpop.f32.mrb[0].mxu0
    %v5427 = vpop.f32.mrb[0].mxu0
    %5428 = vdwg.mxu0
    %5429 = vmatprep.subr.bf16.mxu0 %v4718
    %5430 = vmatpush1.bf16.msra.mxu0 %v4717
    %5431 = vmatprep.subr.bf16.mxu0 %v4726
    %5432 = vmatpush1.bf16.msra.mxu0 %v4725
    %5433 = vmatprep.subr.bf16.mxu0 %v4734
    %5434 = vmatpush1.bf16.msra.mxu0 %v4733
    %5435 = vmatprep.subr.bf16.mxu0 %v4742
    %5436 = vmatpush1.bf16.msra.mxu0 %v4741
    %5437 = vmatprep.subr.bf16.mxu0 %v4750
    %5438 = vmatpush1.bf16.msra.mxu0 %v4749
    %5439 = vmatprep.subr.bf16.mxu0 %v4758
    %5440 = vmatpush1.bf16.msra.mxu0 %v4757
    %5441 = vmatprep.subr.bf16.mxu0 %v4766
    %5442 = vmatpush1.bf16.msra.mxu0 %v4765
    %5443 = vmatprep.subr.bf16.mxu0 %v4774
    %5444 = vmatpush1.bf16.msra.mxu0 %v4773
    %5445 = vmatprep.subr.bf16.mxu0 %v4782
    %5446 = vmatpush1.bf16.msra.mxu0 %v4781
    %5447 = vmatprep.subr.bf16.mxu0 %v4790
    %5448 = vmatpush1.bf16.msra.mxu0 %v4789
    %5449 = vmatprep.subr.bf16.mxu0 %v4798
    %5450 = vmatpush1.bf16.msra.mxu0 %v4797
    %5451 = vmatprep.subr.bf16.mxu0 %v4806
    %5452 = vmatpush1.bf16.msra.mxu0 %v4805
    %5453 = vmatprep.subr.bf16.mxu0 %v4814
    %5454 = vmatpush1.bf16.msra.mxu0 %v4813
    %5455 = vmatprep.subr.bf16.mxu0 %v4822
    %5456 = vmatpush1.bf16.msra.mxu0 %v4821
    %5457 = vmatprep.subr.bf16.mxu0 %v4830
    %5458 = vmatpush1.bf16.msra.mxu0 %v4829
    %5459 = vmatprep.subr.bf16.mxu0 %v4838
    %5460 = vmatpush1.bf16.msra.mxu0 %v4837
    %5461 = vmatprep.mubr.bf16.mxu0 %v4974
    %5462 = vmatmul.mubr.bf16.gmra.mrb[0].mxu0 %v4973
    %v5463 = vpop.f32.mrb[0].mxu0
    %v5464 = vadd.f32 %v5423, %v5463
    %v5465 = vpop.f32.mrb[0].mxu0
    %v5466 = vadd.f32 %v5425, %v5465
    %v5467 = vpop.f32.mrb[0].mxu0
    %v5468 = vpop.f32.mrb[0].mxu0
    %5469 = vdwg.mxu0
    %5470 = vmatprep.subr.bf16.mxu0 %v4846
    %5471 = vmatpush1.bf16.msra.mxu0 %v4845
    %5472 = vmatprep.subr.bf16.mxu0 %v4854
    %5473 = vmatpush1.bf16.msra.mxu0 %v4853
    %5474 = vmatprep.subr.bf16.mxu0 %v4862
    %5475 = vmatpush1.bf16.msra.mxu0 %v4861
    %5476 = vmatprep.subr.bf16.mxu0 %v4870
    %5477 = vmatpush1.bf16.msra.mxu0 %v4869
    %5478 = vmatprep.subr.bf16.mxu0 %v4878
    %5479 = vmatpush1.bf16.msra.mxu0 %v4877
    %5480 = vmatprep.subr.bf16.mxu0 %v4886
    %5481 = vmatpush1.bf16.msra.mxu0 %v4885
    %5482 = vmatprep.subr.bf16.mxu0 %v4894
    %5483 = vmatpush1.bf16.msra.mxu0 %v4893
    %5484 = vmatprep.subr.bf16.mxu0 %v4902
    %5485 = vmatpush1.bf16.msra.mxu0 %v4901
    %5486 = vmatprep.subr.bf16.mxu0 %v4910
    %5487 = vmatpush1.bf16.msra.mxu0 %v4909
    %5488 = vmatprep.subr.bf16.mxu0 %v4918
    %5489 = vmatpush1.bf16.msra.mxu0 %v4917
    %5490 = vmatprep.subr.bf16.mxu0 %v4926
    %5491 = vmatpush1.bf16.msra.mxu0 %v4925
    %5492 = vmatprep.subr.bf16.mxu0 %v4934
    %5493 = vmatpush1.bf16.msra.mxu0 %v4933
    %5494 = vmatprep.subr.bf16.mxu0 %v4942
    %5495 = vmatpush1.bf16.msra.mxu0 %v4941
    %5496 = vmatprep.subr.bf16.mxu0 %v4950
    %5497 = vmatpush1.bf16.msra.mxu0 %v4949
    %5498 = vmatprep.subr.bf16.mxu0 %v4958
    %5499 = vmatpush1.bf16.msra.mxu0 %v4957
    %5500 = vmatprep.subr.bf16.mxu0 %v4966
    %5501 = vmatpush1.bf16.msra.mxu0 %v4965
    %5502 = vmatprep.mubr.bf16.mxu0 %v4976
    %5503 = vmatmul.mubr.bf16.gmra.mrb[0].mxu0 %v4975
    %v5504 = vpop.f32.mrb[0].mxu0
    %v5505 = vadd.f32 %v5464, %v5504
    %v5506 = vpop.f32.mrb[0].mxu0
    %v5507 = vadd.f32 %v5466, %v5506
    %v5508 = vpop.f32.mrb[0].mxu0
    %v5509 = vpop.f32.mrb[0].mxu0
    %5510 = vdwg.mxu0
    %5511 = vmatprep.subr.bf16.mxu0 %v4464
    %5512 = vmatpush1.bf16.msra.mxu0 %v4463
    %5513 = vmatprep.subr.bf16.mxu0 %v4472
    %5514 = vmatpush1.bf16.msra.mxu0 %v4471
    %5515 = vmatprep.subr.bf16.mxu0 %v4480
    %5516 = vmatpush1.bf16.msra.mxu0 %v4479
    %5517 = vmatprep.subr.bf16.mxu0 %v4488
    %5518 = vmatpush1.bf16.msra.mxu0 %v4487
    %5519 = vmatprep.subr.bf16.mxu0 %v4496
    %5520 = vmatpush1.bf16.msra.mxu0 %v4495
    %5521 = vmatprep.subr.bf16.mxu0 %v4504
    %5522 = vmatpush1.bf16.msra.mxu0 %v4503
    %5523 = vmatprep.subr.bf16.mxu0 %v4512
    %5524 = vmatpush1.bf16.msra.mxu0 %v4511
    %5525 = vmatprep.subr.bf16.mxu0 %v4520
    %5526 = vmatpush1.bf16.msra.mxu0 %v4519
    %5527 = vmatprep.subr.bf16.mxu0 %v4528
    %5528 = vmatpush1.bf16.msra.mxu0 %v4527
    %5529 = vmatprep.subr.bf16.mxu0 %v4536
    %5530 = vmatpush1.bf16.msra.mxu0 %v4535
    %5531 = vmatprep.subr.bf16.mxu0 %v4544
    %5532 = vmatpush1.bf16.msra.mxu0 %v4543
    %5533 = vmatprep.subr.bf16.mxu0 %v4552
    %5534 = vmatpush1.bf16.msra.mxu0 %v4551
    %5535 = vmatprep.subr.bf16.mxu0 %v4560
    %5536 = vmatpush1.bf16.msra.mxu0 %v4559
    %5537 = vmatprep.subr.bf16.mxu0 %v4568
    %5538 = vmatpush1.bf16.msra.mxu0 %v4567
    %5539 = vmatprep.subr.bf16.mxu0 %v4576
    %5540 = vmatpush1.bf16.msra.mxu0 %v4575
    %5541 = vmatprep.subr.bf16.mxu0 %v4584
    %5542 = vmatpush1.bf16.msra.mxu0 %v4583
    %5543 = vmatprep.mubr.bf16.mxu0 %v4970
    %5544 = vmatmul.mubr.bf16.gmra.mrb[0].mxu0 %v4969
    %v5545 = vpop.f32.mrb[0].mxu0
    %v5546 = vadd.f32 %v5006, %v5545
    %v5547 = vpop.f32.mrb[0].mxu0
    %v5548 = vadd.f32 %v5010, %v5547
    %v5549 = vpop.f32.mrb[0].mxu0
    %v5550 = vpop.f32.mrb[0].mxu0
    %5551 = vdwg.mxu0
    %5552 = vmatprep.subr.bf16.mxu0 %v4592
    %5553 = vmatpush1.bf16.msra.mxu0 %v4591
    %5554 = vmatprep.subr.bf16.mxu0 %v4600
    %5555 = vmatpush1.bf16.msra.mxu0 %v4599
    %5556 = vmatprep.subr.bf16.mxu0 %v4608
    %5557 = vmatpush1.bf16.msra.mxu0 %v4607
    %5558 = vmatprep.subr.bf16.mxu0 %v4616
    %5559 = vmatpush1.bf16.msra.mxu0 %v4615
    %5560 = vmatprep.subr.bf16.mxu0 %v4624
    %5561 = vmatpush1.bf16.msra.mxu0 %v4623
    %5562 = vmatprep.subr.bf16.mxu0 %v4632
    %5563 = vmatpush1.bf16.msra.mxu0 %v4631
    %5564 = vmatprep.subr.bf16.mxu0 %v4640
    %5565 = vmatpush1.bf16.msra.mxu0 %v4639
    %5566 = vmatprep.subr.bf16.mxu0 %v4648
    %5567 = vmatpush1.bf16.msra.mxu0 %v4647
    %5568 = vmatprep.subr.bf16.mxu0 %v4656
    %5569 = vmatpush1.bf16.msra.mxu0 %v4655
    %5570 = vmatprep.subr.bf16.mxu0 %v4664
    %5571 = vmatpush1.bf16.msra.mxu0 %v4663
    %5572 = vmatprep.subr.bf16.mxu0 %v4672
    %5573 = vmatpush1.bf16.msra.mxu0 %v4671
    %5574 = vmatprep.subr.bf16.mxu0 %v4680
    %5575 = vmatpush1.bf16.msra.mxu0 %v4679
    %5576 = vmatprep.subr.bf16.mxu0 %v4688
    %5577 = vmatpush1.bf16.msra.mxu0 %v4687
    %5578 = vmatprep.subr.bf16.mxu0 %v4696
    %5579 = vmatpush1.bf16.msra.mxu0 %v4695
    %5580 = vmatprep.subr.bf16.mxu0 %v4704
    %5581 = vmatpush1.bf16.msra.mxu0 %v4703
    %5582 = vmatprep.subr.bf16.mxu0 %v4712
    %5583 = vmatpush1.bf16.msra.mxu0 %v4711
    %5584 = vmatprep.mubr.bf16.mxu0 %v4972
    %5585 = vmatmul.mubr.bf16.gmra.mrb[0].mxu0 %v4971
    %v5586 = vpop.f32.mrb[0].mxu0
    %v5587 = vadd.f32 %v5546, %v5586
    %v5588 = vpop.f32.mrb[0].mxu0
    %v5589 = vadd.f32 %v5548, %v5588
    %v5590 = vpop.f32.mrb[0].mxu0
    %v5591 = vpop.f32.mrb[0].mxu0
    %5592 = vdwg.mxu0
    %5593 = vmatprep.subr.bf16.mxu0 %v4720
    %5594 = vmatpush1.bf16.msra.mxu0 %v4719
    %5595 = vmatprep.subr.bf16.mxu0 %v4728
    %5596 = vmatpush1.bf16.msra.mxu0 %v4727
    %5597 = vmatprep.subr.bf16.mxu0 %v4736
    %5598 = vmatpush1.bf16.msra.mxu0 %v4735
    %5599 = vmatprep.subr.bf16.mxu0 %v4744
    %5600 = vmatpush1.bf16.msra.mxu0 %v4743
    %5601 = vmatprep.subr.bf16.mxu0 %v4752
    %5602 = vmatpush1.bf16.msra.mxu0 %v4751
    %5603 = vmatprep.subr.bf16.mxu0 %v4760
    %5604 = vmatpush1.bf16.msra.mxu0 %v4759
    %5605 = vmatprep.subr.bf16.mxu0 %v4768
    %5606 = vmatpush1.bf16.msra.mxu0 %v4767
    %5607 = vmatprep.subr.bf16.mxu0 %v4776
    %5608 = vmatpush1.bf16.msra.mxu0 %v4775
    %5609 = vmatprep.subr.bf16.mxu0 %v4784
    %5610 = vmatpush1.bf16.msra.mxu0 %v4783
    %5611 = vmatprep.subr.bf16.mxu0 %v4792
    %5612 = vmatpush1.bf16.msra.mxu0 %v4791
    %5613 = vmatprep.subr.bf16.mxu0 %v4800
    %5614 = vmatpush1.bf16.msra.mxu0 %v4799
    %5615 = vmatprep.subr.bf16.mxu0 %v4808
    %5616 = vmatpush1.bf16.msra.mxu0 %v4807
    %5617 = vmatprep.subr.bf16.mxu0 %v4816
    %5618 = vmatpush1.bf16.msra.mxu0 %v4815
    %5619 = vmatprep.subr.bf16.mxu0 %v4824
    %5620 = vmatpush1.bf16.msra.mxu0 %v4823
    %5621 = vmatprep.subr.bf16.mxu0 %v4832
    %5622 = vmatpush1.bf16.msra.mxu0 %v4831
    %5623 = vmatprep.subr.bf16.mxu0 %v4840
    %5624 = vmatpush1.bf16.msra.mxu0 %v4839
    %5625 = vmatprep.mubr.bf16.mxu0 %v4974
    %5626 = vmatmul.mubr.bf16.gmra.mrb[0].mxu0 %v4973
    %v5627 = vpop.f32.mrb[0].mxu0
    %v5628 = vadd.f32 %v5587, %v5627
    %v5629 = vpop.f32.mrb[0].mxu0
    %v5630 = vadd.f32 %v5589, %v5629
    %v5631 = vpop.f32.mrb[0].mxu0
    %v5632 = vpop.f32.mrb[0].mxu0
    %5633 = vdwg.mxu0
    %5634 = vmatprep.subr.bf16.mxu0 %v4848
    %5635 = vmatpush1.bf16.msra.mxu0 %v4847
    %5636 = vmatprep.subr.bf16.mxu0 %v4856
    %5637 = vmatpush1.bf16.msra.mxu0 %v4855
    %5638 = vmatprep.subr.bf16.mxu0 %v4864
    %5639 = vmatpush1.bf16.msra.mxu0 %v4863
    %5640 = vmatprep.subr.bf16.mxu0 %v4872
    %5641 = vmatpush1.bf16.msra.mxu0 %v4871
    %5642 = vmatprep.subr.bf16.mxu0 %v4880
    %5643 = vmatpush1.bf16.msra.mxu0 %v4879
    %5644 = vmatprep.subr.bf16.mxu0 %v4888
    %5645 = vmatpush1.bf16.msra.mxu0 %v4887
    %5646 = vmatprep.subr.bf16.mxu0 %v4896
    %5647 = vmatpush1.bf16.msra.mxu0 %v4895
    %5648 = vmatprep.subr.bf16.mxu0 %v4904
    %5649 = vmatpush1.bf16.msra.mxu0 %v4903
    %5650 = vmatprep.subr.bf16.mxu0 %v4912
    %5651 = vmatpush1.bf16.msra.mxu0 %v4911
    %5652 = vmatprep.subr.bf16.mxu0 %v4920
    %5653 = vmatpush1.bf16.msra.mxu0 %v4919
    %5654 = vmatprep.subr.bf16.mxu0 %v4928
    %5655 = vmatpush1.bf16.msra.mxu0 %v4927
    %5656 = vmatprep.subr.bf16.mxu0 %v4936
    %5657 = vmatpush1.bf16.msra.mxu0 %v4935
    %5658 = vmatprep.subr.bf16.mxu0 %v4944
    %5659 = vmatpush1.bf16.msra.mxu0 %v4943
    %5660 = vmatprep.subr.bf16.mxu0 %v4952
    %5661 = vmatpush1.bf16.msra.mxu0 %v4951
    %5662 = vmatprep.subr.bf16.mxu0 %v4960
    %5663 = vmatpush1.bf16.msra.mxu0 %v4959
    %5664 = vmatprep.subr.bf16.mxu0 %v4968
    %5665 = vmatpush1.bf16.msra.mxu0 %v4967
    %5666 = vmatprep.mubr.bf16.mxu0 %v4976
    %5667 = vmatmul.mubr.bf16.gmra.mrb[0].mxu0 %v4975
    %v5668 = vpop.f32.mrb[0].mxu0
    %v5669 = vadd.f32 %v5628, %v5668
    %v5670 = vpop.f32.mrb[0].mxu0
    %v5671 = vadd.f32 %v5630, %v5670
    %v5672 = vpop.f32.mrb[0].mxu0
    %v5673 = vpop.f32.mrb[0].mxu0
    %5674 = vdwg.mxu0
    %v5675 = vxor.u32 %v5177, 2147483648
    %v5676 = vxor.u32 %v5179, 2147483648
    %v5677 = vxor.u32 %v5341, 2147483648
    %v5678 = vxor.u32 %v5343, 2147483648
    %v5679 = vxor.u32 %v5505, 2147483648
    %v5680 = vxor.u32 %v5507, 2147483648
    %v5681 = vxor.u32 %v5669, 2147483648
    %v5682 = vxor.u32 %v5671, 2147483648
    %v5683 = vmul.f32 %v5675, 1.442695
    %v5684 = vpow.pop %v5683
    %v5685 = vmul.f32 %v5676, 1.442695
    %v5686 = vpow.pop %v5685
    %v5687 = vmul.f32 %v5677, 1.442695
    %v5688 = vpow.pop %v5687
    %v5689 = vmul.f32 %v5678, 1.442695
    %v5690 = vpow.pop %v5689
    %v5691 = vmul.f32 %v5679, 1.442695
    %v5692 = vpow.pop %v5691
    %v5693 = vmul.f32 %v5680, 1.442695
    %v5694 = vpow.pop %v5693
    %v5695 = vmul.f32 %v5681, 1.442695
    %v5696 = vpow.pop %v5695
    %v5697 = vmul.f32 %v5682, 1.442695
    %v5698 = vpow.pop %v5697
    %v5699 = vadd.f32 %v5684, 1.0
    %v5700 = vadd.f32 %v5686, 1.0
    %v5701 = vadd.f32 %v5688, 1.0
    %v5702 = vadd.f32 %v5690, 1.0
    %v5703 = vadd.f32 %v5692, 1.0
    %v5704 = vadd.f32 %v5694, 1.0
    %v5705 = vadd.f32 %v5696, 1.0
    %v5706 = vadd.f32 %v5698, 1.0
    %v5707 = vrcp.pop %v5699
    %v5708 = vmul.f32 1.0, %v5707
    %v5709 = vrcp.pop %v5700
    %v5710 = vmul.f32 1.0, %v5709
    %v5711 = vrcp.pop %v5701
    %v5712 = vmul.f32 1.0, %v5711
    %v5713 = vrcp.pop %v5702
    %v5714 = vmul.f32 1.0, %v5713
    %v5715 = vrcp.pop %v5703
    %v5716 = vmul.f32 1.0, %v5715
    %v5717 = vrcp.pop %v5704
    %v5718 = vmul.f32 1.0, %v5717
    %v5719 = vrcp.pop %v5705
    %v5720 = vmul.f32 1.0, %v5719
    %v5721 = vrcp.pop %v5706
    %v5722 = vmul.f32 1.0, %v5721
    %5723 = vst [vmem:[#allocation16] sm:$0xff] %v5708
    %5724 = vst [vmem:[#allocation16 + $0x8] sm:$0xff] %v5710
    %5725 = vst [vmem:[#allocation16 + $0x10] sm:$0xff] %v5712
    %5726 = vst [vmem:[#allocation16 + $0x18] sm:$0xff] %v5714
    %5727 = vst [vmem:[#allocation16 + $0x20] sm:$0xff] %v5716
    %5728 = vst [vmem:[#allocation16 + $0x28] sm:$0xff] %v5718
    %5729 = vst [vmem:[#allocation16 + $0x30] sm:$0xff] %v5720
    %5730 = vst [vmem:[#allocation16 + $0x38] sm:$0xff] %v5722
    %s5731 = sshll.u32 %s204, 4
    %5732 = dma.done %s152, %s5731
    %v5733 = vld [vmem:[%s151] sm:$0xff]
    %v5734 = vld [vmem:[%s151 + $0x8] sm:$0xff]
    %v5735 = vld [vmem:[%s151 + $0x10] sm:$0xff]
    %v5736 = vld [vmem:[%s151 + $0x18] sm:$0xff]
    %v5737 = vld [vmem:[%s151 + $0x20] sm:$0xff]
    %v5738 = vld [vmem:[%s151 + $0x28] sm:$0xff]
    %v5739 = vld [vmem:[%s151 + $0x30] sm:$0xff]
    %v5740 = vld [vmem:[%s151 + $0x38] sm:$0xff]
    %v5741 = vld [vmem:[%s151 + $0x40] sm:$0xff]
    %v5742 = vld [vmem:[%s151 + $0x48] sm:$0xff]
    %v5743 = vld [vmem:[%s151 + $0x50] sm:$0xff]
    %v5744 = vld [vmem:[%s151 + $0x58] sm:$0xff]
    %v5745 = vld [vmem:[%s151 + $0x60] sm:$0xff]
    %v5746 = vld [vmem:[%s151 + $0x68] sm:$0xff]
    %v5747 = vld [vmem:[%s151 + $0x70] sm:$0xff]
    %v5748 = vld [vmem:[%s151 + $0x78] sm:$0xff]
    %v5749 = vld [vmem:[%s151 + $0x80] sm:$0xff]
    %v5750 = vld [vmem:[%s151 + $0x88] sm:$0xff]
    %v5751 = vld [vmem:[%s151 + $0x90] sm:$0xff]
    %v5752 = vld [vmem:[%s151 + $0x98] sm:$0xff]
    %v5753 = vld [vmem:[%s151 + $0xa0] sm:$0xff]
    %v5754 = vld [vmem:[%s151 + $0xa8] sm:$0xff]
    %v5755 = vld [vmem:[%s151 + $0xb0] sm:$0xff]
    %v5756 = vld [vmem:[%s151 + $0xb8] sm:$0xff]
    %v5757 = vld [vmem:[%s151 + $0xc0] sm:$0xff]
    %v5758 = vld [vmem:[%s151 + $0xc8] sm:$0xff]
    %v5759 = vld [vmem:[%s151 + $0xd0] sm:$0xff]
    %v5760 = vld [vmem:[%s151 + $0xd8] sm:$0xff]
    %v5761 = vld [vmem:[%s151 + $0xe0] sm:$0xff]
    %v5762 = vld [vmem:[%s151 + $0xe8] sm:$0xff]
    %v5763 = vld [vmem:[%s151 + $0xf0] sm:$0xff]
    %v5764 = vld [vmem:[%s151 + $0xf8] sm:$0xff]
    %v5765 = vld [vmem:[%s151 + $0x100] sm:$0xff]
    %v5766 = vld [vmem:[%s151 + $0x108] sm:$0xff]
    %v5767 = vld [vmem:[%s151 + $0x110] sm:$0xff]
    %v5768 = vld [vmem:[%s151 + $0x118] sm:$0xff]
    %v5769 = vld [vmem:[%s151 + $0x120] sm:$0xff]
    %v5770 = vld [vmem:[%s151 + $0x128] sm:$0xff]
    %v5771 = vld [vmem:[%s151 + $0x130] sm:$0xff]
    %v5772 = vld [vmem:[%s151 + $0x138] sm:$0xff]
    %v5773 = vld [vmem:[%s151 + $0x140] sm:$0xff]
    %v5774 = vld [vmem:[%s151 + $0x148] sm:$0xff]
    %v5775 = vld [vmem:[%s151 + $0x150] sm:$0xff]
    %v5776 = vld [vmem:[%s151 + $0x158] sm:$0xff]
    %v5777 = vld [vmem:[%s151 + $0x160] sm:$0xff]
    %v5778 = vld [vmem:[%s151 + $0x168] sm:$0xff]
    %v5779 = vld [vmem:[%s151 + $0x170] sm:$0xff]
    %v5780 = vld [vmem:[%s151 + $0x178] sm:$0xff]
    %v5781 = vld [vmem:[%s151 + $0x180] sm:$0xff]
    %v5782 = vld [vmem:[%s151 + $0x188] sm:$0xff]
    %v5783 = vld [vmem:[%s151 + $0x190] sm:$0xff]
    %v5784 = vld [vmem:[%s151 + $0x198] sm:$0xff]
    %v5785 = vld [vmem:[%s151 + $0x1a0] sm:$0xff]
    %v5786 = vld [vmem:[%s151 + $0x1a8] sm:$0xff]
    %v5787 = vld [vmem:[%s151 + $0x1b0] sm:$0xff]
    %v5788 = vld [vmem:[%s151 + $0x1b8] sm:$0xff]
    %v5789 = vld [vmem:[%s151 + $0x1c0] sm:$0xff]
    %v5790 = vld [vmem:[%s151 + $0x1c8] sm:$0xff]
    %v5791 = vld [vmem:[%s151 + $0x1d0] sm:$0xff]
    %v5792 = vld [vmem:[%s151 + $0x1d8] sm:$0xff]
    %v5793 = vld [vmem:[%s151 + $0x1e0] sm:$0xff]
    %v5794 = vld [vmem:[%s151 + $0x1e8] sm:$0xff]
    %v5795 = vld [vmem:[%s151 + $0x1f0] sm:$0xff]
    %v5796 = vld [vmem:[%s151 + $0x1f8] sm:$0xff]
    %v5797 = vld [vmem:[%s151 + $0x200] sm:$0xff]
    %v5798 = vld [vmem:[%s151 + $0x208] sm:$0xff]
    %v5799 = vld [vmem:[%s151 + $0x210] sm:$0xff]
    %v5800 = vld [vmem:[%s151 + $0x218] sm:$0xff]
    %v5801 = vld [vmem:[%s151 + $0x220] sm:$0xff]
    %v5802 = vld [vmem:[%s151 + $0x228] sm:$0xff]
    %v5803 = vld [vmem:[%s151 + $0x230] sm:$0xff]
    %v5804 = vld [vmem:[%s151 + $0x238] sm:$0xff]
    %v5805 = vld [vmem:[%s151 + $0x240] sm:$0xff]
    %v5806 = vld [vmem:[%s151 + $0x248] sm:$0xff]
    %v5807 = vld [vmem:[%s151 + $0x250] sm:$0xff]
    %v5808 = vld [vmem:[%s151 + $0x258] sm:$0xff]
    %v5809 = vld [vmem:[%s151 + $0x260] sm:$0xff]
    %v5810 = vld [vmem:[%s151 + $0x268] sm:$0xff]
    %v5811 = vld [vmem:[%s151 + $0x270] sm:$0xff]
    %v5812 = vld [vmem:[%s151 + $0x278] sm:$0xff]
    %v5813 = vld [vmem:[%s151 + $0x280] sm:$0xff]
    %v5814 = vld [vmem:[%s151 + $0x288] sm:$0xff]
    %v5815 = vld [vmem:[%s151 + $0x290] sm:$0xff]
    %v5816 = vld [vmem:[%s151 + $0x298] sm:$0xff]
    %v5817 = vld [vmem:[%s151 + $0x2a0] sm:$0xff]
    %v5818 = vld [vmem:[%s151 + $0x2a8] sm:$0xff]
    %v5819 = vld [vmem:[%s151 + $0x2b0] sm:$0xff]
    %v5820 = vld [vmem:[%s151 + $0x2b8] sm:$0xff]
    %v5821 = vld [vmem:[%s151 + $0x2c0] sm:$0xff]
    %v5822 = vld [vmem:[%s151 + $0x2c8] sm:$0xff]
    %v5823 = vld [vmem:[%s151 + $0x2d0] sm:$0xff]
    %v5824 = vld [vmem:[%s151 + $0x2d8] sm:$0xff]
    %v5825 = vld [vmem:[%s151 + $0x2e0] sm:$0xff]
    %v5826 = vld [vmem:[%s151 + $0x2e8] sm:$0xff]
    %v5827 = vld [vmem:[%s151 + $0x2f0] sm:$0xff]
    %v5828 = vld [vmem:[%s151 + $0x2f8] sm:$0xff]
    %v5829 = vld [vmem:[%s151 + $0x300] sm:$0xff]
    %v5830 = vld [vmem:[%s151 + $0x308] sm:$0xff]
    %v5831 = vld [vmem:[%s151 + $0x310] sm:$0xff]
    %v5832 = vld [vmem:[%s151 + $0x318] sm:$0xff]
    %v5833 = vld [vmem:[%s151 + $0x320] sm:$0xff]
    %v5834 = vld [vmem:[%s151 + $0x328] sm:$0xff]
    %v5835 = vld [vmem:[%s151 + $0x330] sm:$0xff]
    %v5836 = vld [vmem:[%s151 + $0x338] sm:$0xff]
    %v5837 = vld [vmem:[%s151 + $0x340] sm:$0xff]
    %v5838 = vld [vmem:[%s151 + $0x348] sm:$0xff]
    %v5839 = vld [vmem:[%s151 + $0x350] sm:$0xff]
    %v5840 = vld [vmem:[%s151 + $0x358] sm:$0xff]
    %v5841 = vld [vmem:[%s151 + $0x360] sm:$0xff]
    %v5842 = vld [vmem:[%s151 + $0x368] sm:$0xff]
    %v5843 = vld [vmem:[%s151 + $0x370] sm:$0xff]
    %v5844 = vld [vmem:[%s151 + $0x378] sm:$0xff]
    %v5845 = vld [vmem:[%s151 + $0x380] sm:$0xff]
    %v5846 = vld [vmem:[%s151 + $0x388] sm:$0xff]
    %v5847 = vld [vmem:[%s151 + $0x390] sm:$0xff]
    %v5848 = vld [vmem:[%s151 + $0x398] sm:$0xff]
    %v5849 = vld [vmem:[%s151 + $0x3a0] sm:$0xff]
    %v5850 = vld [vmem:[%s151 + $0x3a8] sm:$0xff]
    %v5851 = vld [vmem:[%s151 + $0x3b0] sm:$0xff]
    %v5852 = vld [vmem:[%s151 + $0x3b8] sm:$0xff]
    %v5853 = vld [vmem:[%s151 + $0x3c0] sm:$0xff]
    %v5854 = vld [vmem:[%s151 + $0x3c8] sm:$0xff]
    %v5855 = vld [vmem:[%s151 + $0x3d0] sm:$0xff]
    %v5856 = vld [vmem:[%s151 + $0x3d8] sm:$0xff]
    %v5857 = vld [vmem:[%s151 + $0x3e0] sm:$0xff]
    %v5858 = vld [vmem:[%s151 + $0x3e8] sm:$0xff]
    %v5859 = vld [vmem:[%s151 + $0x3f0] sm:$0xff]
    %v5860 = vld [vmem:[%s151 + $0x3f8] sm:$0xff]
    %v5861 = vld [vmem:[%s151 + $0x400] sm:$0xff]
    %v5862 = vld [vmem:[%s151 + $0x408] sm:$0xff]
    %v5863 = vld [vmem:[%s151 + $0x410] sm:$0xff]
    %v5864 = vld [vmem:[%s151 + $0x418] sm:$0xff]
    %v5865 = vld [vmem:[%s151 + $0x420] sm:$0xff]
    %v5866 = vld [vmem:[%s151 + $0x428] sm:$0xff]
    %v5867 = vld [vmem:[%s151 + $0x430] sm:$0xff]
    %v5868 = vld [vmem:[%s151 + $0x438] sm:$0xff]
    %v5869 = vld [vmem:[%s151 + $0x440] sm:$0xff]
    %v5870 = vld [vmem:[%s151 + $0x448] sm:$0xff]
    %v5871 = vld [vmem:[%s151 + $0x450] sm:$0xff]
    %v5872 = vld [vmem:[%s151 + $0x458] sm:$0xff]
    %v5873 = vld [vmem:[%s151 + $0x460] sm:$0xff]
    %v5874 = vld [vmem:[%s151 + $0x468] sm:$0xff]
    %v5875 = vld [vmem:[%s151 + $0x470] sm:$0xff]
    %v5876 = vld [vmem:[%s151 + $0x478] sm:$0xff]
    %v5877 = vld [vmem:[%s151 + $0x480] sm:$0xff]
    %v5878 = vld [vmem:[%s151 + $0x488] sm:$0xff]
    %v5879 = vld [vmem:[%s151 + $0x490] sm:$0xff]
    %v5880 = vld [vmem:[%s151 + $0x498] sm:$0xff]
    %v5881 = vld [vmem:[%s151 + $0x4a0] sm:$0xff]
    %v5882 = vld [vmem:[%s151 + $0x4a8] sm:$0xff]
    %v5883 = vld [vmem:[%s151 + $0x4b0] sm:$0xff]
    %v5884 = vld [vmem:[%s151 + $0x4b8] sm:$0xff]
    %v5885 = vld [vmem:[%s151 + $0x4c0] sm:$0xff]
    %v5886 = vld [vmem:[%s151 + $0x4c8] sm:$0xff]
    %v5887 = vld [vmem:[%s151 + $0x4d0] sm:$0xff]
    %v5888 = vld [vmem:[%s151 + $0x4d8] sm:$0xff]
    %v5889 = vld [vmem:[%s151 + $0x4e0] sm:$0xff]
    %v5890 = vld [vmem:[%s151 + $0x4e8] sm:$0xff]
    %v5891 = vld [vmem:[%s151 + $0x4f0] sm:$0xff]
    %v5892 = vld [vmem:[%s151 + $0x4f8] sm:$0xff]
    %v5893 = vld [vmem:[%s151 + $0x500] sm:$0xff]
    %v5894 = vld [vmem:[%s151 + $0x508] sm:$0xff]
    %v5895 = vld [vmem:[%s151 + $0x510] sm:$0xff]
    %v5896 = vld [vmem:[%s151 + $0x518] sm:$0xff]
    %v5897 = vld [vmem:[%s151 + $0x520] sm:$0xff]
    %v5898 = vld [vmem:[%s151 + $0x528] sm:$0xff]
    %v5899 = vld [vmem:[%s151 + $0x530] sm:$0xff]
    %v5900 = vld [vmem:[%s151 + $0x538] sm:$0xff]
    %v5901 = vld [vmem:[%s151 + $0x540] sm:$0xff]
    %v5902 = vld [vmem:[%s151 + $0x548] sm:$0xff]
    %v5903 = vld [vmem:[%s151 + $0x550] sm:$0xff]
    %v5904 = vld [vmem:[%s151 + $0x558] sm:$0xff]
    %v5905 = vld [vmem:[%s151 + $0x560] sm:$0xff]
    %v5906 = vld [vmem:[%s151 + $0x568] sm:$0xff]
    %v5907 = vld [vmem:[%s151 + $0x570] sm:$0xff]
    %v5908 = vld [vmem:[%s151 + $0x578] sm:$0xff]
    %v5909 = vld [vmem:[%s151 + $0x580] sm:$0xff]
    %v5910 = vld [vmem:[%s151 + $0x588] sm:$0xff]
    %v5911 = vld [vmem:[%s151 + $0x590] sm:$0xff]
    %v5912 = vld [vmem:[%s151 + $0x598] sm:$0xff]
    %v5913 = vld [vmem:[%s151 + $0x5a0] sm:$0xff]
    %v5914 = vld [vmem:[%s151 + $0x5a8] sm:$0xff]
    %v5915 = vld [vmem:[%s151 + $0x5b0] sm:$0xff]
    %v5916 = vld [vmem:[%s151 + $0x5b8] sm:$0xff]
    %v5917 = vld [vmem:[%s151 + $0x5c0] sm:$0xff]
    %v5918 = vld [vmem:[%s151 + $0x5c8] sm:$0xff]
    %v5919 = vld [vmem:[%s151 + $0x5d0] sm:$0xff]
    %v5920 = vld [vmem:[%s151 + $0x5d8] sm:$0xff]
    %v5921 = vld [vmem:[%s151 + $0x5e0] sm:$0xff]
    %v5922 = vld [vmem:[%s151 + $0x5e8] sm:$0xff]
    %v5923 = vld [vmem:[%s151 + $0x5f0] sm:$0xff]
    %v5924 = vld [vmem:[%s151 + $0x5f8] sm:$0xff]
    %v5925 = vld [vmem:[%s151 + $0x600] sm:$0xff]
    %v5926 = vld [vmem:[%s151 + $0x608] sm:$0xff]
    %v5927 = vld [vmem:[%s151 + $0x610] sm:$0xff]
    %v5928 = vld [vmem:[%s151 + $0x618] sm:$0xff]
    %v5929 = vld [vmem:[%s151 + $0x620] sm:$0xff]
    %v5930 = vld [vmem:[%s151 + $0x628] sm:$0xff]
    %v5931 = vld [vmem:[%s151 + $0x630] sm:$0xff]
    %v5932 = vld [vmem:[%s151 + $0x638] sm:$0xff]
    %v5933 = vld [vmem:[%s151 + $0x640] sm:$0xff]
    %v5934 = vld [vmem:[%s151 + $0x648] sm:$0xff]
    %v5935 = vld [vmem:[%s151 + $0x650] sm:$0xff]
    %v5936 = vld [vmem:[%s151 + $0x658] sm:$0xff]
    %v5937 = vld [vmem:[%s151 + $0x660] sm:$0xff]
    %v5938 = vld [vmem:[%s151 + $0x668] sm:$0xff]
    %v5939 = vld [vmem:[%s151 + $0x670] sm:$0xff]
    %v5940 = vld [vmem:[%s151 + $0x678] sm:$0xff]
    %v5941 = vld [vmem:[%s151 + $0x680] sm:$0xff]
    %v5942 = vld [vmem:[%s151 + $0x688] sm:$0xff]
    %v5943 = vld [vmem:[%s151 + $0x690] sm:$0xff]
    %v5944 = vld [vmem:[%s151 + $0x698] sm:$0xff]
    %v5945 = vld [vmem:[%s151 + $0x6a0] sm:$0xff]
    %v5946 = vld [vmem:[%s151 + $0x6a8] sm:$0xff]
    %v5947 = vld [vmem:[%s151 + $0x6b0] sm:$0xff]
    %v5948 = vld [vmem:[%s151 + $0x6b8] sm:$0xff]
    %v5949 = vld [vmem:[%s151 + $0x6c0] sm:$0xff]
    %v5950 = vld [vmem:[%s151 + $0x6c8] sm:$0xff]
    %v5951 = vld [vmem:[%s151 + $0x6d0] sm:$0xff]
    %v5952 = vld [vmem:[%s151 + $0x6d8] sm:$0xff]
    %v5953 = vld [vmem:[%s151 + $0x6e0] sm:$0xff]
    %v5954 = vld [vmem:[%s151 + $0x6e8] sm:$0xff]
    %v5955 = vld [vmem:[%s151 + $0x6f0] sm:$0xff]
    %v5956 = vld [vmem:[%s151 + $0x6f8] sm:$0xff]
    %v5957 = vld [vmem:[%s151 + $0x700] sm:$0xff]
    %v5958 = vld [vmem:[%s151 + $0x708] sm:$0xff]
    %v5959 = vld [vmem:[%s151 + $0x710] sm:$0xff]
    %v5960 = vld [vmem:[%s151 + $0x718] sm:$0xff]
    %v5961 = vld [vmem:[%s151 + $0x720] sm:$0xff]
    %v5962 = vld [vmem:[%s151 + $0x728] sm:$0xff]
    %v5963 = vld [vmem:[%s151 + $0x730] sm:$0xff]
    %v5964 = vld [vmem:[%s151 + $0x738] sm:$0xff]
    %v5965 = vld [vmem:[%s151 + $0x740] sm:$0xff]
    %v5966 = vld [vmem:[%s151 + $0x748] sm:$0xff]
    %v5967 = vld [vmem:[%s151 + $0x750] sm:$0xff]
    %v5968 = vld [vmem:[%s151 + $0x758] sm:$0xff]
    %v5969 = vld [vmem:[%s151 + $0x760] sm:$0xff]
    %v5970 = vld [vmem:[%s151 + $0x768] sm:$0xff]
    %v5971 = vld [vmem:[%s151 + $0x770] sm:$0xff]
    %v5972 = vld [vmem:[%s151 + $0x778] sm:$0xff]
    %v5973 = vld [vmem:[%s151 + $0x780] sm:$0xff]
    %v5974 = vld [vmem:[%s151 + $0x788] sm:$0xff]
    %v5975 = vld [vmem:[%s151 + $0x790] sm:$0xff]
    %v5976 = vld [vmem:[%s151 + $0x798] sm:$0xff]
    %v5977 = vld [vmem:[%s151 + $0x7a0] sm:$0xff]
    %v5978 = vld [vmem:[%s151 + $0x7a8] sm:$0xff]
    %v5979 = vld [vmem:[%s151 + $0x7b0] sm:$0xff]
    %v5980 = vld [vmem:[%s151 + $0x7b8] sm:$0xff]
    %v5981 = vld [vmem:[%s151 + $0x7c0] sm:$0xff]
    %v5982 = vld [vmem:[%s151 + $0x7c8] sm:$0xff]
    %v5983 = vld [vmem:[%s151 + $0x7d0] sm:$0xff]
    %v5984 = vld [vmem:[%s151 + $0x7d8] sm:$0xff]
    %v5985 = vld [vmem:[%s151 + $0x7e0] sm:$0xff]
    %v5986 = vld [vmem:[%s151 + $0x7e8] sm:$0xff]
    %v5987 = vld [vmem:[%s151 + $0x7f0] sm:$0xff]
    %v5988 = vld [vmem:[%s151 + $0x7f8] sm:$0xff]
    %v5989 = vld [vmem:[%s151 + $0x800] sm:$0xff]
    %v5990 = vld [vmem:[%s151 + $0x808] sm:$0xff]
    %v5991 = vld [vmem:[%s151 + $0x810] sm:$0xff]
    %v5992 = vld [vmem:[%s151 + $0x818] sm:$0xff]
    %v5993 = vld [vmem:[%s151 + $0x820] sm:$0xff]
    %v5994 = vld [vmem:[%s151 + $0x828] sm:$0xff]
    %v5995 = vld [vmem:[%s151 + $0x830] sm:$0xff]
    %v5996 = vld [vmem:[%s151 + $0x838] sm:$0xff]
    %v5997 = vld [vmem:[%s151 + $0x840] sm:$0xff]
    %v5998 = vld [vmem:[%s151 + $0x848] sm:$0xff]
    %v5999 = vld [vmem:[%s151 + $0x850] sm:$0xff]
    %v6000 = vld [vmem:[%s151 + $0x858] sm:$0xff]
    %v6001 = vld [vmem:[%s151 + $0x860] sm:$0xff]
    %v6002 = vld [vmem:[%s151 + $0x868] sm:$0xff]
    %v6003 = vld [vmem:[%s151 + $0x870] sm:$0xff]
    %v6004 = vld [vmem:[%s151 + $0x878] sm:$0xff]
    %v6005 = vld [vmem:[%s151 + $0x880] sm:$0xff]
    %v6006 = vld [vmem:[%s151 + $0x888] sm:$0xff]
    %v6007 = vld [vmem:[%s151 + $0x890] sm:$0xff]
    %v6008 = vld [vmem:[%s151 + $0x898] sm:$0xff]
    %v6009 = vld [vmem:[%s151 + $0x8a0] sm:$0xff]
    %v6010 = vld [vmem:[%s151 + $0x8a8] sm:$0xff]
    %v6011 = vld [vmem:[%s151 + $0x8b0] sm:$0xff]
    %v6012 = vld [vmem:[%s151 + $0x8b8] sm:$0xff]
    %v6013 = vld [vmem:[%s151 + $0x8c0] sm:$0xff]
    %v6014 = vld [vmem:[%s151 + $0x8c8] sm:$0xff]
    %v6015 = vld [vmem:[%s151 + $0x8d0] sm:$0xff]
    %v6016 = vld [vmem:[%s151 + $0x8d8] sm:$0xff]
    %v6017 = vld [vmem:[%s151 + $0x8e0] sm:$0xff]
    %v6018 = vld [vmem:[%s151 + $0x8e8] sm:$0xff]
    %v6019 = vld [vmem:[%s151 + $0x8f0] sm:$0xff]
    %v6020 = vld [vmem:[%s151 + $0x8f8] sm:$0xff]
    %v6021 = vld [vmem:[%s151 + $0x900] sm:$0xff]
    %v6022 = vld [vmem:[%s151 + $0x908] sm:$0xff]
    %v6023 = vld [vmem:[%s151 + $0x910] sm:$0xff]
    %v6024 = vld [vmem:[%s151 + $0x918] sm:$0xff]
    %v6025 = vld [vmem:[%s151 + $0x920] sm:$0xff]
    %v6026 = vld [vmem:[%s151 + $0x928] sm:$0xff]
    %v6027 = vld [vmem:[%s151 + $0x930] sm:$0xff]
    %v6028 = vld [vmem:[%s151 + $0x938] sm:$0xff]
    %v6029 = vld [vmem:[%s151 + $0x940] sm:$0xff]
    %v6030 = vld [vmem:[%s151 + $0x948] sm:$0xff]
    %v6031 = vld [vmem:[%s151 + $0x950] sm:$0xff]
    %v6032 = vld [vmem:[%s151 + $0x958] sm:$0xff]
    %v6033 = vld [vmem:[%s151 + $0x960] sm:$0xff]
    %v6034 = vld [vmem:[%s151 + $0x968] sm:$0xff]
    %v6035 = vld [vmem:[%s151 + $0x970] sm:$0xff]
    %v6036 = vld [vmem:[%s151 + $0x978] sm:$0xff]
    %v6037 = vld [vmem:[%s151 + $0x980] sm:$0xff]
    %v6038 = vld [vmem:[%s151 + $0x988] sm:$0xff]
    %v6039 = vld [vmem:[%s151 + $0x990] sm:$0xff]
    %v6040 = vld [vmem:[%s151 + $0x998] sm:$0xff]
    %v6041 = vld [vmem:[%s151 + $0x9a0] sm:$0xff]
    %v6042 = vld [vmem:[%s151 + $0x9a8] sm:$0xff]
    %v6043 = vld [vmem:[%s151 + $0x9b0] sm:$0xff]
    %v6044 = vld [vmem:[%s151 + $0x9b8] sm:$0xff]
    %v6045 = vld [vmem:[%s151 + $0x9c0] sm:$0xff]
    %v6046 = vld [vmem:[%s151 + $0x9c8] sm:$0xff]
    %v6047 = vld [vmem:[%s151 + $0x9d0] sm:$0xff]
    %v6048 = vld [vmem:[%s151 + $0x9d8] sm:$0xff]
    %v6049 = vld [vmem:[%s151 + $0x9e0] sm:$0xff]
    %v6050 = vld [vmem:[%s151 + $0x9e8] sm:$0xff]
    %v6051 = vld [vmem:[%s151 + $0x9f0] sm:$0xff]
    %v6052 = vld [vmem:[%s151 + $0x9f8] sm:$0xff]
    %v6053 = vld [vmem:[%s151 + $0xa00] sm:$0xff]
    %v6054 = vld [vmem:[%s151 + $0xa08] sm:$0xff]
    %v6055 = vld [vmem:[%s151 + $0xa10] sm:$0xff]
    %v6056 = vld [vmem:[%s151 + $0xa18] sm:$0xff]
    %v6057 = vld [vmem:[%s151 + $0xa20] sm:$0xff]
    %v6058 = vld [vmem:[%s151 + $0xa28] sm:$0xff]
    %v6059 = vld [vmem:[%s151 + $0xa30] sm:$0xff]
    %v6060 = vld [vmem:[%s151 + $0xa38] sm:$0xff]
    %v6061 = vld [vmem:[%s151 + $0xa40] sm:$0xff]
    %v6062 = vld [vmem:[%s151 + $0xa48] sm:$0xff]
    %v6063 = vld [vmem:[%s151 + $0xa50] sm:$0xff]
    %v6064 = vld [vmem:[%s151 + $0xa58] sm:$0xff]
    %v6065 = vld [vmem:[%s151 + $0xa60] sm:$0xff]
    %v6066 = vld [vmem:[%s151 + $0xa68] sm:$0xff]
    %v6067 = vld [vmem:[%s151 + $0xa70] sm:$0xff]
    %v6068 = vld [vmem:[%s151 + $0xa78] sm:$0xff]
    %v6069 = vld [vmem:[%s151 + $0xa80] sm:$0xff]
    %v6070 = vld [vmem:[%s151 + $0xa88] sm:$0xff]
    %v6071 = vld [vmem:[%s151 + $0xa90] sm:$0xff]
    %v6072 = vld [vmem:[%s151 + $0xa98] sm:$0xff]
    %v6073 = vld [vmem:[%s151 + $0xaa0] sm:$0xff]
    %v6074 = vld [vmem:[%s151 + $0xaa8] sm:$0xff]
    %v6075 = vld [vmem:[%s151 + $0xab0] sm:$0xff]
    %v6076 = vld [vmem:[%s151 + $0xab8] sm:$0xff]
    %v6077 = vld [vmem:[%s151 + $0xac0] sm:$0xff]
    %v6078 = vld [vmem:[%s151 + $0xac8] sm:$0xff]
    %v6079 = vld [vmem:[%s151 + $0xad0] sm:$0xff]
    %v6080 = vld [vmem:[%s151 + $0xad8] sm:$0xff]
    %v6081 = vld [vmem:[%s151 + $0xae0] sm:$0xff]
    %v6082 = vld [vmem:[%s151 + $0xae8] sm:$0xff]
    %v6083 = vld [vmem:[%s151 + $0xaf0] sm:$0xff]
    %v6084 = vld [vmem:[%s151 + $0xaf8] sm:$0xff]
    %v6085 = vld [vmem:[%s151 + $0xb00] sm:$0xff]
    %v6086 = vld [vmem:[%s151 + $0xb08] sm:$0xff]
    %v6087 = vld [vmem:[%s151 + $0xb10] sm:$0xff]
    %v6088 = vld [vmem:[%s151 + $0xb18] sm:$0xff]
    %v6089 = vld [vmem:[%s151 + $0xb20] sm:$0xff]
    %v6090 = vld [vmem:[%s151 + $0xb28] sm:$0xff]
    %v6091 = vld [vmem:[%s151 + $0xb30] sm:$0xff]
    %v6092 = vld [vmem:[%s151 + $0xb38] sm:$0xff]
    %v6093 = vld [vmem:[%s151 + $0xb40] sm:$0xff]
    %v6094 = vld [vmem:[%s151 + $0xb48] sm:$0xff]
    %v6095 = vld [vmem:[%s151 + $0xb50] sm:$0xff]
    %v6096 = vld [vmem:[%s151 + $0xb58] sm:$0xff]
    %v6097 = vld [vmem:[%s151 + $0xb60] sm:$0xff]
    %v6098 = vld [vmem:[%s151 + $0xb68] sm:$0xff]
    %v6099 = vld [vmem:[%s151 + $0xb70] sm:$0xff]
    %v6100 = vld [vmem:[%s151 + $0xb78] sm:$0xff]
    %v6101 = vld [vmem:[%s151 + $0xb80] sm:$0xff]
    %v6102 = vld [vmem:[%s151 + $0xb88] sm:$0xff]
    %v6103 = vld [vmem:[%s151 + $0xb90] sm:$0xff]
    %v6104 = vld [vmem:[%s151 + $0xb98] sm:$0xff]
    %v6105 = vld [vmem:[%s151 + $0xba0] sm:$0xff]
    %v6106 = vld [vmem:[%s151 + $0xba8] sm:$0xff]
    %v6107 = vld [vmem:[%s151 + $0xbb0] sm:$0xff]
    %v6108 = vld [vmem:[%s151 + $0xbb8] sm:$0xff]
    %v6109 = vld [vmem:[%s151 + $0xbc0] sm:$0xff]
    %v6110 = vld [vmem:[%s151 + $0xbc8] sm:$0xff]
    %v6111 = vld [vmem:[%s151 + $0xbd0] sm:$0xff]
    %v6112 = vld [vmem:[%s151 + $0xbd8] sm:$0xff]
    %v6113 = vld [vmem:[%s151 + $0xbe0] sm:$0xff]
    %v6114 = vld [vmem:[%s151 + $0xbe8] sm:$0xff]
    %v6115 = vld [vmem:[%s151 + $0xbf0] sm:$0xff]
    %v6116 = vld [vmem:[%s151 + $0xbf8] sm:$0xff]
    %v6117 = vld [vmem:[%s151 + $0xc00] sm:$0xff]
    %v6118 = vld [vmem:[%s151 + $0xc08] sm:$0xff]
    %v6119 = vld [vmem:[%s151 + $0xc10] sm:$0xff]
    %v6120 = vld [vmem:[%s151 + $0xc18] sm:$0xff]
    %v6121 = vld [vmem:[%s151 + $0xc20] sm:$0xff]
    %v6122 = vld [vmem:[%s151 + $0xc28] sm:$0xff]
    %v6123 = vld [vmem:[%s151 + $0xc30] sm:$0xff]
    %v6124 = vld [vmem:[%s151 + $0xc38] sm:$0xff]
    %v6125 = vld [vmem:[%s151 + $0xc40] sm:$0xff]
    %v6126 = vld [vmem:[%s151 + $0xc48] sm:$0xff]
    %v6127 = vld [vmem:[%s151 + $0xc50] sm:$0xff]
    %v6128 = vld [vmem:[%s151 + $0xc58] sm:$0xff]
    %v6129 = vld [vmem:[%s151 + $0xc60] sm:$0xff]
    %v6130 = vld [vmem:[%s151 + $0xc68] sm:$0xff]
    %v6131 = vld [vmem:[%s151 + $0xc70] sm:$0xff]
    %v6132 = vld [vmem:[%s151 + $0xc78] sm:$0xff]
    %v6133 = vld [vmem:[%s151 + $0xc80] sm:$0xff]
    %v6134 = vld [vmem:[%s151 + $0xc88] sm:$0xff]
    %v6135 = vld [vmem:[%s151 + $0xc90] sm:$0xff]
    %v6136 = vld [vmem:[%s151 + $0xc98] sm:$0xff]
    %v6137 = vld [vmem:[%s151 + $0xca0] sm:$0xff]
    %v6138 = vld [vmem:[%s151 + $0xca8] sm:$0xff]
    %v6139 = vld [vmem:[%s151 + $0xcb0] sm:$0xff]
    %v6140 = vld [vmem:[%s151 + $0xcb8] sm:$0xff]
    %v6141 = vld [vmem:[%s151 + $0xcc0] sm:$0xff]
    %v6142 = vld [vmem:[%s151 + $0xcc8] sm:$0xff]
    %v6143 = vld [vmem:[%s151 + $0xcd0] sm:$0xff]
    %v6144 = vld [vmem:[%s151 + $0xcd8] sm:$0xff]
    %v6145 = vld [vmem:[%s151 + $0xce0] sm:$0xff]
    %v6146 = vld [vmem:[%s151 + $0xce8] sm:$0xff]
    %v6147 = vld [vmem:[%s151 + $0xcf0] sm:$0xff]
    %v6148 = vld [vmem:[%s151 + $0xcf8] sm:$0xff]
    %v6149 = vld [vmem:[%s151 + $0xd00] sm:$0xff]
    %v6150 = vld [vmem:[%s151 + $0xd08] sm:$0xff]
    %v6151 = vld [vmem:[%s151 + $0xd10] sm:$0xff]
    %v6152 = vld [vmem:[%s151 + $0xd18] sm:$0xff]
    %v6153 = vld [vmem:[%s151 + $0xd20] sm:$0xff]
    %v6154 = vld [vmem:[%s151 + $0xd28] sm:$0xff]
    %v6155 = vld [vmem:[%s151 + $0xd30] sm:$0xff]
    %v6156 = vld [vmem:[%s151 + $0xd38] sm:$0xff]
    %v6157 = vld [vmem:[%s151 + $0xd40] sm:$0xff]
    %v6158 = vld [vmem:[%s151 + $0xd48] sm:$0xff]
    %v6159 = vld [vmem:[%s151 + $0xd50] sm:$0xff]
    %v6160 = vld [vmem:[%s151 + $0xd58] sm:$0xff]
    %v6161 = vld [vmem:[%s151 + $0xd60] sm:$0xff]
    %v6162 = vld [vmem:[%s151 + $0xd68] sm:$0xff]
    %v6163 = vld [vmem:[%s151 + $0xd70] sm:$0xff]
    %v6164 = vld [vmem:[%s151 + $0xd78] sm:$0xff]
    %v6165 = vld [vmem:[%s151 + $0xd80] sm:$0xff]
    %v6166 = vld [vmem:[%s151 + $0xd88] sm:$0xff]
    %v6167 = vld [vmem:[%s151 + $0xd90] sm:$0xff]
    %v6168 = vld [vmem:[%s151 + $0xd98] sm:$0xff]
    %v6169 = vld [vmem:[%s151 + $0xda0] sm:$0xff]
    %v6170 = vld [vmem:[%s151 + $0xda8] sm:$0xff]
    %v6171 = vld [vmem:[%s151 + $0xdb0] sm:$0xff]
    %v6172 = vld [vmem:[%s151 + $0xdb8] sm:$0xff]
    %v6173 = vld [vmem:[%s151 + $0xdc0] sm:$0xff]
    %v6174 = vld [vmem:[%s151 + $0xdc8] sm:$0xff]
    %v6175 = vld [vmem:[%s151 + $0xdd0] sm:$0xff]
    %v6176 = vld [vmem:[%s151 + $0xdd8] sm:$0xff]
    %v6177 = vld [vmem:[%s151 + $0xde0] sm:$0xff]
    %v6178 = vld [vmem:[%s151 + $0xde8] sm:$0xff]
    %v6179 = vld [vmem:[%s151 + $0xdf0] sm:$0xff]
    %v6180 = vld [vmem:[%s151 + $0xdf8] sm:$0xff]
    %v6181 = vld [vmem:[%s151 + $0xe00] sm:$0xff]
    %v6182 = vld [vmem:[%s151 + $0xe08] sm:$0xff]
    %v6183 = vld [vmem:[%s151 + $0xe10] sm:$0xff]
    %v6184 = vld [vmem:[%s151 + $0xe18] sm:$0xff]
    %v6185 = vld [vmem:[%s151 + $0xe20] sm:$0xff]
    %v6186 = vld [vmem:[%s151 + $0xe28] sm:$0xff]
    %v6187 = vld [vmem:[%s151 + $0xe30] sm:$0xff]
    %v6188 = vld [vmem:[%s151 + $0xe38] sm:$0xff]
    %v6189 = vld [vmem:[%s151 + $0xe40] sm:$0xff]
    %v6190 = vld [vmem:[%s151 + $0xe48] sm:$0xff]
    %v6191 = vld [vmem:[%s151 + $0xe50] sm:$0xff]
    %v6192 = vld [vmem:[%s151 + $0xe58] sm:$0xff]
    %v6193 = vld [vmem:[%s151 + $0xe60] sm:$0xff]
    %v6194 = vld [vmem:[%s151 + $0xe68] sm:$0xff]
    %v6195 = vld [vmem:[%s151 + $0xe70] sm:$0xff]
    %v6196 = vld [vmem:[%s151 + $0xe78] sm:$0xff]
    %v6197 = vld [vmem:[%s151 + $0xe80] sm:$0xff]
    %v6198 = vld [vmem:[%s151 + $0xe88] sm:$0xff]
    %v6199 = vld [vmem:[%s151 + $0xe90] sm:$0xff]
    %v6200 = vld [vmem:[%s151 + $0xe98] sm:$0xff]
    %v6201 = vld [vmem:[%s151 + $0xea0] sm:$0xff]
    %v6202 = vld [vmem:[%s151 + $0xea8] sm:$0xff]
    %v6203 = vld [vmem:[%s151 + $0xeb0] sm:$0xff]
    %v6204 = vld [vmem:[%s151 + $0xeb8] sm:$0xff]
    %v6205 = vld [vmem:[%s151 + $0xec0] sm:$0xff]
    %v6206 = vld [vmem:[%s151 + $0xec8] sm:$0xff]
    %v6207 = vld [vmem:[%s151 + $0xed0] sm:$0xff]
    %v6208 = vld [vmem:[%s151 + $0xed8] sm:$0xff]
    %v6209 = vld [vmem:[%s151 + $0xee0] sm:$0xff]
    %v6210 = vld [vmem:[%s151 + $0xee8] sm:$0xff]
    %v6211 = vld [vmem:[%s151 + $0xef0] sm:$0xff]
    %v6212 = vld [vmem:[%s151 + $0xef8] sm:$0xff]
    %v6213 = vld [vmem:[%s151 + $0xf00] sm:$0xff]
    %v6214 = vld [vmem:[%s151 + $0xf08] sm:$0xff]
    %v6215 = vld [vmem:[%s151 + $0xf10] sm:$0xff]
    %v6216 = vld [vmem:[%s151 + $0xf18] sm:$0xff]
    %v6217 = vld [vmem:[%s151 + $0xf20] sm:$0xff]
    %v6218 = vld [vmem:[%s151 + $0xf28] sm:$0xff]
    %v6219 = vld [vmem:[%s151 + $0xf30] sm:$0xff]
    %v6220 = vld [vmem:[%s151 + $0xf38] sm:$0xff]
    %v6221 = vld [vmem:[%s151 + $0xf40] sm:$0xff]
    %v6222 = vld [vmem:[%s151 + $0xf48] sm:$0xff]
    %v6223 = vld [vmem:[%s151 + $0xf50] sm:$0xff]
    %v6224 = vld [vmem:[%s151 + $0xf58] sm:$0xff]
    %v6225 = vld [vmem:[%s151 + $0xf60] sm:$0xff]
    %v6226 = vld [vmem:[%s151 + $0xf68] sm:$0xff]
    %v6227 = vld [vmem:[%s151 + $0xf70] sm:$0xff]
    %v6228 = vld [vmem:[%s151 + $0xf78] sm:$0xff]
    %v6229 = vld [vmem:[%s151 + $0xf80] sm:$0xff]
    %v6230 = vld [vmem:[%s151 + $0xf88] sm:$0xff]
    %v6231 = vld [vmem:[%s151 + $0xf90] sm:$0xff]
    %v6232 = vld [vmem:[%s151 + $0xf98] sm:$0xff]
    %v6233 = vld [vmem:[%s151 + $0xfa0] sm:$0xff]
    %v6234 = vld [vmem:[%s151 + $0xfa8] sm:$0xff]
    %v6235 = vld [vmem:[%s151 + $0xfb0] sm:$0xff]
    %v6236 = vld [vmem:[%s151 + $0xfb8] sm:$0xff]
    %v6237 = vld [vmem:[%s151 + $0xfc0] sm:$0xff]
    %v6238 = vld [vmem:[%s151 + $0xfc8] sm:$0xff]
    %v6239 = vld [vmem:[%s151 + $0xfd0] sm:$0xff]
    %v6240 = vld [vmem:[%s151 + $0xfd8] sm:$0xff]
    %v6241 = vld [vmem:[%s151 + $0xfe0] sm:$0xff]
    %v6242 = vld [vmem:[%s151 + $0xfe8] sm:$0xff]
    %v6243 = vld [vmem:[%s151 + $0xff0] sm:$0xff]
    %v6244 = vld [vmem:[%s151 + $0xff8] sm:$0xff]
    %v6245 = vld [vmem:[#allocation15 + $0x8] sm:$0xff]
    %v6247 = vlaneseq
    %v6248 = vshrl.u32 %v6247, 7
    %v6249 = vsub.s32 0, %v6248
    %v6250 = vrot.slane %v6245, %v6249
    %v6251 = vlaneseq
    %v6252 = vshrl.u32 %v6251, 7
    %v6253 = vsub.s32 1, %v6252
    %v6254 = vrot.slane %v6245, %v6253
    %v6255 = vlaneseq
    %v6256 = vshrl.u32 %v6255, 7
    %v6257 = vsub.s32 2, %v6256
    %v6258 = vrot.slane %v6245, %v6257
    %v6259 = vlaneseq
    %v6260 = vshrl.u32 %v6259, 7
    %v6261 = vsub.s32 3, %v6260
    %v6262 = vrot.slane %v6245, %v6261
    %v6263 = vlaneseq
    %v6264 = vshrl.u32 %v6263, 7
    %v6265 = vsub.s32 4, %v6264
    %v6266 = vrot.slane %v6245, %v6265
    %v6267 = vlaneseq
    %v6268 = vshrl.u32 %v6267, 7
    %v6269 = vsub.s32 5, %v6268
    %v6270 = vrot.slane %v6245, %v6269
    %v6271 = vlaneseq
    %v6272 = vshrl.u32 %v6271, 7
    %v6273 = vsub.s32 6, %v6272
    %v6274 = vrot.slane %v6245, %v6273
    %v6275 = vlaneseq
    %v6276 = vshrl.u32 %v6275, 7
    %v6277 = vsub.s32 7, %v6276
    %v6278 = vrot.slane %v6245, %v6277
    %6287 = vmatprep.subr.bf16.mxu0 %v5734
    %6288 = vmatpush1.bf16.msra.mxu0 %v5733
    %6289 = vmatprep.subr.bf16.mxu0 %v5742
    %6290 = vmatpush1.bf16.msra.mxu0 %v5741
    %6291 = vmatprep.subr.bf16.mxu0 %v5750
    %6292 = vmatpush1.bf16.msra.mxu0 %v5749
    %6293 = vmatprep.subr.bf16.mxu0 %v5758
    %6294 = vmatpush1.bf16.msra.mxu0 %v5757
    %6295 = vmatprep.subr.bf16.mxu0 %v5766
    %6296 = vmatpush1.bf16.msra.mxu0 %v5765
    %6297 = vmatprep.subr.bf16.mxu0 %v5774
    %6298 = vmatpush1.bf16.msra.mxu0 %v5773
    %6299 = vmatprep.subr.bf16.mxu0 %v5782
    %6300 = vmatpush1.bf16.msra.mxu0 %v5781
    %6301 = vmatprep.subr.bf16.mxu0 %v5790
    %6302 = vmatpush1.bf16.msra.mxu0 %v5789
    %6303 = vmatprep.subr.bf16.mxu0 %v5798
    %6304 = vmatpush1.bf16.msra.mxu0 %v5797
    %6305 = vmatprep.subr.bf16.mxu0 %v5806
    %6306 = vmatpush1.bf16.msra.mxu0 %v5805
    %6307 = vmatprep.subr.bf16.mxu0 %v5814
    %6308 = vmatpush1.bf16.msra.mxu0 %v5813
    %6309 = vmatprep.subr.bf16.mxu0 %v5822
    %6310 = vmatpush1.bf16.msra.mxu0 %v5821
    %6311 = vmatprep.subr.bf16.mxu0 %v5830
    %6312 = vmatpush1.bf16.msra.mxu0 %v5829
    %6313 = vmatprep.subr.bf16.mxu0 %v5838
    %6314 = vmatpush1.bf16.msra.mxu0 %v5837
    %6315 = vmatprep.subr.bf16.mxu0 %v5846
    %6316 = vmatpush1.bf16.msra.mxu0 %v5845
    %6317 = vmatprep.subr.bf16.mxu0 %v5854
    %6318 = vmatpush1.bf16.msra.mxu0 %v5853
    %6319 = vmatprep.mubr.bf16.mxu0 %v4970
    %6320 = vmatmul.mubr.bf16.gmra.mrb[0].mxu0 %v4969
    %v6321 = vpop.f32.mrb[0].mxu0
    %v6322 = vadd.f32 %v6250, %v6321
    %v6323 = vpop.f32.mrb[0].mxu0
    %v6324 = vadd.f32 %v6254, %v6323
    %v6325 = vpop.f32.mrb[0].mxu0
    %v6326 = vpop.f32.mrb[0].mxu0
    %6327 = vdwg.mxu0
    %6328 = vmatprep.subr.bf16.mxu0 %v5862
    %6329 = vmatpush1.bf16.msra.mxu0 %v5861
    %6330 = vmatprep.subr.bf16.mxu0 %v5870
    %6331 = vmatpush1.bf16.msra.mxu0 %v5869
    %6332 = vmatprep.subr.bf16.mxu0 %v5878
    %6333 = vmatpush1.bf16.msra.mxu0 %v5877
    %6334 = vmatprep.subr.bf16.mxu0 %v5886
    %6335 = vmatpush1.bf16.msra.mxu0 %v5885
    %6336 = vmatprep.subr.bf16.mxu0 %v5894
    %6337 = vmatpush1.bf16.msra.mxu0 %v5893
    %6338 = vmatprep.subr.bf16.mxu0 %v5902
    %6339 = vmatpush1.bf16.msra.mxu0 %v5901
    %6340 = vmatprep.subr.bf16.mxu0 %v5910
    %6341 = vmatpush1.bf16.msra.mxu0 %v5909
    %6342 = vmatprep.subr.bf16.mxu0 %v5918
    %6343 = vmatpush1.bf16.msra.mxu0 %v5917
    %6344 = vmatprep.subr.bf16.mxu0 %v5926
    %6345 = vmatpush1.bf16.msra.mxu0 %v5925
    %6346 = vmatprep.subr.bf16.mxu0 %v5934
    %6347 = vmatpush1.bf16.msra.mxu0 %v5933
    %6348 = vmatprep.subr.bf16.mxu0 %v5942
    %6349 = vmatpush1.bf16.msra.mxu0 %v5941
    %6350 = vmatprep.subr.bf16.mxu0 %v5950
    %6351 = vmatpush1.bf16.msra.mxu0 %v5949
    %6352 = vmatprep.subr.bf16.mxu0 %v5958
    %6353 = vmatpush1.bf16.msra.mxu0 %v5957
    %6354 = vmatprep.subr.bf16.mxu0 %v5966
    %6355 = vmatpush1.bf16.msra.mxu0 %v5965
    %6356 = vmatprep.subr.bf16.mxu0 %v5974
    %6357 = vmatpush1.bf16.msra.mxu0 %v5973
    %6358 = vmatprep.subr.bf16.mxu0 %v5982
    %6359 = vmatpush1.bf16.msra.mxu0 %v5981
    %6360 = vmatprep.mubr.bf16.mxu0 %v4972
    %6361 = vmatmul.mubr.bf16.gmra.mrb[0].mxu0 %v4971
    %v6362 = vpop.f32.mrb[0].mxu0
    %v6363 = vadd.f32 %v6322, %v6362
    %v6364 = vpop.f32.mrb[0].mxu0
    %v6365 = vadd.f32 %v6324, %v6364
    %v6366 = vpop.f32.mrb[0].mxu0
    %v6367 = vpop.f32.mrb[0].mxu0
    %6368 = vdwg.mxu0
    %6369 = vmatprep.subr.bf16.mxu0 %v5990
    %6370 = vmatpush1.bf16.msra.mxu0 %v5989
    %6371 = vmatprep.subr.bf16.mxu0 %v5998
    %6372 = vmatpush1.bf16.msra.mxu0 %v5997
    %6373 = vmatprep.subr.bf16.mxu0 %v6006
    %6374 = vmatpush1.bf16.msra.mxu0 %v6005
    %6375 = vmatprep.subr.bf16.mxu0 %v6014
    %6376 = vmatpush1.bf16.msra.mxu0 %v6013
    %6377 = vmatprep.subr.bf16.mxu0 %v6022
    %6378 = vmatpush1.bf16.msra.mxu0 %v6021
    %6379 = vmatprep.subr.bf16.mxu0 %v6030
    %6380 = vmatpush1.bf16.msra.mxu0 %v6029
    %6381 = vmatprep.subr.bf16.mxu0 %v6038
    %6382 = vmatpush1.bf16.msra.mxu0 %v6037
    %6383 = vmatprep.subr.bf16.mxu0 %v6046
    %6384 = vmatpush1.bf16.msra.mxu0 %v6045
    %6385 = vmatprep.subr.bf16.mxu0 %v6054
    %6386 = vmatpush1.bf16.msra.mxu0 %v6053
    %6387 = vmatprep.subr.bf16.mxu0 %v6062
    %6388 = vmatpush1.bf16.msra.mxu0 %v6061
    %6389 = vmatprep.subr.bf16.mxu0 %v6070
    %6390 = vmatpush1.bf16.msra.mxu0 %v6069
    %6391 = vmatprep.subr.bf16.mxu0 %v6078
    %6392 = vmatpush1.bf16.msra.mxu0 %v6077
    %6393 = vmatprep.subr.bf16.mxu0 %v6086
    %6394 = vmatpush1.bf16.msra.mxu0 %v6085
    %6395 = vmatprep.subr.bf16.mxu0 %v6094
    %6396 = vmatpush1.bf16.msra.mxu0 %v6093
    %6397 = vmatprep.subr.bf16.mxu0 %v6102
    %6398 = vmatpush1.bf16.msra.mxu0 %v6101
    %6399 = vmatprep.subr.bf16.mxu0 %v6110
    %6400 = vmatpush1.bf16.msra.mxu0 %v6109
    %6401 = vmatprep.mubr.bf16.mxu0 %v4974
    %6402 = vmatmul.mubr.bf16.gmra.mrb[0].mxu0 %v4973
    %v6403 = vpop.f32.mrb[0].mxu0
    %v6404 = vadd.f32 %v6363, %v6403
    %v6405 = vpop.f32.mrb[0].mxu0
    %v6406 = vadd.f32 %v6365, %v6405
    %v6407 = vpop.f32.mrb[0].mxu0
    %v6408 = vpop.f32.mrb[0].mxu0
    %6409 = vdwg.mxu0
    %6410 = vmatprep.subr.bf16.mxu0 %v6118
    %6411 = vmatpush1.bf16.msra.mxu0 %v6117
    %6412 = vmatprep.subr.bf16.mxu0 %v6126
    %6413 = vmatpush1.bf16.msra.mxu0 %v6125
    %6414 = vmatprep.subr.bf16.mxu0 %v6134
    %6415 = vmatpush1.bf16.msra.mxu0 %v6133
    %6416 = vmatprep.subr.bf16.mxu0 %v6142
    %6417 = vmatpush1.bf16.msra.mxu0 %v6141
    %6418 = vmatprep.subr.bf16.mxu0 %v6150
    %6419 = vmatpush1.bf16.msra.mxu0 %v6149
    %6420 = vmatprep.subr.bf16.mxu0 %v6158
    %6421 = vmatpush1.bf16.msra.mxu0 %v6157
    %6422 = vmatprep.subr.bf16.mxu0 %v6166
    %6423 = vmatpush1.bf16.msra.mxu0 %v6165
    %6424 = vmatprep.subr.bf16.mxu0 %v6174
    %6425 = vmatpush1.bf16.msra.mxu0 %v6173
    %6426 = vmatprep.subr.bf16.mxu0 %v6182
    %6427 = vmatpush1.bf16.msra.mxu0 %v6181
    %6428 = vmatprep.subr.bf16.mxu0 %v6190
    %6429 = vmatpush1.bf16.msra.mxu0 %v6189
    %6430 = vmatprep.subr.bf16.mxu0 %v6198
    %6431 = vmatpush1.bf16.msra.mxu0 %v6197
    %6432 = vmatprep.subr.bf16.mxu0 %v6206
    %6433 = vmatpush1.bf16.msra.mxu0 %v6205
    %6434 = vmatprep.subr.bf16.mxu0 %v6214
    %6435 = vmatpush1.bf16.msra.mxu0 %v6213
    %6436 = vmatprep.subr.bf16.mxu0 %v6222
    %6437 = vmatpush1.bf16.msra.mxu0 %v6221
    %6438 = vmatprep.subr.bf16.mxu0 %v6230
    %6439 = vmatpush1.bf16.msra.mxu0 %v6229
    %6440 = vmatprep.subr.bf16.mxu0 %v6238
    %6441 = vmatpush1.bf16.msra.mxu0 %v6237
    %6442 = vmatprep.mubr.bf16.mxu0 %v4976
    %6443 = vmatmul.mubr.bf16.gmra.mrb[0].mxu0 %v4975
    %v6444 = vpop.f32.mrb[0].mxu0
    %v6445 = vadd.f32 %v6404, %v6444
    %v6446 = vpop.f32.mrb[0].mxu0
    %v6447 = vadd.f32 %v6406, %v6446
    %v6448 = vpop.f32.mrb[0].mxu0
    %v6449 = vpop.f32.mrb[0].mxu0
    %6450 = vdwg.mxu0
    %6451 = vmatprep.subr.bf16.mxu0 %v5736
    %6452 = vmatpush1.bf16.msra.mxu0 %v5735
    %6453 = vmatprep.subr.bf16.mxu0 %v5744
    %6454 = vmatpush1.bf16.msra.mxu0 %v5743
    %6455 = vmatprep.subr.bf16.mxu0 %v5752
    %6456 = vmatpush1.bf16.msra.mxu0 %v5751
    %6457 = vmatprep.subr.bf16.mxu0 %v5760
    %6458 = vmatpush1.bf16.msra.mxu0 %v5759
    %6459 = vmatprep.subr.bf16.mxu0 %v5768
    %6460 = vmatpush1.bf16.msra.mxu0 %v5767
    %6461 = vmatprep.subr.bf16.mxu0 %v5776
    %6462 = vmatpush1.bf16.msra.mxu0 %v5775
    %6463 = vmatprep.subr.bf16.mxu0 %v5784
    %6464 = vmatpush1.bf16.msra.mxu0 %v5783
    %6465 = vmatprep.subr.bf16.mxu0 %v5792
    %6466 = vmatpush1.bf16.msra.mxu0 %v5791
    %6467 = vmatprep.subr.bf16.mxu0 %v5800
    %6468 = vmatpush1.bf16.msra.mxu0 %v5799
    %6469 = vmatprep.subr.bf16.mxu0 %v5808
    %6470 = vmatpush1.bf16.msra.mxu0 %v5807
    %6471 = vmatprep.subr.bf16.mxu0 %v5816
    %6472 = vmatpush1.bf16.msra.mxu0 %v5815
    %6473 = vmatprep.subr.bf16.mxu0 %v5824
    %6474 = vmatpush1.bf16.msra.mxu0 %v5823
    %6475 = vmatprep.subr.bf16.mxu0 %v5832
    %6476 = vmatpush1.bf16.msra.mxu0 %v5831
    %6477 = vmatprep.subr.bf16.mxu0 %v5840
    %6478 = vmatpush1.bf16.msra.mxu0 %v5839
    %6479 = vmatprep.subr.bf16.mxu0 %v5848
    %6480 = vmatpush1.bf16.msra.mxu0 %v5847
    %6481 = vmatprep.subr.bf16.mxu0 %v5856
    %6482 = vmatpush1.bf16.msra.mxu0 %v5855
    %6483 = vmatprep.mubr.bf16.mxu0 %v4970
    %6484 = vmatmul.mubr.bf16.gmra.mrb[0].mxu0 %v4969
    %v6485 = vpop.f32.mrb[0].mxu0
    %v6486 = vadd.f32 %v6258, %v6485
    %v6487 = vpop.f32.mrb[0].mxu0
    %v6488 = vadd.f32 %v6262, %v6487
    %v6489 = vpop.f32.mrb[0].mxu0
    %v6490 = vpop.f32.mrb[0].mxu0
    %6491 = vdwg.mxu0
    %6492 = vmatprep.subr.bf16.mxu0 %v5864
    %6493 = vmatpush1.bf16.msra.mxu0 %v5863
    %6494 = vmatprep.subr.bf16.mxu0 %v5872
    %6495 = vmatpush1.bf16.msra.mxu0 %v5871
    %6496 = vmatprep.subr.bf16.mxu0 %v5880
    %6497 = vmatpush1.bf16.msra.mxu0 %v5879
    %6498 = vmatprep.subr.bf16.mxu0 %v5888
    %6499 = vmatpush1.bf16.msra.mxu0 %v5887
    %6500 = vmatprep.subr.bf16.mxu0 %v5896
    %6501 = vmatpush1.bf16.msra.mxu0 %v5895
    %6502 = vmatprep.subr.bf16.mxu0 %v5904
    %6503 = vmatpush1.bf16.msra.mxu0 %v5903
    %6504 = vmatprep.subr.bf16.mxu0 %v5912
    %6505 = vmatpush1.bf16.msra.mxu0 %v5911
    %6506 = vmatprep.subr.bf16.mxu0 %v5920
    %6507 = vmatpush1.bf16.msra.mxu0 %v5919
    %6508 = vmatprep.subr.bf16.mxu0 %v5928
    %6509 = vmatpush1.bf16.msra.mxu0 %v5927
    %6510 = vmatprep.subr.bf16.mxu0 %v5936
    %6511 = vmatpush1.bf16.msra.mxu0 %v5935
    %6512 = vmatprep.subr.bf16.mxu0 %v5944
    %6513 = vmatpush1.bf16.msra.mxu0 %v5943
    %6514 = vmatprep.subr.bf16.mxu0 %v5952
    %6515 = vmatpush1.bf16.msra.mxu0 %v5951
    %6516 = vmatprep.subr.bf16.mxu0 %v5960
    %6517 = vmatpush1.bf16.msra.mxu0 %v5959
    %6518 = vmatprep.subr.bf16.mxu0 %v5968
    %6519 = vmatpush1.bf16.msra.mxu0 %v5967
    %6520 = vmatprep.subr.bf16.mxu0 %v5976
    %6521 = vmatpush1.bf16.msra.mxu0 %v5975
    %6522 = vmatprep.subr.bf16.mxu0 %v5984
    %6523 = vmatpush1.bf16.msra.mxu0 %v5983
    %6524 = vmatprep.mubr.bf16.mxu0 %v4972
    %6525 = vmatmul.mubr.bf16.gmra.mrb[0].mxu0 %v4971
    %v6526 = vpop.f32.mrb[0].mxu0
    %v6527 = vadd.f32 %v6486, %v6526
    %v6528 = vpop.f32.mrb[0].mxu0
    %v6529 = vadd.f32 %v6488, %v6528
    %v6530 = vpop.f32.mrb[0].mxu0
    %v6531 = vpop.f32.mrb[0].mxu0
    %6532 = vdwg.mxu0
    %6533 = vmatprep.subr.bf16.mxu0 %v5992
    %6534 = vmatpush1.bf16.msra.mxu0 %v5991
    %6535 = vmatprep.subr.bf16.mxu0 %v6000
    %6536 = vmatpush1.bf16.msra.mxu0 %v5999
    %6537 = vmatprep.subr.bf16.mxu0 %v6008
    %6538 = vmatpush1.bf16.msra.mxu0 %v6007
    %6539 = vmatprep.subr.bf16.mxu0 %v6016
    %6540 = vmatpush1.bf16.msra.mxu0 %v6015
    %6541 = vmatprep.subr.bf16.mxu0 %v6024
    %6542 = vmatpush1.bf16.msra.mxu0 %v6023
    %6543 = vmatprep.subr.bf16.mxu0 %v6032
    %6544 = vmatpush1.bf16.msra.mxu0 %v6031
    %6545 = vmatprep.subr.bf16.mxu0 %v6040
    %6546 = vmatpush1.bf16.msra.mxu0 %v6039
    %6547 = vmatprep.subr.bf16.mxu0 %v6048
    %6548 = vmatpush1.bf16.msra.mxu0 %v6047
    %6549 = vmatprep.subr.bf16.mxu0 %v6056
    %6550 = vmatpush1.bf16.msra.mxu0 %v6055
    %6551 = vmatprep.subr.bf16.mxu0 %v6064
    %6552 = vmatpush1.bf16.msra.mxu0 %v6063
    %6553 = vmatprep.subr.bf16.mxu0 %v6072
    %6554 = vmatpush1.bf16.msra.mxu0 %v6071
    %6555 = vmatprep.subr.bf16.mxu0 %v6080
    %6556 = vmatpush1.bf16.msra.mxu0 %v6079
    %6557 = vmatprep.subr.bf16.mxu0 %v6088
    %6558 = vmatpush1.bf16.msra.mxu0 %v6087
    %6559 = vmatprep.subr.bf16.mxu0 %v6096
    %6560 = vmatpush1.bf16.msra.mxu0 %v6095
    %6561 = vmatprep.subr.bf16.mxu0 %v6104
    %6562 = vmatpush1.bf16.msra.mxu0 %v6103
    %6563 = vmatprep.subr.bf16.mxu0 %v6112
    %6564 = vmatpush1.bf16.msra.mxu0 %v6111
    %6565 = vmatprep.mubr.bf16.mxu0 %v4974
    %6566 = vmatmul.mubr.bf16.gmra.mrb[0].mxu0 %v4973
    %v6567 = vpop.f32.mrb[0].mxu0
    %v6568 = vadd.f32 %v6527, %v6567
    %v6569 = vpop.f32.mrb[0].mxu0
    %v6570 = vadd.f32 %v6529, %v6569
    %v6571 = vpop.f32.mrb[0].mxu0
    %v6572 = vpop.f32.mrb[0].mxu0
    %6573 = vdwg.mxu0
    %6574 = vmatprep.subr.bf16.mxu0 %v6120
    %6575 = vmatpush1.bf16.msra.mxu0 %v6119
    %6576 = vmatprep.subr.bf16.mxu0 %v6128
    %6577 = vmatpush1.bf16.msra.mxu0 %v6127
    %6578 = vmatprep.subr.bf16.mxu0 %v6136
    %6579 = vmatpush1.bf16.msra.mxu0 %v6135
    %6580 = vmatprep.subr.bf16.mxu0 %v6144
    %6581 = vmatpush1.bf16.msra.mxu0 %v6143
    %6582 = vmatprep.subr.bf16.mxu0 %v6152
    %6583 = vmatpush1.bf16.msra.mxu0 %v6151
    %6584 = vmatprep.subr.bf16.mxu0 %v6160
    %6585 = vmatpush1.bf16.msra.mxu0 %v6159
    %6586 = vmatprep.subr.bf16.mxu0 %v6168
    %6587 = vmatpush1.bf16.msra.mxu0 %v6167
    %6588 = vmatprep.subr.bf16.mxu0 %v6176
    %6589 = vmatpush1.bf16.msra.mxu0 %v6175
    %6590 = vmatprep.subr.bf16.mxu0 %v6184
    %6591 = vmatpush1.bf16.msra.mxu0 %v6183
    %6592 = vmatprep.subr.bf16.mxu0 %v6192
    %6593 = vmatpush1.bf16.msra.mxu0 %v6191
    %6594 = vmatprep.subr.bf16.mxu0 %v6200
    %6595 = vmatpush1.bf16.msra.mxu0 %v6199
    %6596 = vmatprep.subr.bf16.mxu0 %v6208
    %6597 = vmatpush1.bf16.msra.mxu0 %v6207
    %6598 = vmatprep.subr.bf16.mxu0 %v6216
    %6599 = vmatpush1.bf16.msra.mxu0 %v6215
    %6600 = vmatprep.subr.bf16.mxu0 %v6224
    %6601 = vmatpush1.bf16.msra.mxu0 %v6223
    %6602 = vmatprep.subr.bf16.mxu0 %v6232
    %6603 = vmatpush1.bf16.msra.mxu0 %v6231
    %6604 = vmatprep.subr.bf16.mxu0 %v6240
    %6605 = vmatpush1.bf16.msra.mxu0 %v6239
    %6606 = vmatprep.mubr.bf16.mxu0 %v4976
    %6607 = vmatmul.mubr.bf16.gmra.mrb[0].mxu0 %v4975
    %v6608 = vpop.f32.mrb[0].mxu0
    %v6609 = vadd.f32 %v6568, %v6608
    %v6610 = vpop.f32.mrb[0].mxu0
    %v6611 = vadd.f32 %v6570, %v6610
    %v6612 = vpop.f32.mrb[0].mxu0
    %v6613 = vpop.f32.mrb[0].mxu0
    %6614 = vdwg.mxu0
    %6615 = vmatprep.subr.bf16.mxu0 %v5738
    %6616 = vmatpush1.bf16.msra.mxu0 %v5737
    %6617 = vmatprep.subr.bf16.mxu0 %v5746
    %6618 = vmatpush1.bf16.msra.mxu0 %v5745
    %6619 = vmatprep.subr.bf16.mxu0 %v5754
    %6620 = vmatpush1.bf16.msra.mxu0 %v5753
    %6621 = vmatprep.subr.bf16.mxu0 %v5762
    %6622 = vmatpush1.bf16.msra.mxu0 %v5761
    %6623 = vmatprep.subr.bf16.mxu0 %v5770
    %6624 = vmatpush1.bf16.msra.mxu0 %v5769
    %6625 = vmatprep.subr.bf16.mxu0 %v5778
    %6626 = vmatpush1.bf16.msra.mxu0 %v5777
    %6627 = vmatprep.subr.bf16.mxu0 %v5786
    %6628 = vmatpush1.bf16.msra.mxu0 %v5785
    %6629 = vmatprep.subr.bf16.mxu0 %v5794
    %6630 = vmatpush1.bf16.msra.mxu0 %v5793
    %6631 = vmatprep.subr.bf16.mxu0 %v5802
    %6632 = vmatpush1.bf16.msra.mxu0 %v5801
    %6633 = vmatprep.subr.bf16.mxu0 %v5810
    %6634 = vmatpush1.bf16.msra.mxu0 %v5809
    %6635 = vmatprep.subr.bf16.mxu0 %v5818
    %6636 = vmatpush1.bf16.msra.mxu0 %v5817
    %6637 = vmatprep.subr.bf16.mxu0 %v5826
    %6638 = vmatpush1.bf16.msra.mxu0 %v5825
    %6639 = vmatprep.subr.bf16.mxu0 %v5834
    %6640 = vmatpush1.bf16.msra.mxu0 %v5833
    %6641 = vmatprep.subr.bf16.mxu0 %v5842
    %6642 = vmatpush1.bf16.msra.mxu0 %v5841
    %6643 = vmatprep.subr.bf16.mxu0 %v5850
    %6644 = vmatpush1.bf16.msra.mxu0 %v5849
    %6645 = vmatprep.subr.bf16.mxu0 %v5858
    %6646 = vmatpush1.bf16.msra.mxu0 %v5857
    %6647 = vmatprep.mubr.bf16.mxu0 %v4970
    %6648 = vmatmul.mubr.bf16.gmra.mrb[0].mxu0 %v4969
    %v6649 = vpop.f32.mrb[0].mxu0
    %v6650 = vadd.f32 %v6266, %v6649
    %v6651 = vpop.f32.mrb[0].mxu0
    %v6652 = vadd.f32 %v6270, %v6651
    %v6653 = vpop.f32.mrb[0].mxu0
    %v6654 = vpop.f32.mrb[0].mxu0
    %6655 = vdwg.mxu0
    %6656 = vmatprep.subr.bf16.mxu0 %v5866
    %6657 = vmatpush1.bf16.msra.mxu0 %v5865
    %6658 = vmatprep.subr.bf16.mxu0 %v5874
    %6659 = vmatpush1.bf16.msra.mxu0 %v5873
    %6660 = vmatprep.subr.bf16.mxu0 %v5882
    %6661 = vmatpush1.bf16.msra.mxu0 %v5881
    %6662 = vmatprep.subr.bf16.mxu0 %v5890
    %6663 = vmatpush1.bf16.msra.mxu0 %v5889
    %6664 = vmatprep.subr.bf16.mxu0 %v5898
    %6665 = vmatpush1.bf16.msra.mxu0 %v5897
    %6666 = vmatprep.subr.bf16.mxu0 %v5906
    %6667 = vmatpush1.bf16.msra.mxu0 %v5905
    %6668 = vmatprep.subr.bf16.mxu0 %v5914
    %6669 = vmatpush1.bf16.msra.mxu0 %v5913
    %6670 = vmatprep.subr.bf16.mxu0 %v5922
    %6671 = vmatpush1.bf16.msra.mxu0 %v5921
    %6672 = vmatprep.subr.bf16.mxu0 %v5930
    %6673 = vmatpush1.bf16.msra.mxu0 %v5929
    %6674 = vmatprep.subr.bf16.mxu0 %v5938
    %6675 = vmatpush1.bf16.msra.mxu0 %v5937
    %6676 = vmatprep.subr.bf16.mxu0 %v5946
    %6677 = vmatpush1.bf16.msra.mxu0 %v5945
    %6678 = vmatprep.subr.bf16.mxu0 %v5954
    %6679 = vmatpush1.bf16.msra.mxu0 %v5953
    %6680 = vmatprep.subr.bf16.mxu0 %v5962
    %6681 = vmatpush1.bf16.msra.mxu0 %v5961
    %6682 = vmatprep.subr.bf16.mxu0 %v5970
    %6683 = vmatpush1.bf16.msra.mxu0 %v5969
    %6684 = vmatprep.subr.bf16.mxu0 %v5978
    %6685 = vmatpush1.bf16.msra.mxu0 %v5977
    %6686 = vmatprep.subr.bf16.mxu0 %v5986
    %6687 = vmatpush1.bf16.msra.mxu0 %v5985
    %6688 = vmatprep.mubr.bf16.mxu0 %v4972
    %6689 = vmatmul.mubr.bf16.gmra.mrb[0].mxu0 %v4971
    %v6690 = vpop.f32.mrb[0].mxu0
    %v6691 = vadd.f32 %v6650, %v6690
    %v6692 = vpop.f32.mrb[0].mxu0
    %v6693 = vadd.f32 %v6652, %v6692
    %v6694 = vpop.f32.mrb[0].mxu0
    %v6695 = vpop.f32.mrb[0].mxu0
    %6696 = vdwg.mxu0
    %6697 = vmatprep.subr.bf16.mxu0 %v5994
    %6698 = vmatpush1.bf16.msra.mxu0 %v5993
    %6699 = vmatprep.subr.bf16.mxu0 %v6002
    %6700 = vmatpush1.bf16.msra.mxu0 %v6001
    %6701 = vmatprep.subr.bf16.mxu0 %v6010
    %6702 = vmatpush1.bf16.msra.mxu0 %v6009
    %6703 = vmatprep.subr.bf16.mxu0 %v6018
    %6704 = vmatpush1.bf16.msra.mxu0 %v6017
    %6705 = vmatprep.subr.bf16.mxu0 %v6026
    %6706 = vmatpush1.bf16.msra.mxu0 %v6025
    %6707 = vmatprep.subr.bf16.mxu0 %v6034
    %6708 = vmatpush1.bf16.msra.mxu0 %v6033
    %6709 = vmatprep.subr.bf16.mxu0 %v6042
    %6710 = vmatpush1.bf16.msra.mxu0 %v6041
    %6711 = vmatprep.subr.bf16.mxu0 %v6050
    %6712 = vmatpush1.bf16.msra.mxu0 %v6049
    %6713 = vmatprep.subr.bf16.mxu0 %v6058
    %6714 = vmatpush1.bf16.msra.mxu0 %v6057
    %6715 = vmatprep.subr.bf16.mxu0 %v6066
    %6716 = vmatpush1.bf16.msra.mxu0 %v6065
    %6717 = vmatprep.subr.bf16.mxu0 %v6074
    %6718 = vmatpush1.bf16.msra.mxu0 %v6073
    %6719 = vmatprep.subr.bf16.mxu0 %v6082
    %6720 = vmatpush1.bf16.msra.mxu0 %v6081
    %6721 = vmatprep.subr.bf16.mxu0 %v6090
    %6722 = vmatpush1.bf16.msra.mxu0 %v6089
    %6723 = vmatprep.subr.bf16.mxu0 %v6098
    %6724 = vmatpush1.bf16.msra.mxu0 %v6097
    %6725 = vmatprep.subr.bf16.mxu0 %v6106
    %6726 = vmatpush1.bf16.msra.mxu0 %v6105
    %6727 = vmatprep.subr.bf16.mxu0 %v6114
    %6728 = vmatpush1.bf16.msra.mxu0 %v6113
    %6729 = vmatprep.mubr.bf16.mxu0 %v4974
    %6730 = vmatmul.mubr.bf16.gmra.mrb[0].mxu0 %v4973
    %v6731 = vpop.f32.mrb[0].mxu0
    %v6732 = vadd.f32 %v6691, %v6731
    %v6733 = vpop.f32.mrb[0].mxu0
    %v6734 = vadd.f32 %v6693, %v6733
    %v6735 = vpop.f32.mrb[0].mxu0
    %v6736 = vpop.f32.mrb[0].mxu0
    %6737 = vdwg.mxu0
    %6738 = vmatprep.subr.bf16.mxu0 %v6122
    %6739 = vmatpush1.bf16.msra.mxu0 %v6121
    %6740 = vmatprep.subr.bf16.mxu0 %v6130
    %6741 = vmatpush1.bf16.msra.mxu0 %v6129
    %6742 = vmatprep.subr.bf16.mxu0 %v6138
    %6743 = vmatpush1.bf16.msra.mxu0 %v6137
    %6744 = vmatprep.subr.bf16.mxu0 %v6146
    %6745 = vmatpush1.bf16.msra.mxu0 %v6145
    %6746 = vmatprep.subr.bf16.mxu0 %v6154
    %6747 = vmatpush1.bf16.msra.mxu0 %v6153
    %6748 = vmatprep.subr.bf16.mxu0 %v6162
    %6749 = vmatpush1.bf16.msra.mxu0 %v6161
    %6750 = vmatprep.subr.bf16.mxu0 %v6170
    %6751 = vmatpush1.bf16.msra.mxu0 %v6169
    %6752 = vmatprep.subr.bf16.mxu0 %v6178
    %6753 = vmatpush1.bf16.msra.mxu0 %v6177
    %6754 = vmatprep.subr.bf16.mxu0 %v6186
    %6755 = vmatpush1.bf16.msra.mxu0 %v6185
    %6756 = vmatprep.subr.bf16.mxu0 %v6194
    %6757 = vmatpush1.bf16.msra.mxu0 %v6193
    %6758 = vmatprep.subr.bf16.mxu0 %v6202
    %6759 = vmatpush1.bf16.msra.mxu0 %v6201
    %6760 = vmatprep.subr.bf16.mxu0 %v6210
    %6761 = vmatpush1.bf16.msra.mxu0 %v6209
    %6762 = vmatprep.subr.bf16.mxu0 %v6218
    %6763 = vmatpush1.bf16.msra.mxu0 %v6217
    %6764 = vmatprep.subr.bf16.mxu0 %v6226
    %6765 = vmatpush1.bf16.msra.mxu0 %v6225
    %6766 = vmatprep.subr.bf16.mxu0 %v6234
    %6767 = vmatpush1.bf16.msra.mxu0 %v6233
    %6768 = vmatprep.subr.bf16.mxu0 %v6242
    %6769 = vmatpush1.bf16.msra.mxu0 %v6241
    %6770 = vmatprep.mubr.bf16.mxu0 %v4976
    %6771 = vmatmul.mubr.bf16.gmra.mrb[0].mxu0 %v4975
    %v6772 = vpop.f32.mrb[0].mxu0
    %v6773 = vadd.f32 %v6732, %v6772
    %v6774 = vpop.f32.mrb[0].mxu0
    %v6775 = vadd.f32 %v6734, %v6774
    %v6776 = vpop.f32.mrb[0].mxu0
    %v6777 = vpop.f32.mrb[0].mxu0
    %6778 = vdwg.mxu0
    %6779 = vmatprep.subr.bf16.mxu0 %v5740
    %6780 = vmatpush1.bf16.msra.mxu0 %v5739
    %6781 = vmatprep.subr.bf16.mxu0 %v5748
    %6782 = vmatpush1.bf16.msra.mxu0 %v5747
    %6783 = vmatprep.subr.bf16.mxu0 %v5756
    %6784 = vmatpush1.bf16.msra.mxu0 %v5755
    %6785 = vmatprep.subr.bf16.mxu0 %v5764
    %6786 = vmatpush1.bf16.msra.mxu0 %v5763
    %6787 = vmatprep.subr.bf16.mxu0 %v5772
    %6788 = vmatpush1.bf16.msra.mxu0 %v5771
    %6789 = vmatprep.subr.bf16.mxu0 %v5780
    %6790 = vmatpush1.bf16.msra.mxu0 %v5779
    %6791 = vmatprep.subr.bf16.mxu0 %v5788
    %6792 = vmatpush1.bf16.msra.mxu0 %v5787
    %6793 = vmatprep.subr.bf16.mxu0 %v5796
    %6794 = vmatpush1.bf16.msra.mxu0 %v5795
    %6795 = vmatprep.subr.bf16.mxu0 %v5804
    %6796 = vmatpush1.bf16.msra.mxu0 %v5803
    %6797 = vmatprep.subr.bf16.mxu0 %v5812
    %6798 = vmatpush1.bf16.msra.mxu0 %v5811
    %6799 = vmatprep.subr.bf16.mxu0 %v5820
    %6800 = vmatpush1.bf16.msra.mxu0 %v5819
    %6801 = vmatprep.subr.bf16.mxu0 %v5828
    %6802 = vmatpush1.bf16.msra.mxu0 %v5827
    %6803 = vmatprep.subr.bf16.mxu0 %v5836
    %6804 = vmatpush1.bf16.msra.mxu0 %v5835
    %6805 = vmatprep.subr.bf16.mxu0 %v5844
    %6806 = vmatpush1.bf16.msra.mxu0 %v5843
    %6807 = vmatprep.subr.bf16.mxu0 %v5852
    %6808 = vmatpush1.bf16.msra.mxu0 %v5851
    %6809 = vmatprep.subr.bf16.mxu0 %v5860
    %6810 = vmatpush1.bf16.msra.mxu0 %v5859
    %6811 = vmatprep.mubr.bf16.mxu0 %v4970
    %6812 = vmatmul.mubr.bf16.gmra.mrb[0].mxu0 %v4969
    %v6813 = vpop.f32.mrb[0].mxu0
    %v6814 = vadd.f32 %v6274, %v6813
    %v6815 = vpop.f32.mrb[0].mxu0
    %v6816 = vadd.f32 %v6278, %v6815
    %v6817 = vpop.f32.mrb[0].mxu0
    %v6818 = vpop.f32.mrb[0].mxu0
    %6819 = vdwg.mxu0
    %6820 = vmatprep.subr.bf16.mxu0 %v5868
    %6821 = vmatpush1.bf16.msra.mxu0 %v5867
    %6822 = vmatprep.subr.bf16.mxu0 %v5876
    %6823 = vmatpush1.bf16.msra.mxu0 %v5875
    %6824 = vmatprep.subr.bf16.mxu0 %v5884
    %6825 = vmatpush1.bf16.msra.mxu0 %v5883
    %6826 = vmatprep.subr.bf16.mxu0 %v5892
    %6827 = vmatpush1.bf16.msra.mxu0 %v5891
    %6828 = vmatprep.subr.bf16.mxu0 %v5900
    %6829 = vmatpush1.bf16.msra.mxu0 %v5899
    %6830 = vmatprep.subr.bf16.mxu0 %v5908
    %6831 = vmatpush1.bf16.msra.mxu0 %v5907
    %6832 = vmatprep.subr.bf16.mxu0 %v5916
    %6833 = vmatpush1.bf16.msra.mxu0 %v5915
    %6834 = vmatprep.subr.bf16.mxu0 %v5924
    %6835 = vmatpush1.bf16.msra.mxu0 %v5923
    %6836 = vmatprep.subr.bf16.mxu0 %v5932
    %6837 = vmatpush1.bf16.msra.mxu0 %v5931
    %6838 = vmatprep.subr.bf16.mxu0 %v5940
    %6839 = vmatpush1.bf16.msra.mxu0 %v5939
    %6840 = vmatprep.subr.bf16.mxu0 %v5948
    %6841 = vmatpush1.bf16.msra.mxu0 %v5947
    %6842 = vmatprep.subr.bf16.mxu0 %v5956
    %6843 = vmatpush1.bf16.msra.mxu0 %v5955
    %6844 = vmatprep.subr.bf16.mxu0 %v5964
    %6845 = vmatpush1.bf16.msra.mxu0 %v5963
    %6846 = vmatprep.subr.bf16.mxu0 %v5972
    %6847 = vmatpush1.bf16.msra.mxu0 %v5971
    %6848 = vmatprep.subr.bf16.mxu0 %v5980
    %6849 = vmatpush1.bf16.msra.mxu0 %v5979
    %6850 = vmatprep.subr.bf16.mxu0 %v5988
    %6851 = vmatpush1.bf16.msra.mxu0 %v5987
    %6852 = vmatprep.mubr.bf16.mxu0 %v4972
    %6853 = vmatmul.mubr.bf16.gmra.mrb[0].mxu0 %v4971
    %v6854 = vpop.f32.mrb[0].mxu0
    %v6855 = vadd.f32 %v6814, %v6854
    %v6856 = vpop.f32.mrb[0].mxu0
    %v6857 = vadd.f32 %v6816, %v6856
    %v6858 = vpop.f32.mrb[0].mxu0
    %v6859 = vpop.f32.mrb[0].mxu0
    %6860 = vdwg.mxu0
    %6861 = vmatprep.subr.bf16.mxu0 %v5996
    %6862 = vmatpush1.bf16.msra.mxu0 %v5995
    %6863 = vmatprep.subr.bf16.mxu0 %v6004
    %6864 = vmatpush1.bf16.msra.mxu0 %v6003
    %6865 = vmatprep.subr.bf16.mxu0 %v6012
    %6866 = vmatpush1.bf16.msra.mxu0 %v6011
    %6867 = vmatprep.subr.bf16.mxu0 %v6020
    %6868 = vmatpush1.bf16.msra.mxu0 %v6019
    %6869 = vmatprep.subr.bf16.mxu0 %v6028
    %6870 = vmatpush1.bf16.msra.mxu0 %v6027
    %6871 = vmatprep.subr.bf16.mxu0 %v6036
    %6872 = vmatpush1.bf16.msra.mxu0 %v6035
    %6873 = vmatprep.subr.bf16.mxu0 %v6044
    %6874 = vmatpush1.bf16.msra.mxu0 %v6043
    %6875 = vmatprep.subr.bf16.mxu0 %v6052
    %6876 = vmatpush1.bf16.msra.mxu0 %v6051
    %6877 = vmatprep.subr.bf16.mxu0 %v6060
    %6878 = vmatpush1.bf16.msra.mxu0 %v6059
    %6879 = vmatprep.subr.bf16.mxu0 %v6068
    %6880 = vmatpush1.bf16.msra.mxu0 %v6067
    %6881 = vmatprep.subr.bf16.mxu0 %v6076
    %6882 = vmatpush1.bf16.msra.mxu0 %v6075
    %6883 = vmatprep.subr.bf16.mxu0 %v6084
    %6884 = vmatpush1.bf16.msra.mxu0 %v6083
    %6885 = vmatprep.subr.bf16.mxu0 %v6092
    %6886 = vmatpush1.bf16.msra.mxu0 %v6091
    %6887 = vmatprep.subr.bf16.mxu0 %v6100
    %6888 = vmatpush1.bf16.msra.mxu0 %v6099
    %6889 = vmatprep.subr.bf16.mxu0 %v6108
    %6890 = vmatpush1.bf16.msra.mxu0 %v6107
    %6891 = vmatprep.subr.bf16.mxu0 %v6116
    %6892 = vmatpush1.bf16.msra.mxu0 %v6115
    %6893 = vmatprep.mubr.bf16.mxu0 %v4974
    %6894 = vmatmul.mubr.bf16.gmra.mrb[0].mxu0 %v4973
    %v6895 = vpop.f32.mrb[0].mxu0
    %v6896 = vadd.f32 %v6855, %v6895
    %v6897 = vpop.f32.mrb[0].mxu0
    %v6898 = vadd.f32 %v6857, %v6897
    %v6899 = vpop.f32.mrb[0].mxu0
    %v6900 = vpop.f32.mrb[0].mxu0
    %6901 = vdwg.mxu0
    %6902 = vmatprep.subr.bf16.mxu0 %v6124
    %6903 = vmatpush1.bf16.msra.mxu0 %v6123
    %6904 = vmatprep.subr.bf16.mxu0 %v6132
    %6905 = vmatpush1.bf16.msra.mxu0 %v6131
    %6906 = vmatprep.subr.bf16.mxu0 %v6140
    %6907 = vmatpush1.bf16.msra.mxu0 %v6139
    %6908 = vmatprep.subr.bf16.mxu0 %v6148
    %6909 = vmatpush1.bf16.msra.mxu0 %v6147
    %6910 = vmatprep.subr.bf16.mxu0 %v6156
    %6911 = vmatpush1.bf16.msra.mxu0 %v6155
    %6912 = vmatprep.subr.bf16.mxu0 %v6164
    %6913 = vmatpush1.bf16.msra.mxu0 %v6163
    %6914 = vmatprep.subr.bf16.mxu0 %v6172
    %6915 = vmatpush1.bf16.msra.mxu0 %v6171
    %6916 = vmatprep.subr.bf16.mxu0 %v6180
    %6917 = vmatpush1.bf16.msra.mxu0 %v6179
    %6918 = vmatprep.subr.bf16.mxu0 %v6188
    %6919 = vmatpush1.bf16.msra.mxu0 %v6187
    %6920 = vmatprep.subr.bf16.mxu0 %v6196
    %6921 = vmatpush1.bf16.msra.mxu0 %v6195
    %6922 = vmatprep.subr.bf16.mxu0 %v6204
    %6923 = vmatpush1.bf16.msra.mxu0 %v6203
    %6924 = vmatprep.subr.bf16.mxu0 %v6212
    %6925 = vmatpush1.bf16.msra.mxu0 %v6211
    %6926 = vmatprep.subr.bf16.mxu0 %v6220
    %6927 = vmatpush1.bf16.msra.mxu0 %v6219
    %6928 = vmatprep.subr.bf16.mxu0 %v6228
    %6929 = vmatpush1.bf16.msra.mxu0 %v6227
    %6930 = vmatprep.subr.bf16.mxu0 %v6236
    %6931 = vmatpush1.bf16.msra.mxu0 %v6235
    %6932 = vmatprep.subr.bf16.mxu0 %v6244
    %6933 = vmatpush1.bf16.msra.mxu0 %v6243
    %6934 = vmatprep.mubr.bf16.mxu0 %v4976
    %6935 = vmatmul.mubr.bf16.gmra.mrb[0].mxu0 %v4975
    %v6936 = vpop.f32.mrb[0].mxu0
    %v6937 = vadd.f32 %v6896, %v6936
    %v6938 = vpop.f32.mrb[0].mxu0
    %v6939 = vadd.f32 %v6898, %v6938
    %v6940 = vpop.f32.mrb[0].mxu0
    %v6941 = vpop.f32.mrb[0].mxu0
    %6942 = vdwg.mxu0
    %v6943 = vxor.u32 %v6445, 2147483648
    %v6944 = vxor.u32 %v6447, 2147483648
    %v6945 = vxor.u32 %v6609, 2147483648
    %v6946 = vxor.u32 %v6611, 2147483648
    %v6947 = vxor.u32 %v6773, 2147483648
    %v6948 = vxor.u32 %v6775, 2147483648
    %v6949 = vxor.u32 %v6937, 2147483648
    %v6950 = vxor.u32 %v6939, 2147483648
    %v6951 = vmul.f32 %v6943, 1.442695
    %v6952 = vpow.pop %v6951
    %v6953 = vmul.f32 %v6944, 1.442695
    %v6954 = vpow.pop %v6953
    %v6955 = vmul.f32 %v6945, 1.442695
    %v6956 = vpow.pop %v6955
    %v6957 = vmul.f32 %v6946, 1.442695
    %v6958 = vpow.pop %v6957
    %v6959 = vmul.f32 %v6947, 1.442695
    %v6960 = vpow.pop %v6959
    %v6961 = vmul.f32 %v6948, 1.442695
    %v6962 = vpow.pop %v6961
    %v6963 = vmul.f32 %v6949, 1.442695
    %v6964 = vpow.pop %v6963
    %v6965 = vmul.f32 %v6950, 1.442695
    %v6966 = vpow.pop %v6965
    %v6967 = vadd.f32 %v6952, 1.0
    %v6968 = vadd.f32 %v6954, 1.0
    %v6969 = vadd.f32 %v6956, 1.0
    %v6970 = vadd.f32 %v6958, 1.0
    %v6971 = vadd.f32 %v6960, 1.0
    %v6972 = vadd.f32 %v6962, 1.0
    %v6973 = vadd.f32 %v6964, 1.0
    %v6974 = vadd.f32 %v6966, 1.0
    %v6975 = vrcp.pop %v6967
    %v6976 = vmul.f32 1.0, %v6975
    %v6977 = vrcp.pop %v6968
    %v6978 = vmul.f32 1.0, %v6977
    %v6979 = vrcp.pop %v6969
    %v6980 = vmul.f32 1.0, %v6979
    %v6981 = vrcp.pop %v6970
    %v6982 = vmul.f32 1.0, %v6981
    %v6983 = vrcp.pop %v6971
    %v6984 = vmul.f32 1.0, %v6983
    %v6985 = vrcp.pop %v6972
    %v6986 = vmul.f32 1.0, %v6985
    %v6987 = vrcp.pop %v6973
    %v6988 = vmul.f32 1.0, %v6987
    %v6989 = vrcp.pop %v6974
    %v6990 = vmul.f32 1.0, %v6989
    %6991 = vst [vmem:[#allocation16 + $0x40] sm:$0xff] %v6976
    %6992 = vst [vmem:[#allocation16 + $0x48] sm:$0xff] %v6978
    %6993 = vst [vmem:[#allocation16 + $0x50] sm:$0xff] %v6980
    %6994 = vst [vmem:[#allocation16 + $0x58] sm:$0xff] %v6982
    %6995 = vst [vmem:[#allocation16 + $0x60] sm:$0xff] %v6984
    %6996 = vst [vmem:[#allocation16 + $0x68] sm:$0xff] %v6986
    %6997 = vst [vmem:[#allocation16 + $0x70] sm:$0xff] %v6988
    %6998 = vst [vmem:[#allocation16 + $0x78] sm:$0xff] %v6990
    // Predicated region
    $region58: #{ae_forward.1} parent=1 // pred_check
      _
    $region59: #{ae_forward.1} parent=1 // pred_check_branch
      %7000 = sbr.rel (0) target = $region61
    $region60: #{ae_forward.1} parent=1 // pred_region
      %s7002 = ssub.s32 2048, 2048
      %7003 = vsyncadd [#allocation6], %s7002
      %s7005 = sshll.u32 [#allocation16], 4
      %s7006 = int_to_ptr.vmem [resolvable:$true] %s7005
      %7008 = dma.vmem_to_hbm [thread:$0]  %s7006, 2048, %s14, [#allocation6]
    $region61: #{ae_forward.1} parent=1 // pred_fallthru
      _
    // Predicated region
    $region62: #{ae_forward.1} parent=1 // pred_check
      _
    $region63: #{ae_forward.1} parent=1 // pred_check_branch
      %7010 = sbr.rel (0) target = $region65
    $region64: #{ae_forward.1} parent=1 // pred_region
      %7011 = dma.done [#allocation6], 2048
    $region65: #{ae_forward.1} parent=1 // pred_fallthru
      _
    %7012 = vsyncpa [#allocation5], 1
    %7013 = vsyncpa [#allocation8], 1
    %7014 = vsyncpa [#allocation11], 1
    %7015 = vsyncpa [#allocation14], 1
    %7016 = vsyncpa [#allocation6], 1
  %7017 = vsyncmov [#allocation3]
  %s7018 = vpop.sfrf %7017
  %p7019 = scmp.eq.s32.totalorder %s7018, 0
  %p7020 = pneg %p7019
  %7022 = shalt.err (%p7020)
  %s7023 = scalar_lea.sflag [#allocation3], 1
  %7024 = vsyncmov %s7023
  %s7025 = vpop.sfrf %7024
  %p7026 = scmp.eq.s32.totalorder %s7025, 0
  %p7027 = pneg %p7026
  %7029 = shalt.err (%p7027)
  %s7030 = scalar_lea.sflag [#allocation3], 2
  %7031 = vsyncmov %s7030
  %s7032 = vpop.sfrf %7031
  %p7033 = scmp.eq.s32.totalorder %s7032, 0
  %p7034 = pneg %p7033
  %7036 = shalt.err (%p7034)

</llo_original>
